<compile_context>
chip_gen: v6e
topology: v6e:2x2x1
jax: 0.10.0
libtpu: 0.0.40
codegen_flags: <defaults>
</compile_context>

<pallas_src>
import jax
import jax.numpy as jnp
from jax import lax
from jax.experimental import pallas as pl
from jax.experimental.pallas import tpu as pltpu

# ---------------------------------------------------------------------------
# Model dimensions (synthetic, scaled-down EfficientNet)
# ---------------------------------------------------------------------------
IN_HW = 16                      # input spatial size (wrapper asserts this)
HO = WO = IN_HW // 2            # stem output spatial (3x3 conv, stride 2, pad 1)
S = HO * WO                     # 64 flattened spatial positions per sample
K_IM = 3 * 3 * 3                # stem im2col K (27)
K_PAD = 32                      # stem K padded to a lane-friendly width
STEM_C, EXP_C, SE_C, HEAD_C = 32, 128, 8, 256
FEAT_C, NUM_CLASSES = 1000, 11
FEAT_PAD, CLS_PAD = 1024, 128   # lane-dense padded widths
NB = 8                          # samples per grid step -> M = NB*S = 512 MXU rows
PAD_OFF = 16                    # per-sample zero-halo rows (>= 9, sublane aligned)
PAD_ROWS = PAD_OFF + S + PAD_OFF   # 96 rows per sample in the dwconv scratch


# ---------------------------------------------------------------------------
# Fused kernel: stem -> MBConv (expand/dwconv/SE/project+residual) -> head ->
#               global pool -> fc(1000) -> classifier(11)
# ---------------------------------------------------------------------------
def _effnet_kernel(x_ref, stem_w_ref, stem_b_ref,
                   exp_w_ref, exp_b_ref, dw_w_ref, dw_b_ref,
                   se1_w_ref, se1_b_ref, se2_w_ref, se2_b_ref,
                   proj_w_ref, proj_b_ref, head_w_ref, head_b_ref,
                   fc_w_ref, fc_b_ref, cls_w_ref, cls_b_ref,
                   o_ref, pad_ref):
    f32, bf16 = jnp.float32, jnp.bfloat16

    # ---- stem: 3x3 stride-2 conv as one MXU matmul on im2col input + swish ----
    xm = x_ref[...].reshape(NB * S, K_PAD)                         # bf16
    acc = jnp.dot(xm, stem_w_ref[...],
                  preferred_element_type=f32) + stem_b_ref[...]
    y = acc * jax.nn.sigmoid(acc)                                  # (NB*S, STEM_C)

    # ---- MBConv expand 1x1 + swish (bf16 MXU inputs, f32 accumulation) ----
    e = jnp.dot(y.astype(bf16), exp_w_ref[...],
                preferred_element_type=f32) + exp_b_ref[...]
    e = e * jax.nn.sigmoid(e)                                      # (NB*S, EXP_C)

    # ---- depthwise 3x3 + swish: shifted reads of a per-sample zero-haloed
    #      VMEM scratch; halos re-zeroed every step (megacore-safe, see header).
    zero_halo = jnp.zeros((NB, PAD_OFF, EXP_C), f32)
    pad_ref[:, 0:PAD_OFF, :] = zero_halo
    pad_ref[:, PAD_OFF + S:PAD_ROWS, :] = zero_halo
    pad_ref[:, PAD_OFF:PAD_OFF + S, :] = e.reshape(NB, S, EXP_C)
    padv = pad_ref[...]                                            # (NB, 96, EXP_C)

    dwv = dw_w_ref[...]                                            # (9, EXP_C) f32
    rj = lax.broadcasted_iota(jnp.int32, (1, S, 1), 1) % WO
    mask_l = rj >= 1              # column j-1 valid (dc == -1 taps)
    mask_r = rj <= WO - 2         # column j+1 valid (dc == +1 taps)
    d = jnp.zeros((NB, S, EXP_C), f32) + dw_b_ref[...]
    for kh in range(3):
        for kw in range(3):
            dr, dc = kh - 1, kw - 1
            shift = dr * WO + dc
            win = padv[:, PAD_OFF + shift:PAD_OFF + shift + S, :]  # (NB, S, EXP_C)
            if dc == -1:
                win = jnp.where(mask_l, win, 0.0)
            elif dc == 1:
                win = jnp.where(mask_r, win, 0.0)
            tap = kh * 3 + kw
            d = d + win * dwv[tap:tap + 1, :]
    d = d * jax.nn.sigmoid(d)                                      # (NB, S, EXP_C)

    # ---- squeeze-excite on the (NB, EXP_C) batch of pooled vectors ----
    s = jnp.mean(d, axis=1)                                        # (NB, EXP_C)
    s1 = jnp.dot(s.astype(bf16), se1_w_ref[...],
                 preferred_element_type=f32) + se1_b_ref[...]
    s1 = s1 * jax.nn.sigmoid(s1)                                   # (NB, SE_C)
    gate = jax.nn.sigmoid(jnp.dot(s1.astype(bf16), se2_w_ref[...],
                                  preferred_element_type=f32) + se2_b_ref[...])
    d = d * gate[:, None, :]                                       # (NB, S, EXP_C)

    # ---- project 1x1 with fused residual add (no activation) ----
    p = jnp.dot(d.reshape(NB * S, EXP_C).astype(bf16), proj_w_ref[...],
                preferred_element_type=f32) + proj_b_ref[...]
    ynew = y + p                                                   # (NB*S, STEM_C)

    # ---- head 1x1 conv + swish, global average pool ----
    h = jnp.dot(ynew.astype(bf16), head_w_ref[...],
                preferred_element_type=f32) + head_b_ref[...]
    h = h * jax.nn.sigmoid(h)                                      # (NB*S, HEAD_C)
    feat = jnp.mean(h.reshape(NB, S, HEAD_C), axis=1)              # (NB, HEAD_C)

    # ---- fused fc (1000 padded to 1024) + classifier (11 padded to 128) ----
    z = jnp.dot(feat.astype(bf16), fc_w_ref[...],
                preferred_element_type=f32) + fc_b_ref[...]        # (NB, FEAT_PAD)
    o_ref[...] = (jnp.dot(z.astype(bf16), cls_w_ref[...],
                          preferred_element_type=f32) + cls_b_ref[...])


# ---------------------------------------------------------------------------
# Parameters (deterministic synthetic init; BN folded into biases)
# ---------------------------------------------------------------------------
def init_params(key):
    ks = jax.random.split(key, 20)
    n = lambda k, shape, s=0.05: jax.random.normal(k, shape, jnp.float32) * s
    return {
        # stem conv 3x3/2, rows ordered (kh, kw) outer / c_in inner
        "stem_w": n(ks[0], (K_IM, STEM_C)),
        "stem_b": n(ks[1], (STEM_C,)),
        # MBConv: expand 1x1, depthwise 3x3, SE, project 1x1
        "exp_w": n(ks[2], (STEM_C, EXP_C)),
        "exp_b": n(ks[3], (EXP_C,)),
        "dw_w": n(ks[4], (9, EXP_C)),
        "dw_b": n(ks[5], (EXP_C,)),
        "se1_w": n(ks[6], (EXP_C, SE_C)),
        "se1_b": n(ks[7], (SE_C,)),
        "se2_w": n(ks[8], (SE_C, EXP_C)),
        "se2_b": n(ks[9], (EXP_C,)),
        "proj_w": n(ks[10], (EXP_C, STEM_C)),
        "proj_b": n(ks[11], (STEM_C,)),
        # head conv 1x1 + swish, then FC to 1000 features
        "head_w": n(ks[12], (STEM_C, HEAD_C)),
        "head_b": n(ks[13], (HEAD_C,)),
        "fc_w": n(ks[14], (HEAD_C, FEAT_C)),
        "fc_b": n(ks[15], (FEAT_C,)),
        # EffnetModel.classifier = nn.Linear(1000, 11)
        "cls_w": n(ks[16], (FEAT_C, NUM_CLASSES)),
        "cls_b": n(ks[17], (NUM_CLASSES,)),
    }


# ---------------------------------------------------------------------------
# Forward pass (matches EffnetModel.forward: features -> Linear(1000, 11))
# ---------------------------------------------------------------------------
def effnet_model_forward(params, x_nchw):
    x = jnp.transpose(x_nchw, (0, 2, 3, 1)).astype(jnp.float32)   # NCHW -> NHWC
    B, Hi, Wi, Ci = x.shape
    assert Hi == IN_HW and Wi == IN_HW and Ci == 3

    # Stem im2col in the wrapper (~7 KiB/sample): lane-dense (B, S, 32) bf16.
    # Row ordering of the 27 taps = (kh, kw) outer, c_in inner (matches stem_w).
    xp = jnp.pad(x, ((0, 0), (1, 1), (1, 1), (0, 0)))
    cols = [xp[:, kh:kh + 2 * HO:2, kw:kw + 2 * WO:2, :]
            for kh in range(3) for kw in range(3)]                 # each (B,HO,WO,3)
    im = jnp.concatenate(cols, axis=-1).reshape(B, S, K_IM)
    im = jnp.pad(im, ((0, 0), (0, 0), (0, K_PAD - K_IM))).astype(jnp.bfloat16)

    # Pad the batch to a multiple of NB (padded samples are zero; sliced off).
    B_pad = -(-B // NB) * NB
    if B_pad != B:
        im = jnp.pad(im, ((0, B_pad - B), (0, 0), (0, 0)))

    bf = lambda w: w.astype(jnp.bfloat16)
    r2 = lambda b: b.reshape(1, -1).astype(jnp.float32)
    stem_w = jnp.pad(params["stem_w"], ((0, K_PAD - K_IM), (0, 0))).astype(jnp.bfloat16)
    fc_w = jnp.pad(params["fc_w"], ((0, 0), (0, FEAT_PAD - FEAT_C))).astype(jnp.bfloat16)
    fc_b = jnp.pad(params["fc_b"], (0, FEAT_PAD - FEAT_C)).reshape(1, FEAT_PAD)
    cls_w = jnp.pad(params["cls_w"], ((0, FEAT_PAD - FEAT_C),
                                      (0, CLS_PAD - NUM_CLASSES))).astype(jnp.bfloat16)
    cls_b = jnp.pad(params["cls_b"], (0, CLS_PAD - NUM_CLASSES)).reshape(1, CLS_PAD)

    args = (im,
            stem_w, r2(params["stem_b"]),
            bf(params["exp_w"]), r2(params["exp_b"]),
            params["dw_w"].astype(jnp.float32), r2(params["dw_b"]),
            bf(params["se1_w"]), r2(params["se1_b"]),
            bf(params["se2_w"]), r2(params["se2_b"]),
            bf(params["proj_w"]), r2(params["proj_b"]),
            bf(params["head_w"]), r2(params["head_b"]),
            fc_w, fc_b.astype(jnp.float32),
            cls_w, cls_b.astype(jnp.float32))

    w2 = lambda shp: pl.BlockSpec(shp, lambda b: (0, 0))
    in_specs = [pl.BlockSpec((NB, S, K_PAD), lambda b: (b, 0, 0)),
                w2((K_PAD, STEM_C)), w2((1, STEM_C)),
                w2((STEM_C, EXP_C)), w2((1, EXP_C)),
                w2((9, EXP_C)), w2((1, EXP_C)),
                w2((EXP_C, SE_C)), w2((1, SE_C)),
                w2((SE_C, EXP_C)), w2((1, EXP_C)),
                w2((EXP_C, STEM_C)), w2((1, STEM_C)),
                w2((STEM_C, HEAD_C)), w2((1, HEAD_C)),
                w2((HEAD_C, FEAT_PAD)), w2((1, FEAT_PAD)),
                w2((FEAT_PAD, CLS_PAD)), w2((1, CLS_PAD))]

    flops = (B_pad * 2 * S * (K_PAD * STEM_C + STEM_C * EXP_C + 9 * EXP_C
                              + EXP_C * STEM_C + STEM_C * HEAD_C)
             + B_pad * 2 * (EXP_C * SE_C + SE_C * EXP_C
                            + HEAD_C * FEAT_PAD + FEAT_PAD * CLS_PAD))
    trans = B_pad * (S * (STEM_C + 2 * EXP_C + HEAD_C) + SE_C + EXP_C)
    nbytes = (sum(int(a.size) * a.dtype.itemsize for a in args)
              + B_pad * CLS_PAD * 4)

    logits = pl.pallas_call(
        _effnet_kernel,
        out_shape=jax.ShapeDtypeStruct((B_pad, CLS_PAD), jnp.float32),
        grid=(B_pad // NB,),
        in_specs=in_specs,
        out_specs=pl.BlockSpec((NB, CLS_PAD), lambda b: (b, 0)),
        scratch_shapes=[pltpu.VMEM((NB, PAD_ROWS, EXP_C), jnp.float32)],
        compiler_params=pltpu.CompilerParams(
            dimension_semantics=("parallel",),
            vmem_limit_bytes=32 * 1024 * 1024),
        cost_estimate=pl.CostEstimate(flops=int(flops), transcendentals=int(trans),
                                      bytes_accessed=int(nbytes)),
    )(*args)

    return logits[:B, :NUM_CLASSES]                    # (B, 11)


if __name__ == "__main__":
    key = jax.random.PRNGKey(0)
    k_x, k_p = jax.random.split(key)
    x = jax.random.normal(k_x, (2, 3, IN_HW, IN_HW), jnp.float32)  # NCHW, small
    params = init_params(k_p)

    fwd = jax.jit(effnet_model_forward)
    out = jax.block_until_ready(fwd(params, x))

    assert out.shape == (2, NUM_CLASSES), out.shape
    assert out.dtype == jnp.float32
    assert bool(jnp.all(jnp.isfinite(out)))
    print("KERNEL_OK")
</pallas_src>

<mosaic_0001>
module attributes {stable_mosaic.version = 11 : i64} {
  func.func @_effnet_kernel(%arg0: i32, %arg1: memref<8x64x32xbf16, #tpu.memory_space<vmem>>, %arg2: memref<32x32xbf16, #tpu.memory_space<vmem>>, %arg3: memref<1x32xf32, #tpu.memory_space<vmem>>, %arg4: memref<32x128xbf16, #tpu.memory_space<vmem>>, %arg5: memref<1x128xf32, #tpu.memory_space<vmem>>, %arg6: memref<9x128xf32, #tpu.memory_space<vmem>>, %arg7: memref<1x128xf32, #tpu.memory_space<vmem>>, %arg8: memref<128x8xbf16, #tpu.memory_space<vmem>>, %arg9: memref<1x8xf32, #tpu.memory_space<vmem>>, %arg10: memref<8x128xbf16, #tpu.memory_space<vmem>>, %arg11: memref<1x128xf32, #tpu.memory_space<vmem>>, %arg12: memref<128x32xbf16, #tpu.memory_space<vmem>>, %arg13: memref<1x32xf32, #tpu.memory_space<vmem>>, %arg14: memref<32x256xbf16, #tpu.memory_space<vmem>>, %arg15: memref<1x256xf32, #tpu.memory_space<vmem>>, %arg16: memref<256x1024xbf16, #tpu.memory_space<vmem>>, %arg17: memref<1x1024xf32, #tpu.memory_space<vmem>>, %arg18: memref<1024x128xbf16, #tpu.memory_space<vmem>>, %arg19: memref<1x128xf32, #tpu.memory_space<vmem>>, %arg20: memref<8x128xf32, #tpu.memory_space<vmem>>, %arg21: memref<8x96x128xf32, #tpu.memory_space<vmem>>) attributes {dimension_semantics = [#tpu.dimension_semantics<parallel>], iteration_bounds = array<i64: 1>, scalar_prefetch = 0 : i64, scratch_operands = 1 : i64, tpu.core_type = #tpu.core_type<tc>, window_params = [{transform_indices = @transform_0, window_bounds = array<i64: 8, 64, 32>}, {pipeline_mode = #tpu.pipeline_mode<synchronous>, transform_indices = @transform_1, window_bounds = array<i64: 32, 32>}, {pipeline_mode = #tpu.pipeline_mode<synchronous>, transform_indices = @transform_2, window_bounds = array<i64: 1, 32>}, {pipeline_mode = #tpu.pipeline_mode<synchronous>, transform_indices = @transform_3, window_bounds = array<i64: 32, 128>}, {pipeline_mode = #tpu.pipeline_mode<synchronous>, transform_indices = @transform_4, window_bounds = array<i64: 1, 128>}, {pipeline_mode = #tpu.pipeline_mode<synchronous>, transform_indices = @transform_5, window_bounds = array<i64: 9, 128>}, {pipeline_mode = #tpu.pipeline_mode<synchronous>, transform_indices = @transform_6, window_bounds = array<i64: 1, 128>}, {pipeline_mode = #tpu.pipeline_mode<synchronous>, transform_indices = @transform_7, window_bounds = array<i64: 128, 8>}, {pipeline_mode = #tpu.pipeline_mode<synchronous>, transform_indices = @transform_8, window_bounds = array<i64: 1, 8>}, {pipeline_mode = #tpu.pipeline_mode<synchronous>, transform_indices = @transform_9, window_bounds = array<i64: 8, 128>}, {pipeline_mode = #tpu.pipeline_mode<synchronous>, transform_indices = @transform_10, window_bounds = array<i64: 1, 128>}, {pipeline_mode = #tpu.pipeline_mode<synchronous>, transform_indices = @transform_11, window_bounds = array<i64: 128, 32>}, {pipeline_mode = #tpu.pipeline_mode<synchronous>, transform_indices = @transform_12, window_bounds = array<i64: 1, 32>}, {pipeline_mode = #tpu.pipeline_mode<synchronous>, transform_indices = @transform_13, window_bounds = array<i64: 32, 256>}, {pipeline_mode = #tpu.pipeline_mode<synchronous>, transform_indices = @transform_14, window_bounds = array<i64: 1, 256>}, {pipeline_mode = #tpu.pipeline_mode<synchronous>, transform_indices = @transform_15, window_bounds = array<i64: 256, 1024>}, {pipeline_mode = #tpu.pipeline_mode<synchronous>, transform_indices = @transform_16, window_bounds = array<i64: 1, 1024>}, {pipeline_mode = #tpu.pipeline_mode<synchronous>, transform_indices = @transform_17, window_bounds = array<i64: 1024, 128>}, {pipeline_mode = #tpu.pipeline_mode<synchronous>, transform_indices = @transform_18, window_bounds = array<i64: 1, 128>}, {transform_indices = @transform_19, window_bounds = array<i64: 8, 128>}]} {
    %c0 = arith.constant 0 : index
    %c0_0 = arith.constant 0 : index
    %c0_1 = arith.constant 0 : index
    %0 = vector.load %arg1[%c0, %c0_0, %c0_1] : memref<8x64x32xbf16, #tpu.memory_space<vmem>>, vector<8x64x32xbf16>
    %1 = vector.shape_cast %0 : vector<8x64x32xbf16> to vector<512x32xbf16>
    %c0_2 = arith.constant 0 : index
    %c0_3 = arith.constant 0 : index
    %2 = vector.load %arg2[%c0_2, %c0_3] : memref<32x32xbf16, #tpu.memory_space<vmem>>, vector<32x32xbf16>
    %cst = arith.constant dense<0.000000e+00> : vector<512x32xf32>
    %3 = tpu.matmul %1, %2, %cst {dimension_numbers = #tpu.dot_dimension_numbers<[1], [0], [0], [1], [0, 0, 1, 1], [], []>} : vector<512x32xbf16>, vector<32x32xbf16>, vector<512x32xf32> -> vector<512x32xf32>
    %c0_4 = arith.constant 0 : index
    %c0_5 = arith.constant 0 : index
    %4 = vector.load %arg3[%c0_4, %c0_5] : memref<1x32xf32, #tpu.memory_space<vmem>>, vector<1x32xf32>
    %5 = vector.broadcast %4 : vector<1x32xf32> to vector<512x32xf32>
    %6 = arith.addf %3, %5 : vector<512x32xf32>
    %7 = arith.negf %6 : vector<512x32xf32>
    %8 = math.exp %7 : vector<512x32xf32>
    %cst_6 = arith.constant 1.000000e+00 : f32
    %9 = vector.broadcast %cst_6 : f32 to vector<512x32xf32>
    %10 = arith.addf %9, %8 : vector<512x32xf32>
    %11 = arith.divf %9, %10 : vector<512x32xf32>
    %12 = arith.mulf %6, %11 : vector<512x32xf32>
    %13 = arith.truncf %12 : vector<512x32xf32> to vector<512x32xbf16>
    %c0_7 = arith.constant 0 : index
    %c0_8 = arith.constant 0 : index
    %14 = vector.load %arg4[%c0_7, %c0_8] : memref<32x128xbf16, #tpu.memory_space<vmem>>, vector<32x128xbf16>
    %cst_9 = arith.constant dense<0.000000e+00> : vector<512x128xf32>
    %15 = tpu.matmul %13, %14, %cst_9 {dimension_numbers = #tpu.dot_dimension_numbers<[1], [0], [0], [1], [0, 0, 1, 1], [], []>} : vector<512x32xbf16>, vector<32x128xbf16>, vector<512x128xf32> -> vector<512x128xf32>
    %c0_10 = arith.constant 0 : index
    %c0_11 = arith.constant 0 : index
    %16 = vector.load %arg5[%c0_10, %c0_11] : memref<1x128xf32, #tpu.memory_space<vmem>>, vector<1x128xf32>
    %17 = vector.broadcast %16 : vector<1x128xf32> to vector<512x128xf32>
    %18 = arith.addf %15, %17 : vector<512x128xf32>
    %19 = arith.negf %18 : vector<512x128xf32>
    %20 = math.exp %19 : vector<512x128xf32>
    %cst_12 = arith.constant 1.000000e+00 : f32
    %21 = vector.broadcast %cst_12 : f32 to vector<512x128xf32>
    %22 = arith.addf %21, %20 : vector<512x128xf32>
    %23 = arith.divf %21, %22 : vector<512x128xf32>
    %24 = arith.mulf %18, %23 : vector<512x128xf32>
    %cst_13 = arith.constant 0.000000e+00 : f32
    %25 = vector.broadcast %cst_13 : f32 to vector<8x16x128xf32>
    %c0_14 = arith.constant 0 : index
    %c0_15 = arith.constant 0 : index
    %c0_16 = arith.constant 0 : index
    %26 = vector.load %arg21[%c0_14, %c0_15, %c0_16] : memref<8x96x128xf32, #tpu.memory_space<vmem>>, vector<8x16x128xf32>
    tpu.vector_store %arg21[%c0_14, %c0_15, %c0_16], %25 {strides = array<i32>} : memref<8x96x128xf32, #tpu.memory_space<vmem>>, vector<8x16x128xf32>,
    %c0_17 = arith.constant 0 : index
    %c80 = arith.constant 80 : index
    %c0_18 = arith.constant 0 : index
    %27 = vector.load %arg21[%c0_17, %c80, %c0_18] : memref<8x96x128xf32, #tpu.memory_space<vmem>>, vector<8x16x128xf32>
    tpu.vector_store %arg21[%c0_17, %c80, %c0_18], %25 {strides = array<i32>} : memref<8x96x128xf32, #tpu.memory_space<vmem>>, vector<8x16x128xf32>,
    %28 = vector.shape_cast %24 : vector<512x128xf32> to vector<8x64x128xf32>
    %c0_19 = arith.constant 0 : index
    %c16 = arith.constant 16 : index
    %c0_20 = arith.constant 0 : index
    %29 = vector.load %arg21[%c0_19, %c16, %c0_20] : memref<8x96x128xf32, #tpu.memory_space<vmem>>, vector<8x64x128xf32>
    tpu.vector_store %arg21[%c0_19, %c16, %c0_20], %28 {strides = array<i32>} : memref<8x96x128xf32, #tpu.memory_space<vmem>>, vector<8x64x128xf32>,
    %c0_21 = arith.constant 0 : index
    %c0_22 = arith.constant 0 : index
    %c0_23 = arith.constant 0 : index
    %30 = vector.load %arg21[%c0_21, %c0_22, %c0_23] : memref<8x96x128xf32, #tpu.memory_space<vmem>>, vector<8x96x128xf32>
    %c0_24 = arith.constant 0 : index
    %c0_25 = arith.constant 0 : index
    %31 = vector.load %arg6[%c0_24, %c0_25] : memref<9x128xf32, #tpu.memory_space<vmem>>, vector<9x128xf32>
    %32 = tpu.iota {dimensions = array<i32: 1>} : vector<1x64x1xi32>
    %c8_i32 = arith.constant 8 : i32
    %c0_i32 = arith.constant 0 : i32
    %33 = arith.cmpi eq, %c8_i32, %c0_i32 : i32
    %c1_i32 = arith.constant 1 : i32
    %34 = arith.select %33, %c1_i32, %c8_i32 : i32
    %35 = vector.broadcast %34 : i32 to vector<1x64x1xi32>
    %36 = arith.remsi %32, %35 : vector<1x64x1xi32>
    %c0_i32_26 = arith.constant 0 : i32
    %37 = vector.broadcast %c0_i32_26 : i32 to vector<1x64x1xi32>
    %38 = arith.cmpi ne, %36, %37 : vector<1x64x1xi32>
    %c0_i32_27 = arith.constant 0 : i32
    %39 = vector.broadcast %c0_i32_27 : i32 to vector<1x64x1xi32>
    %40 = arith.cmpi slt, %36, %39 : vector<1x64x1xi32>
    %c0_i32_28 = arith.constant 0 : i32
    %41 = arith.cmpi slt, %34, %c0_i32_28 : i32
    %42 = vector.broadcast %41 : i1 to vector<1x64x1xi1>
    %43 = vector.broadcast %42 : vector<1x64x1xi1> to vector<1x64x1xi1>
    %44 = arith.xori %40, %43 : vector<1x64x1xi1>
    %45 = arith.andi %44, %38 : vector<1x64x1xi1>
    %46 = vector.broadcast %34 : i32 to vector<1x64x1xi32>
    %47 = arith.addi %36, %46 : vector<1x64x1xi32>
    %48 = arith.select %45, %47, %36 : vector<1x64x1xi1>, vector<1x64x1xi32>
    %c1_i32_29 = arith.constant 1 : i32
    %49 = vector.broadcast %c1_i32_29 : i32 to vector<1x64x1xi32>
    %50 = arith.cmpi sge, %48, %49 : vector<1x64x1xi32>
    %c6_i32 = arith.constant 6 : i32
    %51 = vector.broadcast %c6_i32 : i32 to vector<1x64x1xi32>
    %52 = arith.cmpi sle, %48, %51 : vector<1x64x1xi32>
    %cst_30 = arith.constant 0.000000e+00 : f32
    %53 = vector.broadcast %cst_30 : f32 to vector<8x64x128xf32>
    %c0_31 = arith.constant 0 : index
    %c0_32 = arith.constant 0 : index
    %54 = vector.load %arg7[%c0_31, %c0_32] : memref<1x128xf32, #tpu.memory_space<vmem>>, vector<1x128xf32>
    %55 = vector.shape_cast %54 : vector<1x128xf32> to vector<1x1x128xf32>
    %56 = vector.broadcast %55 : vector<1x1x128xf32> to vector<8x64x128xf32>
    %57 = arith.addf %53, %56 : vector<8x64x128xf32>
    %58 = vector.extract_strided_slice %30 {offsets = [0, 7, 0], sizes = [8, 64, 128], strides = [1, 1, 1]} : vector<8x96x128xf32> to vector<8x64x128xf32>
    %cst_33 = arith.constant 0.000000e+00 : f32
    %59 = vector.shape_cast %50 : vector<1x64x1xi1> to vector<1x64x1xi1>
    %60 = vector.broadcast %59 : vector<1x64x1xi1> to vector<8x64x128xi1>
    %61 = vector.broadcast %cst_33 : f32 to vector<8x64x128xf32>
    %62 = arith.select %60, %58, %61 : vector<8x64x128xi1>, vector<8x64x128xf32>
    %63 = vector.extract_strided_slice %31 {offsets = [0, 0], sizes = [1, 128], strides = [1, 1]} : vector<9x128xf32> to vector<1x128xf32>
    %64 = vector.shape_cast %63 : vector<1x128xf32> to vector<1x1x128xf32>
    %65 = vector.broadcast %64 : vector<1x1x128xf32> to vector<8x64x128xf32>
    %66 = arith.mulf %62, %65 : vector<8x64x128xf32>
    %67 = arith.addf %57, %66 : vector<8x64x128xf32>
    %68 = vector.extract_strided_slice %30 {offsets = [0, 8, 0], sizes = [8, 64, 128], strides = [1, 1, 1]} : vector<8x96x128xf32> to vector<8x64x128xf32>
    %69 = vector.extract_strided_slice %31 {offsets = [1, 0], sizes = [1, 128], strides = [1, 1]} : vector<9x128xf32> to vector<1x128xf32>
    %70 = vector.shape_cast %69 : vector<1x128xf32> to vector<1x1x128xf32>
    %71 = vector.broadcast %70 : vector<1x1x128xf32> to vector<8x64x128xf32>
    %72 = arith.mulf %68, %71 : vector<8x64x128xf32>
    %73 = arith.addf %67, %72 : vector<8x64x128xf32>
    %74 = vector.extract_strided_slice %30 {offsets = [0, 9, 0], sizes = [8, 64, 128], strides = [1, 1, 1]} : vector<8x96x128xf32> to vector<8x64x128xf32>
    %cst_34 = arith.constant 0.000000e+00 : f32
    %75 = vector.shape_cast %52 : vector<1x64x1xi1> to vector<1x64x1xi1>
    %76 = vector.broadcast %75 : vector<1x64x1xi1> to vector<8x64x128xi1>
    %77 = vector.broadcast %cst_34 : f32 to vector<8x64x128xf32>
    %78 = arith.select %76, %74, %77 : vector<8x64x128xi1>, vector<8x64x128xf32>
    %79 = vector.extract_strided_slice %31 {offsets = [2, 0], sizes = [1, 128], strides = [1, 1]} : vector<9x128xf32> to vector<1x128xf32>
    %80 = vector.shape_cast %79 : vector<1x128xf32> to vector<1x1x128xf32>
    %81 = vector.broadcast %80 : vector<1x1x128xf32> to vector<8x64x128xf32>
    %82 = arith.mulf %78, %81 : vector<8x64x128xf32>
    %83 = arith.addf %73, %82 : vector<8x64x128xf32>
    %84 = vector.extract_strided_slice %30 {offsets = [0, 15, 0], sizes = [8, 64, 128], strides = [1, 1, 1]} : vector<8x96x128xf32> to vector<8x64x128xf32>
    %cst_35 = arith.constant 0.000000e+00 : f32
    %85 = vector.shape_cast %50 : vector<1x64x1xi1> to vector<1x64x1xi1>
    %86 = vector.broadcast %85 : vector<1x64x1xi1> to vector<8x64x128xi1>
    %87 = vector.broadcast %cst_35 : f32 to vector<8x64x128xf32>
    %88 = arith.select %86, %84, %87 : vector<8x64x128xi1>, vector<8x64x128xf32>
    %89 = vector.extract_strided_slice %31 {offsets = [3, 0], sizes = [1, 128], strides = [1, 1]} : vector<9x128xf32> to vector<1x128xf32>
    %90 = vector.shape_cast %89 : vector<1x128xf32> to vector<1x1x128xf32>
    %91 = vector.broadcast %90 : vector<1x1x128xf32> to vector<8x64x128xf32>
    %92 = arith.mulf %88, %91 : vector<8x64x128xf32>
    %93 = arith.addf %83, %92 : vector<8x64x128xf32>
    %94 = vector.extract_strided_slice %30 {offsets = [0, 16, 0], sizes = [8, 64, 128], strides = [1, 1, 1]} : vector<8x96x128xf32> to vector<8x64x128xf32>
    %95 = vector.extract_strided_slice %31 {offsets = [4, 0], sizes = [1, 128], strides = [1, 1]} : vector<9x128xf32> to vector<1x128xf32>
    %96 = vector.shape_cast %95 : vector<1x128xf32> to vector<1x1x128xf32>
    %97 = vector.broadcast %96 : vector<1x1x128xf32> to vector<8x64x128xf32>
    %98 = arith.mulf %94, %97 : vector<8x64x128xf32>
    %99 = arith.addf %93, %98 : vector<8x64x128xf32>
    %100 = vector.extract_strided_slice %30 {offsets = [0, 17, 0], sizes = [8, 64, 128], strides = [1, 1, 1]} : vector<8x96x128xf32> to vector<8x64x128xf32>
    %cst_36 = arith.constant 0.000000e+00 : f32
    %101 = vector.shape_cast %52 : vector<1x64x1xi1> to vector<1x64x1xi1>
    %102 = vector.broadcast %101 : vector<1x64x1xi1> to vector<8x64x128xi1>
    %103 = vector.broadcast %cst_36 : f32 to vector<8x64x128xf32>
    %104 = arith.select %102, %100, %103 : vector<8x64x128xi1>, vector<8x64x128xf32>
    %105 = vector.extract_strided_slice %31 {offsets = [5, 0], sizes = [1, 128], strides = [1, 1]} : vector<9x128xf32> to vector<1x128xf32>
    %106 = vector.shape_cast %105 : vector<1x128xf32> to vector<1x1x128xf32>
    %107 = vector.broadcast %106 : vector<1x1x128xf32> to vector<8x64x128xf32>
    %108 = arith.mulf %104, %107 : vector<8x64x128xf32>
    %109 = arith.addf %99, %108 : vector<8x64x128xf32>
    %110 = vector.extract_strided_slice %30 {offsets = [0, 23, 0], sizes = [8, 64, 128], strides = [1, 1, 1]} : vector<8x96x128xf32> to vector<8x64x128xf32>
    %cst_37 = arith.constant 0.000000e+00 : f32
    %111 = vector.shape_cast %50 : vector<1x64x1xi1> to vector<1x64x1xi1>
    %112 = vector.broadcast %111 : vector<1x64x1xi1> to vector<8x64x128xi1>
    %113 = vector.broadcast %cst_37 : f32 to vector<8x64x128xf32>
    %114 = arith.select %112, %110, %113 : vector<8x64x128xi1>, vector<8x64x128xf32>
    %115 = vector.extract_strided_slice %31 {offsets = [6, 0], sizes = [1, 128], strides = [1, 1]} : vector<9x128xf32> to vector<1x128xf32>
    %116 = vector.shape_cast %115 : vector<1x128xf32> to vector<1x1x128xf32>
    %117 = vector.broadcast %116 : vector<1x1x128xf32> to vector<8x64x128xf32>
    %118 = arith.mulf %114, %117 : vector<8x64x128xf32>
    %119 = arith.addf %109, %118 : vector<8x64x128xf32>
    %120 = vector.extract_strided_slice %30 {offsets = [0, 24, 0], sizes = [8, 64, 128], strides = [1, 1, 1]} : vector<8x96x128xf32> to vector<8x64x128xf32>
    %121 = vector.extract_strided_slice %31 {offsets = [7, 0], sizes = [1, 128], strides = [1, 1]} : vector<9x128xf32> to vector<1x128xf32>
    %122 = vector.shape_cast %121 : vector<1x128xf32> to vector<1x1x128xf32>
    %123 = vector.broadcast %122 : vector<1x1x128xf32> to vector<8x64x128xf32>
    %124 = arith.mulf %120, %123 : vector<8x64x128xf32>
    %125 = arith.addf %119, %124 : vector<8x64x128xf32>
    %126 = vector.extract_strided_slice %30 {offsets = [0, 25, 0], sizes = [8, 64, 128], strides = [1, 1, 1]} : vector<8x96x128xf32> to vector<8x64x128xf32>
    %cst_38 = arith.constant 0.000000e+00 : f32
    %127 = vector.shape_cast %52 : vector<1x64x1xi1> to vector<1x64x1xi1>
    %128 = vector.broadcast %127 : vector<1x64x1xi1> to vector<8x64x128xi1>
    %129 = vector.broadcast %cst_38 : f32 to vector<8x64x128xf32>
    %130 = arith.select %128, %126, %129 : vector<8x64x128xi1>, vector<8x64x128xf32>
    %131 = vector.extract_strided_slice %31 {offsets = [8, 0], sizes = [1, 128], strides = [1, 1]} : vector<9x128xf32> to vector<1x128xf32>
    %132 = vector.shape_cast %131 : vector<1x128xf32> to vector<1x1x128xf32>
    %133 = vector.broadcast %132 : vector<1x1x128xf32> to vector<8x64x128xf32>
    %134 = arith.mulf %130, %133 : vector<8x64x128xf32>
    %135 = arith.addf %125, %134 : vector<8x64x128xf32>
    %136 = arith.negf %135 : vector<8x64x128xf32>
    %137 = math.exp %136 : vector<8x64x128xf32>
    %cst_39 = arith.constant 1.000000e+00 : f32
    %138 = vector.broadcast %cst_39 : f32 to vector<8x64x128xf32>
    %139 = arith.addf %138, %137 : vector<8x64x128xf32>
    %140 = arith.divf %138, %139 : vector<8x64x128xf32>
    %141 = arith.mulf %135, %140 : vector<8x64x128xf32>
    %cst_40 = arith.constant dense<0.000000e+00> : vector<8x128xf32>
    %142 = vector.multi_reduction <add>, %141, %cst_40 [1] : vector<8x64x128xf32> to vector<8x128xf32>
    %cst_41 = arith.constant 6.400000e+01 : f32
    %143 = vector.broadcast %cst_41 : f32 to vector<8x128xf32>
    %144 = arith.divf %142, %143 : vector<8x128xf32>
    %145 = arith.truncf %144 : vector<8x128xf32> to vector<8x128xbf16>
    %c0_42 = arith.constant 0 : index
    %c0_43 = arith.constant 0 : index
    %146 = vector.load %arg8[%c0_42, %c0_43] : memref<128x8xbf16, #tpu.memory_space<vmem>>, vector<128x8xbf16>
    %cst_44 = arith.constant dense<0.000000e+00> : vector<8x8xf32>
    %147 = tpu.matmul %145, %146, %cst_44 {dimension_numbers = #tpu.dot_dimension_numbers<[1], [0], [0], [1], [0, 0, 1, 1], [], []>} : vector<8x128xbf16>, vector<128x8xbf16>, vector<8x8xf32> -> vector<8x8xf32>
    %c0_45 = arith.constant 0 : index
    %c0_46 = arith.constant 0 : index
    %148 = vector.load %arg9[%c0_45, %c0_46] : memref<1x8xf32, #tpu.memory_space<vmem>>, vector<1x8xf32>
    %149 = vector.broadcast %148 : vector<1x8xf32> to vector<8x8xf32>
    %150 = arith.addf %147, %149 : vector<8x8xf32>
    %151 = arith.negf %150 : vector<8x8xf32>
    %152 = math.exp %151 : vector<8x8xf32>
    %cst_47 = arith.constant 1.000000e+00 : f32
    %153 = vector.broadcast %cst_47 : f32 to vector<8x8xf32>
    %154 = arith.addf %153, %152 : vector<8x8xf32>
    %155 = arith.divf %153, %154 : vector<8x8xf32>
    %156 = arith.mulf %150, %155 : vector<8x8xf32>
    %157 = arith.truncf %156 : vector<8x8xf32> to vector<8x8xbf16>
    %c0_48 = arith.constant 0 : index
    %c0_49 = arith.constant 0 : index
    %158 = vector.load %arg10[%c0_48, %c0_49] : memref<8x128xbf16, #tpu.memory_space<vmem>>, vector<8x128xbf16>
    %cst_50 = arith.constant dense<0.000000e+00> : vector<8x128xf32>
    %159 = tpu.matmul %157, %158, %cst_50 {dimension_numbers = #tpu.dot_dimension_numbers<[1], [0], [0], [1], [0, 0, 1, 1], [], []>} : vector<8x8xbf16>, vector<8x128xbf16>, vector<8x128xf32> -> vector<8x128xf32>
    %c0_51 = arith.constant 0 : index
    %c0_52 = arith.constant 0 : index
    %160 = vector.load %arg11[%c0_51, %c0_52] : memref<1x128xf32, #tpu.memory_space<vmem>>, vector<1x128xf32>
    %161 = vector.broadcast %160 : vector<1x128xf32> to vector<8x128xf32>
    %162 = arith.addf %159, %161 : vector<8x128xf32>
    %163 = arith.negf %162 : vector<8x128xf32>
    %164 = math.exp %163 : vector<8x128xf32>
    %cst_53 = arith.constant 1.000000e+00 : f32
    %165 = vector.broadcast %cst_53 : f32 to vector<8x128xf32>
    %166 = arith.addf %165, %164 : vector<8x128xf32>
    %167 = arith.divf %165, %166 : vector<8x128xf32>
    %168 = vector.shape_cast %167 : vector<8x128xf32> to vector<8x1x128xf32>
    %169 = vector.broadcast %168 : vector<8x1x128xf32> to vector<8x64x128xf32>
    %170 = arith.mulf %141, %169 : vector<8x64x128xf32>
    %171 = vector.shape_cast %170 : vector<8x64x128xf32> to vector<512x128xf32>
    %172 = arith.truncf %171 : vector<512x128xf32> to vector<512x128xbf16>
    %c0_54 = arith.constant 0 : index
    %c0_55 = arith.constant 0 : index
    %173 = vector.load %arg12[%c0_54, %c0_55] : memref<128x32xbf16, #tpu.memory_space<vmem>>, vector<128x32xbf16>
    %cst_56 = arith.constant dense<0.000000e+00> : vector<512x32xf32>
    %174 = tpu.matmul %172, %173, %cst_56 {dimension_numbers = #tpu.dot_dimension_numbers<[1], [0], [0], [1], [0, 0, 1, 1], [], []>} : vector<512x128xbf16>, vector<128x32xbf16>, vector<512x32xf32> -> vector<512x32xf32>
    %c0_57 = arith.constant 0 : index
    %c0_58 = arith.constant 0 : index
    %175 = vector.load %arg13[%c0_57, %c0_58] : memref<1x32xf32, #tpu.memory_space<vmem>>, vector<1x32xf32>
    %176 = vector.broadcast %175 : vector<1x32xf32> to vector<512x32xf32>
    %177 = arith.addf %174, %176 : vector<512x32xf32>
    %178 = arith.addf %12, %177 : vector<512x32xf32>
    %179 = arith.truncf %178 : vector<512x32xf32> to vector<512x32xbf16>
    %c0_59 = arith.constant 0 : index
    %c0_60 = arith.constant 0 : index
    %180 = vector.load %arg14[%c0_59, %c0_60] : memref<32x256xbf16, #tpu.memory_space<vmem>>, vector<32x256xbf16>
    %cst_61 = arith.constant dense<0.000000e+00> : vector<512x256xf32>
    %181 = tpu.matmul %179, %180, %cst_61 {dimension_numbers = #tpu.dot_dimension_numbers<[1], [0], [0], [1], [0, 0, 1, 1], [], []>} : vector<512x32xbf16>, vector<32x256xbf16>, vector<512x256xf32> -> vector<512x256xf32>
    %c0_62 = arith.constant 0 : index
    %c0_63 = arith.constant 0 : index
    %182 = vector.load %arg15[%c0_62, %c0_63] : memref<1x256xf32, #tpu.memory_space<vmem>>, vector<1x256xf32>
    %183 = vector.broadcast %182 : vector<1x256xf32> to vector<512x256xf32>
    %184 = arith.addf %181, %183 : vector<512x256xf32>
    %185 = arith.negf %184 : vector<512x256xf32>
    %186 = math.exp %185 : vector<512x256xf32>
    %cst_64 = arith.constant 1.000000e+00 : f32
    %187 = vector.broadcast %cst_64 : f32 to vector<512x256xf32>
    %188 = arith.addf %187, %186 : vector<512x256xf32>
    %189 = arith.divf %187, %188 : vector<512x256xf32>
    %190 = arith.mulf %184, %189 : vector<512x256xf32>
    %191 = vector.shape_cast %190 : vector<512x256xf32> to vector<8x64x256xf32>
    %cst_65 = arith.constant dense<0.000000e+00> : vector<8x256xf32>
    %192 = vector.multi_reduction <add>, %191, %cst_65 [1] : vector<8x64x256xf32> to vector<8x256xf32>
    %cst_66 = arith.constant 6.400000e+01 : f32
    %193 = vector.broadcast %cst_66 : f32 to vector<8x256xf32>
    %194 = arith.divf %192, %193 : vector<8x256xf32>
    %195 = arith.truncf %194 : vector<8x256xf32> to vector<8x256xbf16>
    %c0_67 = arith.constant 0 : index
    %c0_68 = arith.constant 0 : index
    %196 = vector.load %arg16[%c0_67, %c0_68] : memref<256x1024xbf16, #tpu.memory_space<vmem>>, vector<256x1024xbf16>
    %cst_69 = arith.constant dense<0.000000e+00> : vector<8x1024xf32>
    %197 = tpu.matmul %195, %196, %cst_69 {dimension_numbers = #tpu.dot_dimension_numbers<[1], [0], [0], [1], [0, 0, 1, 1], [], []>} : vector<8x256xbf16>, vector<256x1024xbf16>, vector<8x1024xf32> -> vector<8x1024xf32>
    %c0_70 = arith.constant 0 : index
    %c0_71 = arith.constant 0 : index
    %198 = vector.load %arg17[%c0_70, %c0_71] : memref<1x1024xf32, #tpu.memory_space<vmem>>, vector<1x1024xf32>
    %199 = vector.broadcast %198 : vector<1x1024xf32> to vector<8x1024xf32>
    %200 = arith.addf %197, %199 : vector<8x1024xf32>
    %201 = arith.truncf %200 : vector<8x1024xf32> to vector<8x1024xbf16>
    %c0_72 = arith.constant 0 : index
    %c0_73 = arith.constant 0 : index
    %202 = vector.load %arg18[%c0_72, %c0_73] : memref<1024x128xbf16, #tpu.memory_space<vmem>>, vector<1024x128xbf16>
    %cst_74 = arith.constant dense<0.000000e+00> : vector<8x128xf32>
    %203 = tpu.matmul %201, %202, %cst_74 {dimension_numbers = #tpu.dot_dimension_numbers<[1], [0], [0], [1], [0, 0, 1, 1], [], []>} : vector<8x1024xbf16>, vector<1024x128xbf16>, vector<8x128xf32> -> vector<8x128xf32>
    %c0_75 = arith.constant 0 : index
    %c0_76 = arith.constant 0 : index
    %204 = vector.load %arg19[%c0_75, %c0_76] : memref<1x128xf32, #tpu.memory_space<vmem>>, vector<1x128xf32>
    %205 = vector.broadcast %204 : vector<1x128xf32> to vector<8x128xf32>
    %206 = arith.addf %203, %205 : vector<8x128xf32>
    %c0_77 = arith.constant 0 : index
    %c0_78 = arith.constant 0 : index
    %207 = vector.load %arg20[%c0_77, %c0_78] : memref<8x128xf32, #tpu.memory_space<vmem>>, vector<8x128xf32>
    tpu.vector_store %arg20[%c0_77, %c0_78], %206 {strides = array<i32>} : memref<8x128xf32, #tpu.memory_space<vmem>>, vector<8x128xf32>,
    return
  }
  func.func @transform_0(%arg0: i32) -> (i32, i32, i32) {
    %c0_i32 = arith.constant 0 : i32
    %c0_i32_0 = arith.constant 0 : i32
    %c0_i32_1 = arith.constant 0 : i32
    return %arg0, %c0_i32, %c0_i32_0 : i32, i32, i32
  }
  func.func @transform_1(%arg0: i32) -> (i32, i32) {
    %c0_i32 = arith.constant 0 : i32
    %c0_i32_0 = arith.constant 0 : i32
    %c0_i32_1 = arith.constant 0 : i32
    return %c0_i32, %c0_i32_0 : i32, i32
  }
  func.func @transform_2(%arg0: i32) -> (i32, i32) {
    %c0_i32 = arith.constant 0 : i32
    %c0_i32_0 = arith.constant 0 : i32
    %c0_i32_1 = arith.constant 0 : i32
    return %c0_i32, %c0_i32_0 : i32, i32
  }
  func.func @transform_3(%arg0: i32) -> (i32, i32) {
    %c0_i32 = arith.constant 0 : i32
    %c0_i32_0 = arith.constant 0 : i32
    %c0_i32_1 = arith.constant 0 : i32
    return %c0_i32, %c0_i32_0 : i32, i32
  }
  func.func @transform_4(%arg0: i32) -> (i32, i32) {
    %c0_i32 = arith.constant 0 : i32
    %c0_i32_0 = arith.constant 0 : i32
    %c0_i32_1 = arith.constant 0 : i32
    return %c0_i32, %c0_i32_0 : i32, i32
  }
  func.func @transform_5(%arg0: i32) -> (i32, i32) {
    %c0_i32 = arith.constant 0 : i32
    %c0_i32_0 = arith.constant 0 : i32
    %c0_i32_1 = arith.constant 0 : i32
    return %c0_i32, %c0_i32_0 : i32, i32
  }
  func.func @transform_6(%arg0: i32) -> (i32, i32) {
    %c0_i32 = arith.constant 0 : i32
    %c0_i32_0 = arith.constant 0 : i32
    %c0_i32_1 = arith.constant 0 : i32
    return %c0_i32, %c0_i32_0 : i32, i32
  }
  func.func @transform_7(%arg0: i32) -> (i32, i32) {
    %c0_i32 = arith.constant 0 : i32
    %c0_i32_0 = arith.constant 0 : i32
    %c0_i32_1 = arith.constant 0 : i32
    return %c0_i32, %c0_i32_0 : i32, i32
  }
  func.func @transform_8(%arg0: i32) -> (i32, i32) {
    %c0_i32 = arith.constant 0 : i32
    %c0_i32_0 = arith.constant 0 : i32
    %c0_i32_1 = arith.constant 0 : i32
    return %c0_i32, %c0_i32_0 : i32, i32
  }
  func.func @transform_9(%arg0: i32) -> (i32, i32) {
    %c0_i32 = arith.constant 0 : i32
    %c0_i32_0 = arith.constant 0 : i32
    %c0_i32_1 = arith.constant 0 : i32
    return %c0_i32, %c0_i32_0 : i32, i32
  }
  func.func @transform_10(%arg0: i32) -> (i32, i32) {
    %c0_i32 = arith.constant 0 : i32
    %c0_i32_0 = arith.constant 0 : i32
    %c0_i32_1 = arith.constant 0 : i32
    return %c0_i32, %c0_i32_0 : i32, i32
  }
  func.func @transform_11(%arg0: i32) -> (i32, i32) {
    %c0_i32 = arith.constant 0 : i32
    %c0_i32_0 = arith.constant 0 : i32
    %c0_i32_1 = arith.constant 0 : i32
    return %c0_i32, %c0_i32_0 : i32, i32
  }
  func.func @transform_12(%arg0: i32) -> (i32, i32) {
    %c0_i32 = arith.constant 0 : i32
    %c0_i32_0 = arith.constant 0 : i32
    %c0_i32_1 = arith.constant 0 : i32
    return %c0_i32, %c0_i32_0 : i32, i32
  }
  func.func @transform_13(%arg0: i32) -> (i32, i32) {
    %c0_i32 = arith.constant 0 : i32
    %c0_i32_0 = arith.constant 0 : i32
    %c0_i32_1 = arith.constant 0 : i32
    return %c0_i32, %c0_i32_0 : i32, i32
  }
  func.func @transform_14(%arg0: i32) -> (i32, i32) {
    %c0_i32 = arith.constant 0 : i32
    %c0_i32_0 = arith.constant 0 : i32
    %c0_i32_1 = arith.constant 0 : i32
    return %c0_i32, %c0_i32_0 : i32, i32
  }
  func.func @transform_15(%arg0: i32) -> (i32, i32) {
    %c0_i32 = arith.constant 0 : i32
    %c0_i32_0 = arith.constant 0 : i32
    %c0_i32_1 = arith.constant 0 : i32
    return %c0_i32, %c0_i32_0 : i32, i32
  }
  func.func @transform_16(%arg0: i32) -> (i32, i32) {
    %c0_i32 = arith.constant 0 : i32
    %c0_i32_0 = arith.constant 0 : i32
    %c0_i32_1 = arith.constant 0 : i32
    return %c0_i32, %c0_i32_0 : i32, i32
  }
  func.func @transform_17(%arg0: i32) -> (i32, i32) {
    %c0_i32 = arith.constant 0 : i32
    %c0_i32_0 = arith.constant 0 : i32
    %c0_i32_1 = arith.constant 0 : i32
    return %c0_i32, %c0_i32_0 : i32, i32
  }
  func.func @transform_18(%arg0: i32) -> (i32, i32) {
    %c0_i32 = arith.constant 0 : i32
    %c0_i32_0 = arith.constant 0 : i32
    %c0_i32_1 = arith.constant 0 : i32
    return %c0_i32, %c0_i32_0 : i32, i32
  }
  func.func @transform_19(%arg0: i32) -> (i32, i32) {
    %c0_i32 = arith.constant 0 : i32
    %c0_i32_0 = arith.constant 0 : i32
    return %arg0, %c0_i32 : i32, i32
  }
}

</mosaic_0001>

<llo_original>
// kernel: effnet_model_forward.1
$region0: #{effnet_model_forward.1}
  #allocation0 [shape = 'u32[]', space=smem, size = 0x4, offset = 0x4, fixed_abs, tag = 'smem constant byte address 0x4 - core index']
  #allocation1 [shape = 'u32[144,128]{1,0:T(1,128)}', space=vmem, size = 0x12000, scoped, tag = 'internal scratch']
  #allocation2 [shape = 'f32[8,96,128]{2,1,0:T(8,128)}', space=vmem, size = 0x60000, scoped, tag = 'scratch operand']
  %s0 = inlined_call_operand.vmem [shape: bf16[8,64,32], index: 0, kind: input, shape index: {}]
  %s1 = inlined_call_operand.vmem [shape: bf16[32,32], index: 1, kind: input, shape index: {}]
  %s2 = inlined_call_operand.vmem [shape: f32[1,32], index: 2, kind: input, shape index: {}]
  %s3 = inlined_call_operand.vmem [shape: bf16[32,128], index: 3, kind: input, shape index: {}]
  %s4 = inlined_call_operand.vmem [shape: f32[1,128], index: 4, kind: input, shape index: {}]
  %s5 = inlined_call_operand.vmem [shape: f32[9,128], index: 5, kind: input, shape index: {}]
  %s6 = inlined_call_operand.vmem [shape: f32[1,128], index: 6, kind: input, shape index: {}]
  %s7 = inlined_call_operand.vmem [shape: bf16[128,8], index: 7, kind: input, shape index: {}]
  %s8 = inlined_call_operand.vmem [shape: f32[1,8], index: 8, kind: input, shape index: {}]
  %s9 = inlined_call_operand.vmem [shape: bf16[8,128], index: 9, kind: input, shape index: {}]
  %s10 = inlined_call_operand.vmem [shape: f32[1,128], index: 10, kind: input, shape index: {}]
  %s11 = inlined_call_operand.vmem [shape: bf16[128,32], index: 11, kind: input, shape index: {}]
  %s12 = inlined_call_operand.vmem [shape: f32[1,32], index: 12, kind: input, shape index: {}]
  %s13 = inlined_call_operand.vmem [shape: bf16[32,256], index: 13, kind: input, shape index: {}]
  %s14 = inlined_call_operand.vmem [shape: f32[1,256], index: 14, kind: input, shape index: {}]
  %s15 = inlined_call_operand.vmem [shape: bf16[256,1024], index: 15, kind: input, shape index: {}]
  %s16 = inlined_call_operand.vmem [shape: f32[1,1024], index: 16, kind: input, shape index: {}]
  %s17 = inlined_call_operand.vmem [shape: bf16[1024,128], index: 17, kind: input, shape index: {}]
  %s18 = inlined_call_operand.vmem [shape: f32[1,128], index: 18, kind: input, shape index: {}]
  %s19 = inlined_call_operand.vmem [shape: f32[8,128], index: 19, kind: output, shape index: {}]
  %s20 = sld [smem:[#allocation0]]
  $region86: #{effnet_model_forward.1} parent=0
    _
  %s22 = ssub.s32 1, %s20
  %s23 = scalar_select 0, %s22, %s20
  // Predicated region
  $region2: #{effnet_model_forward.1} parent=0 // pred_check
    _
  $region3: #{effnet_model_forward.1} parent=0 // pred_check_branch
    %25 = sbr.rel (0) target = $region5
  $region4: #{effnet_model_forward.1} parent=0 // pred_region
    _
  $region5: #{effnet_model_forward.1} parent=0 // pred_fallthru
    _
  // Predicated region
  $region6: #{effnet_model_forward.1} parent=0 // pred_check
    _
  $region7: #{effnet_model_forward.1} parent=0 // pred_check_branch
    %27 = sbr.rel (0) target = $region9
  $region8: #{effnet_model_forward.1} parent=0 // pred_region
    _
  $region9: #{effnet_model_forward.1} parent=0 // pred_fallthru
    _
  // Predicated region
  $region10: #{effnet_model_forward.1} parent=0 // pred_check
    _
  $region11: #{effnet_model_forward.1} parent=0 // pred_check_branch
    %29 = sbr.rel (0) target = $region13
  $region12: #{effnet_model_forward.1} parent=0 // pred_region
    _
  $region13: #{effnet_model_forward.1} parent=0 // pred_fallthru
    _
  // Predicated region
  $region14: #{effnet_model_forward.1} parent=0 // pred_check
    _
  $region15: #{effnet_model_forward.1} parent=0 // pred_check_branch
    %31 = sbr.rel (0) target = $region17
  $region16: #{effnet_model_forward.1} parent=0 // pred_region
    _
  $region17: #{effnet_model_forward.1} parent=0 // pred_fallthru
    _
  // Predicated region
  $region18: #{effnet_model_forward.1} parent=0 // pred_check
    _
  $region19: #{effnet_model_forward.1} parent=0 // pred_check_branch
    %33 = sbr.rel (0) target = $region21
  $region20: #{effnet_model_forward.1} parent=0 // pred_region
    _
  $region21: #{effnet_model_forward.1} parent=0 // pred_fallthru
    _
  // Predicated region
  $region22: #{effnet_model_forward.1} parent=0 // pred_check
    _
  $region23: #{effnet_model_forward.1} parent=0 // pred_check_branch
    %35 = sbr.rel (0) target = $region25
  $region24: #{effnet_model_forward.1} parent=0 // pred_region
    _
  $region25: #{effnet_model_forward.1} parent=0 // pred_fallthru
    _
  // Predicated region
  $region26: #{effnet_model_forward.1} parent=0 // pred_check
    _
  $region27: #{effnet_model_forward.1} parent=0 // pred_check_branch
    %37 = sbr.rel (0) target = $region29
  $region28: #{effnet_model_forward.1} parent=0 // pred_region
    _
  $region29: #{effnet_model_forward.1} parent=0 // pred_fallthru
    _
  // Predicated region
  $region30: #{effnet_model_forward.1} parent=0 // pred_check
    _
  $region31: #{effnet_model_forward.1} parent=0 // pred_check_branch
    %39 = sbr.rel (0) target = $region33
  $region32: #{effnet_model_forward.1} parent=0 // pred_region
    _
  $region33: #{effnet_model_forward.1} parent=0 // pred_fallthru
    _
  // Predicated region
  $region34: #{effnet_model_forward.1} parent=0 // pred_check
    _
  $region35: #{effnet_model_forward.1} parent=0 // pred_check_branch
    %41 = sbr.rel (0) target = $region37
  $region36: #{effnet_model_forward.1} parent=0 // pred_region
    _
  $region37: #{effnet_model_forward.1} parent=0 // pred_fallthru
    _
  // Predicated region
  $region38: #{effnet_model_forward.1} parent=0 // pred_check
    _
  $region39: #{effnet_model_forward.1} parent=0 // pred_check_branch
    %43 = sbr.rel (0) target = $region41
  $region40: #{effnet_model_forward.1} parent=0 // pred_region
    _
  $region41: #{effnet_model_forward.1} parent=0 // pred_fallthru
    _
  // Predicated region
  $region42: #{effnet_model_forward.1} parent=0 // pred_check
    _
  $region43: #{effnet_model_forward.1} parent=0 // pred_check_branch
    %45 = sbr.rel (0) target = $region45
  $region44: #{effnet_model_forward.1} parent=0 // pred_region
    _
  $region45: #{effnet_model_forward.1} parent=0 // pred_fallthru
    _
  // Predicated region
  $region46: #{effnet_model_forward.1} parent=0 // pred_check
    _
  $region47: #{effnet_model_forward.1} parent=0 // pred_check_branch
    %47 = sbr.rel (0) target = $region49
  $region48: #{effnet_model_forward.1} parent=0 // pred_region
    _
  $region49: #{effnet_model_forward.1} parent=0 // pred_fallthru
    _
  // Predicated region
  $region50: #{effnet_model_forward.1} parent=0 // pred_check
    _
  $region51: #{effnet_model_forward.1} parent=0 // pred_check_branch
    %49 = sbr.rel (0) target = $region53
  $region52: #{effnet_model_forward.1} parent=0 // pred_region
    _
  $region53: #{effnet_model_forward.1} parent=0 // pred_fallthru
    _
  // Predicated region
  $region54: #{effnet_model_forward.1} parent=0 // pred_check
    _
  $region55: #{effnet_model_forward.1} parent=0 // pred_check_branch
    %51 = sbr.rel (0) target = $region57
  $region56: #{effnet_model_forward.1} parent=0 // pred_region
    _
  $region57: #{effnet_model_forward.1} parent=0 // pred_fallthru
    _
  // Predicated region
  $region58: #{effnet_model_forward.1} parent=0 // pred_check
    _
  $region59: #{effnet_model_forward.1} parent=0 // pred_check_branch
    %53 = sbr.rel (0) target = $region61
  $region60: #{effnet_model_forward.1} parent=0 // pred_region
    _
  $region61: #{effnet_model_forward.1} parent=0 // pred_fallthru
    _
  // Predicated region
  $region62: #{effnet_model_forward.1} parent=0 // pred_check
    _
  $region63: #{effnet_model_forward.1} parent=0 // pred_check_branch
    %55 = sbr.rel (0) target = $region65
  $region64: #{effnet_model_forward.1} parent=0 // pred_region
    _
  $region65: #{effnet_model_forward.1} parent=0 // pred_fallthru
    _
  // Predicated region
  $region66: #{effnet_model_forward.1} parent=0 // pred_check
    _
  $region67: #{effnet_model_forward.1} parent=0 // pred_check_branch
    %57 = sbr.rel (0) target = $region69
  $region68: #{effnet_model_forward.1} parent=0 // pred_region
    _
  $region69: #{effnet_model_forward.1} parent=0 // pred_fallthru
    _
  // Predicated region
  $region70: #{effnet_model_forward.1} parent=0 // pred_check
    _
  $region71: #{effnet_model_forward.1} parent=0 // pred_check_branch
    %59 = sbr.rel (0) target = $region73
  $region72: #{effnet_model_forward.1} parent=0 // pred_region
    _
  $region73: #{effnet_model_forward.1} parent=0 // pred_fallthru
    _
  // Predicated region
  $region74: #{effnet_model_forward.1} parent=0 // pred_check
    _
  $region75: #{effnet_model_forward.1} parent=0 // pred_check_branch
    %61 = sbr.rel (0) target = $region77
  $region76: #{effnet_model_forward.1} parent=0 // pred_region
    _
  $region77: #{effnet_model_forward.1} parent=0 // pred_fallthru
    _
  %v63 = vld [vmem:[%s0] sm:$0xf]
  %v64 = vld [vmem:[%s0 + $0x4] sm:$0xf]
  %v65 = vld [vmem:[%s0 + $0x8] sm:$0xf]
  %v66 = vld [vmem:[%s0 + $0xc] sm:$0xf]
  %v67 = vld [vmem:[%s0 + $0x10] sm:$0xf]
  %v68 = vld [vmem:[%s0 + $0x14] sm:$0xf]
  %v69 = vld [vmem:[%s0 + $0x18] sm:$0xf]
  %v70 = vld [vmem:[%s0 + $0x1c] sm:$0xf]
  %v71 = vld [vmem:[%s0 + $0x20] sm:$0xf]
  %v72 = vld [vmem:[%s0 + $0x24] sm:$0xf]
  %v73 = vld [vmem:[%s0 + $0x28] sm:$0xf]
  %v74 = vld [vmem:[%s0 + $0x2c] sm:$0xf]
  %v75 = vld [vmem:[%s0 + $0x30] sm:$0xf]
  %v76 = vld [vmem:[%s0 + $0x34] sm:$0xf]
  %v77 = vld [vmem:[%s0 + $0x38] sm:$0xf]
  %v78 = vld [vmem:[%s0 + $0x3c] sm:$0xf]
  %v79 = vld [vmem:[%s0 + $0x40] sm:$0xf]
  %v80 = vld [vmem:[%s0 + $0x44] sm:$0xf]
  %v81 = vld [vmem:[%s0 + $0x48] sm:$0xf]
  %v82 = vld [vmem:[%s0 + $0x4c] sm:$0xf]
  %v83 = vld [vmem:[%s0 + $0x50] sm:$0xf]
  %v84 = vld [vmem:[%s0 + $0x54] sm:$0xf]
  %v85 = vld [vmem:[%s0 + $0x58] sm:$0xf]
  %v86 = vld [vmem:[%s0 + $0x5c] sm:$0xf]
  %v87 = vld [vmem:[%s0 + $0x60] sm:$0xf]
  %v88 = vld [vmem:[%s0 + $0x64] sm:$0xf]
  %v89 = vld [vmem:[%s0 + $0x68] sm:$0xf]
  %v90 = vld [vmem:[%s0 + $0x6c] sm:$0xf]
  %v91 = vld [vmem:[%s0 + $0x70] sm:$0xf]
  %v92 = vld [vmem:[%s0 + $0x74] sm:$0xf]
  %v93 = vld [vmem:[%s0 + $0x78] sm:$0xf]
  %v94 = vld [vmem:[%s0 + $0x7c] sm:$0xf]
  %v95 = vld [vmem:[%s0 + $0x80] sm:$0xf]
  %v96 = vld [vmem:[%s0 + $0x84] sm:$0xf]
  %v97 = vld [vmem:[%s0 + $0x88] sm:$0xf]
  %v98 = vld [vmem:[%s0 + $0x8c] sm:$0xf]
  %v99 = vld [vmem:[%s0 + $0x90] sm:$0xf]
  %v100 = vld [vmem:[%s0 + $0x94] sm:$0xf]
  %v101 = vld [vmem:[%s0 + $0x98] sm:$0xf]
  %v102 = vld [vmem:[%s0 + $0x9c] sm:$0xf]
  %v103 = vld [vmem:[%s0 + $0xa0] sm:$0xf]
  %v104 = vld [vmem:[%s0 + $0xa4] sm:$0xf]
  %v105 = vld [vmem:[%s0 + $0xa8] sm:$0xf]
  %v106 = vld [vmem:[%s0 + $0xac] sm:$0xf]
  %v107 = vld [vmem:[%s0 + $0xb0] sm:$0xf]
  %v108 = vld [vmem:[%s0 + $0xb4] sm:$0xf]
  %v109 = vld [vmem:[%s0 + $0xb8] sm:$0xf]
  %v110 = vld [vmem:[%s0 + $0xbc] sm:$0xf]
  %v111 = vld [vmem:[%s0 + $0xc0] sm:$0xf]
  %v112 = vld [vmem:[%s0 + $0xc4] sm:$0xf]
  %v113 = vld [vmem:[%s0 + $0xc8] sm:$0xf]
  %v114 = vld [vmem:[%s0 + $0xcc] sm:$0xf]
  %v115 = vld [vmem:[%s0 + $0xd0] sm:$0xf]
  %v116 = vld [vmem:[%s0 + $0xd4] sm:$0xf]
  %v117 = vld [vmem:[%s0 + $0xd8] sm:$0xf]
  %v118 = vld [vmem:[%s0 + $0xdc] sm:$0xf]
  %v119 = vld [vmem:[%s0 + $0xe0] sm:$0xf]
  %v120 = vld [vmem:[%s0 + $0xe4] sm:$0xf]
  %v121 = vld [vmem:[%s0 + $0xe8] sm:$0xf]
  %v122 = vld [vmem:[%s0 + $0xec] sm:$0xf]
  %v123 = vld [vmem:[%s0 + $0xf0] sm:$0xf]
  %v124 = vld [vmem:[%s0 + $0xf4] sm:$0xf]
  %v125 = vld [vmem:[%s0 + $0xf8] sm:$0xf]
  %v126 = vld [vmem:[%s0 + $0xfc] sm:$0xf]
  %v127 = vld [vmem:[%s1] sm:$0xf]
  %v128 = vld [vmem:[%s1 + $0x4] sm:$0xf]
  %v129 = vld [vmem:[%s1 + $0x8] sm:$0xf]
  %v130 = vld [vmem:[%s1 + $0xc] sm:$0xf]
  %v131 = vld [vmem:[%s2] sm:$0x1]
  %v133 = vlaneseq
  %v134 = vshrl.u32 %v133, 7
  %v135 = vsub.s32 0, %v134
  %v136 = vrot.slane %v131, %v135
  %v202 = vunpack.c.l.b16 %v63
  %v203 = vunpack.c.l.b16 %v64
  %v204 = vunpack.c.l.b16 %v65
  %v205 = vunpack.c.l.b16 %v66
  %v206 = vunpack.c.l.b16 %v67
  %v207 = vunpack.c.l.b16 %v68
  %v208 = vunpack.c.l.b16 %v69
  %v209 = vunpack.c.l.b16 %v70
  %v210 = vunpack.c.l.b16 %v71
  %v211 = vunpack.c.l.b16 %v72
  %v212 = vunpack.c.l.b16 %v73
  %v213 = vunpack.c.l.b16 %v74
  %v214 = vunpack.c.l.b16 %v75
  %v215 = vunpack.c.l.b16 %v76
  %v216 = vunpack.c.l.b16 %v77
  %v217 = vunpack.c.l.b16 %v78
  %v218 = vunpack.c.l.b16 %v79
  %v219 = vunpack.c.l.b16 %v80
  %v220 = vunpack.c.l.b16 %v81
  %v221 = vunpack.c.l.b16 %v82
  %v222 = vunpack.c.l.b16 %v83
  %v223 = vunpack.c.l.b16 %v84
  %v224 = vunpack.c.l.b16 %v85
  %v225 = vunpack.c.l.b16 %v86
  %v226 = vunpack.c.l.b16 %v87
  %v227 = vunpack.c.l.b16 %v88
  %v228 = vunpack.c.l.b16 %v89
  %v229 = vunpack.c.l.b16 %v90
  %v230 = vunpack.c.l.b16 %v91
  %v231 = vunpack.c.l.b16 %v92
  %v232 = vunpack.c.l.b16 %v93
  %v233 = vunpack.c.l.b16 %v94
  %v234 = vunpack.c.l.b16 %v95
  %v235 = vunpack.c.l.b16 %v96
  %v236 = vunpack.c.l.b16 %v97
  %v237 = vunpack.c.l.b16 %v98
  %v238 = vunpack.c.l.b16 %v99
  %v239 = vunpack.c.l.b16 %v100
  %v240 = vunpack.c.l.b16 %v101
  %v241 = vunpack.c.l.b16 %v102
  %v242 = vunpack.c.l.b16 %v103
  %v243 = vunpack.c.l.b16 %v104
  %v244 = vunpack.c.l.b16 %v105
  %v245 = vunpack.c.l.b16 %v106
  %v246 = vunpack.c.l.b16 %v107
  %v247 = vunpack.c.l.b16 %v108
  %v248 = vunpack.c.l.b16 %v109
  %v249 = vunpack.c.l.b16 %v110
  %v250 = vunpack.c.l.b16 %v111
  %v251 = vunpack.c.l.b16 %v112
  %v252 = vunpack.c.l.b16 %v113
  %v253 = vunpack.c.l.b16 %v114
  %v254 = vunpack.c.l.b16 %v115
  %v255 = vunpack.c.l.b16 %v116
  %v256 = vunpack.c.l.b16 %v117
  %v257 = vunpack.c.l.b16 %v118
  %v258 = vunpack.c.l.b16 %v119
  %v259 = vunpack.c.l.b16 %v120
  %v260 = vunpack.c.l.b16 %v121
  %v261 = vunpack.c.l.b16 %v122
  %v262 = vunpack.c.l.b16 %v123
  %v263 = vunpack.c.l.b16 %v124
  %v264 = vunpack.c.l.b16 %v125
  %v265 = vunpack.c.l.b16 %v126
  %v266 = vpack.c.b16 %v203, %v202
  %v267 = vpack.c.b16 %v205, %v204
  %v268 = vpack.c.b16 %v207, %v206
  %v269 = vpack.c.b16 %v209, %v208
  %v270 = vpack.c.b16 %v211, %v210
  %v271 = vpack.c.b16 %v213, %v212
  %v272 = vpack.c.b16 %v215, %v214
  %v273 = vpack.c.b16 %v217, %v216
  %v274 = vpack.c.b16 %v219, %v218
  %v275 = vpack.c.b16 %v221, %v220
  %v276 = vpack.c.b16 %v223, %v222
  %v277 = vpack.c.b16 %v225, %v224
  %v278 = vpack.c.b16 %v227, %v226
  %v279 = vpack.c.b16 %v229, %v228
  %v280 = vpack.c.b16 %v231, %v230
  %v281 = vpack.c.b16 %v233, %v232
  %v282 = vpack.c.b16 %v235, %v234
  %v283 = vpack.c.b16 %v237, %v236
  %v284 = vpack.c.b16 %v239, %v238
  %v285 = vpack.c.b16 %v241, %v240
  %v286 = vpack.c.b16 %v243, %v242
  %v287 = vpack.c.b16 %v245, %v244
  %v288 = vpack.c.b16 %v247, %v246
  %v289 = vpack.c.b16 %v249, %v248
  %v290 = vpack.c.b16 %v251, %v250
  %v291 = vpack.c.b16 %v253, %v252
  %v292 = vpack.c.b16 %v255, %v254
  %v293 = vpack.c.b16 %v257, %v256
  %v294 = vpack.c.b16 %v259, %v258
  %v295 = vpack.c.b16 %v261, %v260
  %v296 = vpack.c.b16 %v263, %v262
  %v297 = vpack.c.b16 %v265, %v264
  %v302 = vunpack.c.l.b16 %v127
  %v303 = vunpack.c.l.b16 %v128
  %v304 = vunpack.c.l.b16 %v129
  %v305 = vunpack.c.l.b16 %v130
  %v306 = vpack.c.b16 %v303, %v302
  %v307 = vpack.c.b16 %v305, %v304
  %vm310 = vcmask 261120
  %v312 = vsel %vm310, %v266, 0
  %v315 = vsel %vm310, %v267, 0
  %v318 = vsel %vm310, %v268, 0
  %v321 = vsel %vm310, %v269, 0
  %v324 = vsel %vm310, %v270, 0
  %v327 = vsel %vm310, %v271, 0
  %v330 = vsel %vm310, %v272, 0
  %v333 = vsel %vm310, %v273, 0
  %v336 = vsel %vm310, %v274, 0
  %v339 = vsel %vm310, %v275, 0
  %v342 = vsel %vm310, %v276, 0
  %v345 = vsel %vm310, %v277, 0
  %v348 = vsel %vm310, %v278, 0
  %v351 = vsel %vm310, %v279, 0
  %v354 = vsel %vm310, %v280, 0
  %v357 = vsel %vm310, %v281, 0
  %v360 = vsel %vm310, %v282, 0
  %v363 = vsel %vm310, %v283, 0
  %v366 = vsel %vm310, %v284, 0
  %v369 = vsel %vm310, %v285, 0
  %v372 = vsel %vm310, %v286, 0
  %v375 = vsel %vm310, %v287, 0
  %v378 = vsel %vm310, %v288, 0
  %v381 = vsel %vm310, %v289, 0
  %v384 = vsel %vm310, %v290, 0
  %v387 = vsel %vm310, %v291, 0
  %v390 = vsel %vm310, %v292, 0
  %v393 = vsel %vm310, %v293, 0
  %v396 = vsel %vm310, %v294, 0
  %v399 = vsel %vm310, %v295, 0
  %v402 = vsel %vm310, %v296, 0
  %v405 = vsel %vm310, %v297, 0
  %407 = vmatprep.subr.bf16.mxu0 0
  %408 = vmatpush1.bf16.msra.mxu0 0
  %409 = vmatprep.subr.bf16.mxu0 0
  %410 = vmatpush1.bf16.msra.mxu0 0
  %411 = vmatprep.subr.bf16.mxu0 0
  %412 = vmatpush1.bf16.msra.mxu0 0
  %413 = vmatprep.subr.bf16.mxu0 0
  %414 = vmatpush1.bf16.msra.mxu0 0
  %415 = vmatprep.subr.bf16.mxu0 0
  %416 = vmatpush1.bf16.msra.mxu0 0
  %417 = vmatprep.subr.bf16.mxu0 0
  %418 = vmatpush1.bf16.msra.mxu0 0
  %419 = vmatprep.subr.bf16.mxu0 0
  %420 = vmatpush1.bf16.msra.mxu0 %v307
  %421 = vmatprep.subr.bf16.mxu0 0
  %422 = vmatpush1.bf16.msra.mxu0 %v306
  %423 = vmatprep.subr.bf16.mxu0 0
  %424 = vmatpush2.bf16.msra.mxu0 0
  %425 = vmatprep.subr.bf16.mxu0 0
  %426 = vmatpush2.bf16.msra.mxu0 0
  %427 = vmatprep.subr.bf16.mxu0 0
  %428 = vmatpush2.bf16.msra.mxu0 0
  %429 = vmatprep.subr.bf16.mxu0 0
  %430 = vmatpush2.bf16.msra.mxu0 0
  %431 = vmatprep.subr.bf16.mxu0 0
  %432 = vmatpush2.bf16.msra.mxu0 0
  %433 = vmatprep.subr.bf16.mxu0 0
  %434 = vmatpush2.bf16.msra.mxu0 0
  %435 = vmatprep.subr.bf16.mxu0 0
  %436 = vmatpush2.bf16.msra.mxu0 0
  %437 = vmatprep.subr.bf16.mxu0 0
  %438 = vmatpush2.bf16.msra.mxu0 0
  %439 = vmatprep.mubr.bf16.mxu0 0
  %440 = vmatmul.mubr.bf16.gmra.mxu0 %v312
  %v441 = vpop.f32.mrf.mxu0
  %v442 = vadd.f32 %v136, %v441
  %v443 = vpop.f32.mrf.mxu0
  %v444 = vpop.f32.mrf.mxu0
  %v445 = vadd.f32 %v136, %v444
  %v446 = vpop.f32.mrf.mxu0
  %447 = vmatprep.mubr.bf16.mxu0 0
  %448 = vmatmul.mubr.bf16.gmra.mxu0 %v315
  %v449 = vpop.f32.mrf.mxu0
  %v450 = vadd.f32 %v136, %v449
  %v451 = vpop.f32.mrf.mxu0
  %v452 = vpop.f32.mrf.mxu0
  %v453 = vadd.f32 %v136, %v452
  %v454 = vpop.f32.mrf.mxu0
  %455 = vmatprep.mubr.bf16.mxu0 0
  %456 = vmatmul.mubr.bf16.gmra.mxu0 %v318
  %v457 = vpop.f32.mrf.mxu0
  %v458 = vadd.f32 %v136, %v457
  %v459 = vpop.f32.mrf.mxu0
  %v460 = vpop.f32.mrf.mxu0
  %v461 = vadd.f32 %v136, %v460
  %v462 = vpop.f32.mrf.mxu0
  %463 = vmatprep.mubr.bf16.mxu0 0
  %464 = vmatmul.mubr.bf16.gmra.mxu0 %v321
  %v465 = vpop.f32.mrf.mxu0
  %v466 = vadd.f32 %v136, %v465
  %v467 = vpop.f32.mrf.mxu0
  %v468 = vpop.f32.mrf.mxu0
  %v469 = vadd.f32 %v136, %v468
  %v470 = vpop.f32.mrf.mxu0
  %471 = vmatprep.mubr.bf16.mxu0 0
  %472 = vmatmul.mubr.bf16.gmra.mxu0 %v324
  %v473 = vpop.f32.mrf.mxu0
  %v474 = vadd.f32 %v136, %v473
  %v475 = vpop.f32.mrf.mxu0
  %v476 = vpop.f32.mrf.mxu0
  %v477 = vadd.f32 %v136, %v476
  %v478 = vpop.f32.mrf.mxu0
  %479 = vmatprep.mubr.bf16.mxu0 0
  %480 = vmatmul.mubr.bf16.gmra.mxu0 %v327
  %v481 = vpop.f32.mrf.mxu0
  %v482 = vadd.f32 %v136, %v481
  %v483 = vpop.f32.mrf.mxu0
  %v484 = vpop.f32.mrf.mxu0
  %v485 = vadd.f32 %v136, %v484
  %v486 = vpop.f32.mrf.mxu0
  %487 = vmatprep.mubr.bf16.mxu0 0
  %488 = vmatmul.mubr.bf16.gmra.mxu0 %v330
  %v489 = vpop.f32.mrf.mxu0
  %v490 = vadd.f32 %v136, %v489
  %v491 = vpop.f32.mrf.mxu0
  %v492 = vpop.f32.mrf.mxu0
  %v493 = vadd.f32 %v136, %v492
  %v494 = vpop.f32.mrf.mxu0
  %495 = vmatprep.mubr.bf16.mxu0 0
  %496 = vmatmul.mubr.bf16.gmra.mxu0 %v333
  %v497 = vpop.f32.mrf.mxu0
  %v498 = vadd.f32 %v136, %v497
  %v499 = vpop.f32.mrf.mxu0
  %v500 = vpop.f32.mrf.mxu0
  %v501 = vadd.f32 %v136, %v500
  %v502 = vpop.f32.mrf.mxu0
  %503 = vmatprep.mubr.bf16.mxu0 0
  %504 = vmatmul.mubr.bf16.gmra.mxu0 %v336
  %v505 = vpop.f32.mrf.mxu0
  %v506 = vadd.f32 %v136, %v505
  %v507 = vpop.f32.mrf.mxu0
  %v508 = vpop.f32.mrf.mxu0
  %v509 = vadd.f32 %v136, %v508
  %v510 = vpop.f32.mrf.mxu0
  %511 = vmatprep.mubr.bf16.mxu0 0
  %512 = vmatmul.mubr.bf16.gmra.mxu0 %v339
  %v513 = vpop.f32.mrf.mxu0
  %v514 = vadd.f32 %v136, %v513
  %v515 = vpop.f32.mrf.mxu0
  %v516 = vpop.f32.mrf.mxu0
  %v517 = vadd.f32 %v136, %v516
  %v518 = vpop.f32.mrf.mxu0
  %519 = vmatprep.mubr.bf16.mxu0 0
  %520 = vmatmul.mubr.bf16.gmra.mxu0 %v342
  %v521 = vpop.f32.mrf.mxu0
  %v522 = vadd.f32 %v136, %v521
  %v523 = vpop.f32.mrf.mxu0
  %v524 = vpop.f32.mrf.mxu0
  %v525 = vadd.f32 %v136, %v524
  %v526 = vpop.f32.mrf.mxu0
  %527 = vmatprep.mubr.bf16.mxu0 0
  %528 = vmatmul.mubr.bf16.gmra.mxu0 %v345
  %v529 = vpop.f32.mrf.mxu0
  %v530 = vadd.f32 %v136, %v529
  %v531 = vpop.f32.mrf.mxu0
  %v532 = vpop.f32.mrf.mxu0
  %v533 = vadd.f32 %v136, %v532
  %v534 = vpop.f32.mrf.mxu0
  %535 = vmatprep.mubr.bf16.mxu0 0
  %536 = vmatmul.mubr.bf16.gmra.mxu0 %v348
  %v537 = vpop.f32.mrf.mxu0
  %v538 = vadd.f32 %v136, %v537
  %v539 = vpop.f32.mrf.mxu0
  %v540 = vpop.f32.mrf.mxu0
  %v541 = vadd.f32 %v136, %v540
  %v542 = vpop.f32.mrf.mxu0
  %543 = vmatprep.mubr.bf16.mxu0 0
  %544 = vmatmul.mubr.bf16.gmra.mxu0 %v351
  %v545 = vpop.f32.mrf.mxu0
  %v546 = vadd.f32 %v136, %v545
  %v547 = vpop.f32.mrf.mxu0
  %v548 = vpop.f32.mrf.mxu0
  %v549 = vadd.f32 %v136, %v548
  %v550 = vpop.f32.mrf.mxu0
  %551 = vmatprep.mubr.bf16.mxu0 0
  %552 = vmatmul.mubr.bf16.gmra.mxu0 %v354
  %v553 = vpop.f32.mrf.mxu0
  %v554 = vadd.f32 %v136, %v553
  %v555 = vpop.f32.mrf.mxu0
  %v556 = vpop.f32.mrf.mxu0
  %v557 = vadd.f32 %v136, %v556
  %v558 = vpop.f32.mrf.mxu0
  %559 = vmatprep.mubr.bf16.mxu0 0
  %560 = vmatmul.mubr.bf16.gmra.mxu0 %v357
  %v561 = vpop.f32.mrf.mxu0
  %v562 = vadd.f32 %v136, %v561
  %v563 = vpop.f32.mrf.mxu0
  %v564 = vpop.f32.mrf.mxu0
  %v565 = vadd.f32 %v136, %v564
  %v566 = vpop.f32.mrf.mxu0
  %567 = vmatprep.mubr.bf16.mxu0 0
  %568 = vmatmul.mubr.bf16.gmra.mxu0 %v360
  %v569 = vpop.f32.mrf.mxu0
  %v570 = vadd.f32 %v136, %v569
  %v571 = vpop.f32.mrf.mxu0
  %v572 = vpop.f32.mrf.mxu0
  %v573 = vadd.f32 %v136, %v572
  %v574 = vpop.f32.mrf.mxu0
  %575 = vmatprep.mubr.bf16.mxu0 0
  %576 = vmatmul.mubr.bf16.gmra.mxu0 %v363
  %v577 = vpop.f32.mrf.mxu0
  %v578 = vadd.f32 %v136, %v577
  %v579 = vpop.f32.mrf.mxu0
  %v580 = vpop.f32.mrf.mxu0
  %v581 = vadd.f32 %v136, %v580
  %v582 = vpop.f32.mrf.mxu0
  %583 = vmatprep.mubr.bf16.mxu0 0
  %584 = vmatmul.mubr.bf16.gmra.mxu0 %v366
  %v585 = vpop.f32.mrf.mxu0
  %v586 = vadd.f32 %v136, %v585
  %v587 = vpop.f32.mrf.mxu0
  %v588 = vpop.f32.mrf.mxu0
  %v589 = vadd.f32 %v136, %v588
  %v590 = vpop.f32.mrf.mxu0
  %591 = vmatprep.mubr.bf16.mxu0 0
  %592 = vmatmul.mubr.bf16.gmra.mxu0 %v369
  %v593 = vpop.f32.mrf.mxu0
  %v594 = vadd.f32 %v136, %v593
  %v595 = vpop.f32.mrf.mxu0
  %v596 = vpop.f32.mrf.mxu0
  %v597 = vadd.f32 %v136, %v596
  %v598 = vpop.f32.mrf.mxu0
  %599 = vmatprep.mubr.bf16.mxu0 0
  %600 = vmatmul.mubr.bf16.gmra.mxu0 %v372
  %v601 = vpop.f32.mrf.mxu0
  %v602 = vadd.f32 %v136, %v601
  %v603 = vpop.f32.mrf.mxu0
  %v604 = vpop.f32.mrf.mxu0
  %v605 = vadd.f32 %v136, %v604
  %v606 = vpop.f32.mrf.mxu0
  %607 = vmatprep.mubr.bf16.mxu0 0
  %608 = vmatmul.mubr.bf16.gmra.mxu0 %v375
  %v609 = vpop.f32.mrf.mxu0
  %v610 = vadd.f32 %v136, %v609
  %v611 = vpop.f32.mrf.mxu0
  %v612 = vpop.f32.mrf.mxu0
  %v613 = vadd.f32 %v136, %v612
  %v614 = vpop.f32.mrf.mxu0
  %615 = vmatprep.mubr.bf16.mxu0 0
  %616 = vmatmul.mubr.bf16.gmra.mxu0 %v378
  %v617 = vpop.f32.mrf.mxu0
  %v618 = vadd.f32 %v136, %v617
  %v619 = vpop.f32.mrf.mxu0
  %v620 = vpop.f32.mrf.mxu0
  %v621 = vadd.f32 %v136, %v620
  %v622 = vpop.f32.mrf.mxu0
  %623 = vmatprep.mubr.bf16.mxu0 0
  %624 = vmatmul.mubr.bf16.gmra.mxu0 %v381
  %v625 = vpop.f32.mrf.mxu0
  %v626 = vadd.f32 %v136, %v625
  %v627 = vpop.f32.mrf.mxu0
  %v628 = vpop.f32.mrf.mxu0
  %v629 = vadd.f32 %v136, %v628
  %v630 = vpop.f32.mrf.mxu0
  %631 = vmatprep.mubr.bf16.mxu0 0
  %632 = vmatmul.mubr.bf16.gmra.mxu0 %v384
  %v633 = vpop.f32.mrf.mxu0
  %v634 = vadd.f32 %v136, %v633
  %v635 = vpop.f32.mrf.mxu0
  %v636 = vpop.f32.mrf.mxu0
  %v637 = vadd.f32 %v136, %v636
  %v638 = vpop.f32.mrf.mxu0
  %639 = vmatprep.mubr.bf16.mxu0 0
  %640 = vmatmul.mubr.bf16.gmra.mxu0 %v387
  %v641 = vpop.f32.mrf.mxu0
  %v642 = vadd.f32 %v136, %v641
  %v643 = vpop.f32.mrf.mxu0
  %v644 = vpop.f32.mrf.mxu0
  %v645 = vadd.f32 %v136, %v644
  %v646 = vpop.f32.mrf.mxu0
  %647 = vmatprep.mubr.bf16.mxu0 0
  %648 = vmatmul.mubr.bf16.gmra.mxu0 %v390
  %v649 = vpop.f32.mrf.mxu0
  %v650 = vadd.f32 %v136, %v649
  %v651 = vpop.f32.mrf.mxu0
  %v652 = vpop.f32.mrf.mxu0
  %v653 = vadd.f32 %v136, %v652
  %v654 = vpop.f32.mrf.mxu0
  %655 = vmatprep.mubr.bf16.mxu0 0
  %656 = vmatmul.mubr.bf16.gmra.mxu0 %v393
  %v657 = vpop.f32.mrf.mxu0
  %v658 = vadd.f32 %v136, %v657
  %v659 = vpop.f32.mrf.mxu0
  %v660 = vpop.f32.mrf.mxu0
  %v661 = vadd.f32 %v136, %v660
  %v662 = vpop.f32.mrf.mxu0
  %663 = vmatprep.mubr.bf16.mxu0 0
  %664 = vmatmul.mubr.bf16.gmra.mxu0 %v396
  %v665 = vpop.f32.mrf.mxu0
  %v666 = vadd.f32 %v136, %v665
  %v667 = vpop.f32.mrf.mxu0
  %v668 = vpop.f32.mrf.mxu0
  %v669 = vadd.f32 %v136, %v668
  %v670 = vpop.f32.mrf.mxu0
  %671 = vmatprep.mubr.bf16.mxu0 0
  %672 = vmatmul.mubr.bf16.gmra.mxu0 %v399
  %v673 = vpop.f32.mrf.mxu0
  %v674 = vadd.f32 %v136, %v673
  %v675 = vpop.f32.mrf.mxu0
  %v676 = vpop.f32.mrf.mxu0
  %v677 = vadd.f32 %v136, %v676
  %v678 = vpop.f32.mrf.mxu0
  %679 = vmatprep.mubr.bf16.mxu0 0
  %680 = vmatmul.mubr.bf16.gmra.mxu0 %v402
  %v681 = vpop.f32.mrf.mxu0
  %v682 = vadd.f32 %v136, %v681
  %v683 = vpop.f32.mrf.mxu0
  %v684 = vpop.f32.mrf.mxu0
  %v685 = vadd.f32 %v136, %v684
  %v686 = vpop.f32.mrf.mxu0
  %687 = vmatprep.mubr.bf16.mxu0 0
  %688 = vmatmul.mubr.bf16.gmra.mxu0 %v405
  %v689 = vpop.f32.mrf.mxu0
  %v690 = vadd.f32 %v136, %v689
  %v691 = vpop.f32.mrf.mxu0
  %v692 = vpop.f32.mrf.mxu0
  %v693 = vadd.f32 %v136, %v692
  %v694 = vpop.f32.mrf.mxu0
  %695 = vdwg.mxu0
  %v696 = vxor.u32 %v442, 2147483648
  %v697 = vxor.u32 %v445, 2147483648
  %v698 = vxor.u32 %v450, 2147483648
  %v699 = vxor.u32 %v453, 2147483648
  %v700 = vxor.u32 %v458, 2147483648
  %v701 = vxor.u32 %v461, 2147483648
  %v702 = vxor.u32 %v466, 2147483648
  %v703 = vxor.u32 %v469, 2147483648
  %v704 = vxor.u32 %v474, 2147483648
  %v705 = vxor.u32 %v477, 2147483648
  %v706 = vxor.u32 %v482, 2147483648
  %v707 = vxor.u32 %v485, 2147483648
  %v708 = vxor.u32 %v490, 2147483648
  %v709 = vxor.u32 %v493, 2147483648
  %v710 = vxor.u32 %v498, 2147483648
  %v711 = vxor.u32 %v501, 2147483648
  %v712 = vxor.u32 %v506, 2147483648
  %v713 = vxor.u32 %v509, 2147483648
  %v714 = vxor.u32 %v514, 2147483648
  %v715 = vxor.u32 %v517, 2147483648
  %v716 = vxor.u32 %v522, 2147483648
  %v717 = vxor.u32 %v525, 2147483648
  %v718 = vxor.u32 %v530, 2147483648
  %v719 = vxor.u32 %v533, 2147483648
  %v720 = vxor.u32 %v538, 2147483648
  %v721 = vxor.u32 %v541, 2147483648
  %v722 = vxor.u32 %v546, 2147483648
  %v723 = vxor.u32 %v549, 2147483648
  %v724 = vxor.u32 %v554, 2147483648
  %v725 = vxor.u32 %v557, 2147483648
  %v726 = vxor.u32 %v562, 2147483648
  %v727 = vxor.u32 %v565, 2147483648
  %v728 = vxor.u32 %v570, 2147483648
  %v729 = vxor.u32 %v573, 2147483648
  %v730 = vxor.u32 %v578, 2147483648
  %v731 = vxor.u32 %v581, 2147483648
  %v732 = vxor.u32 %v586, 2147483648
  %v733 = vxor.u32 %v589, 2147483648
  %v734 = vxor.u32 %v594, 2147483648
  %v735 = vxor.u32 %v597, 2147483648
  %v736 = vxor.u32 %v602, 2147483648
  %v737 = vxor.u32 %v605, 2147483648
  %v738 = vxor.u32 %v610, 2147483648
  %v739 = vxor.u32 %v613, 2147483648
  %v740 = vxor.u32 %v618, 2147483648
  %v741 = vxor.u32 %v621, 2147483648
  %v742 = vxor.u32 %v626, 2147483648
  %v743 = vxor.u32 %v629, 2147483648
  %v744 = vxor.u32 %v634, 2147483648
  %v745 = vxor.u32 %v637, 2147483648
  %v746 = vxor.u32 %v642, 2147483648
  %v747 = vxor.u32 %v645, 2147483648
  %v748 = vxor.u32 %v650, 2147483648
  %v749 = vxor.u32 %v653, 2147483648
  %v750 = vxor.u32 %v658, 2147483648
  %v751 = vxor.u32 %v661, 2147483648
  %v752 = vxor.u32 %v666, 2147483648
  %v753 = vxor.u32 %v669, 2147483648
  %v754 = vxor.u32 %v674, 2147483648
  %v755 = vxor.u32 %v677, 2147483648
  %v756 = vxor.u32 %v682, 2147483648
  %v757 = vxor.u32 %v685, 2147483648
  %v758 = vxor.u32 %v690, 2147483648
  %v759 = vxor.u32 %v693, 2147483648
  %v760 = vmul.f32 %v696, 1.442695
  %v761 = vpow.pop %v760
  %v762 = vmul.f32 %v697, 1.442695
  %v763 = vpow.pop %v762
  %v764 = vmul.f32 %v698, 1.442695
  %v765 = vpow.pop %v764
  %v766 = vmul.f32 %v699, 1.442695
  %v767 = vpow.pop %v766
  %v768 = vmul.f32 %v700, 1.442695
  %v769 = vpow.pop %v768
  %v770 = vmul.f32 %v701, 1.442695
  %v771 = vpow.pop %v770
  %v772 = vmul.f32 %v702, 1.442695
  %v773 = vpow.pop %v772
  %v774 = vmul.f32 %v703, 1.442695
  %v775 = vpow.pop %v774
  %v776 = vmul.f32 %v704, 1.442695
  %v777 = vpow.pop %v776
  %v778 = vmul.f32 %v705, 1.442695
  %v779 = vpow.pop %v778
  %v780 = vmul.f32 %v706, 1.442695
  %v781 = vpow.pop %v780
  %v782 = vmul.f32 %v707, 1.442695
  %v783 = vpow.pop %v782
  %v784 = vmul.f32 %v708, 1.442695
  %v785 = vpow.pop %v784
  %v786 = vmul.f32 %v709, 1.442695
  %v787 = vpow.pop %v786
  %v788 = vmul.f32 %v710, 1.442695
  %v789 = vpow.pop %v788
  %v790 = vmul.f32 %v711, 1.442695
  %v791 = vpow.pop %v790
  %v792 = vmul.f32 %v712, 1.442695
  %v793 = vpow.pop %v792
  %v794 = vmul.f32 %v713, 1.442695
  %v795 = vpow.pop %v794
  %v796 = vmul.f32 %v714, 1.442695
  %v797 = vpow.pop %v796
  %v798 = vmul.f32 %v715, 1.442695
  %v799 = vpow.pop %v798
  %v800 = vmul.f32 %v716, 1.442695
  %v801 = vpow.pop %v800
  %v802 = vmul.f32 %v717, 1.442695
  %v803 = vpow.pop %v802
  %v804 = vmul.f32 %v718, 1.442695
  %v805 = vpow.pop %v804
  %v806 = vmul.f32 %v719, 1.442695
  %v807 = vpow.pop %v806
  %v808 = vmul.f32 %v720, 1.442695
  %v809 = vpow.pop %v808
  %v810 = vmul.f32 %v721, 1.442695
  %v811 = vpow.pop %v810
  %v812 = vmul.f32 %v722, 1.442695
  %v813 = vpow.pop %v812
  %v814 = vmul.f32 %v723, 1.442695
  %v815 = vpow.pop %v814
  %v816 = vmul.f32 %v724, 1.442695
  %v817 = vpow.pop %v816
  %v818 = vmul.f32 %v725, 1.442695
  %v819 = vpow.pop %v818
  %v820 = vmul.f32 %v726, 1.442695
  %v821 = vpow.pop %v820
  %v822 = vmul.f32 %v727, 1.442695
  %v823 = vpow.pop %v822
  %v824 = vmul.f32 %v728, 1.442695
  %v825 = vpow.pop %v824
  %v826 = vmul.f32 %v729, 1.442695
  %v827 = vpow.pop %v826
  %v828 = vmul.f32 %v730, 1.442695
  %v829 = vpow.pop %v828
  %v830 = vmul.f32 %v731, 1.442695
  %v831 = vpow.pop %v830
  %v832 = vmul.f32 %v732, 1.442695
  %v833 = vpow.pop %v832
  %v834 = vmul.f32 %v733, 1.442695
  %v835 = vpow.pop %v834
  %v836 = vmul.f32 %v734, 1.442695
  %v837 = vpow.pop %v836
  %v838 = vmul.f32 %v735, 1.442695
  %v839 = vpow.pop %v838
  %v840 = vmul.f32 %v736, 1.442695
  %v841 = vpow.pop %v840
  %v842 = vmul.f32 %v737, 1.442695
  %v843 = vpow.pop %v842
  %v844 = vmul.f32 %v738, 1.442695
  %v845 = vpow.pop %v844
  %v846 = vmul.f32 %v739, 1.442695
  %v847 = vpow.pop %v846
  %v848 = vmul.f32 %v740, 1.442695
  %v849 = vpow.pop %v848
  %v850 = vmul.f32 %v741, 1.442695
  %v851 = vpow.pop %v850
  %v852 = vmul.f32 %v742, 1.442695
  %v853 = vpow.pop %v852
  %v854 = vmul.f32 %v743, 1.442695
  %v855 = vpow.pop %v854
  %v856 = vmul.f32 %v744, 1.442695
  %v857 = vpow.pop %v856
  %v858 = vmul.f32 %v745, 1.442695
  %v859 = vpow.pop %v858
  %v860 = vmul.f32 %v746, 1.442695
  %v861 = vpow.pop %v860
  %v862 = vmul.f32 %v747, 1.442695
  %v863 = vpow.pop %v862
  %v864 = vmul.f32 %v748, 1.442695
  %v865 = vpow.pop %v864
  %v866 = vmul.f32 %v749, 1.442695
  %v867 = vpow.pop %v866
  %v868 = vmul.f32 %v750, 1.442695
  %v869 = vpow.pop %v868
  %v870 = vmul.f32 %v751, 1.442695
  %v871 = vpow.pop %v870
  %v872 = vmul.f32 %v752, 1.442695
  %v873 = vpow.pop %v872
  %v874 = vmul.f32 %v753, 1.442695
  %v875 = vpow.pop %v874
  %v876 = vmul.f32 %v754, 1.442695
  %v877 = vpow.pop %v876
  %v878 = vmul.f32 %v755, 1.442695
  %v879 = vpow.pop %v878
  %v880 = vmul.f32 %v756, 1.442695
  %v881 = vpow.pop %v880
  %v882 = vmul.f32 %v757, 1.442695
  %v883 = vpow.pop %v882
  %v884 = vmul.f32 %v758, 1.442695
  %v885 = vpow.pop %v884
  %v886 = vmul.f32 %v759, 1.442695
  %v887 = vpow.pop %v886
  %v888 = vadd.f32 %v761, 1.0
  %v889 = vadd.f32 %v763, 1.0
  %v890 = vadd.f32 %v765, 1.0
  %v891 = vadd.f32 %v767, 1.0
  %v892 = vadd.f32 %v769, 1.0
  %v893 = vadd.f32 %v771, 1.0
  %v894 = vadd.f32 %v773, 1.0
  %v895 = vadd.f32 %v775, 1.0
  %v896 = vadd.f32 %v777, 1.0
  %v897 = vadd.f32 %v779, 1.0
  %v898 = vadd.f32 %v781, 1.0
  %v899 = vadd.f32 %v783, 1.0
  %v900 = vadd.f32 %v785, 1.0
  %v901 = vadd.f32 %v787, 1.0
  %v902 = vadd.f32 %v789, 1.0
  %v903 = vadd.f32 %v791, 1.0
  %v904 = vadd.f32 %v793, 1.0
  %v905 = vadd.f32 %v795, 1.0
  %v906 = vadd.f32 %v797, 1.0
  %v907 = vadd.f32 %v799, 1.0
  %v908 = vadd.f32 %v801, 1.0
  %v909 = vadd.f32 %v803, 1.0
  %v910 = vadd.f32 %v805, 1.0
  %v911 = vadd.f32 %v807, 1.0
  %v912 = vadd.f32 %v809, 1.0
  %v913 = vadd.f32 %v811, 1.0
  %v914 = vadd.f32 %v813, 1.0
  %v915 = vadd.f32 %v815, 1.0
  %v916 = vadd.f32 %v817, 1.0
  %v917 = vadd.f32 %v819, 1.0
  %v918 = vadd.f32 %v821, 1.0
  %v919 = vadd.f32 %v823, 1.0
  %v920 = vadd.f32 %v825, 1.0
  %v921 = vadd.f32 %v827, 1.0
  %v922 = vadd.f32 %v829, 1.0
  %v923 = vadd.f32 %v831, 1.0
  %v924 = vadd.f32 %v833, 1.0
  %v925 = vadd.f32 %v835, 1.0
  %v926 = vadd.f32 %v837, 1.0
  %v927 = vadd.f32 %v839, 1.0
  %v928 = vadd.f32 %v841, 1.0
  %v929 = vadd.f32 %v843, 1.0
  %v930 = vadd.f32 %v845, 1.0
  %v931 = vadd.f32 %v847, 1.0
  %v932 = vadd.f32 %v849, 1.0
  %v933 = vadd.f32 %v851, 1.0
  %v934 = vadd.f32 %v853, 1.0
  %v935 = vadd.f32 %v855, 1.0
  %v936 = vadd.f32 %v857, 1.0
  %v937 = vadd.f32 %v859, 1.0
  %v938 = vadd.f32 %v861, 1.0
  %v939 = vadd.f32 %v863, 1.0
  %v940 = vadd.f32 %v865, 1.0
  %v941 = vadd.f32 %v867, 1.0
  %v942 = vadd.f32 %v869, 1.0
  %v943 = vadd.f32 %v871, 1.0
  %v944 = vadd.f32 %v873, 1.0
  %v945 = vadd.f32 %v875, 1.0
  %v946 = vadd.f32 %v877, 1.0
  %v947 = vadd.f32 %v879, 1.0
  %v948 = vadd.f32 %v881, 1.0
  %v949 = vadd.f32 %v883, 1.0
  %v950 = vadd.f32 %v885, 1.0
  %v951 = vadd.f32 %v887, 1.0
  %v952 = vrcp.pop %v888
  %v953 = vmul.f32 1.0, %v952
  %v954 = vrcp.pop %v889
  %v955 = vmul.f32 1.0, %v954
  %v956 = vrcp.pop %v890
  %v957 = vmul.f32 1.0, %v956
  %v958 = vrcp.pop %v891
  %v959 = vmul.f32 1.0, %v958
  %v960 = vrcp.pop %v892
  %v961 = vmul.f32 1.0, %v960
  %v962 = vrcp.pop %v893
  %v963 = vmul.f32 1.0, %v962
  %v964 = vrcp.pop %v894
  %v965 = vmul.f32 1.0, %v964
  %v966 = vrcp.pop %v895
  %v967 = vmul.f32 1.0, %v966
  %v968 = vrcp.pop %v896
  %v969 = vmul.f32 1.0, %v968
  %v970 = vrcp.pop %v897
  %v971 = vmul.f32 1.0, %v970
  %v972 = vrcp.pop %v898
  %v973 = vmul.f32 1.0, %v972
  %v974 = vrcp.pop %v899
  %v975 = vmul.f32 1.0, %v974
  %v976 = vrcp.pop %v900
  %v977 = vmul.f32 1.0, %v976
  %v978 = vrcp.pop %v901
  %v979 = vmul.f32 1.0, %v978
  %v980 = vrcp.pop %v902
  %v981 = vmul.f32 1.0, %v980
  %v982 = vrcp.pop %v903
  %v983 = vmul.f32 1.0, %v982
  %v984 = vrcp.pop %v904
  %v985 = vmul.f32 1.0, %v984
  %v986 = vrcp.pop %v905
  %v987 = vmul.f32 1.0, %v986
  %v988 = vrcp.pop %v906
  %v989 = vmul.f32 1.0, %v988
  %v990 = vrcp.pop %v907
  %v991 = vmul.f32 1.0, %v990
  %v992 = vrcp.pop %v908
  %v993 = vmul.f32 1.0, %v992
  %v994 = vrcp.pop %v909
  %v995 = vmul.f32 1.0, %v994
  %v996 = vrcp.pop %v910
  %v997 = vmul.f32 1.0, %v996
  %v998 = vrcp.pop %v911
  %v999 = vmul.f32 1.0, %v998
  %v1000 = vrcp.pop %v912
  %v1001 = vmul.f32 1.0, %v1000
  %v1002 = vrcp.pop %v913
  %v1003 = vmul.f32 1.0, %v1002
  %v1004 = vrcp.pop %v914
  %v1005 = vmul.f32 1.0, %v1004
  %v1006 = vrcp.pop %v915
  %v1007 = vmul.f32 1.0, %v1006
  %v1008 = vrcp.pop %v916
  %v1009 = vmul.f32 1.0, %v1008
  %v1010 = vrcp.pop %v917
  %v1011 = vmul.f32 1.0, %v1010
  %v1012 = vrcp.pop %v918
  %v1013 = vmul.f32 1.0, %v1012
  %v1014 = vrcp.pop %v919
  %v1015 = vmul.f32 1.0, %v1014
  %v1016 = vrcp.pop %v920
  %v1017 = vmul.f32 1.0, %v1016
  %v1018 = vrcp.pop %v921
  %v1019 = vmul.f32 1.0, %v1018
  %v1020 = vrcp.pop %v922
  %v1021 = vmul.f32 1.0, %v1020
  %v1022 = vrcp.pop %v923
  %v1023 = vmul.f32 1.0, %v1022
  %v1024 = vrcp.pop %v924
  %v1025 = vmul.f32 1.0, %v1024
  %v1026 = vrcp.pop %v925
  %v1027 = vmul.f32 1.0, %v1026
  %v1028 = vrcp.pop %v926
  %v1029 = vmul.f32 1.0, %v1028
  %v1030 = vrcp.pop %v927
  %v1031 = vmul.f32 1.0, %v1030
  %v1032 = vrcp.pop %v928
  %v1033 = vmul.f32 1.0, %v1032
  %v1034 = vrcp.pop %v929
  %v1035 = vmul.f32 1.0, %v1034
  %v1036 = vrcp.pop %v930
  %v1037 = vmul.f32 1.0, %v1036
  %v1038 = vrcp.pop %v931
  %v1039 = vmul.f32 1.0, %v1038
  %v1040 = vrcp.pop %v932
  %v1041 = vmul.f32 1.0, %v1040
  %v1042 = vrcp.pop %v933
  %v1043 = vmul.f32 1.0, %v1042
  %v1044 = vrcp.pop %v934
  %v1045 = vmul.f32 1.0, %v1044
  %v1046 = vrcp.pop %v935
  %v1047 = vmul.f32 1.0, %v1046
  %v1048 = vrcp.pop %v936
  %v1049 = vmul.f32 1.0, %v1048
  %v1050 = vrcp.pop %v937
  %v1051 = vmul.f32 1.0, %v1050
  %v1052 = vrcp.pop %v938
  %v1053 = vmul.f32 1.0, %v1052
  %v1054 = vrcp.pop %v939
  %v1055 = vmul.f32 1.0, %v1054
  %v1056 = vrcp.pop %v940
  %v1057 = vmul.f32 1.0, %v1056
  %v1058 = vrcp.pop %v941
  %v1059 = vmul.f32 1.0, %v1058
  %v1060 = vrcp.pop %v942
  %v1061 = vmul.f32 1.0, %v1060
  %v1062 = vrcp.pop %v943
  %v1063 = vmul.f32 1.0, %v1062
  %v1064 = vrcp.pop %v944
  %v1065 = vmul.f32 1.0, %v1064
  %v1066 = vrcp.pop %v945
  %v1067 = vmul.f32 1.0, %v1066
  %v1068 = vrcp.pop %v946
  %v1069 = vmul.f32 1.0, %v1068
  %v1070 = vrcp.pop %v947
  %v1071 = vmul.f32 1.0, %v1070
  %v1072 = vrcp.pop %v948
  %v1073 = vmul.f32 1.0, %v1072
  %v1074 = vrcp.pop %v949
  %v1075 = vmul.f32 1.0, %v1074
  %v1076 = vrcp.pop %v950
  %v1077 = vmul.f32 1.0, %v1076
  %v1078 = vrcp.pop %v951
  %v1079 = vmul.f32 1.0, %v1078
  %v1080 = vmul.f32 %v442, %v953
  %v1081 = vmul.f32 %v445, %v955
  %v1082 = vmul.f32 %v450, %v957
  %v1083 = vmul.f32 %v453, %v959
  %v1084 = vmul.f32 %v458, %v961
  %v1085 = vmul.f32 %v461, %v963
  %v1086 = vmul.f32 %v466, %v965
  %v1087 = vmul.f32 %v469, %v967
  %v1088 = vmul.f32 %v474, %v969
  %v1089 = vmul.f32 %v477, %v971
  %v1090 = vmul.f32 %v482, %v973
  %v1091 = vmul.f32 %v485, %v975
  %v1092 = vmul.f32 %v490, %v977
  %v1093 = vmul.f32 %v493, %v979
  %v1094 = vmul.f32 %v498, %v981
  %v1095 = vmul.f32 %v501, %v983
  %v1096 = vmul.f32 %v506, %v985
  %v1097 = vmul.f32 %v509, %v987
  %v1098 = vmul.f32 %v514, %v989
  %v1099 = vmul.f32 %v517, %v991
  %v1100 = vmul.f32 %v522, %v993
  %v1101 = vmul.f32 %v525, %v995
  %v1102 = vmul.f32 %v530, %v997
  %v1103 = vmul.f32 %v533, %v999
  %v1104 = vmul.f32 %v538, %v1001
  %v1105 = vmul.f32 %v541, %v1003
  %v1106 = vmul.f32 %v546, %v1005
  %v1107 = vmul.f32 %v549, %v1007
  %v1108 = vmul.f32 %v554, %v1009
  %v1109 = vmul.f32 %v557, %v1011
  %v1110 = vmul.f32 %v562, %v1013
  %v1111 = vmul.f32 %v565, %v1015
  %v1112 = vmul.f32 %v570, %v1017
  %v1113 = vmul.f32 %v573, %v1019
  %v1114 = vmul.f32 %v578, %v1021
  %v1115 = vmul.f32 %v581, %v1023
  %v1116 = vmul.f32 %v586, %v1025
  %v1117 = vmul.f32 %v589, %v1027
  %v1118 = vmul.f32 %v594, %v1029
  %v1119 = vmul.f32 %v597, %v1031
  %v1120 = vmul.f32 %v602, %v1033
  %v1121 = vmul.f32 %v605, %v1035
  %v1122 = vmul.f32 %v610, %v1037
  %v1123 = vmul.f32 %v613, %v1039
  %v1124 = vmul.f32 %v618, %v1041
  %v1125 = vmul.f32 %v621, %v1043
  %v1126 = vmul.f32 %v626, %v1045
  %v1127 = vmul.f32 %v629, %v1047
  %v1128 = vmul.f32 %v634, %v1049
  %v1129 = vmul.f32 %v637, %v1051
  %v1130 = vmul.f32 %v642, %v1053
  %v1131 = vmul.f32 %v645, %v1055
  %v1132 = vmul.f32 %v650, %v1057
  %v1133 = vmul.f32 %v653, %v1059
  %v1134 = vmul.f32 %v658, %v1061
  %v1135 = vmul.f32 %v661, %v1063
  %v1136 = vmul.f32 %v666, %v1065
  %v1137 = vmul.f32 %v669, %v1067
  %v1138 = vmul.f32 %v674, %v1069
  %v1139 = vmul.f32 %v677, %v1071
  %v1140 = vmul.f32 %v682, %v1073
  %v1141 = vmul.f32 %v685, %v1075
  %v1142 = vmul.f32 %v690, %v1077
  %v1143 = vmul.f32 %v693, %v1079
  %v1144 = vpack.c.bf16 %v1081, %v1080
  %v1145 = vpack.c.bf16 %v1083, %v1082
  %v1146 = vpack.c.bf16 %v1085, %v1084
  %v1147 = vpack.c.bf16 %v1087, %v1086
  %v1148 = vpack.c.bf16 %v1089, %v1088
  %v1149 = vpack.c.bf16 %v1091, %v1090
  %v1150 = vpack.c.bf16 %v1093, %v1092
  %v1151 = vpack.c.bf16 %v1095, %v1094
  %v1152 = vpack.c.bf16 %v1097, %v1096
  %v1153 = vpack.c.bf16 %v1099, %v1098
  %v1154 = vpack.c.bf16 %v1101, %v1100
  %v1155 = vpack.c.bf16 %v1103, %v1102
  %v1156 = vpack.c.bf16 %v1105, %v1104
  %v1157 = vpack.c.bf16 %v1107, %v1106
  %v1158 = vpack.c.bf16 %v1109, %v1108
  %v1159 = vpack.c.bf16 %v1111, %v1110
  %v1160 = vpack.c.bf16 %v1113, %v1112
  %v1161 = vpack.c.bf16 %v1115, %v1114
  %v1162 = vpack.c.bf16 %v1117, %v1116
  %v1163 = vpack.c.bf16 %v1119, %v1118
  %v1164 = vpack.c.bf16 %v1121, %v1120
  %v1165 = vpack.c.bf16 %v1123, %v1122
  %v1166 = vpack.c.bf16 %v1125, %v1124
  %v1167 = vpack.c.bf16 %v1127, %v1126
  %v1168 = vpack.c.bf16 %v1129, %v1128
  %v1169 = vpack.c.bf16 %v1131, %v1130
  %v1170 = vpack.c.bf16 %v1133, %v1132
  %v1171 = vpack.c.bf16 %v1135, %v1134
  %v1172 = vpack.c.bf16 %v1137, %v1136
  %v1173 = vpack.c.bf16 %v1139, %v1138
  %v1174 = vpack.c.bf16 %v1141, %v1140
  %v1175 = vpack.c.bf16 %v1143, %v1142
  %v1176 = vld [vmem:[%s3] sm:$0xf]
  %v1177 = vld [vmem:[%s3 + $0x4] sm:$0xf]
  %v1178 = vld [vmem:[%s3 + $0x8] sm:$0xf]
  %v1179 = vld [vmem:[%s3 + $0xc] sm:$0xf]
  %v1180 = vld [vmem:[%s4] sm:$0x1]
  %v1182 = vlaneseq
  %v1183 = vshrl.u32 %v1182, 7
  %v1184 = vsub.s32 0, %v1183
  %v1185 = vrot.slane %v1180, %v1184
  %v1191 = vunpack.c.l.b16 %v1176
  %v1192 = vunpack.c.l.b16 %v1177
  %v1193 = vunpack.c.l.b16 %v1178
  %v1194 = vunpack.c.l.b16 %v1179
  %v1195 = vpack.c.b16 %v1192, %v1191
  %v1196 = vpack.c.b16 %v1194, %v1193
  %v1200 = vsel %vm310, %v1144, 0
  %v1203 = vsel %vm310, %v1145, 0
  %v1206 = vsel %vm310, %v1146, 0
  %v1209 = vsel %vm310, %v1147, 0
  %v1212 = vsel %vm310, %v1148, 0
  %v1215 = vsel %vm310, %v1149, 0
  %v1218 = vsel %vm310, %v1150, 0
  %v1221 = vsel %vm310, %v1151, 0
  %v1224 = vsel %vm310, %v1152, 0
  %v1227 = vsel %vm310, %v1153, 0
  %v1230 = vsel %vm310, %v1154, 0
  %v1233 = vsel %vm310, %v1155, 0
  %v1236 = vsel %vm310, %v1156, 0
  %v1239 = vsel %vm310, %v1157, 0
  %v1242 = vsel %vm310, %v1158, 0
  %v1245 = vsel %vm310, %v1159, 0
  %v1248 = vsel %vm310, %v1160, 0
  %v1251 = vsel %vm310, %v1161, 0
  %v1254 = vsel %vm310, %v1162, 0
  %v1257 = vsel %vm310, %v1163, 0
  %v1260 = vsel %vm310, %v1164, 0
  %v1263 = vsel %vm310, %v1165, 0
  %v1266 = vsel %vm310, %v1166, 0
  %v1269 = vsel %vm310, %v1167, 0
  %v1272 = vsel %vm310, %v1168, 0
  %v1275 = vsel %vm310, %v1169, 0
  %v1278 = vsel %vm310, %v1170, 0
  %v1281 = vsel %vm310, %v1171, 0
  %v1284 = vsel %vm310, %v1172, 0
  %v1287 = vsel %vm310, %v1173, 0
  %v1290 = vsel %vm310, %v1174, 0
  %v1293 = vsel %vm310, %v1175, 0
  %1295 = vmatprep.subr.bf16.mxu0 0
  %1296 = vmatpush1.bf16.msra.mxu0 0
  %1297 = vmatprep.subr.bf16.mxu0 0
  %1298 = vmatpush1.bf16.msra.mxu0 0
  %1299 = vmatprep.subr.bf16.mxu0 0
  %1300 = vmatpush1.bf16.msra.mxu0 0
  %1301 = vmatprep.subr.bf16.mxu0 0
  %1302 = vmatpush1.bf16.msra.mxu0 0
  %1303 = vmatprep.subr.bf16.mxu0 0
  %1304 = vmatpush1.bf16.msra.mxu0 0
  %1305 = vmatprep.subr.bf16.mxu0 0
  %1306 = vmatpush1.bf16.msra.mxu0 0
  %1307 = vmatprep.subr.bf16.mxu0 0
  %1308 = vmatpush1.bf16.msra.mxu0 %v1196
  %1309 = vmatprep.subr.bf16.mxu0 0
  %1310 = vmatpush1.bf16.msra.mxu0 %v1195
  %1311 = vmatprep.subr.bf16.mxu0 0
  %1312 = vmatpush2.bf16.msra.mxu0 0
  %1313 = vmatprep.subr.bf16.mxu0 0
  %1314 = vmatpush2.bf16.msra.mxu0 0
  %1315 = vmatprep.subr.bf16.mxu0 0
  %1316 = vmatpush2.bf16.msra.mxu0 0
  %1317 = vmatprep.subr.bf16.mxu0 0
  %1318 = vmatpush2.bf16.msra.mxu0 0
  %1319 = vmatprep.subr.bf16.mxu0 0
  %1320 = vmatpush2.bf16.msra.mxu0 0
  %1321 = vmatprep.subr.bf16.mxu0 0
  %1322 = vmatpush2.bf16.msra.mxu0 0
  %1323 = vmatprep.subr.bf16.mxu0 0
  %1324 = vmatpush2.bf16.msra.mxu0 0
  %1325 = vmatprep.subr.bf16.mxu0 0
  %1326 = vmatpush2.bf16.msra.mxu0 0
  %1327 = vmatprep.mubr.bf16.mxu0 0
  %1328 = vmatmul.mubr.bf16.gmra.mxu0 %v1200
  %v1329 = vpop.f32.mrf.mxu0
  %v1330 = vadd.f32 %v1185, %v1329
  %v1331 = vpop.f32.mrf.mxu0
  %v1332 = vpop.f32.mrf.mxu0
  %v1333 = vadd.f32 %v1185, %v1332
  %v1334 = vpop.f32.mrf.mxu0
  %1335 = vmatprep.mubr.bf16.mxu0 0
  %1336 = vmatmul.mubr.bf16.gmra.mxu0 %v1203
  %v1337 = vpop.f32.mrf.mxu0
  %v1338 = vadd.f32 %v1185, %v1337
  %v1339 = vpop.f32.mrf.mxu0
  %v1340 = vpop.f32.mrf.mxu0
  %v1341 = vadd.f32 %v1185, %v1340
  %v1342 = vpop.f32.mrf.mxu0
  %1343 = vmatprep.mubr.bf16.mxu0 0
  %1344 = vmatmul.mubr.bf16.gmra.mxu0 %v1206
  %v1345 = vpop.f32.mrf.mxu0
  %v1346 = vadd.f32 %v1185, %v1345
  %v1347 = vpop.f32.mrf.mxu0
  %v1348 = vpop.f32.mrf.mxu0
  %v1349 = vadd.f32 %v1185, %v1348
  %v1350 = vpop.f32.mrf.mxu0
  %1351 = vmatprep.mubr.bf16.mxu0 0
  %1352 = vmatmul.mubr.bf16.gmra.mxu0 %v1209
  %v1353 = vpop.f32.mrf.mxu0
  %v1354 = vadd.f32 %v1185, %v1353
  %v1355 = vpop.f32.mrf.mxu0
  %v1356 = vpop.f32.mrf.mxu0
  %v1357 = vadd.f32 %v1185, %v1356
  %v1358 = vpop.f32.mrf.mxu0
  %1359 = vmatprep.mubr.bf16.mxu0 0
  %1360 = vmatmul.mubr.bf16.gmra.mxu0 %v1212
  %v1361 = vpop.f32.mrf.mxu0
  %v1362 = vadd.f32 %v1185, %v1361
  %v1363 = vpop.f32.mrf.mxu0
  %v1364 = vpop.f32.mrf.mxu0
  %v1365 = vadd.f32 %v1185, %v1364
  %v1366 = vpop.f32.mrf.mxu0
  %1367 = vmatprep.mubr.bf16.mxu0 0
  %1368 = vmatmul.mubr.bf16.gmra.mxu0 %v1215
  %v1369 = vpop.f32.mrf.mxu0
  %v1370 = vadd.f32 %v1185, %v1369
  %v1371 = vpop.f32.mrf.mxu0
  %v1372 = vpop.f32.mrf.mxu0
  %v1373 = vadd.f32 %v1185, %v1372
  %v1374 = vpop.f32.mrf.mxu0
  %1375 = vmatprep.mubr.bf16.mxu0 0
  %1376 = vmatmul.mubr.bf16.gmra.mxu0 %v1218
  %v1377 = vpop.f32.mrf.mxu0
  %v1378 = vadd.f32 %v1185, %v1377
  %v1379 = vpop.f32.mrf.mxu0
  %v1380 = vpop.f32.mrf.mxu0
  %v1381 = vadd.f32 %v1185, %v1380
  %v1382 = vpop.f32.mrf.mxu0
  %1383 = vmatprep.mubr.bf16.mxu0 0
  %1384 = vmatmul.mubr.bf16.gmra.mxu0 %v1221
  %v1385 = vpop.f32.mrf.mxu0
  %v1386 = vadd.f32 %v1185, %v1385
  %v1387 = vpop.f32.mrf.mxu0
  %v1388 = vpop.f32.mrf.mxu0
  %v1389 = vadd.f32 %v1185, %v1388
  %v1390 = vpop.f32.mrf.mxu0
  %1391 = vmatprep.mubr.bf16.mxu0 0
  %1392 = vmatmul.mubr.bf16.gmra.mxu0 %v1224
  %v1393 = vpop.f32.mrf.mxu0
  %v1394 = vadd.f32 %v1185, %v1393
  %v1395 = vpop.f32.mrf.mxu0
  %v1396 = vpop.f32.mrf.mxu0
  %v1397 = vadd.f32 %v1185, %v1396
  %v1398 = vpop.f32.mrf.mxu0
  %1399 = vmatprep.mubr.bf16.mxu0 0
  %1400 = vmatmul.mubr.bf16.gmra.mxu0 %v1227
  %v1401 = vpop.f32.mrf.mxu0
  %v1402 = vadd.f32 %v1185, %v1401
  %v1403 = vpop.f32.mrf.mxu0
  %v1404 = vpop.f32.mrf.mxu0
  %v1405 = vadd.f32 %v1185, %v1404
  %v1406 = vpop.f32.mrf.mxu0
  %1407 = vmatprep.mubr.bf16.mxu0 0
  %1408 = vmatmul.mubr.bf16.gmra.mxu0 %v1230
  %v1409 = vpop.f32.mrf.mxu0
  %v1410 = vadd.f32 %v1185, %v1409
  %v1411 = vpop.f32.mrf.mxu0
  %v1412 = vpop.f32.mrf.mxu0
  %v1413 = vadd.f32 %v1185, %v1412
  %v1414 = vpop.f32.mrf.mxu0
  %1415 = vmatprep.mubr.bf16.mxu0 0
  %1416 = vmatmul.mubr.bf16.gmra.mxu0 %v1233
  %v1417 = vpop.f32.mrf.mxu0
  %v1418 = vadd.f32 %v1185, %v1417
  %v1419 = vpop.f32.mrf.mxu0
  %v1420 = vpop.f32.mrf.mxu0
  %v1421 = vadd.f32 %v1185, %v1420
  %v1422 = vpop.f32.mrf.mxu0
  %1423 = vmatprep.mubr.bf16.mxu0 0
  %1424 = vmatmul.mubr.bf16.gmra.mxu0 %v1236
  %v1425 = vpop.f32.mrf.mxu0
  %v1426 = vadd.f32 %v1185, %v1425
  %v1427 = vpop.f32.mrf.mxu0
  %v1428 = vpop.f32.mrf.mxu0
  %v1429 = vadd.f32 %v1185, %v1428
  %v1430 = vpop.f32.mrf.mxu0
  %1431 = vmatprep.mubr.bf16.mxu0 0
  %1432 = vmatmul.mubr.bf16.gmra.mxu0 %v1239
  %v1433 = vpop.f32.mrf.mxu0
  %v1434 = vadd.f32 %v1185, %v1433
  %v1435 = vpop.f32.mrf.mxu0
  %v1436 = vpop.f32.mrf.mxu0
  %v1437 = vadd.f32 %v1185, %v1436
  %v1438 = vpop.f32.mrf.mxu0
  %1439 = vmatprep.mubr.bf16.mxu0 0
  %1440 = vmatmul.mubr.bf16.gmra.mxu0 %v1242
  %v1441 = vpop.f32.mrf.mxu0
  %v1442 = vadd.f32 %v1185, %v1441
  %v1443 = vpop.f32.mrf.mxu0
  %v1444 = vpop.f32.mrf.mxu0
  %v1445 = vadd.f32 %v1185, %v1444
  %v1446 = vpop.f32.mrf.mxu0
  %1447 = vmatprep.mubr.bf16.mxu0 0
  %1448 = vmatmul.mubr.bf16.gmra.mxu0 %v1245
  %v1449 = vpop.f32.mrf.mxu0
  %v1450 = vadd.f32 %v1185, %v1449
  %v1451 = vpop.f32.mrf.mxu0
  %v1452 = vpop.f32.mrf.mxu0
  %v1453 = vadd.f32 %v1185, %v1452
  %v1454 = vpop.f32.mrf.mxu0
  %1455 = vmatprep.mubr.bf16.mxu0 0
  %1456 = vmatmul.mubr.bf16.gmra.mxu0 %v1248
  %v1457 = vpop.f32.mrf.mxu0
  %v1458 = vadd.f32 %v1185, %v1457
  %v1459 = vpop.f32.mrf.mxu0
  %v1460 = vpop.f32.mrf.mxu0
  %v1461 = vadd.f32 %v1185, %v1460
  %v1462 = vpop.f32.mrf.mxu0
  %1463 = vmatprep.mubr.bf16.mxu0 0
  %1464 = vmatmul.mubr.bf16.gmra.mxu0 %v1251
  %v1465 = vpop.f32.mrf.mxu0
  %v1466 = vadd.f32 %v1185, %v1465
  %v1467 = vpop.f32.mrf.mxu0
  %v1468 = vpop.f32.mrf.mxu0
  %v1469 = vadd.f32 %v1185, %v1468
  %v1470 = vpop.f32.mrf.mxu0
  %1471 = vmatprep.mubr.bf16.mxu0 0
  %1472 = vmatmul.mubr.bf16.gmra.mxu0 %v1254
  %v1473 = vpop.f32.mrf.mxu0
  %v1474 = vadd.f32 %v1185, %v1473
  %v1475 = vpop.f32.mrf.mxu0
  %v1476 = vpop.f32.mrf.mxu0
  %v1477 = vadd.f32 %v1185, %v1476
  %v1478 = vpop.f32.mrf.mxu0
  %1479 = vmatprep.mubr.bf16.mxu0 0
  %1480 = vmatmul.mubr.bf16.gmra.mxu0 %v1257
  %v1481 = vpop.f32.mrf.mxu0
  %v1482 = vadd.f32 %v1185, %v1481
  %v1483 = vpop.f32.mrf.mxu0
  %v1484 = vpop.f32.mrf.mxu0
  %v1485 = vadd.f32 %v1185, %v1484
  %v1486 = vpop.f32.mrf.mxu0
  %1487 = vmatprep.mubr.bf16.mxu0 0
  %1488 = vmatmul.mubr.bf16.gmra.mxu0 %v1260
  %v1489 = vpop.f32.mrf.mxu0
  %v1490 = vadd.f32 %v1185, %v1489
  %v1491 = vpop.f32.mrf.mxu0
  %v1492 = vpop.f32.mrf.mxu0
  %v1493 = vadd.f32 %v1185, %v1492
  %v1494 = vpop.f32.mrf.mxu0
  %1495 = vmatprep.mubr.bf16.mxu0 0
  %1496 = vmatmul.mubr.bf16.gmra.mxu0 %v1263
  %v1497 = vpop.f32.mrf.mxu0
  %v1498 = vadd.f32 %v1185, %v1497
  %v1499 = vpop.f32.mrf.mxu0
  %v1500 = vpop.f32.mrf.mxu0
  %v1501 = vadd.f32 %v1185, %v1500
  %v1502 = vpop.f32.mrf.mxu0
  %1503 = vmatprep.mubr.bf16.mxu0 0
  %1504 = vmatmul.mubr.bf16.gmra.mxu0 %v1266
  %v1505 = vpop.f32.mrf.mxu0
  %v1506 = vadd.f32 %v1185, %v1505
  %v1507 = vpop.f32.mrf.mxu0
  %v1508 = vpop.f32.mrf.mxu0
  %v1509 = vadd.f32 %v1185, %v1508
  %v1510 = vpop.f32.mrf.mxu0
  %1511 = vmatprep.mubr.bf16.mxu0 0
  %1512 = vmatmul.mubr.bf16.gmra.mxu0 %v1269
  %v1513 = vpop.f32.mrf.mxu0
  %v1514 = vadd.f32 %v1185, %v1513
  %v1515 = vpop.f32.mrf.mxu0
  %v1516 = vpop.f32.mrf.mxu0
  %v1517 = vadd.f32 %v1185, %v1516
  %v1518 = vpop.f32.mrf.mxu0
  %1519 = vmatprep.mubr.bf16.mxu0 0
  %1520 = vmatmul.mubr.bf16.gmra.mxu0 %v1272
  %v1521 = vpop.f32.mrf.mxu0
  %v1522 = vadd.f32 %v1185, %v1521
  %v1523 = vpop.f32.mrf.mxu0
  %v1524 = vpop.f32.mrf.mxu0
  %v1525 = vadd.f32 %v1185, %v1524
  %v1526 = vpop.f32.mrf.mxu0
  %1527 = vmatprep.mubr.bf16.mxu0 0
  %1528 = vmatmul.mubr.bf16.gmra.mxu0 %v1275
  %v1529 = vpop.f32.mrf.mxu0
  %v1530 = vadd.f32 %v1185, %v1529
  %v1531 = vpop.f32.mrf.mxu0
  %v1532 = vpop.f32.mrf.mxu0
  %v1533 = vadd.f32 %v1185, %v1532
  %v1534 = vpop.f32.mrf.mxu0
  %1535 = vmatprep.mubr.bf16.mxu0 0
  %1536 = vmatmul.mubr.bf16.gmra.mxu0 %v1278
  %v1537 = vpop.f32.mrf.mxu0
  %v1538 = vadd.f32 %v1185, %v1537
  %v1539 = vpop.f32.mrf.mxu0
  %v1540 = vpop.f32.mrf.mxu0
  %v1541 = vadd.f32 %v1185, %v1540
  %v1542 = vpop.f32.mrf.mxu0
  %1543 = vmatprep.mubr.bf16.mxu0 0
  %1544 = vmatmul.mubr.bf16.gmra.mxu0 %v1281
  %v1545 = vpop.f32.mrf.mxu0
  %v1546 = vadd.f32 %v1185, %v1545
  %v1547 = vpop.f32.mrf.mxu0
  %v1548 = vpop.f32.mrf.mxu0
  %v1549 = vadd.f32 %v1185, %v1548
  %v1550 = vpop.f32.mrf.mxu0
  %1551 = vmatprep.mubr.bf16.mxu0 0
  %1552 = vmatmul.mubr.bf16.gmra.mxu0 %v1284
  %v1553 = vpop.f32.mrf.mxu0
  %v1554 = vadd.f32 %v1185, %v1553
  %v1555 = vpop.f32.mrf.mxu0
  %v1556 = vpop.f32.mrf.mxu0
  %v1557 = vadd.f32 %v1185, %v1556
  %v1558 = vpop.f32.mrf.mxu0
  %1559 = vmatprep.mubr.bf16.mxu0 0
  %1560 = vmatmul.mubr.bf16.gmra.mxu0 %v1287
  %v1561 = vpop.f32.mrf.mxu0
  %v1562 = vadd.f32 %v1185, %v1561
  %v1563 = vpop.f32.mrf.mxu0
  %v1564 = vpop.f32.mrf.mxu0
  %v1565 = vadd.f32 %v1185, %v1564
  %v1566 = vpop.f32.mrf.mxu0
  %1567 = vmatprep.mubr.bf16.mxu0 0
  %1568 = vmatmul.mubr.bf16.gmra.mxu0 %v1290
  %v1569 = vpop.f32.mrf.mxu0
  %v1570 = vadd.f32 %v1185, %v1569
  %v1571 = vpop.f32.mrf.mxu0
  %v1572 = vpop.f32.mrf.mxu0
  %v1573 = vadd.f32 %v1185, %v1572
  %v1574 = vpop.f32.mrf.mxu0
  %1575 = vmatprep.mubr.bf16.mxu0 0
  %1576 = vmatmul.mubr.bf16.gmra.mxu0 %v1293
  %v1577 = vpop.f32.mrf.mxu0
  %v1578 = vadd.f32 %v1185, %v1577
  %v1579 = vpop.f32.mrf.mxu0
  %v1580 = vpop.f32.mrf.mxu0
  %v1581 = vadd.f32 %v1185, %v1580
  %v1582 = vpop.f32.mrf.mxu0
  %1583 = vdwg.mxu0
  %v1584 = vxor.u32 %v1330, 2147483648
  %v1585 = vxor.u32 %v1333, 2147483648
  %v1586 = vxor.u32 %v1338, 2147483648
  %v1587 = vxor.u32 %v1341, 2147483648
  %v1588 = vxor.u32 %v1346, 2147483648
  %v1589 = vxor.u32 %v1349, 2147483648
  %v1590 = vxor.u32 %v1354, 2147483648
  %v1591 = vxor.u32 %v1357, 2147483648
  %v1592 = vxor.u32 %v1362, 2147483648
  %v1593 = vxor.u32 %v1365, 2147483648
  %v1594 = vxor.u32 %v1370, 2147483648
  %v1595 = vxor.u32 %v1373, 2147483648
  %v1596 = vxor.u32 %v1378, 2147483648
  %v1597 = vxor.u32 %v1381, 2147483648
  %v1598 = vxor.u32 %v1386, 2147483648
  %v1599 = vxor.u32 %v1389, 2147483648
  %v1600 = vxor.u32 %v1394, 2147483648
  %v1601 = vxor.u32 %v1397, 2147483648
  %v1602 = vxor.u32 %v1402, 2147483648
  %v1603 = vxor.u32 %v1405, 2147483648
  %v1604 = vxor.u32 %v1410, 2147483648
  %v1605 = vxor.u32 %v1413, 2147483648
  %v1606 = vxor.u32 %v1418, 2147483648
  %v1607 = vxor.u32 %v1421, 2147483648
  %v1608 = vxor.u32 %v1426, 2147483648
  %v1609 = vxor.u32 %v1429, 2147483648
  %v1610 = vxor.u32 %v1434, 2147483648
  %v1611 = vxor.u32 %v1437, 2147483648
  %v1612 = vxor.u32 %v1442, 2147483648
  %v1613 = vxor.u32 %v1445, 2147483648
  %v1614 = vxor.u32 %v1450, 2147483648
  %v1615 = vxor.u32 %v1453, 2147483648
  %v1616 = vxor.u32 %v1458, 2147483648
  %v1617 = vxor.u32 %v1461, 2147483648
  %v1618 = vxor.u32 %v1466, 2147483648
  %v1619 = vxor.u32 %v1469, 2147483648
  %v1620 = vxor.u32 %v1474, 2147483648
  %v1621 = vxor.u32 %v1477, 2147483648
  %v1622 = vxor.u32 %v1482, 2147483648
  %v1623 = vxor.u32 %v1485, 2147483648
  %v1624 = vxor.u32 %v1490, 2147483648
  %v1625 = vxor.u32 %v1493, 2147483648
  %v1626 = vxor.u32 %v1498, 2147483648
  %v1627 = vxor.u32 %v1501, 2147483648
  %v1628 = vxor.u32 %v1506, 2147483648
  %v1629 = vxor.u32 %v1509, 2147483648
  %v1630 = vxor.u32 %v1514, 2147483648
  %v1631 = vxor.u32 %v1517, 2147483648
  %v1632 = vxor.u32 %v1522, 2147483648
  %v1633 = vxor.u32 %v1525, 2147483648
  %v1634 = vxor.u32 %v1530, 2147483648
  %v1635 = vxor.u32 %v1533, 2147483648
  %v1636 = vxor.u32 %v1538, 2147483648
  %v1637 = vxor.u32 %v1541, 2147483648
  %v1638 = vxor.u32 %v1546, 2147483648
  %v1639 = vxor.u32 %v1549, 2147483648
  %v1640 = vxor.u32 %v1554, 2147483648
  %v1641 = vxor.u32 %v1557, 2147483648
  %v1642 = vxor.u32 %v1562, 2147483648
  %v1643 = vxor.u32 %v1565, 2147483648
  %v1644 = vxor.u32 %v1570, 2147483648
  %v1645 = vxor.u32 %v1573, 2147483648
  %v1646 = vxor.u32 %v1578, 2147483648
  %v1647 = vxor.u32 %v1581, 2147483648
  %v1648 = vmul.f32 %v1584, 1.442695
  %v1649 = vpow.pop %v1648
  %v1650 = vmul.f32 %v1585, 1.442695
  %v1651 = vpow.pop %v1650
  %v1652 = vmul.f32 %v1586, 1.442695
  %v1653 = vpow.pop %v1652
  %v1654 = vmul.f32 %v1587, 1.442695
  %v1655 = vpow.pop %v1654
  %v1656 = vmul.f32 %v1588, 1.442695
  %v1657 = vpow.pop %v1656
  %v1658 = vmul.f32 %v1589, 1.442695
  %v1659 = vpow.pop %v1658
  %v1660 = vmul.f32 %v1590, 1.442695
  %v1661 = vpow.pop %v1660
  %v1662 = vmul.f32 %v1591, 1.442695
  %v1663 = vpow.pop %v1662
  %v1664 = vmul.f32 %v1592, 1.442695
  %v1665 = vpow.pop %v1664
  %v1666 = vmul.f32 %v1593, 1.442695
  %v1667 = vpow.pop %v1666
  %v1668 = vmul.f32 %v1594, 1.442695
  %v1669 = vpow.pop %v1668
  %v1670 = vmul.f32 %v1595, 1.442695
  %v1671 = vpow.pop %v1670
  %v1672 = vmul.f32 %v1596, 1.442695
  %v1673 = vpow.pop %v1672
  %v1674 = vmul.f32 %v1597, 1.442695
  %v1675 = vpow.pop %v1674
  %v1676 = vmul.f32 %v1598, 1.442695
  %v1677 = vpow.pop %v1676
  %v1678 = vmul.f32 %v1599, 1.442695
  %v1679 = vpow.pop %v1678
  %v1680 = vmul.f32 %v1600, 1.442695
  %v1681 = vpow.pop %v1680
  %v1682 = vmul.f32 %v1601, 1.442695
  %v1683 = vpow.pop %v1682
  %v1684 = vmul.f32 %v1602, 1.442695
  %v1685 = vpow.pop %v1684
  %v1686 = vmul.f32 %v1603, 1.442695
  %v1687 = vpow.pop %v1686
  %v1688 = vmul.f32 %v1604, 1.442695
  %v1689 = vpow.pop %v1688
  %v1690 = vmul.f32 %v1605, 1.442695
  %v1691 = vpow.pop %v1690
  %v1692 = vmul.f32 %v1606, 1.442695
  %v1693 = vpow.pop %v1692
  %v1694 = vmul.f32 %v1607, 1.442695
  %v1695 = vpow.pop %v1694
  %v1696 = vmul.f32 %v1608, 1.442695
  %v1697 = vpow.pop %v1696
  %v1698 = vmul.f32 %v1609, 1.442695
  %v1699 = vpow.pop %v1698
  %v1700 = vmul.f32 %v1610, 1.442695
  %v1701 = vpow.pop %v1700
  %v1702 = vmul.f32 %v1611, 1.442695
  %v1703 = vpow.pop %v1702
  %v1704 = vmul.f32 %v1612, 1.442695
  %v1705 = vpow.pop %v1704
  %v1706 = vmul.f32 %v1613, 1.442695
  %v1707 = vpow.pop %v1706
  %v1708 = vmul.f32 %v1614, 1.442695
  %v1709 = vpow.pop %v1708
  %v1710 = vmul.f32 %v1615, 1.442695
  %v1711 = vpow.pop %v1710
  %v1712 = vmul.f32 %v1616, 1.442695
  %v1713 = vpow.pop %v1712
  %v1714 = vmul.f32 %v1617, 1.442695
  %v1715 = vpow.pop %v1714
  %v1716 = vmul.f32 %v1618, 1.442695
  %v1717 = vpow.pop %v1716
  %v1718 = vmul.f32 %v1619, 1.442695
  %v1719 = vpow.pop %v1718
  %v1720 = vmul.f32 %v1620, 1.442695
  %v1721 = vpow.pop %v1720
  %v1722 = vmul.f32 %v1621, 1.442695
  %v1723 = vpow.pop %v1722
  %v1724 = vmul.f32 %v1622, 1.442695
  %v1725 = vpow.pop %v1724
  %v1726 = vmul.f32 %v1623, 1.442695
  %v1727 = vpow.pop %v1726
  %v1728 = vmul.f32 %v1624, 1.442695
  %v1729 = vpow.pop %v1728
  %v1730 = vmul.f32 %v1625, 1.442695
  %v1731 = vpow.pop %v1730
  %v1732 = vmul.f32 %v1626, 1.442695
  %v1733 = vpow.pop %v1732
  %v1734 = vmul.f32 %v1627, 1.442695
  %v1735 = vpow.pop %v1734
  %v1736 = vmul.f32 %v1628, 1.442695
  %v1737 = vpow.pop %v1736
  %v1738 = vmul.f32 %v1629, 1.442695
  %v1739 = vpow.pop %v1738
  %v1740 = vmul.f32 %v1630, 1.442695
  %v1741 = vpow.pop %v1740
  %v1742 = vmul.f32 %v1631, 1.442695
  %v1743 = vpow.pop %v1742
  %v1744 = vmul.f32 %v1632, 1.442695
  %v1745 = vpow.pop %v1744
  %v1746 = vmul.f32 %v1633, 1.442695
  %v1747 = vpow.pop %v1746
  %v1748 = vmul.f32 %v1634, 1.442695
  %v1749 = vpow.pop %v1748
  %v1750 = vmul.f32 %v1635, 1.442695
  %v1751 = vpow.pop %v1750
  %v1752 = vmul.f32 %v1636, 1.442695
  %v1753 = vpow.pop %v1752
  %v1754 = vmul.f32 %v1637, 1.442695
  %v1755 = vpow.pop %v1754
  %v1756 = vmul.f32 %v1638, 1.442695
  %v1757 = vpow.pop %v1756
  %v1758 = vmul.f32 %v1639, 1.442695
  %v1759 = vpow.pop %v1758
  %v1760 = vmul.f32 %v1640, 1.442695
  %v1761 = vpow.pop %v1760
  %v1762 = vmul.f32 %v1641, 1.442695
  %v1763 = vpow.pop %v1762
  %v1764 = vmul.f32 %v1642, 1.442695
  %v1765 = vpow.pop %v1764
  %v1766 = vmul.f32 %v1643, 1.442695
  %v1767 = vpow.pop %v1766
  %v1768 = vmul.f32 %v1644, 1.442695
  %v1769 = vpow.pop %v1768
  %v1770 = vmul.f32 %v1645, 1.442695
  %v1771 = vpow.pop %v1770
  %v1772 = vmul.f32 %v1646, 1.442695
  %v1773 = vpow.pop %v1772
  %v1774 = vmul.f32 %v1647, 1.442695
  %v1775 = vpow.pop %v1774
  %v1776 = vadd.f32 %v1649, 1.0
  %v1777 = vadd.f32 %v1651, 1.0
  %v1778 = vadd.f32 %v1653, 1.0
  %v1779 = vadd.f32 %v1655, 1.0
  %v1780 = vadd.f32 %v1657, 1.0
  %v1781 = vadd.f32 %v1659, 1.0
  %v1782 = vadd.f32 %v1661, 1.0
  %v1783 = vadd.f32 %v1663, 1.0
  %v1784 = vadd.f32 %v1665, 1.0
  %v1785 = vadd.f32 %v1667, 1.0
  %v1786 = vadd.f32 %v1669, 1.0
  %v1787 = vadd.f32 %v1671, 1.0
  %v1788 = vadd.f32 %v1673, 1.0
  %v1789 = vadd.f32 %v1675, 1.0
  %v1790 = vadd.f32 %v1677, 1.0
  %v1791 = vadd.f32 %v1679, 1.0
  %v1792 = vadd.f32 %v1681, 1.0
  %v1793 = vadd.f32 %v1683, 1.0
  %v1794 = vadd.f32 %v1685, 1.0
  %v1795 = vadd.f32 %v1687, 1.0
  %v1796 = vadd.f32 %v1689, 1.0
  %v1797 = vadd.f32 %v1691, 1.0
  %v1798 = vadd.f32 %v1693, 1.0
  %v1799 = vadd.f32 %v1695, 1.0
  %v1800 = vadd.f32 %v1697, 1.0
  %v1801 = vadd.f32 %v1699, 1.0
  %v1802 = vadd.f32 %v1701, 1.0
  %v1803 = vadd.f32 %v1703, 1.0
  %v1804 = vadd.f32 %v1705, 1.0
  %v1805 = vadd.f32 %v1707, 1.0
  %v1806 = vadd.f32 %v1709, 1.0
  %v1807 = vadd.f32 %v1711, 1.0
  %v1808 = vadd.f32 %v1713, 1.0
  %v1809 = vadd.f32 %v1715, 1.0
  %v1810 = vadd.f32 %v1717, 1.0
  %v1811 = vadd.f32 %v1719, 1.0
  %v1812 = vadd.f32 %v1721, 1.0
  %v1813 = vadd.f32 %v1723, 1.0
  %v1814 = vadd.f32 %v1725, 1.0
  %v1815 = vadd.f32 %v1727, 1.0
  %v1816 = vadd.f32 %v1729, 1.0
  %v1817 = vadd.f32 %v1731, 1.0
  %v1818 = vadd.f32 %v1733, 1.0
  %v1819 = vadd.f32 %v1735, 1.0
  %v1820 = vadd.f32 %v1737, 1.0
  %v1821 = vadd.f32 %v1739, 1.0
  %v1822 = vadd.f32 %v1741, 1.0
  %v1823 = vadd.f32 %v1743, 1.0
  %v1824 = vadd.f32 %v1745, 1.0
  %v1825 = vadd.f32 %v1747, 1.0
  %v1826 = vadd.f32 %v1749, 1.0
  %v1827 = vadd.f32 %v1751, 1.0
  %v1828 = vadd.f32 %v1753, 1.0
  %v1829 = vadd.f32 %v1755, 1.0
  %v1830 = vadd.f32 %v1757, 1.0
  %v1831 = vadd.f32 %v1759, 1.0
  %v1832 = vadd.f32 %v1761, 1.0
  %v1833 = vadd.f32 %v1763, 1.0
  %v1834 = vadd.f32 %v1765, 1.0
  %v1835 = vadd.f32 %v1767, 1.0
  %v1836 = vadd.f32 %v1769, 1.0
  %v1837 = vadd.f32 %v1771, 1.0
  %v1838 = vadd.f32 %v1773, 1.0
  %v1839 = vadd.f32 %v1775, 1.0
  %v1840 = vrcp.pop %v1776
  %v1841 = vmul.f32 1.0, %v1840
  %v1842 = vrcp.pop %v1777
  %v1843 = vmul.f32 1.0, %v1842
  %v1844 = vrcp.pop %v1778
  %v1845 = vmul.f32 1.0, %v1844
  %v1846 = vrcp.pop %v1779
  %v1847 = vmul.f32 1.0, %v1846
  %v1848 = vrcp.pop %v1780
  %v1849 = vmul.f32 1.0, %v1848
  %v1850 = vrcp.pop %v1781
  %v1851 = vmul.f32 1.0, %v1850
  %v1852 = vrcp.pop %v1782
  %v1853 = vmul.f32 1.0, %v1852
  %v1854 = vrcp.pop %v1783
  %v1855 = vmul.f32 1.0, %v1854
  %v1856 = vrcp.pop %v1784
  %v1857 = vmul.f32 1.0, %v1856
  %v1858 = vrcp.pop %v1785
  %v1859 = vmul.f32 1.0, %v1858
  %v1860 = vrcp.pop %v1786
  %v1861 = vmul.f32 1.0, %v1860
  %v1862 = vrcp.pop %v1787
  %v1863 = vmul.f32 1.0, %v1862
  %v1864 = vrcp.pop %v1788
  %v1865 = vmul.f32 1.0, %v1864
  %v1866 = vrcp.pop %v1789
  %v1867 = vmul.f32 1.0, %v1866
  %v1868 = vrcp.pop %v1790
  %v1869 = vmul.f32 1.0, %v1868
  %v1870 = vrcp.pop %v1791
  %v1871 = vmul.f32 1.0, %v1870
  %v1872 = vrcp.pop %v1792
  %v1873 = vmul.f32 1.0, %v1872
  %v1874 = vrcp.pop %v1793
  %v1875 = vmul.f32 1.0, %v1874
  %v1876 = vrcp.pop %v1794
  %v1877 = vmul.f32 1.0, %v1876
  %v1878 = vrcp.pop %v1795
  %v1879 = vmul.f32 1.0, %v1878
  %v1880 = vrcp.pop %v1796
  %v1881 = vmul.f32 1.0, %v1880
  %v1882 = vrcp.pop %v1797
  %v1883 = vmul.f32 1.0, %v1882
  %v1884 = vrcp.pop %v1798
  %v1885 = vmul.f32 1.0, %v1884
  %v1886 = vrcp.pop %v1799
  %v1887 = vmul.f32 1.0, %v1886
  %v1888 = vrcp.pop %v1800
  %v1889 = vmul.f32 1.0, %v1888
  %v1890 = vrcp.pop %v1801
  %v1891 = vmul.f32 1.0, %v1890
  %v1892 = vrcp.pop %v1802
  %v1893 = vmul.f32 1.0, %v1892
  %v1894 = vrcp.pop %v1803
  %v1895 = vmul.f32 1.0, %v1894
  %v1896 = vrcp.pop %v1804
  %v1897 = vmul.f32 1.0, %v1896
  %v1898 = vrcp.pop %v1805
  %v1899 = vmul.f32 1.0, %v1898
  %v1900 = vrcp.pop %v1806
  %v1901 = vmul.f32 1.0, %v1900
  %v1902 = vrcp.pop %v1807
  %v1903 = vmul.f32 1.0, %v1902
  %v1904 = vrcp.pop %v1808
  %v1905 = vmul.f32 1.0, %v1904
  %v1906 = vrcp.pop %v1809
  %v1907 = vmul.f32 1.0, %v1906
  %v1908 = vrcp.pop %v1810
  %v1909 = vmul.f32 1.0, %v1908
  %v1910 = vrcp.pop %v1811
  %v1911 = vmul.f32 1.0, %v1910
  %v1912 = vrcp.pop %v1812
  %v1913 = vmul.f32 1.0, %v1912
  %v1914 = vrcp.pop %v1813
  %v1915 = vmul.f32 1.0, %v1914
  %v1916 = vrcp.pop %v1814
  %v1917 = vmul.f32 1.0, %v1916
  %v1918 = vrcp.pop %v1815
  %v1919 = vmul.f32 1.0, %v1918
  %v1920 = vrcp.pop %v1816
  %v1921 = vmul.f32 1.0, %v1920
  %v1922 = vrcp.pop %v1817
  %v1923 = vmul.f32 1.0, %v1922
  %v1924 = vrcp.pop %v1818
  %v1925 = vmul.f32 1.0, %v1924
  %v1926 = vrcp.pop %v1819
  %v1927 = vmul.f32 1.0, %v1926
  %v1928 = vrcp.pop %v1820
  %v1929 = vmul.f32 1.0, %v1928
  %v1930 = vrcp.pop %v1821
  %v1931 = vmul.f32 1.0, %v1930
  %v1932 = vrcp.pop %v1822
  %v1933 = vmul.f32 1.0, %v1932
  %v1934 = vrcp.pop %v1823
  %v1935 = vmul.f32 1.0, %v1934
  %v1936 = vrcp.pop %v1824
  %v1937 = vmul.f32 1.0, %v1936
  %v1938 = vrcp.pop %v1825
  %v1939 = vmul.f32 1.0, %v1938
  %v1940 = vrcp.pop %v1826
  %v1941 = vmul.f32 1.0, %v1940
  %v1942 = vrcp.pop %v1827
  %v1943 = vmul.f32 1.0, %v1942
  %v1944 = vrcp.pop %v1828
  %v1945 = vmul.f32 1.0, %v1944
  %v1946 = vrcp.pop %v1829
  %v1947 = vmul.f32 1.0, %v1946
  %v1948 = vrcp.pop %v1830
  %v1949 = vmul.f32 1.0, %v1948
  %v1950 = vrcp.pop %v1831
  %v1951 = vmul.f32 1.0, %v1950
  %v1952 = vrcp.pop %v1832
  %v1953 = vmul.f32 1.0, %v1952
  %v1954 = vrcp.pop %v1833
  %v1955 = vmul.f32 1.0, %v1954
  %v1956 = vrcp.pop %v1834
  %v1957 = vmul.f32 1.0, %v1956
  %v1958 = vrcp.pop %v1835
  %v1959 = vmul.f32 1.0, %v1958
  %v1960 = vrcp.pop %v1836
  %v1961 = vmul.f32 1.0, %v1960
  %v1962 = vrcp.pop %v1837
  %v1963 = vmul.f32 1.0, %v1962
  %v1964 = vrcp.pop %v1838
  %v1965 = vmul.f32 1.0, %v1964
  %v1966 = vrcp.pop %v1839
  %v1967 = vmul.f32 1.0, %v1966
  %v1968 = vmul.f32 %v1330, %v1841
  %v1969 = vmul.f32 %v1333, %v1843
  %v1970 = vmul.f32 %v1338, %v1845
  %v1971 = vmul.f32 %v1341, %v1847
  %v1972 = vmul.f32 %v1346, %v1849
  %v1973 = vmul.f32 %v1349, %v1851
  %v1974 = vmul.f32 %v1354, %v1853
  %v1975 = vmul.f32 %v1357, %v1855
  %v1976 = vmul.f32 %v1362, %v1857
  %v1977 = vmul.f32 %v1365, %v1859
  %v1978 = vmul.f32 %v1370, %v1861
  %v1979 = vmul.f32 %v1373, %v1863
  %v1980 = vmul.f32 %v1378, %v1865
  %v1981 = vmul.f32 %v1381, %v1867
  %v1982 = vmul.f32 %v1386, %v1869
  %v1983 = vmul.f32 %v1389, %v1871
  %v1984 = vmul.f32 %v1394, %v1873
  %v1985 = vmul.f32 %v1397, %v1875
  %v1986 = vmul.f32 %v1402, %v1877
  %v1987 = vmul.f32 %v1405, %v1879
  %v1988 = vmul.f32 %v1410, %v1881
  %v1989 = vmul.f32 %v1413, %v1883
  %v1990 = vmul.f32 %v1418, %v1885
  %v1991 = vmul.f32 %v1421, %v1887
  %v1992 = vmul.f32 %v1426, %v1889
  %v1993 = vmul.f32 %v1429, %v1891
  %v1994 = vmul.f32 %v1434, %v1893
  %v1995 = vmul.f32 %v1437, %v1895
  %v1996 = vmul.f32 %v1442, %v1897
  %v1997 = vmul.f32 %v1445, %v1899
  %v1998 = vmul.f32 %v1450, %v1901
  %v1999 = vmul.f32 %v1453, %v1903
  %v2000 = vmul.f32 %v1458, %v1905
  %v2001 = vmul.f32 %v1461, %v1907
  %v2002 = vmul.f32 %v1466, %v1909
  %v2003 = vmul.f32 %v1469, %v1911
  %v2004 = vmul.f32 %v1474, %v1913
  %v2005 = vmul.f32 %v1477, %v1915
  %v2006 = vmul.f32 %v1482, %v1917
  %v2007 = vmul.f32 %v1485, %v1919
  %v2008 = vmul.f32 %v1490, %v1921
  %v2009 = vmul.f32 %v1493, %v1923
  %v2010 = vmul.f32 %v1498, %v1925
  %v2011 = vmul.f32 %v1501, %v1927
  %v2012 = vmul.f32 %v1506, %v1929
  %v2013 = vmul.f32 %v1509, %v1931
  %v2014 = vmul.f32 %v1514, %v1933
  %v2015 = vmul.f32 %v1517, %v1935
  %v2016 = vmul.f32 %v1522, %v1937
  %v2017 = vmul.f32 %v1525, %v1939
  %v2018 = vmul.f32 %v1530, %v1941
  %v2019 = vmul.f32 %v1533, %v1943
  %v2020 = vmul.f32 %v1538, %v1945
  %v2021 = vmul.f32 %v1541, %v1947
  %v2022 = vmul.f32 %v1546, %v1949
  %v2023 = vmul.f32 %v1549, %v1951
  %v2024 = vmul.f32 %v1554, %v1953
  %v2025 = vmul.f32 %v1557, %v1955
  %v2026 = vmul.f32 %v1562, %v1957
  %v2027 = vmul.f32 %v1565, %v1959
  %v2028 = vmul.f32 %v1570, %v1961
  %v2029 = vmul.f32 %v1573, %v1963
  %v2030 = vmul.f32 %v1578, %v1965
  %v2031 = vmul.f32 %v1581, %v1967
  %2032 = vst [vmem:[#allocation2] sm:$0xff] 0.0
  %2033 = vst [vmem:[#allocation2 + $0x8] sm:$0xff] 0.0
  %2034 = vst [vmem:[#allocation2 + $0x60] sm:$0xff] 0.0
  %2035 = vst [vmem:[#allocation2 + $0x68] sm:$0xff] 0.0
  %2036 = vst [vmem:[#allocation2 + $0xc0] sm:$0xff] 0.0
  %2037 = vst [vmem:[#allocation2 + $0xc8] sm:$0xff] 0.0
  %2038 = vst [vmem:[#allocation2 + $0x120] sm:$0xff] 0.0
  %2039 = vst [vmem:[#allocation2 + $0x128] sm:$0xff] 0.0
  %2040 = vst [vmem:[#allocation2 + $0x180] sm:$0xff] 0.0
  %2041 = vst [vmem:[#allocation2 + $0x188] sm:$0xff] 0.0
  %2042 = vst [vmem:[#allocation2 + $0x1e0] sm:$0xff] 0.0
  %2043 = vst [vmem:[#allocation2 + $0x1e8] sm:$0xff] 0.0
  %2044 = vst [vmem:[#allocation2 + $0x240] sm:$0xff] 0.0
  %2045 = vst [vmem:[#allocation2 + $0x248] sm:$0xff] 0.0
  %2046 = vst [vmem:[#allocation2 + $0x2a0] sm:$0xff] 0.0
  %2047 = vst [vmem:[#allocation2 + $0x2a8] sm:$0xff] 0.0
  %2048 = vst [vmem:[#allocation2 + $0x50] sm:$0xff] 0.0
  %2049 = vst [vmem:[#allocation2 + $0x58] sm:$0xff] 0.0
  %2050 = vst [vmem:[#allocation2 + $0xb0] sm:$0xff] 0.0
  %2051 = vst [vmem:[#allocation2 + $0xb8] sm:$0xff] 0.0
  %2052 = vst [vmem:[#allocation2 + $0x110] sm:$0xff] 0.0
  %2053 = vst [vmem:[#allocation2 + $0x118] sm:$0xff] 0.0
  %2054 = vst [vmem:[#allocation2 + $0x170] sm:$0xff] 0.0
  %2055 = vst [vmem:[#allocation2 + $0x178] sm:$0xff] 0.0
  %2056 = vst [vmem:[#allocation2 + $0x1d0] sm:$0xff] 0.0
  %2057 = vst [vmem:[#allocation2 + $0x1d8] sm:$0xff] 0.0
  %2058 = vst [vmem:[#allocation2 + $0x230] sm:$0xff] 0.0
  %2059 = vst [vmem:[#allocation2 + $0x238] sm:$0xff] 0.0
  %2060 = vst [vmem:[#allocation2 + $0x290] sm:$0xff] 0.0
  %2061 = vst [vmem:[#allocation2 + $0x298] sm:$0xff] 0.0
  %2062 = vst [vmem:[#allocation2 + $0x2f0] sm:$0xff] 0.0
  %2063 = vst [vmem:[#allocation2 + $0x2f8] sm:$0xff] 0.0
  %2064 = vst [vmem:[#allocation2 + $0x10] sm:$0xff] %v1968
  %2065 = vst [vmem:[#allocation2 + $0x18] sm:$0xff] %v1969
  %2066 = vst [vmem:[#allocation2 + $0x20] sm:$0xff] %v1970
  %2067 = vst [vmem:[#allocation2 + $0x28] sm:$0xff] %v1971
  %2068 = vst [vmem:[#allocation2 + $0x30] sm:$0xff] %v1972
  %2069 = vst [vmem:[#allocation2 + $0x38] sm:$0xff] %v1973
  %2070 = vst [vmem:[#allocation2 + $0x40] sm:$0xff] %v1974
  %2071 = vst [vmem:[#allocation2 + $0x48] sm:$0xff] %v1975
  %2072 = vst [vmem:[#allocation2 + $0x70] sm:$0xff] %v1976
  %2073 = vst [vmem:[#allocation2 + $0x78] sm:$0xff] %v1977
  %2074 = vst [vmem:[#allocation2 + $0x80] sm:$0xff] %v1978
  %2075 = vst [vmem:[#allocation2 + $0x88] sm:$0xff] %v1979
  %2076 = vst [vmem:[#allocation2 + $0x90] sm:$0xff] %v1980
  %2077 = vst [vmem:[#allocation2 + $0x98] sm:$0xff] %v1981
  %2078 = vst [vmem:[#allocation2 + $0xa0] sm:$0xff] %v1982
  %2079 = vst [vmem:[#allocation2 + $0xa8] sm:$0xff] %v1983
  %2080 = vst [vmem:[#allocation2 + $0xd0] sm:$0xff] %v1984
  %2081 = vst [vmem:[#allocation2 + $0xd8] sm:$0xff] %v1985
  %2082 = vst [vmem:[#allocation2 + $0xe0] sm:$0xff] %v1986
  %2083 = vst [vmem:[#allocation2 + $0xe8] sm:$0xff] %v1987
  %2084 = vst [vmem:[#allocation2 + $0xf0] sm:$0xff] %v1988
  %2085 = vst [vmem:[#allocation2 + $0xf8] sm:$0xff] %v1989
  %2086 = vst [vmem:[#allocation2 + $0x100] sm:$0xff] %v1990
  %2087 = vst [vmem:[#allocation2 + $0x108] sm:$0xff] %v1991
  %2088 = vst [vmem:[#allocation2 + $0x130] sm:$0xff] %v1992
  %2089 = vst [vmem:[#allocation2 + $0x138] sm:$0xff] %v1993
  %2090 = vst [vmem:[#allocation2 + $0x140] sm:$0xff] %v1994
  %2091 = vst [vmem:[#allocation2 + $0x148] sm:$0xff] %v1995
  %2092 = vst [vmem:[#allocation2 + $0x150] sm:$0xff] %v1996
  %2093 = vst [vmem:[#allocation2 + $0x158] sm:$0xff] %v1997
  %2094 = vst [vmem:[#allocation2 + $0x160] sm:$0xff] %v1998
  %2095 = vst [vmem:[#allocation2 + $0x168] sm:$0xff] %v1999
  %2096 = vst [vmem:[#allocation2 + $0x190] sm:$0xff] %v2000
  %2097 = vst [vmem:[#allocation2 + $0x198] sm:$0xff] %v2001
  %2098 = vst [vmem:[#allocation2 + $0x1a0] sm:$0xff] %v2002
  %2099 = vst [vmem:[#allocation2 + $0x1a8] sm:$0xff] %v2003
  %2100 = vst [vmem:[#allocation2 + $0x1b0] sm:$0xff] %v2004
  %2101 = vst [vmem:[#allocation2 + $0x1b8] sm:$0xff] %v2005
  %2102 = vst [vmem:[#allocation2 + $0x1c0] sm:$0xff] %v2006
  %2103 = vst [vmem:[#allocation2 + $0x1c8] sm:$0xff] %v2007
  %2104 = vst [vmem:[#allocation2 + $0x1f0] sm:$0xff] %v2008
  %2105 = vst [vmem:[#allocation2 + $0x1f8] sm:$0xff] %v2009
  %2106 = vst [vmem:[#allocation2 + $0x200] sm:$0xff] %v2010
  %2107 = vst [vmem:[#allocation2 + $0x208] sm:$0xff] %v2011
  %2108 = vst [vmem:[#allocation2 + $0x210] sm:$0xff] %v2012
  %2109 = vst [vmem:[#allocation2 + $0x218] sm:$0xff] %v2013
  %2110 = vst [vmem:[#allocation2 + $0x220] sm:$0xff] %v2014
  %2111 = vst [vmem:[#allocation2 + $0x228] sm:$0xff] %v2015
  %2112 = vst [vmem:[#allocation2 + $0x250] sm:$0xff] %v2016
  %2113 = vst [vmem:[#allocation2 + $0x258] sm:$0xff] %v2017
  %2114 = vst [vmem:[#allocation2 + $0x260] sm:$0xff] %v2018
  %2115 = vst [vmem:[#allocation2 + $0x268] sm:$0xff] %v2019
  %2116 = vst [vmem:[#allocation2 + $0x270] sm:$0xff] %v2020
  %2117 = vst [vmem:[#allocation2 + $0x278] sm:$0xff] %v2021
  %2118 = vst [vmem:[#allocation2 + $0x280] sm:$0xff] %v2022
  %2119 = vst [vmem:[#allocation2 + $0x288] sm:$0xff] %v2023
  %2120 = vst [vmem:[#allocation2 + $0x2b0] sm:$0xff] %v2024
  %2121 = vst [vmem:[#allocation2 + $0x2b8] sm:$0xff] %v2025
  %2122 = vst [vmem:[#allocation2 + $0x2c0] sm:$0xff] %v2026
  %2123 = vst [vmem:[#allocation2 + $0x2c8] sm:$0xff] %v2027
  %2124 = vst [vmem:[#allocation2 + $0x2d0] sm:$0xff] %v2028
  %2125 = vst [vmem:[#allocation2 + $0x2d8] sm:$0xff] %v2029
  %2126 = vst [vmem:[#allocation2 + $0x2e0] sm:$0xff] %v2030
  %2127 = vst [vmem:[#allocation2 + $0x2e8] sm:$0xff] %v2031
  %v2128 = vld [vmem:[#allocation2] sm:$0xff]
  %v2129 = vld [vmem:[#allocation2 + $0x8] sm:$0xff]
  %v2130 = vld [vmem:[#allocation2 + $0x10] sm:$0xff]
  %v2131 = vld [vmem:[#allocation2 + $0x18] sm:$0xff]
  %v2132 = vld [vmem:[#allocation2 + $0x20] sm:$0xff]
  %v2133 = vld [vmem:[#allocation2 + $0x28] sm:$0xff]
  %v2134 = vld [vmem:[#allocation2 + $0x30] sm:$0xff]
  %v2135 = vld [vmem:[#allocation2 + $0x38] sm:$0xff]
  %v2136 = vld [vmem:[#allocation2 + $0x40] sm:$0xff]
  %v2137 = vld [vmem:[#allocation2 + $0x48] sm:$0xff]
  %v2138 = vld [vmem:[#allocation2 + $0x50] sm:$0xff]
  %v2139 = vld [vmem:[#allocation2 + $0x58] sm:$0xff]
  %v2140 = vld [vmem:[#allocation2 + $0x60] sm:$0xff]
  %v2141 = vld [vmem:[#allocation2 + $0x68] sm:$0xff]
  %v2142 = vld [vmem:[#allocation2 + $0x70] sm:$0xff]
  %v2143 = vld [vmem:[#allocation2 + $0x78] sm:$0xff]
  %v2144 = vld [vmem:[#allocation2 + $0x80] sm:$0xff]
  %v2145 = vld [vmem:[#allocation2 + $0x88] sm:$0xff]
  %v2146 = vld [vmem:[#allocation2 + $0x90] sm:$0xff]
  %v2147 = vld [vmem:[#allocation2 + $0x98] sm:$0xff]
  %v2148 = vld [vmem:[#allocation2 + $0xa0] sm:$0xff]
  %v2149 = vld [vmem:[#allocation2 + $0xa8] sm:$0xff]
  %v2150 = vld [vmem:[#allocation2 + $0xb0] sm:$0xff]
  %v2151 = vld [vmem:[#allocation2 + $0xb8] sm:$0xff]
  %v2152 = vld [vmem:[#allocation2 + $0xc0] sm:$0xff]
  %v2153 = vld [vmem:[#allocation2 + $0xc8] sm:$0xff]
  %v2154 = vld [vmem:[#allocation2 + $0xd0] sm:$0xff]
  %v2155 = vld [vmem:[#allocation2 + $0xd8] sm:$0xff]
  %v2156 = vld [vmem:[#allocation2 + $0xe0] sm:$0xff]
  %v2157 = vld [vmem:[#allocation2 + $0xe8] sm:$0xff]
  %v2158 = vld [vmem:[#allocation2 + $0xf0] sm:$0xff]
  %v2159 = vld [vmem:[#allocation2 + $0xf8] sm:$0xff]
  %v2160 = vld [vmem:[#allocation2 + $0x100] sm:$0xff]
  %v2161 = vld [vmem:[#allocation2 + $0x108] sm:$0xff]
  %v2162 = vld [vmem:[#allocation2 + $0x110] sm:$0xff]
  %v2163 = vld [vmem:[#allocation2 + $0x118] sm:$0xff]
  %v2164 = vld [vmem:[#allocation2 + $0x120] sm:$0xff]
  %v2165 = vld [vmem:[#allocation2 + $0x128] sm:$0xff]
  %v2166 = vld [vmem:[#allocation2 + $0x130] sm:$0xff]
  %v2167 = vld [vmem:[#allocation2 + $0x138] sm:$0xff]
  %v2168 = vld [vmem:[#allocation2 + $0x140] sm:$0xff]
  %v2169 = vld [vmem:[#allocation2 + $0x148] sm:$0xff]
  %v2170 = vld [vmem:[#allocation2 + $0x150] sm:$0xff]
  %v2171 = vld [vmem:[#allocation2 + $0x158] sm:$0xff]
  %v2172 = vld [vmem:[#allocation2 + $0x160] sm:$0xff]
  %v2173 = vld [vmem:[#allocation2 + $0x168] sm:$0xff]
  %v2174 = vld [vmem:[#allocation2 + $0x170] sm:$0xff]
  %v2175 = vld [vmem:[#allocation2 + $0x178] sm:$0xff]
  %v2176 = vld [vmem:[#allocation2 + $0x180] sm:$0xff]
  %v2177 = vld [vmem:[#allocation2 + $0x188] sm:$0xff]
  %v2178 = vld [vmem:[#allocation2 + $0x190] sm:$0xff]
  %v2179 = vld [vmem:[#allocation2 + $0x198] sm:$0xff]
  %v2180 = vld [vmem:[#allocation2 + $0x1a0] sm:$0xff]
  %v2181 = vld [vmem:[#allocation2 + $0x1a8] sm:$0xff]
  %v2182 = vld [vmem:[#allocation2 + $0x1b0] sm:$0xff]
  %v2183 = vld [vmem:[#allocation2 + $0x1b8] sm:$0xff]
  %v2184 = vld [vmem:[#allocation2 + $0x1c0] sm:$0xff]
  %v2185 = vld [vmem:[#allocation2 + $0x1c8] sm:$0xff]
  %v2186 = vld [vmem:[#allocation2 + $0x1d0] sm:$0xff]
  %v2187 = vld [vmem:[#allocation2 + $0x1d8] sm:$0xff]
  %v2188 = vld [vmem:[#allocation2 + $0x1e0] sm:$0xff]
  %v2189 = vld [vmem:[#allocation2 + $0x1e8] sm:$0xff]
  %v2190 = vld [vmem:[#allocation2 + $0x1f0] sm:$0xff]
  %v2191 = vld [vmem:[#allocation2 + $0x1f8] sm:$0xff]
  %v2192 = vld [vmem:[#allocation2 + $0x200] sm:$0xff]
  %v2193 = vld [vmem:[#allocation2 + $0x208] sm:$0xff]
  %v2194 = vld [vmem:[#allocation2 + $0x210] sm:$0xff]
  %v2195 = vld [vmem:[#allocation2 + $0x218] sm:$0xff]
  %v2196 = vld [vmem:[#allocation2 + $0x220] sm:$0xff]
  %v2197 = vld [vmem:[#allocation2 + $0x228] sm:$0xff]
  %v2198 = vld [vmem:[#allocation2 + $0x230] sm:$0xff]
  %v2199 = vld [vmem:[#allocation2 + $0x238] sm:$0xff]
  %v2200 = vld [vmem:[#allocation2 + $0x240] sm:$0xff]
  %v2201 = vld [vmem:[#allocation2 + $0x248] sm:$0xff]
  %v2202 = vld [vmem:[#allocation2 + $0x250] sm:$0xff]
  %v2203 = vld [vmem:[#allocation2 + $0x258] sm:$0xff]
  %v2204 = vld [vmem:[#allocation2 + $0x260] sm:$0xff]
  %v2205 = vld [vmem:[#allocation2 + $0x268] sm:$0xff]
  %v2206 = vld [vmem:[#allocation2 + $0x270] sm:$0xff]
  %v2207 = vld [vmem:[#allocation2 + $0x278] sm:$0xff]
  %v2208 = vld [vmem:[#allocation2 + $0x280] sm:$0xff]
  %v2209 = vld [vmem:[#allocation2 + $0x288] sm:$0xff]
  %v2210 = vld [vmem:[#allocation2 + $0x290] sm:$0xff]
  %v2211 = vld [vmem:[#allocation2 + $0x298] sm:$0xff]
  %v2212 = vld [vmem:[#allocation2 + $0x2a0] sm:$0xff]
  %v2213 = vld [vmem:[#allocation2 + $0x2a8] sm:$0xff]
  %v2214 = vld [vmem:[#allocation2 + $0x2b0] sm:$0xff]
  %v2215 = vld [vmem:[#allocation2 + $0x2b8] sm:$0xff]
  %v2216 = vld [vmem:[#allocation2 + $0x2c0] sm:$0xff]
  %v2217 = vld [vmem:[#allocation2 + $0x2c8] sm:$0xff]
  %v2218 = vld [vmem:[#allocation2 + $0x2d0] sm:$0xff]
  %v2219 = vld [vmem:[#allocation2 + $0x2d8] sm:$0xff]
  %v2220 = vld [vmem:[#allocation2 + $0x2e0] sm:$0xff]
  %v2221 = vld [vmem:[#allocation2 + $0x2e8] sm:$0xff]
  %v2222 = vld [vmem:[#allocation2 + $0x2f0] sm:$0xff]
  %v2223 = vld [vmem:[#allocation2 + $0x2f8] sm:$0xff]
  %v2224 = vld [vmem:[%s5] sm:$0xff]
  %v2225 = vld [vmem:[%s5 + $0x8] sm:$0x1]
  %v2226 = vlaneseq
  %v2227 = vshrl.u32 %v2226, 7
  %v2228 = vadd.s32 %v2227, 8
  %v2229 = vadd.s32 %v2227, 16
  %v2230 = vadd.s32 %v2227, 24
  %v2231 = vadd.s32 %v2227, 32
  %v2232 = vadd.s32 %v2227, 40
  %v2233 = vadd.s32 %v2227, 48
  %v2234 = vadd.s32 %v2227, 56
  %vm2235 = vcmp.lt.s32.totalorder %v2227, 0
  %v2236 = vsub.s32 0, %v2227
  %v2237 = vsel %vm2235, %v2236, %v2227
  %v2238 = vshrl.u32 %v2237, 3
  %v2239 = vand.u32 %v2237, 7
  %v2240 = vsub.s32 0, %v2239
  %v2241 = vsel %vm2235, %v2240, %v2239
  %vm2242 = vcmp.lt.s32.totalorder %v2228, 0
  %v2243 = vsub.s32 0, %v2228
  %v2244 = vsel %vm2242, %v2243, %v2228
  %v2245 = vshrl.u32 %v2244, 3
  %v2246 = vand.u32 %v2244, 7
  %v2247 = vsub.s32 0, %v2246
  %v2248 = vsel %vm2242, %v2247, %v2246
  %vm2249 = vcmp.lt.s32.totalorder %v2229, 0
  %v2250 = vsub.s32 0, %v2229
  %v2251 = vsel %vm2249, %v2250, %v2229
  %v2252 = vshrl.u32 %v2251, 3
  %v2253 = vand.u32 %v2251, 7
  %v2254 = vsub.s32 0, %v2253
  %v2255 = vsel %vm2249, %v2254, %v2253
  %vm2256 = vcmp.lt.s32.totalorder %v2230, 0
  %v2257 = vsub.s32 0, %v2230
  %v2258 = vsel %vm2256, %v2257, %v2230
  %v2259 = vshrl.u32 %v2258, 3
  %v2260 = vand.u32 %v2258, 7
  %v2261 = vsub.s32 0, %v2260
  %v2262 = vsel %vm2256, %v2261, %v2260
  %vm2263 = vcmp.lt.s32.totalorder %v2231, 0
  %v2264 = vsub.s32 0, %v2231
  %v2265 = vsel %vm2263, %v2264, %v2231
  %v2266 = vshrl.u32 %v2265, 3
  %v2267 = vand.u32 %v2265, 7
  %v2268 = vsub.s32 0, %v2267
  %v2269 = vsel %vm2263, %v2268, %v2267
  %vm2270 = vcmp.lt.s32.totalorder %v2232, 0
  %v2271 = vsub.s32 0, %v2232
  %v2272 = vsel %vm2270, %v2271, %v2232
  %v2273 = vshrl.u32 %v2272, 3
  %v2274 = vand.u32 %v2272, 7
  %v2275 = vsub.s32 0, %v2274
  %v2276 = vsel %vm2270, %v2275, %v2274
  %vm2277 = vcmp.lt.s32.totalorder %v2233, 0
  %v2278 = vsub.s32 0, %v2233
  %v2279 = vsel %vm2277, %v2278, %v2233
  %v2280 = vshrl.u32 %v2279, 3
  %v2281 = vand.u32 %v2279, 7
  %v2282 = vsub.s32 0, %v2281
  %v2283 = vsel %vm2277, %v2282, %v2281
  %vm2284 = vcmp.lt.s32.totalorder %v2234, 0
  %v2285 = vsub.s32 0, %v2234
  %v2286 = vsel %vm2284, %v2285, %v2234
  %v2287 = vshrl.u32 %v2286, 3
  %v2288 = vand.u32 %v2286, 7
  %v2289 = vsub.s32 0, %v2288
  %v2290 = vsel %vm2284, %v2289, %v2288
  %vm2291 = vcmp.ne.s32.totalorder %v2241, 0
  %vm2292 = vcmp.ne.s32.totalorder %v2248, 0
  %vm2293 = vcmp.ne.s32.totalorder %v2255, 0
  %vm2294 = vcmp.ne.s32.totalorder %v2262, 0
  %vm2295 = vcmp.ne.s32.totalorder %v2269, 0
  %vm2296 = vcmp.ne.s32.totalorder %v2276, 0
  %vm2297 = vcmp.ne.s32.totalorder %v2283, 0
  %vm2298 = vcmp.ne.s32.totalorder %v2290, 0
  %vm2299 = vcmp.lt.s32.totalorder %v2241, 0
  %vm2300 = vcmp.lt.s32.totalorder %v2248, 0
  %vm2301 = vcmp.lt.s32.totalorder %v2255, 0
  %vm2302 = vcmp.lt.s32.totalorder %v2262, 0
  %vm2303 = vcmp.lt.s32.totalorder %v2269, 0
  %vm2304 = vcmp.lt.s32.totalorder %v2276, 0
  %vm2305 = vcmp.lt.s32.totalorder %v2283, 0
  %vm2306 = vcmp.lt.s32.totalorder %v2290, 0
  %vm2307 = vmand %vm2299, %vm2291
  %vm2308 = vmand %vm2300, %vm2292
  %vm2309 = vmand %vm2301, %vm2293
  %vm2310 = vmand %vm2302, %vm2294
  %vm2311 = vmand %vm2303, %vm2295
  %vm2312 = vmand %vm2304, %vm2296
  %vm2313 = vmand %vm2305, %vm2297
  %vm2314 = vmand %vm2306, %vm2298
  %v2315 = vadd.s32 %v2241, 8
  %v2316 = vadd.s32 %v2248, 8
  %v2317 = vadd.s32 %v2255, 8
  %v2318 = vadd.s32 %v2262, 8
  %v2319 = vadd.s32 %v2269, 8
  %v2320 = vadd.s32 %v2276, 8
  %v2321 = vadd.s32 %v2283, 8
  %v2322 = vadd.s32 %v2290, 8
  %v2323 = vsel %vm2307, %v2315, %v2241
  %v2324 = vsel %vm2308, %v2316, %v2248
  %v2325 = vsel %vm2309, %v2317, %v2255
  %v2326 = vsel %vm2310, %v2318, %v2262
  %v2327 = vsel %vm2311, %v2319, %v2269
  %v2328 = vsel %vm2312, %v2320, %v2276
  %v2329 = vsel %vm2313, %v2321, %v2283
  %v2330 = vsel %vm2314, %v2322, %v2290
  %vm2331 = vcmp.ge.s32.totalorder %v2323, 1
  %vm2332 = vcmp.ge.s32.totalorder %v2324, 1
  %vm2333 = vcmp.ge.s32.totalorder %v2325, 1
  %vm2334 = vcmp.ge.s32.totalorder %v2326, 1
  %vm2335 = vcmp.ge.s32.totalorder %v2327, 1
  %vm2336 = vcmp.ge.s32.totalorder %v2328, 1
  %vm2337 = vcmp.ge.s32.totalorder %v2329, 1
  %vm2338 = vcmp.ge.s32.totalorder %v2330, 1
  %vm2339 = vcmp.le.s32.totalorder %v2323, 6
  %vm2340 = vcmp.le.s32.totalorder %v2324, 6
  %vm2341 = vcmp.le.s32.totalorder %v2325, 6
  %vm2342 = vcmp.le.s32.totalorder %v2326, 6
  %vm2343 = vcmp.le.s32.totalorder %v2327, 6
  %vm2344 = vcmp.le.s32.totalorder %v2328, 6
  %vm2345 = vcmp.le.s32.totalorder %v2329, 6
  %vm2346 = vcmp.le.s32.totalorder %v2330, 6
  %v2347 = vld [vmem:[%s6] sm:$0x1]
  %v2349 = vlaneseq
  %v2350 = vshrl.u32 %v2349, 7
  %v2351 = vsub.s32 0, %v2350
  %v2352 = vrot.slane %v2347, %v2351
  %v2354 = vadd.f32 %v2352, 0.0
  %v2355 = vsel %vm2331, 1, 0
  %v2356 = vsel %vm2332, 1, 0
  %v2357 = vsel %vm2333, 1, 0
  %v2358 = vsel %vm2334, 1, 0
  %v2359 = vsel %vm2335, 1, 0
  %v2360 = vsel %vm2336, 1, 0
  %v2361 = vsel %vm2337, 1, 0
  %v2362 = vsel %vm2338, 1, 0
  %vm2363 = vcmp.eq.s32.totalorder %v2355, 1
  %vm2364 = vcmp.eq.s32.totalorder %v2356, 1
  %vm2365 = vcmp.eq.s32.totalorder %v2357, 1
  %vm2366 = vcmp.eq.s32.totalorder %v2358, 1
  %vm2367 = vcmp.eq.s32.totalorder %v2359, 1
  %vm2368 = vcmp.eq.s32.totalorder %v2360, 1
  %vm2369 = vcmp.eq.s32.totalorder %v2361, 1
  %vm2370 = vcmp.eq.s32.totalorder %v2362, 1
  %vm2443 = vcmask 1040384
  %v2444 = vrot.slane %v2128, 7
  %v2445 = vrot.slane %v2129, 7
  %v2446 = vsel %vm2443, %v2444, %v2445
  %v2447 = vrot.slane %v2130, 7
  %v2448 = vsel %vm2443, %v2445, %v2447
  %v2449 = vrot.slane %v2131, 7
  %v2450 = vsel %vm2443, %v2447, %v2449
  %v2451 = vrot.slane %v2132, 7
  %v2452 = vsel %vm2443, %v2449, %v2451
  %v2453 = vrot.slane %v2133, 7
  %v2454 = vsel %vm2443, %v2451, %v2453
  %v2455 = vrot.slane %v2134, 7
  %v2456 = vsel %vm2443, %v2453, %v2455
  %v2457 = vrot.slane %v2135, 7
  %v2458 = vsel %vm2443, %v2455, %v2457
  %v2459 = vrot.slane %v2136, 7
  %v2460 = vsel %vm2443, %v2457, %v2459
  %v2461 = vrot.slane %v2140, 7
  %v2462 = vrot.slane %v2141, 7
  %v2463 = vsel %vm2443, %v2461, %v2462
  %v2464 = vrot.slane %v2142, 7
  %v2465 = vsel %vm2443, %v2462, %v2464
  %v2466 = vrot.slane %v2143, 7
  %v2467 = vsel %vm2443, %v2464, %v2466
  %v2468 = vrot.slane %v2144, 7
  %v2469 = vsel %vm2443, %v2466, %v2468
  %v2470 = vrot.slane %v2145, 7
  %v2471 = vsel %vm2443, %v2468, %v2470
  %v2472 = vrot.slane %v2146, 7
  %v2473 = vsel %vm2443, %v2470, %v2472
  %v2474 = vrot.slane %v2147, 7
  %v2475 = vsel %vm2443, %v2472, %v2474
  %v2476 = vrot.slane %v2148, 7
  %v2477 = vsel %vm2443, %v2474, %v2476
  %v2478 = vrot.slane %v2152, 7
  %v2479 = vrot.slane %v2153, 7
  %v2480 = vsel %vm2443, %v2478, %v2479
  %v2481 = vrot.slane %v2154, 7
  %v2482 = vsel %vm2443, %v2479, %v2481
  %v2483 = vrot.slane %v2155, 7
  %v2484 = vsel %vm2443, %v2481, %v2483
  %v2485 = vrot.slane %v2156, 7
  %v2486 = vsel %vm2443, %v2483, %v2485
  %v2487 = vrot.slane %v2157, 7
  %v2488 = vsel %vm2443, %v2485, %v2487
  %v2489 = vrot.slane %v2158, 7
  %v2490 = vsel %vm2443, %v2487, %v2489
  %v2491 = vrot.slane %v2159, 7
  %v2492 = vsel %vm2443, %v2489, %v2491
  %v2493 = vrot.slane %v2160, 7
  %v2494 = vsel %vm2443, %v2491, %v2493
  %v2495 = vrot.slane %v2164, 7
  %v2496 = vrot.slane %v2165, 7
  %v2497 = vsel %vm2443, %v2495, %v2496
  %v2498 = vrot.slane %v2166, 7
  %v2499 = vsel %vm2443, %v2496, %v2498
  %v2500 = vrot.slane %v2167, 7
  %v2501 = vsel %vm2443, %v2498, %v2500
  %v2502 = vrot.slane %v2168, 7
  %v2503 = vsel %vm2443, %v2500, %v2502
  %v2504 = vrot.slane %v2169, 7
  %v2505 = vsel %vm2443, %v2502, %v2504
  %v2506 = vrot.slane %v2170, 7
  %v2507 = vsel %vm2443, %v2504, %v2506
  %v2508 = vrot.slane %v2171, 7
  %v2509 = vsel %vm2443, %v2506, %v2508
  %v2510 = vrot.slane %v2172, 7
  %v2511 = vsel %vm2443, %v2508, %v2510
  %v2512 = vrot.slane %v2176, 7
  %v2513 = vrot.slane %v2177, 7
  %v2514 = vsel %vm2443, %v2512, %v2513
  %v2515 = vrot.slane %v2178, 7
  %v2516 = vsel %vm2443, %v2513, %v2515
  %v2517 = vrot.slane %v2179, 7
  %v2518 = vsel %vm2443, %v2515, %v2517
  %v2519 = vrot.slane %v2180, 7
  %v2520 = vsel %vm2443, %v2517, %v2519
  %v2521 = vrot.slane %v2181, 7
  %v2522 = vsel %vm2443, %v2519, %v2521
  %v2523 = vrot.slane %v2182, 7
  %v2524 = vsel %vm2443, %v2521, %v2523
  %v2525 = vrot.slane %v2183, 7
  %v2526 = vsel %vm2443, %v2523, %v2525
  %v2527 = vrot.slane %v2184, 7
  %v2528 = vsel %vm2443, %v2525, %v2527
  %v2529 = vrot.slane %v2188, 7
  %v2530 = vrot.slane %v2189, 7
  %v2531 = vsel %vm2443, %v2529, %v2530
  %v2532 = vrot.slane %v2190, 7
  %v2533 = vsel %vm2443, %v2530, %v2532
  %v2534 = vrot.slane %v2191, 7
  %v2535 = vsel %vm2443, %v2532, %v2534
  %v2536 = vrot.slane %v2192, 7
  %v2537 = vsel %vm2443, %v2534, %v2536
  %v2538 = vrot.slane %v2193, 7
  %v2539 = vsel %vm2443, %v2536, %v2538
  %v2540 = vrot.slane %v2194, 7
  %v2541 = vsel %vm2443, %v2538, %v2540
  %v2542 = vrot.slane %v2195, 7
  %v2543 = vsel %vm2443, %v2540, %v2542
  %v2544 = vrot.slane %v2196, 7
  %v2545 = vsel %vm2443, %v2542, %v2544
  %v2546 = vrot.slane %v2200, 7
  %v2547 = vrot.slane %v2201, 7
  %v2548 = vsel %vm2443, %v2546, %v2547
  %v2549 = vrot.slane %v2202, 7
  %v2550 = vsel %vm2443, %v2547, %v2549
  %v2551 = vrot.slane %v2203, 7
  %v2552 = vsel %vm2443, %v2549, %v2551
  %v2553 = vrot.slane %v2204, 7
  %v2554 = vsel %vm2443, %v2551, %v2553
  %v2555 = vrot.slane %v2205, 7
  %v2556 = vsel %vm2443, %v2553, %v2555
  %v2557 = vrot.slane %v2206, 7
  %v2558 = vsel %vm2443, %v2555, %v2557
  %v2559 = vrot.slane %v2207, 7
  %v2560 = vsel %vm2443, %v2557, %v2559
  %v2561 = vrot.slane %v2208, 7
  %v2562 = vsel %vm2443, %v2559, %v2561
  %v2563 = vrot.slane %v2212, 7
  %v2564 = vrot.slane %v2213, 7
  %v2565 = vsel %vm2443, %v2563, %v2564
  %v2566 = vrot.slane %v2214, 7
  %v2567 = vsel %vm2443, %v2564, %v2566
  %v2568 = vrot.slane %v2215, 7
  %v2569 = vsel %vm2443, %v2566, %v2568
  %v2570 = vrot.slane %v2216, 7
  %v2571 = vsel %vm2443, %v2568, %v2570
  %v2572 = vrot.slane %v2217, 7
  %v2573 = vsel %vm2443, %v2570, %v2572
  %v2574 = vrot.slane %v2218, 7
  %v2575 = vsel %vm2443, %v2572, %v2574
  %v2576 = vrot.slane %v2219, 7
  %v2577 = vsel %vm2443, %v2574, %v2576
  %v2578 = vrot.slane %v2220, 7
  %v2579 = vsel %vm2443, %v2576, %v2578
  %v2644 = vsel %vm2363, %v2446, 0.0
  %v2645 = vsel %vm2364, %v2448, 0.0
  %v2646 = vsel %vm2365, %v2450, 0.0
  %v2647 = vsel %vm2366, %v2452, 0.0
  %v2648 = vsel %vm2367, %v2454, 0.0
  %v2649 = vsel %vm2368, %v2456, 0.0
  %v2650 = vsel %vm2369, %v2458, 0.0
  %v2651 = vsel %vm2370, %v2460, 0.0
  %v2652 = vsel %vm2363, %v2463, 0.0
  %v2653 = vsel %vm2364, %v2465, 0.0
  %v2654 = vsel %vm2365, %v2467, 0.0
  %v2655 = vsel %vm2366, %v2469, 0.0
  %v2656 = vsel %vm2367, %v2471, 0.0
  %v2657 = vsel %vm2368, %v2473, 0.0
  %v2658 = vsel %vm2369, %v2475, 0.0
  %v2659 = vsel %vm2370, %v2477, 0.0
  %v2660 = vsel %vm2363, %v2480, 0.0
  %v2661 = vsel %vm2364, %v2482, 0.0
  %v2662 = vsel %vm2365, %v2484, 0.0
  %v2663 = vsel %vm2366, %v2486, 0.0
  %v2664 = vsel %vm2367, %v2488, 0.0
  %v2665 = vsel %vm2368, %v2490, 0.0
  %v2666 = vsel %vm2369, %v2492, 0.0
  %v2667 = vsel %vm2370, %v2494, 0.0
  %v2668 = vsel %vm2363, %v2497, 0.0
  %v2669 = vsel %vm2364, %v2499, 0.0
  %v2670 = vsel %vm2365, %v2501, 0.0
  %v2671 = vsel %vm2366, %v2503, 0.0
  %v2672 = vsel %vm2367, %v2505, 0.0
  %v2673 = vsel %vm2368, %v2507, 0.0
  %v2674 = vsel %vm2369, %v2509, 0.0
  %v2675 = vsel %vm2370, %v2511, 0.0
  %v2676 = vsel %vm2363, %v2514, 0.0
  %v2677 = vsel %vm2364, %v2516, 0.0
  %v2678 = vsel %vm2365, %v2518, 0.0
  %v2679 = vsel %vm2366, %v2520, 0.0
  %v2680 = vsel %vm2367, %v2522, 0.0
  %v2681 = vsel %vm2368, %v2524, 0.0
  %v2682 = vsel %vm2369, %v2526, 0.0
  %v2683 = vsel %vm2370, %v2528, 0.0
  %v2684 = vsel %vm2363, %v2531, 0.0
  %v2685 = vsel %vm2364, %v2533, 0.0
  %v2686 = vsel %vm2365, %v2535, 0.0
  %v2687 = vsel %vm2366, %v2537, 0.0
  %v2688 = vsel %vm2367, %v2539, 0.0
  %v2689 = vsel %vm2368, %v2541, 0.0
  %v2690 = vsel %vm2369, %v2543, 0.0
  %v2691 = vsel %vm2370, %v2545, 0.0
  %v2692 = vsel %vm2363, %v2548, 0.0
  %v2693 = vsel %vm2364, %v2550, 0.0
  %v2694 = vsel %vm2365, %v2552, 0.0
  %v2695 = vsel %vm2366, %v2554, 0.0
  %v2696 = vsel %vm2367, %v2556, 0.0
  %v2697 = vsel %vm2368, %v2558, 0.0
  %v2698 = vsel %vm2369, %v2560, 0.0
  %v2699 = vsel %vm2370, %v2562, 0.0
  %v2700 = vsel %vm2363, %v2565, 0.0
  %v2701 = vsel %vm2364, %v2567, 0.0
  %v2702 = vsel %vm2365, %v2569, 0.0
  %v2703 = vsel %vm2366, %v2571, 0.0
  %v2704 = vsel %vm2367, %v2573, 0.0
  %v2705 = vsel %vm2368, %v2575, 0.0
  %v2706 = vsel %vm2369, %v2577, 0.0
  %v2707 = vsel %vm2370, %v2579, 0.0
  %v2708 = vlaneseq
  %v2709 = vshrl.u32 %v2708, 7
  %v2710 = vsub.s32 0, %v2709
  %v2711 = vrot.slane %v2224, %v2710
  %v2712 = vmul.f32 %v2644, %v2711
  %v2713 = vmul.f32 %v2645, %v2711
  %v2714 = vmul.f32 %v2646, %v2711
  %v2715 = vmul.f32 %v2647, %v2711
  %v2716 = vmul.f32 %v2648, %v2711
  %v2717 = vmul.f32 %v2649, %v2711
  %v2718 = vmul.f32 %v2650, %v2711
  %v2719 = vmul.f32 %v2651, %v2711
  %v2720 = vmul.f32 %v2652, %v2711
  %v2721 = vmul.f32 %v2653, %v2711
  %v2722 = vmul.f32 %v2654, %v2711
  %v2723 = vmul.f32 %v2655, %v2711
  %v2724 = vmul.f32 %v2656, %v2711
  %v2725 = vmul.f32 %v2657, %v2711
  %v2726 = vmul.f32 %v2658, %v2711
  %v2727 = vmul.f32 %v2659, %v2711
  %v2728 = vmul.f32 %v2660, %v2711
  %v2729 = vmul.f32 %v2661, %v2711
  %v2730 = vmul.f32 %v2662, %v2711
  %v2731 = vmul.f32 %v2663, %v2711
  %v2732 = vmul.f32 %v2664, %v2711
  %v2733 = vmul.f32 %v2665, %v2711
  %v2734 = vmul.f32 %v2666, %v2711
  %v2735 = vmul.f32 %v2667, %v2711
  %v2736 = vmul.f32 %v2668, %v2711
  %v2737 = vmul.f32 %v2669, %v2711
  %v2738 = vmul.f32 %v2670, %v2711
  %v2739 = vmul.f32 %v2671, %v2711
  %v2740 = vmul.f32 %v2672, %v2711
  %v2741 = vmul.f32 %v2673, %v2711
  %v2742 = vmul.f32 %v2674, %v2711
  %v2743 = vmul.f32 %v2675, %v2711
  %v2744 = vmul.f32 %v2676, %v2711
  %v2745 = vmul.f32 %v2677, %v2711
  %v2746 = vmul.f32 %v2678, %v2711
  %v2747 = vmul.f32 %v2679, %v2711
  %v2748 = vmul.f32 %v2680, %v2711
  %v2749 = vmul.f32 %v2681, %v2711
  %v2750 = vmul.f32 %v2682, %v2711
  %v2751 = vmul.f32 %v2683, %v2711
  %v2752 = vmul.f32 %v2684, %v2711
  %v2753 = vmul.f32 %v2685, %v2711
  %v2754 = vmul.f32 %v2686, %v2711
  %v2755 = vmul.f32 %v2687, %v2711
  %v2756 = vmul.f32 %v2688, %v2711
  %v2757 = vmul.f32 %v2689, %v2711
  %v2758 = vmul.f32 %v2690, %v2711
  %v2759 = vmul.f32 %v2691, %v2711
  %v2760 = vmul.f32 %v2692, %v2711
  %v2761 = vmul.f32 %v2693, %v2711
  %v2762 = vmul.f32 %v2694, %v2711
  %v2763 = vmul.f32 %v2695, %v2711
  %v2764 = vmul.f32 %v2696, %v2711
  %v2765 = vmul.f32 %v2697, %v2711
  %v2766 = vmul.f32 %v2698, %v2711
  %v2767 = vmul.f32 %v2699, %v2711
  %v2768 = vmul.f32 %v2700, %v2711
  %v2769 = vmul.f32 %v2701, %v2711
  %v2770 = vmul.f32 %v2702, %v2711
  %v2771 = vmul.f32 %v2703, %v2711
  %v2772 = vmul.f32 %v2704, %v2711
  %v2773 = vmul.f32 %v2705, %v2711
  %v2774 = vmul.f32 %v2706, %v2711
  %v2775 = vmul.f32 %v2707, %v2711
  %v2776 = vadd.f32 %v2354, %v2712
  %v2777 = vadd.f32 %v2354, %v2713
  %v2778 = vadd.f32 %v2354, %v2714
  %v2779 = vadd.f32 %v2354, %v2715
  %v2780 = vadd.f32 %v2354, %v2716
  %v2781 = vadd.f32 %v2354, %v2717
  %v2782 = vadd.f32 %v2354, %v2718
  %v2783 = vadd.f32 %v2354, %v2719
  %v2784 = vadd.f32 %v2354, %v2720
  %v2785 = vadd.f32 %v2354, %v2721
  %v2786 = vadd.f32 %v2354, %v2722
  %v2787 = vadd.f32 %v2354, %v2723
  %v2788 = vadd.f32 %v2354, %v2724
  %v2789 = vadd.f32 %v2354, %v2725
  %v2790 = vadd.f32 %v2354, %v2726
  %v2791 = vadd.f32 %v2354, %v2727
  %v2792 = vadd.f32 %v2354, %v2728
  %v2793 = vadd.f32 %v2354, %v2729
  %v2794 = vadd.f32 %v2354, %v2730
  %v2795 = vadd.f32 %v2354, %v2731
  %v2796 = vadd.f32 %v2354, %v2732
  %v2797 = vadd.f32 %v2354, %v2733
  %v2798 = vadd.f32 %v2354, %v2734
  %v2799 = vadd.f32 %v2354, %v2735
  %v2800 = vadd.f32 %v2354, %v2736
  %v2801 = vadd.f32 %v2354, %v2737
  %v2802 = vadd.f32 %v2354, %v2738
  %v2803 = vadd.f32 %v2354, %v2739
  %v2804 = vadd.f32 %v2354, %v2740
  %v2805 = vadd.f32 %v2354, %v2741
  %v2806 = vadd.f32 %v2354, %v2742
  %v2807 = vadd.f32 %v2354, %v2743
  %v2808 = vadd.f32 %v2354, %v2744
  %v2809 = vadd.f32 %v2354, %v2745
  %v2810 = vadd.f32 %v2354, %v2746
  %v2811 = vadd.f32 %v2354, %v2747
  %v2812 = vadd.f32 %v2354, %v2748
  %v2813 = vadd.f32 %v2354, %v2749
  %v2814 = vadd.f32 %v2354, %v2750
  %v2815 = vadd.f32 %v2354, %v2751
  %v2816 = vadd.f32 %v2354, %v2752
  %v2817 = vadd.f32 %v2354, %v2753
  %v2818 = vadd.f32 %v2354, %v2754
  %v2819 = vadd.f32 %v2354, %v2755
  %v2820 = vadd.f32 %v2354, %v2756
  %v2821 = vadd.f32 %v2354, %v2757
  %v2822 = vadd.f32 %v2354, %v2758
  %v2823 = vadd.f32 %v2354, %v2759
  %v2824 = vadd.f32 %v2354, %v2760
  %v2825 = vadd.f32 %v2354, %v2761
  %v2826 = vadd.f32 %v2354, %v2762
  %v2827 = vadd.f32 %v2354, %v2763
  %v2828 = vadd.f32 %v2354, %v2764
  %v2829 = vadd.f32 %v2354, %v2765
  %v2830 = vadd.f32 %v2354, %v2766
  %v2831 = vadd.f32 %v2354, %v2767
  %v2832 = vadd.f32 %v2354, %v2768
  %v2833 = vadd.f32 %v2354, %v2769
  %v2834 = vadd.f32 %v2354, %v2770
  %v2835 = vadd.f32 %v2354, %v2771
  %v2836 = vadd.f32 %v2354, %v2772
  %v2837 = vadd.f32 %v2354, %v2773
  %v2838 = vadd.f32 %v2354, %v2774
  %v2839 = vadd.f32 %v2354, %v2775
  %v2840 = vlaneseq
  %v2841 = vshrl.u32 %v2840, 7
  %v2842 = vsub.s32 1, %v2841
  %v2843 = vrot.slane %v2224, %v2842
  %v2844 = vmul.f32 %v2129, %v2843
  %v2845 = vmul.f32 %v2130, %v2843
  %v2846 = vmul.f32 %v2131, %v2843
  %v2847 = vmul.f32 %v2132, %v2843
  %v2848 = vmul.f32 %v2133, %v2843
  %v2849 = vmul.f32 %v2134, %v2843
  %v2850 = vmul.f32 %v2135, %v2843
  %v2851 = vmul.f32 %v2136, %v2843
  %v2852 = vmul.f32 %v2141, %v2843
  %v2853 = vmul.f32 %v2142, %v2843
  %v2854 = vmul.f32 %v2143, %v2843
  %v2855 = vmul.f32 %v2144, %v2843
  %v2856 = vmul.f32 %v2145, %v2843
  %v2857 = vmul.f32 %v2146, %v2843
  %v2858 = vmul.f32 %v2147, %v2843
  %v2859 = vmul.f32 %v2148, %v2843
  %v2860 = vmul.f32 %v2153, %v2843
  %v2861 = vmul.f32 %v2154, %v2843
  %v2862 = vmul.f32 %v2155, %v2843
  %v2863 = vmul.f32 %v2156, %v2843
  %v2864 = vmul.f32 %v2157, %v2843
  %v2865 = vmul.f32 %v2158, %v2843
  %v2866 = vmul.f32 %v2159, %v2843
  %v2867 = vmul.f32 %v2160, %v2843
  %v2868 = vmul.f32 %v2165, %v2843
  %v2869 = vmul.f32 %v2166, %v2843
  %v2870 = vmul.f32 %v2167, %v2843
  %v2871 = vmul.f32 %v2168, %v2843
  %v2872 = vmul.f32 %v2169, %v2843
  %v2873 = vmul.f32 %v2170, %v2843
  %v2874 = vmul.f32 %v2171, %v2843
  %v2875 = vmul.f32 %v2172, %v2843
  %v2876 = vmul.f32 %v2177, %v2843
  %v2877 = vmul.f32 %v2178, %v2843
  %v2878 = vmul.f32 %v2179, %v2843
  %v2879 = vmul.f32 %v2180, %v2843
  %v2880 = vmul.f32 %v2181, %v2843
  %v2881 = vmul.f32 %v2182, %v2843
  %v2882 = vmul.f32 %v2183, %v2843
  %v2883 = vmul.f32 %v2184, %v2843
  %v2884 = vmul.f32 %v2189, %v2843
  %v2885 = vmul.f32 %v2190, %v2843
  %v2886 = vmul.f32 %v2191, %v2843
  %v2887 = vmul.f32 %v2192, %v2843
  %v2888 = vmul.f32 %v2193, %v2843
  %v2889 = vmul.f32 %v2194, %v2843
  %v2890 = vmul.f32 %v2195, %v2843
  %v2891 = vmul.f32 %v2196, %v2843
  %v2892 = vmul.f32 %v2201, %v2843
  %v2893 = vmul.f32 %v2202, %v2843
  %v2894 = vmul.f32 %v2203, %v2843
  %v2895 = vmul.f32 %v2204, %v2843
  %v2896 = vmul.f32 %v2205, %v2843
  %v2897 = vmul.f32 %v2206, %v2843
  %v2898 = vmul.f32 %v2207, %v2843
  %v2899 = vmul.f32 %v2208, %v2843
  %v2900 = vmul.f32 %v2213, %v2843
  %v2901 = vmul.f32 %v2214, %v2843
  %v2902 = vmul.f32 %v2215, %v2843
  %v2903 = vmul.f32 %v2216, %v2843
  %v2904 = vmul.f32 %v2217, %v2843
  %v2905 = vmul.f32 %v2218, %v2843
  %v2906 = vmul.f32 %v2219, %v2843
  %v2907 = vmul.f32 %v2220, %v2843
  %v2908 = vadd.f32 %v2776, %v2844
  %v2909 = vadd.f32 %v2777, %v2845
  %v2910 = vadd.f32 %v2778, %v2846
  %v2911 = vadd.f32 %v2779, %v2847
  %v2912 = vadd.f32 %v2780, %v2848
  %v2913 = vadd.f32 %v2781, %v2849
  %v2914 = vadd.f32 %v2782, %v2850
  %v2915 = vadd.f32 %v2783, %v2851
  %v2916 = vadd.f32 %v2784, %v2852
  %v2917 = vadd.f32 %v2785, %v2853
  %v2918 = vadd.f32 %v2786, %v2854
  %v2919 = vadd.f32 %v2787, %v2855
  %v2920 = vadd.f32 %v2788, %v2856
  %v2921 = vadd.f32 %v2789, %v2857
  %v2922 = vadd.f32 %v2790, %v2858
  %v2923 = vadd.f32 %v2791, %v2859
  %v2924 = vadd.f32 %v2792, %v2860
  %v2925 = vadd.f32 %v2793, %v2861
  %v2926 = vadd.f32 %v2794, %v2862
  %v2927 = vadd.f32 %v2795, %v2863
  %v2928 = vadd.f32 %v2796, %v2864
  %v2929 = vadd.f32 %v2797, %v2865
  %v2930 = vadd.f32 %v2798, %v2866
  %v2931 = vadd.f32 %v2799, %v2867
  %v2932 = vadd.f32 %v2800, %v2868
  %v2933 = vadd.f32 %v2801, %v2869
  %v2934 = vadd.f32 %v2802, %v2870
  %v2935 = vadd.f32 %v2803, %v2871
  %v2936 = vadd.f32 %v2804, %v2872
  %v2937 = vadd.f32 %v2805, %v2873
  %v2938 = vadd.f32 %v2806, %v2874
  %v2939 = vadd.f32 %v2807, %v2875
  %v2940 = vadd.f32 %v2808, %v2876
  %v2941 = vadd.f32 %v2809, %v2877
  %v2942 = vadd.f32 %v2810, %v2878
  %v2943 = vadd.f32 %v2811, %v2879
  %v2944 = vadd.f32 %v2812, %v2880
  %v2945 = vadd.f32 %v2813, %v2881
  %v2946 = vadd.f32 %v2814, %v2882
  %v2947 = vadd.f32 %v2815, %v2883
  %v2948 = vadd.f32 %v2816, %v2884
  %v2949 = vadd.f32 %v2817, %v2885
  %v2950 = vadd.f32 %v2818, %v2886
  %v2951 = vadd.f32 %v2819, %v2887
  %v2952 = vadd.f32 %v2820, %v2888
  %v2953 = vadd.f32 %v2821, %v2889
  %v2954 = vadd.f32 %v2822, %v2890
  %v2955 = vadd.f32 %v2823, %v2891
  %v2956 = vadd.f32 %v2824, %v2892
  %v2957 = vadd.f32 %v2825, %v2893
  %v2958 = vadd.f32 %v2826, %v2894
  %v2959 = vadd.f32 %v2827, %v2895
  %v2960 = vadd.f32 %v2828, %v2896
  %v2961 = vadd.f32 %v2829, %v2897
  %v2962 = vadd.f32 %v2830, %v2898
  %v2963 = vadd.f32 %v2831, %v2899
  %v2964 = vadd.f32 %v2832, %v2900
  %v2965 = vadd.f32 %v2833, %v2901
  %v2966 = vadd.f32 %v2834, %v2902
  %v2967 = vadd.f32 %v2835, %v2903
  %v2968 = vadd.f32 %v2836, %v2904
  %v2969 = vadd.f32 %v2837, %v2905
  %v2970 = vadd.f32 %v2838, %v2906
  %v2971 = vadd.f32 %v2839, %v2907
  %v2972 = vsel %vm2339, 1, 0
  %v2973 = vsel %vm2340, 1, 0
  %v2974 = vsel %vm2341, 1, 0
  %v2975 = vsel %vm2342, 1, 0
  %v2976 = vsel %vm2343, 1, 0
  %v2977 = vsel %vm2344, 1, 0
  %v2978 = vsel %vm2345, 1, 0
  %v2979 = vsel %vm2346, 1, 0
  %vm2980 = vcmp.eq.s32.totalorder %v2972, 1
  %vm2981 = vcmp.eq.s32.totalorder %v2973, 1
  %vm2982 = vcmp.eq.s32.totalorder %v2974, 1
  %vm2983 = vcmp.eq.s32.totalorder %v2975, 1
  %vm2984 = vcmp.eq.s32.totalorder %v2976, 1
  %vm2985 = vcmp.eq.s32.totalorder %v2977, 1
  %vm2986 = vcmp.eq.s32.totalorder %v2978, 1
  %vm2987 = vcmp.eq.s32.totalorder %v2979, 1
  %vm2996 = vcmask 1046528
  %v2997 = vrot.slane %v2129, 1
  %v2998 = vrot.slane %v2130, 1
  %v2999 = vsel %vm2996, %v2997, %v2998
  %v3000 = vrot.slane %v2131, 1
  %v3001 = vsel %vm2996, %v2998, %v3000
  %v3002 = vrot.slane %v2132, 1
  %v3003 = vsel %vm2996, %v3000, %v3002
  %v3004 = vrot.slane %v2133, 1
  %v3005 = vsel %vm2996, %v3002, %v3004
  %v3006 = vrot.slane %v2134, 1
  %v3007 = vsel %vm2996, %v3004, %v3006
  %v3008 = vrot.slane %v2135, 1
  %v3009 = vsel %vm2996, %v3006, %v3008
  %v3010 = vrot.slane %v2136, 1
  %v3011 = vsel %vm2996, %v3008, %v3010
  %v3012 = vrot.slane %v2137, 1
  %v3013 = vsel %vm2996, %v3010, %v3012
  %v3014 = vrot.slane %v2141, 1
  %v3015 = vrot.slane %v2142, 1
  %v3016 = vsel %vm2996, %v3014, %v3015
  %v3017 = vrot.slane %v2143, 1
  %v3018 = vsel %vm2996, %v3015, %v3017
  %v3019 = vrot.slane %v2144, 1
  %v3020 = vsel %vm2996, %v3017, %v3019
  %v3021 = vrot.slane %v2145, 1
  %v3022 = vsel %vm2996, %v3019, %v3021
  %v3023 = vrot.slane %v2146, 1
  %v3024 = vsel %vm2996, %v3021, %v3023
  %v3025 = vrot.slane %v2147, 1
  %v3026 = vsel %vm2996, %v3023, %v3025
  %v3027 = vrot.slane %v2148, 1
  %v3028 = vsel %vm2996, %v3025, %v3027
  %v3029 = vrot.slane %v2149, 1
  %v3030 = vsel %vm2996, %v3027, %v3029
  %v3031 = vrot.slane %v2153, 1
  %v3032 = vrot.slane %v2154, 1
  %v3033 = vsel %vm2996, %v3031, %v3032
  %v3034 = vrot.slane %v2155, 1
  %v3035 = vsel %vm2996, %v3032, %v3034
  %v3036 = vrot.slane %v2156, 1
  %v3037 = vsel %vm2996, %v3034, %v3036
  %v3038 = vrot.slane %v2157, 1
  %v3039 = vsel %vm2996, %v3036, %v3038
  %v3040 = vrot.slane %v2158, 1
  %v3041 = vsel %vm2996, %v3038, %v3040
  %v3042 = vrot.slane %v2159, 1
  %v3043 = vsel %vm2996, %v3040, %v3042
  %v3044 = vrot.slane %v2160, 1
  %v3045 = vsel %vm2996, %v3042, %v3044
  %v3046 = vrot.slane %v2161, 1
  %v3047 = vsel %vm2996, %v3044, %v3046
  %v3048 = vrot.slane %v2165, 1
  %v3049 = vrot.slane %v2166, 1
  %v3050 = vsel %vm2996, %v3048, %v3049
  %v3051 = vrot.slane %v2167, 1
  %v3052 = vsel %vm2996, %v3049, %v3051
  %v3053 = vrot.slane %v2168, 1
  %v3054 = vsel %vm2996, %v3051, %v3053
  %v3055 = vrot.slane %v2169, 1
  %v3056 = vsel %vm2996, %v3053, %v3055
  %v3057 = vrot.slane %v2170, 1
  %v3058 = vsel %vm2996, %v3055, %v3057
  %v3059 = vrot.slane %v2171, 1
  %v3060 = vsel %vm2996, %v3057, %v3059
  %v3061 = vrot.slane %v2172, 1
  %v3062 = vsel %vm2996, %v3059, %v3061
  %v3063 = vrot.slane %v2173, 1
  %v3064 = vsel %vm2996, %v3061, %v3063
  %v3065 = vrot.slane %v2177, 1
  %v3066 = vrot.slane %v2178, 1
  %v3067 = vsel %vm2996, %v3065, %v3066
  %v3068 = vrot.slane %v2179, 1
  %v3069 = vsel %vm2996, %v3066, %v3068
  %v3070 = vrot.slane %v2180, 1
  %v3071 = vsel %vm2996, %v3068, %v3070
  %v3072 = vrot.slane %v2181, 1
  %v3073 = vsel %vm2996, %v3070, %v3072
  %v3074 = vrot.slane %v2182, 1
  %v3075 = vsel %vm2996, %v3072, %v3074
  %v3076 = vrot.slane %v2183, 1
  %v3077 = vsel %vm2996, %v3074, %v3076
  %v3078 = vrot.slane %v2184, 1
  %v3079 = vsel %vm2996, %v3076, %v3078
  %v3080 = vrot.slane %v2185, 1
  %v3081 = vsel %vm2996, %v3078, %v3080
  %v3082 = vrot.slane %v2189, 1
  %v3083 = vrot.slane %v2190, 1
  %v3084 = vsel %vm2996, %v3082, %v3083
  %v3085 = vrot.slane %v2191, 1
  %v3086 = vsel %vm2996, %v3083, %v3085
  %v3087 = vrot.slane %v2192, 1
  %v3088 = vsel %vm2996, %v3085, %v3087
  %v3089 = vrot.slane %v2193, 1
  %v3090 = vsel %vm2996, %v3087, %v3089
  %v3091 = vrot.slane %v2194, 1
  %v3092 = vsel %vm2996, %v3089, %v3091
  %v3093 = vrot.slane %v2195, 1
  %v3094 = vsel %vm2996, %v3091, %v3093
  %v3095 = vrot.slane %v2196, 1
  %v3096 = vsel %vm2996, %v3093, %v3095
  %v3097 = vrot.slane %v2197, 1
  %v3098 = vsel %vm2996, %v3095, %v3097
  %v3099 = vrot.slane %v2201, 1
  %v3100 = vrot.slane %v2202, 1
  %v3101 = vsel %vm2996, %v3099, %v3100
  %v3102 = vrot.slane %v2203, 1
  %v3103 = vsel %vm2996, %v3100, %v3102
  %v3104 = vrot.slane %v2204, 1
  %v3105 = vsel %vm2996, %v3102, %v3104
  %v3106 = vrot.slane %v2205, 1
  %v3107 = vsel %vm2996, %v3104, %v3106
  %v3108 = vrot.slane %v2206, 1
  %v3109 = vsel %vm2996, %v3106, %v3108
  %v3110 = vrot.slane %v2207, 1
  %v3111 = vsel %vm2996, %v3108, %v3110
  %v3112 = vrot.slane %v2208, 1
  %v3113 = vsel %vm2996, %v3110, %v3112
  %v3114 = vrot.slane %v2209, 1
  %v3115 = vsel %vm2996, %v3112, %v3114
  %v3116 = vrot.slane %v2213, 1
  %v3117 = vrot.slane %v2214, 1
  %v3118 = vsel %vm2996, %v3116, %v3117
  %v3119 = vrot.slane %v2215, 1
  %v3120 = vsel %vm2996, %v3117, %v3119
  %v3121 = vrot.slane %v2216, 1
  %v3122 = vsel %vm2996, %v3119, %v3121
  %v3123 = vrot.slane %v2217, 1
  %v3124 = vsel %vm2996, %v3121, %v3123
  %v3125 = vrot.slane %v2218, 1
  %v3126 = vsel %vm2996, %v3123, %v3125
  %v3127 = vrot.slane %v2219, 1
  %v3128 = vsel %vm2996, %v3125, %v3127
  %v3129 = vrot.slane %v2220, 1
  %v3130 = vsel %vm2996, %v3127, %v3129
  %v3131 = vrot.slane %v2221, 1
  %v3132 = vsel %vm2996, %v3129, %v3131
  %v3197 = vsel %vm2980, %v2999, 0.0
  %v3198 = vsel %vm2981, %v3001, 0.0
  %v3199 = vsel %vm2982, %v3003, 0.0
  %v3200 = vsel %vm2983, %v3005, 0.0
  %v3201 = vsel %vm2984, %v3007, 0.0
  %v3202 = vsel %vm2985, %v3009, 0.0
  %v3203 = vsel %vm2986, %v3011, 0.0
  %v3204 = vsel %vm2987, %v3013, 0.0
  %v3205 = vsel %vm2980, %v3016, 0.0
  %v3206 = vsel %vm2981, %v3018, 0.0
  %v3207 = vsel %vm2982, %v3020, 0.0
  %v3208 = vsel %vm2983, %v3022, 0.0
  %v3209 = vsel %vm2984, %v3024, 0.0
  %v3210 = vsel %vm2985, %v3026, 0.0
  %v3211 = vsel %vm2986, %v3028, 0.0
  %v3212 = vsel %vm2987, %v3030, 0.0
  %v3213 = vsel %vm2980, %v3033, 0.0
  %v3214 = vsel %vm2981, %v3035, 0.0
  %v3215 = vsel %vm2982, %v3037, 0.0
  %v3216 = vsel %vm2983, %v3039, 0.0
  %v3217 = vsel %vm2984, %v3041, 0.0
  %v3218 = vsel %vm2985, %v3043, 0.0
  %v3219 = vsel %vm2986, %v3045, 0.0
  %v3220 = vsel %vm2987, %v3047, 0.0
  %v3221 = vsel %vm2980, %v3050, 0.0
  %v3222 = vsel %vm2981, %v3052, 0.0
  %v3223 = vsel %vm2982, %v3054, 0.0
  %v3224 = vsel %vm2983, %v3056, 0.0
  %v3225 = vsel %vm2984, %v3058, 0.0
  %v3226 = vsel %vm2985, %v3060, 0.0
  %v3227 = vsel %vm2986, %v3062, 0.0
  %v3228 = vsel %vm2987, %v3064, 0.0
  %v3229 = vsel %vm2980, %v3067, 0.0
  %v3230 = vsel %vm2981, %v3069, 0.0
  %v3231 = vsel %vm2982, %v3071, 0.0
  %v3232 = vsel %vm2983, %v3073, 0.0
  %v3233 = vsel %vm2984, %v3075, 0.0
  %v3234 = vsel %vm2985, %v3077, 0.0
  %v3235 = vsel %vm2986, %v3079, 0.0
  %v3236 = vsel %vm2987, %v3081, 0.0
  %v3237 = vsel %vm2980, %v3084, 0.0
  %v3238 = vsel %vm2981, %v3086, 0.0
  %v3239 = vsel %vm2982, %v3088, 0.0
  %v3240 = vsel %vm2983, %v3090, 0.0
  %v3241 = vsel %vm2984, %v3092, 0.0
  %v3242 = vsel %vm2985, %v3094, 0.0
  %v3243 = vsel %vm2986, %v3096, 0.0
  %v3244 = vsel %vm2987, %v3098, 0.0
  %v3245 = vsel %vm2980, %v3101, 0.0
  %v3246 = vsel %vm2981, %v3103, 0.0
  %v3247 = vsel %vm2982, %v3105, 0.0
  %v3248 = vsel %vm2983, %v3107, 0.0
  %v3249 = vsel %vm2984, %v3109, 0.0
  %v3250 = vsel %vm2985, %v3111, 0.0
  %v3251 = vsel %vm2986, %v3113, 0.0
  %v3252 = vsel %vm2987, %v3115, 0.0
  %v3253 = vsel %vm2980, %v3118, 0.0
  %v3254 = vsel %vm2981, %v3120, 0.0
  %v3255 = vsel %vm2982, %v3122, 0.0
  %v3256 = vsel %vm2983, %v3124, 0.0
  %v3257 = vsel %vm2984, %v3126, 0.0
  %v3258 = vsel %vm2985, %v3128, 0.0
  %v3259 = vsel %vm2986, %v3130, 0.0
  %v3260 = vsel %vm2987, %v3132, 0.0
  %v3261 = vlaneseq
  %v3262 = vshrl.u32 %v3261, 7
  %v3263 = vsub.s32 2, %v3262
  %v3264 = vrot.slane %v2224, %v3263
  %v3265 = vmul.f32 %v3197, %v3264
  %v3266 = vmul.f32 %v3198, %v3264
  %v3267 = vmul.f32 %v3199, %v3264
  %v3268 = vmul.f32 %v3200, %v3264
  %v3269 = vmul.f32 %v3201, %v3264
  %v3270 = vmul.f32 %v3202, %v3264
  %v3271 = vmul.f32 %v3203, %v3264
  %v3272 = vmul.f32 %v3204, %v3264
  %v3273 = vmul.f32 %v3205, %v3264
  %v3274 = vmul.f32 %v3206, %v3264
  %v3275 = vmul.f32 %v3207, %v3264
  %v3276 = vmul.f32 %v3208, %v3264
  %v3277 = vmul.f32 %v3209, %v3264
  %v3278 = vmul.f32 %v3210, %v3264
  %v3279 = vmul.f32 %v3211, %v3264
  %v3280 = vmul.f32 %v3212, %v3264
  %v3281 = vmul.f32 %v3213, %v3264
  %v3282 = vmul.f32 %v3214, %v3264
  %v3283 = vmul.f32 %v3215, %v3264
  %v3284 = vmul.f32 %v3216, %v3264
  %v3285 = vmul.f32 %v3217, %v3264
  %v3286 = vmul.f32 %v3218, %v3264
  %v3287 = vmul.f32 %v3219, %v3264
  %v3288 = vmul.f32 %v3220, %v3264
  %v3289 = vmul.f32 %v3221, %v3264
  %v3290 = vmul.f32 %v3222, %v3264
  %v3291 = vmul.f32 %v3223, %v3264
  %v3292 = vmul.f32 %v3224, %v3264
  %v3293 = vmul.f32 %v3225, %v3264
  %v3294 = vmul.f32 %v3226, %v3264
  %v3295 = vmul.f32 %v3227, %v3264
  %v3296 = vmul.f32 %v3228, %v3264
  %v3297 = vmul.f32 %v3229, %v3264
  %v3298 = vmul.f32 %v3230, %v3264
  %v3299 = vmul.f32 %v3231, %v3264
  %v3300 = vmul.f32 %v3232, %v3264
  %v3301 = vmul.f32 %v3233, %v3264
  %v3302 = vmul.f32 %v3234, %v3264
  %v3303 = vmul.f32 %v3235, %v3264
  %v3304 = vmul.f32 %v3236, %v3264
  %v3305 = vmul.f32 %v3237, %v3264
  %v3306 = vmul.f32 %v3238, %v3264
  %v3307 = vmul.f32 %v3239, %v3264
  %v3308 = vmul.f32 %v3240, %v3264
  %v3309 = vmul.f32 %v3241, %v3264
  %v3310 = vmul.f32 %v3242, %v3264
  %v3311 = vmul.f32 %v3243, %v3264
  %v3312 = vmul.f32 %v3244, %v3264
  %v3313 = vmul.f32 %v3245, %v3264
  %v3314 = vmul.f32 %v3246, %v3264
  %v3315 = vmul.f32 %v3247, %v3264
  %v3316 = vmul.f32 %v3248, %v3264
  %v3317 = vmul.f32 %v3249, %v3264
  %v3318 = vmul.f32 %v3250, %v3264
  %v3319 = vmul.f32 %v3251, %v3264
  %v3320 = vmul.f32 %v3252, %v3264
  %v3321 = vmul.f32 %v3253, %v3264
  %v3322 = vmul.f32 %v3254, %v3264
  %v3323 = vmul.f32 %v3255, %v3264
  %v3324 = vmul.f32 %v3256, %v3264
  %v3325 = vmul.f32 %v3257, %v3264
  %v3326 = vmul.f32 %v3258, %v3264
  %v3327 = vmul.f32 %v3259, %v3264
  %v3328 = vmul.f32 %v3260, %v3264
  %v3329 = vadd.f32 %v2908, %v3265
  %v3330 = vadd.f32 %v2909, %v3266
  %v3331 = vadd.f32 %v2910, %v3267
  %v3332 = vadd.f32 %v2911, %v3268
  %v3333 = vadd.f32 %v2912, %v3269
  %v3334 = vadd.f32 %v2913, %v3270
  %v3335 = vadd.f32 %v2914, %v3271
  %v3336 = vadd.f32 %v2915, %v3272
  %v3337 = vadd.f32 %v2916, %v3273
  %v3338 = vadd.f32 %v2917, %v3274
  %v3339 = vadd.f32 %v2918, %v3275
  %v3340 = vadd.f32 %v2919, %v3276
  %v3341 = vadd.f32 %v2920, %v3277
  %v3342 = vadd.f32 %v2921, %v3278
  %v3343 = vadd.f32 %v2922, %v3279
  %v3344 = vadd.f32 %v2923, %v3280
  %v3345 = vadd.f32 %v2924, %v3281
  %v3346 = vadd.f32 %v2925, %v3282
  %v3347 = vadd.f32 %v2926, %v3283
  %v3348 = vadd.f32 %v2927, %v3284
  %v3349 = vadd.f32 %v2928, %v3285
  %v3350 = vadd.f32 %v2929, %v3286
  %v3351 = vadd.f32 %v2930, %v3287
  %v3352 = vadd.f32 %v2931, %v3288
  %v3353 = vadd.f32 %v2932, %v3289
  %v3354 = vadd.f32 %v2933, %v3290
  %v3355 = vadd.f32 %v2934, %v3291
  %v3356 = vadd.f32 %v2935, %v3292
  %v3357 = vadd.f32 %v2936, %v3293
  %v3358 = vadd.f32 %v2937, %v3294
  %v3359 = vadd.f32 %v2938, %v3295
  %v3360 = vadd.f32 %v2939, %v3296
  %v3361 = vadd.f32 %v2940, %v3297
  %v3362 = vadd.f32 %v2941, %v3298
  %v3363 = vadd.f32 %v2942, %v3299
  %v3364 = vadd.f32 %v2943, %v3300
  %v3365 = vadd.f32 %v2944, %v3301
  %v3366 = vadd.f32 %v2945, %v3302
  %v3367 = vadd.f32 %v2946, %v3303
  %v3368 = vadd.f32 %v2947, %v3304
  %v3369 = vadd.f32 %v2948, %v3305
  %v3370 = vadd.f32 %v2949, %v3306
  %v3371 = vadd.f32 %v2950, %v3307
  %v3372 = vadd.f32 %v2951, %v3308
  %v3373 = vadd.f32 %v2952, %v3309
  %v3374 = vadd.f32 %v2953, %v3310
  %v3375 = vadd.f32 %v2954, %v3311
  %v3376 = vadd.f32 %v2955, %v3312
  %v3377 = vadd.f32 %v2956, %v3313
  %v3378 = vadd.f32 %v2957, %v3314
  %v3379 = vadd.f32 %v2958, %v3315
  %v3380 = vadd.f32 %v2959, %v3316
  %v3381 = vadd.f32 %v2960, %v3317
  %v3382 = vadd.f32 %v2961, %v3318
  %v3383 = vadd.f32 %v2962, %v3319
  %v3384 = vadd.f32 %v2963, %v3320
  %v3385 = vadd.f32 %v2964, %v3321
  %v3386 = vadd.f32 %v2965, %v3322
  %v3387 = vadd.f32 %v2966, %v3323
  %v3388 = vadd.f32 %v2967, %v3324
  %v3389 = vadd.f32 %v2968, %v3325
  %v3390 = vadd.f32 %v2969, %v3326
  %v3391 = vadd.f32 %v2970, %v3327
  %v3392 = vadd.f32 %v2971, %v3328
  %v3393 = vrot.slane %v2137, 7
  %v3394 = vsel %vm2443, %v2459, %v3393
  %v3395 = vrot.slane %v2149, 7
  %v3396 = vsel %vm2443, %v2476, %v3395
  %v3397 = vrot.slane %v2161, 7
  %v3398 = vsel %vm2443, %v2493, %v3397
  %v3399 = vrot.slane %v2173, 7
  %v3400 = vsel %vm2443, %v2510, %v3399
  %v3401 = vrot.slane %v2185, 7
  %v3402 = vsel %vm2443, %v2527, %v3401
  %v3403 = vrot.slane %v2197, 7
  %v3404 = vsel %vm2443, %v2544, %v3403
  %v3405 = vrot.slane %v2209, 7
  %v3406 = vsel %vm2443, %v2561, %v3405
  %v3407 = vrot.slane %v2221, 7
  %v3408 = vsel %vm2443, %v2578, %v3407
  %v3417 = vsel %vm2363, %v2448, 0.0
  %v3418 = vsel %vm2364, %v2450, 0.0
  %v3419 = vsel %vm2365, %v2452, 0.0
  %v3420 = vsel %vm2366, %v2454, 0.0
  %v3421 = vsel %vm2367, %v2456, 0.0
  %v3422 = vsel %vm2368, %v2458, 0.0
  %v3423 = vsel %vm2369, %v2460, 0.0
  %v3424 = vsel %vm2370, %v3394, 0.0
  %v3425 = vsel %vm2363, %v2465, 0.0
  %v3426 = vsel %vm2364, %v2467, 0.0
  %v3427 = vsel %vm2365, %v2469, 0.0
  %v3428 = vsel %vm2366, %v2471, 0.0
  %v3429 = vsel %vm2367, %v2473, 0.0
  %v3430 = vsel %vm2368, %v2475, 0.0
  %v3431 = vsel %vm2369, %v2477, 0.0
  %v3432 = vsel %vm2370, %v3396, 0.0
  %v3433 = vsel %vm2363, %v2482, 0.0
  %v3434 = vsel %vm2364, %v2484, 0.0
  %v3435 = vsel %vm2365, %v2486, 0.0
  %v3436 = vsel %vm2366, %v2488, 0.0
  %v3437 = vsel %vm2367, %v2490, 0.0
  %v3438 = vsel %vm2368, %v2492, 0.0
  %v3439 = vsel %vm2369, %v2494, 0.0
  %v3440 = vsel %vm2370, %v3398, 0.0
  %v3441 = vsel %vm2363, %v2499, 0.0
  %v3442 = vsel %vm2364, %v2501, 0.0
  %v3443 = vsel %vm2365, %v2503, 0.0
  %v3444 = vsel %vm2366, %v2505, 0.0
  %v3445 = vsel %vm2367, %v2507, 0.0
  %v3446 = vsel %vm2368, %v2509, 0.0
  %v3447 = vsel %vm2369, %v2511, 0.0
  %v3448 = vsel %vm2370, %v3400, 0.0
  %v3449 = vsel %vm2363, %v2516, 0.0
  %v3450 = vsel %vm2364, %v2518, 0.0
  %v3451 = vsel %vm2365, %v2520, 0.0
  %v3452 = vsel %vm2366, %v2522, 0.0
  %v3453 = vsel %vm2367, %v2524, 0.0
  %v3454 = vsel %vm2368, %v2526, 0.0
  %v3455 = vsel %vm2369, %v2528, 0.0
  %v3456 = vsel %vm2370, %v3402, 0.0
  %v3457 = vsel %vm2363, %v2533, 0.0
  %v3458 = vsel %vm2364, %v2535, 0.0
  %v3459 = vsel %vm2365, %v2537, 0.0
  %v3460 = vsel %vm2366, %v2539, 0.0
  %v3461 = vsel %vm2367, %v2541, 0.0
  %v3462 = vsel %vm2368, %v2543, 0.0
  %v3463 = vsel %vm2369, %v2545, 0.0
  %v3464 = vsel %vm2370, %v3404, 0.0
  %v3465 = vsel %vm2363, %v2550, 0.0
  %v3466 = vsel %vm2364, %v2552, 0.0
  %v3467 = vsel %vm2365, %v2554, 0.0
  %v3468 = vsel %vm2366, %v2556, 0.0
  %v3469 = vsel %vm2367, %v2558, 0.0
  %v3470 = vsel %vm2368, %v2560, 0.0
  %v3471 = vsel %vm2369, %v2562, 0.0
  %v3472 = vsel %vm2370, %v3406, 0.0
  %v3473 = vsel %vm2363, %v2567, 0.0
  %v3474 = vsel %vm2364, %v2569, 0.0
  %v3475 = vsel %vm2365, %v2571, 0.0
  %v3476 = vsel %vm2366, %v2573, 0.0
  %v3477 = vsel %vm2367, %v2575, 0.0
  %v3478 = vsel %vm2368, %v2577, 0.0
  %v3479 = vsel %vm2369, %v2579, 0.0
  %v3480 = vsel %vm2370, %v3408, 0.0
  %v3481 = vlaneseq
  %v3482 = vshrl.u32 %v3481, 7
  %v3483 = vsub.s32 3, %v3482
  %v3484 = vrot.slane %v2224, %v3483
  %v3485 = vmul.f32 %v3417, %v3484
  %v3486 = vmul.f32 %v3418, %v3484
  %v3487 = vmul.f32 %v3419, %v3484
  %v3488 = vmul.f32 %v3420, %v3484
  %v3489 = vmul.f32 %v3421, %v3484
  %v3490 = vmul.f32 %v3422, %v3484
  %v3491 = vmul.f32 %v3423, %v3484
  %v3492 = vmul.f32 %v3424, %v3484
  %v3493 = vmul.f32 %v3425, %v3484
  %v3494 = vmul.f32 %v3426, %v3484
  %v3495 = vmul.f32 %v3427, %v3484
  %v3496 = vmul.f32 %v3428, %v3484
  %v3497 = vmul.f32 %v3429, %v3484
  %v3498 = vmul.f32 %v3430, %v3484
  %v3499 = vmul.f32 %v3431, %v3484
  %v3500 = vmul.f32 %v3432, %v3484
  %v3501 = vmul.f32 %v3433, %v3484
  %v3502 = vmul.f32 %v3434, %v3484
  %v3503 = vmul.f32 %v3435, %v3484
  %v3504 = vmul.f32 %v3436, %v3484
  %v3505 = vmul.f32 %v3437, %v3484
  %v3506 = vmul.f32 %v3438, %v3484
  %v3507 = vmul.f32 %v3439, %v3484
  %v3508 = vmul.f32 %v3440, %v3484
  %v3509 = vmul.f32 %v3441, %v3484
  %v3510 = vmul.f32 %v3442, %v3484
  %v3511 = vmul.f32 %v3443, %v3484
  %v3512 = vmul.f32 %v3444, %v3484
  %v3513 = vmul.f32 %v3445, %v3484
  %v3514 = vmul.f32 %v3446, %v3484
  %v3515 = vmul.f32 %v3447, %v3484
  %v3516 = vmul.f32 %v3448, %v3484
  %v3517 = vmul.f32 %v3449, %v3484
  %v3518 = vmul.f32 %v3450, %v3484
  %v3519 = vmul.f32 %v3451, %v3484
  %v3520 = vmul.f32 %v3452, %v3484
  %v3521 = vmul.f32 %v3453, %v3484
  %v3522 = vmul.f32 %v3454, %v3484
  %v3523 = vmul.f32 %v3455, %v3484
  %v3524 = vmul.f32 %v3456, %v3484
  %v3525 = vmul.f32 %v3457, %v3484
  %v3526 = vmul.f32 %v3458, %v3484
  %v3527 = vmul.f32 %v3459, %v3484
  %v3528 = vmul.f32 %v3460, %v3484
  %v3529 = vmul.f32 %v3461, %v3484
  %v3530 = vmul.f32 %v3462, %v3484
  %v3531 = vmul.f32 %v3463, %v3484
  %v3532 = vmul.f32 %v3464, %v3484
  %v3533 = vmul.f32 %v3465, %v3484
  %v3534 = vmul.f32 %v3466, %v3484
  %v3535 = vmul.f32 %v3467, %v3484
  %v3536 = vmul.f32 %v3468, %v3484
  %v3537 = vmul.f32 %v3469, %v3484
  %v3538 = vmul.f32 %v3470, %v3484
  %v3539 = vmul.f32 %v3471, %v3484
  %v3540 = vmul.f32 %v3472, %v3484
  %v3541 = vmul.f32 %v3473, %v3484
  %v3542 = vmul.f32 %v3474, %v3484
  %v3543 = vmul.f32 %v3475, %v3484
  %v3544 = vmul.f32 %v3476, %v3484
  %v3545 = vmul.f32 %v3477, %v3484
  %v3546 = vmul.f32 %v3478, %v3484
  %v3547 = vmul.f32 %v3479, %v3484
  %v3548 = vmul.f32 %v3480, %v3484
  %v3549 = vadd.f32 %v3329, %v3485
  %v3550 = vadd.f32 %v3330, %v3486
  %v3551 = vadd.f32 %v3331, %v3487
  %v3552 = vadd.f32 %v3332, %v3488
  %v3553 = vadd.f32 %v3333, %v3489
  %v3554 = vadd.f32 %v3334, %v3490
  %v3555 = vadd.f32 %v3335, %v3491
  %v3556 = vadd.f32 %v3336, %v3492
  %v3557 = vadd.f32 %v3337, %v3493
  %v3558 = vadd.f32 %v3338, %v3494
  %v3559 = vadd.f32 %v3339, %v3495
  %v3560 = vadd.f32 %v3340, %v3496
  %v3561 = vadd.f32 %v3341, %v3497
  %v3562 = vadd.f32 %v3342, %v3498
  %v3563 = vadd.f32 %v3343, %v3499
  %v3564 = vadd.f32 %v3344, %v3500
  %v3565 = vadd.f32 %v3345, %v3501
  %v3566 = vadd.f32 %v3346, %v3502
  %v3567 = vadd.f32 %v3347, %v3503
  %v3568 = vadd.f32 %v3348, %v3504
  %v3569 = vadd.f32 %v3349, %v3505
  %v3570 = vadd.f32 %v3350, %v3506
  %v3571 = vadd.f32 %v3351, %v3507
  %v3572 = vadd.f32 %v3352, %v3508
  %v3573 = vadd.f32 %v3353, %v3509
  %v3574 = vadd.f32 %v3354, %v3510
  %v3575 = vadd.f32 %v3355, %v3511
  %v3576 = vadd.f32 %v3356, %v3512
  %v3577 = vadd.f32 %v3357, %v3513
  %v3578 = vadd.f32 %v3358, %v3514
  %v3579 = vadd.f32 %v3359, %v3515
  %v3580 = vadd.f32 %v3360, %v3516
  %v3581 = vadd.f32 %v3361, %v3517
  %v3582 = vadd.f32 %v3362, %v3518
  %v3583 = vadd.f32 %v3363, %v3519
  %v3584 = vadd.f32 %v3364, %v3520
  %v3585 = vadd.f32 %v3365, %v3521
  %v3586 = vadd.f32 %v3366, %v3522
  %v3587 = vadd.f32 %v3367, %v3523
  %v3588 = vadd.f32 %v3368, %v3524
  %v3589 = vadd.f32 %v3369, %v3525
  %v3590 = vadd.f32 %v3370, %v3526
  %v3591 = vadd.f32 %v3371, %v3527
  %v3592 = vadd.f32 %v3372, %v3528
  %v3593 = vadd.f32 %v3373, %v3529
  %v3594 = vadd.f32 %v3374, %v3530
  %v3595 = vadd.f32 %v3375, %v3531
  %v3596 = vadd.f32 %v3376, %v3532
  %v3597 = vadd.f32 %v3377, %v3533
  %v3598 = vadd.f32 %v3378, %v3534
  %v3599 = vadd.f32 %v3379, %v3535
  %v3600 = vadd.f32 %v3380, %v3536
  %v3601 = vadd.f32 %v3381, %v3537
  %v3602 = vadd.f32 %v3382, %v3538
  %v3603 = vadd.f32 %v3383, %v3539
  %v3604 = vadd.f32 %v3384, %v3540
  %v3605 = vadd.f32 %v3385, %v3541
  %v3606 = vadd.f32 %v3386, %v3542
  %v3607 = vadd.f32 %v3387, %v3543
  %v3608 = vadd.f32 %v3388, %v3544
  %v3609 = vadd.f32 %v3389, %v3545
  %v3610 = vadd.f32 %v3390, %v3546
  %v3611 = vadd.f32 %v3391, %v3547
  %v3612 = vadd.f32 %v3392, %v3548
  %v3613 = vlaneseq
  %v3614 = vshrl.u32 %v3613, 7
  %v3615 = vsub.s32 4, %v3614
  %v3616 = vrot.slane %v2224, %v3615
  %v3617 = vmul.f32 %v2130, %v3616
  %v3618 = vmul.f32 %v2131, %v3616
  %v3619 = vmul.f32 %v2132, %v3616
  %v3620 = vmul.f32 %v2133, %v3616
  %v3621 = vmul.f32 %v2134, %v3616
  %v3622 = vmul.f32 %v2135, %v3616
  %v3623 = vmul.f32 %v2136, %v3616
  %v3624 = vmul.f32 %v2137, %v3616
  %v3625 = vmul.f32 %v2142, %v3616
  %v3626 = vmul.f32 %v2143, %v3616
  %v3627 = vmul.f32 %v2144, %v3616
  %v3628 = vmul.f32 %v2145, %v3616
  %v3629 = vmul.f32 %v2146, %v3616
  %v3630 = vmul.f32 %v2147, %v3616
  %v3631 = vmul.f32 %v2148, %v3616
  %v3632 = vmul.f32 %v2149, %v3616
  %v3633 = vmul.f32 %v2154, %v3616
  %v3634 = vmul.f32 %v2155, %v3616
  %v3635 = vmul.f32 %v2156, %v3616
  %v3636 = vmul.f32 %v2157, %v3616
  %v3637 = vmul.f32 %v2158, %v3616
  %v3638 = vmul.f32 %v2159, %v3616
  %v3639 = vmul.f32 %v2160, %v3616
  %v3640 = vmul.f32 %v2161, %v3616
  %v3641 = vmul.f32 %v2166, %v3616
  %v3642 = vmul.f32 %v2167, %v3616
  %v3643 = vmul.f32 %v2168, %v3616
  %v3644 = vmul.f32 %v2169, %v3616
  %v3645 = vmul.f32 %v2170, %v3616
  %v3646 = vmul.f32 %v2171, %v3616
  %v3647 = vmul.f32 %v2172, %v3616
  %v3648 = vmul.f32 %v2173, %v3616
  %v3649 = vmul.f32 %v2178, %v3616
  %v3650 = vmul.f32 %v2179, %v3616
  %v3651 = vmul.f32 %v2180, %v3616
  %v3652 = vmul.f32 %v2181, %v3616
  %v3653 = vmul.f32 %v2182, %v3616
  %v3654 = vmul.f32 %v2183, %v3616
  %v3655 = vmul.f32 %v2184, %v3616
  %v3656 = vmul.f32 %v2185, %v3616
  %v3657 = vmul.f32 %v2190, %v3616
  %v3658 = vmul.f32 %v2191, %v3616
  %v3659 = vmul.f32 %v2192, %v3616
  %v3660 = vmul.f32 %v2193, %v3616
  %v3661 = vmul.f32 %v2194, %v3616
  %v3662 = vmul.f32 %v2195, %v3616
  %v3663 = vmul.f32 %v2196, %v3616
  %v3664 = vmul.f32 %v2197, %v3616
  %v3665 = vmul.f32 %v2202, %v3616
  %v3666 = vmul.f32 %v2203, %v3616
  %v3667 = vmul.f32 %v2204, %v3616
  %v3668 = vmul.f32 %v2205, %v3616
  %v3669 = vmul.f32 %v2206, %v3616
  %v3670 = vmul.f32 %v2207, %v3616
  %v3671 = vmul.f32 %v2208, %v3616
  %v3672 = vmul.f32 %v2209, %v3616
  %v3673 = vmul.f32 %v2214, %v3616
  %v3674 = vmul.f32 %v2215, %v3616
  %v3675 = vmul.f32 %v2216, %v3616
  %v3676 = vmul.f32 %v2217, %v3616
  %v3677 = vmul.f32 %v2218, %v3616
  %v3678 = vmul.f32 %v2219, %v3616
  %v3679 = vmul.f32 %v2220, %v3616
  %v3680 = vmul.f32 %v2221, %v3616
  %v3681 = vadd.f32 %v3549, %v3617
  %v3682 = vadd.f32 %v3550, %v3618
  %v3683 = vadd.f32 %v3551, %v3619
  %v3684 = vadd.f32 %v3552, %v3620
  %v3685 = vadd.f32 %v3553, %v3621
  %v3686 = vadd.f32 %v3554, %v3622
  %v3687 = vadd.f32 %v3555, %v3623
  %v3688 = vadd.f32 %v3556, %v3624
  %v3689 = vadd.f32 %v3557, %v3625
  %v3690 = vadd.f32 %v3558, %v3626
  %v3691 = vadd.f32 %v3559, %v3627
  %v3692 = vadd.f32 %v3560, %v3628
  %v3693 = vadd.f32 %v3561, %v3629
  %v3694 = vadd.f32 %v3562, %v3630
  %v3695 = vadd.f32 %v3563, %v3631
  %v3696 = vadd.f32 %v3564, %v3632
  %v3697 = vadd.f32 %v3565, %v3633
  %v3698 = vadd.f32 %v3566, %v3634
  %v3699 = vadd.f32 %v3567, %v3635
  %v3700 = vadd.f32 %v3568, %v3636
  %v3701 = vadd.f32 %v3569, %v3637
  %v3702 = vadd.f32 %v3570, %v3638
  %v3703 = vadd.f32 %v3571, %v3639
  %v3704 = vadd.f32 %v3572, %v3640
  %v3705 = vadd.f32 %v3573, %v3641
  %v3706 = vadd.f32 %v3574, %v3642
  %v3707 = vadd.f32 %v3575, %v3643
  %v3708 = vadd.f32 %v3576, %v3644
  %v3709 = vadd.f32 %v3577, %v3645
  %v3710 = vadd.f32 %v3578, %v3646
  %v3711 = vadd.f32 %v3579, %v3647
  %v3712 = vadd.f32 %v3580, %v3648
  %v3713 = vadd.f32 %v3581, %v3649
  %v3714 = vadd.f32 %v3582, %v3650
  %v3715 = vadd.f32 %v3583, %v3651
  %v3716 = vadd.f32 %v3584, %v3652
  %v3717 = vadd.f32 %v3585, %v3653
  %v3718 = vadd.f32 %v3586, %v3654
  %v3719 = vadd.f32 %v3587, %v3655
  %v3720 = vadd.f32 %v3588, %v3656
  %v3721 = vadd.f32 %v3589, %v3657
  %v3722 = vadd.f32 %v3590, %v3658
  %v3723 = vadd.f32 %v3591, %v3659
  %v3724 = vadd.f32 %v3592, %v3660
  %v3725 = vadd.f32 %v3593, %v3661
  %v3726 = vadd.f32 %v3594, %v3662
  %v3727 = vadd.f32 %v3595, %v3663
  %v3728 = vadd.f32 %v3596, %v3664
  %v3729 = vadd.f32 %v3597, %v3665
  %v3730 = vadd.f32 %v3598, %v3666
  %v3731 = vadd.f32 %v3599, %v3667
  %v3732 = vadd.f32 %v3600, %v3668
  %v3733 = vadd.f32 %v3601, %v3669
  %v3734 = vadd.f32 %v3602, %v3670
  %v3735 = vadd.f32 %v3603, %v3671
  %v3736 = vadd.f32 %v3604, %v3672
  %v3737 = vadd.f32 %v3605, %v3673
  %v3738 = vadd.f32 %v3606, %v3674
  %v3739 = vadd.f32 %v3607, %v3675
  %v3740 = vadd.f32 %v3608, %v3676
  %v3741 = vadd.f32 %v3609, %v3677
  %v3742 = vadd.f32 %v3610, %v3678
  %v3743 = vadd.f32 %v3611, %v3679
  %v3744 = vadd.f32 %v3612, %v3680
  %v3753 = vrot.slane %v2138, 1
  %v3754 = vsel %vm2996, %v3012, %v3753
  %v3755 = vrot.slane %v2150, 1
  %v3756 = vsel %vm2996, %v3029, %v3755
  %v3757 = vrot.slane %v2162, 1
  %v3758 = vsel %vm2996, %v3046, %v3757
  %v3759 = vrot.slane %v2174, 1
  %v3760 = vsel %vm2996, %v3063, %v3759
  %v3761 = vrot.slane %v2186, 1
  %v3762 = vsel %vm2996, %v3080, %v3761
  %v3763 = vrot.slane %v2198, 1
  %v3764 = vsel %vm2996, %v3097, %v3763
  %v3765 = vrot.slane %v2210, 1
  %v3766 = vsel %vm2996, %v3114, %v3765
  %v3767 = vrot.slane %v2222, 1
  %v3768 = vsel %vm2996, %v3131, %v3767
  %v3777 = vsel %vm2980, %v3001, 0.0
  %v3778 = vsel %vm2981, %v3003, 0.0
  %v3779 = vsel %vm2982, %v3005, 0.0
  %v3780 = vsel %vm2983, %v3007, 0.0
  %v3781 = vsel %vm2984, %v3009, 0.0
  %v3782 = vsel %vm2985, %v3011, 0.0
  %v3783 = vsel %vm2986, %v3013, 0.0
  %v3784 = vsel %vm2987, %v3754, 0.0
  %v3785 = vsel %vm2980, %v3018, 0.0
  %v3786 = vsel %vm2981, %v3020, 0.0
  %v3787 = vsel %vm2982, %v3022, 0.0
  %v3788 = vsel %vm2983, %v3024, 0.0
  %v3789 = vsel %vm2984, %v3026, 0.0
  %v3790 = vsel %vm2985, %v3028, 0.0
  %v3791 = vsel %vm2986, %v3030, 0.0
  %v3792 = vsel %vm2987, %v3756, 0.0
  %v3793 = vsel %vm2980, %v3035, 0.0
  %v3794 = vsel %vm2981, %v3037, 0.0
  %v3795 = vsel %vm2982, %v3039, 0.0
  %v3796 = vsel %vm2983, %v3041, 0.0
  %v3797 = vsel %vm2984, %v3043, 0.0
  %v3798 = vsel %vm2985, %v3045, 0.0
  %v3799 = vsel %vm2986, %v3047, 0.0
  %v3800 = vsel %vm2987, %v3758, 0.0
  %v3801 = vsel %vm2980, %v3052, 0.0
  %v3802 = vsel %vm2981, %v3054, 0.0
  %v3803 = vsel %vm2982, %v3056, 0.0
  %v3804 = vsel %vm2983, %v3058, 0.0
  %v3805 = vsel %vm2984, %v3060, 0.0
  %v3806 = vsel %vm2985, %v3062, 0.0
  %v3807 = vsel %vm2986, %v3064, 0.0
  %v3808 = vsel %vm2987, %v3760, 0.0
  %v3809 = vsel %vm2980, %v3069, 0.0
  %v3810 = vsel %vm2981, %v3071, 0.0
  %v3811 = vsel %vm2982, %v3073, 0.0
  %v3812 = vsel %vm2983, %v3075, 0.0
  %v3813 = vsel %vm2984, %v3077, 0.0
  %v3814 = vsel %vm2985, %v3079, 0.0
  %v3815 = vsel %vm2986, %v3081, 0.0
  %v3816 = vsel %vm2987, %v3762, 0.0
  %v3817 = vsel %vm2980, %v3086, 0.0
  %v3818 = vsel %vm2981, %v3088, 0.0
  %v3819 = vsel %vm2982, %v3090, 0.0
  %v3820 = vsel %vm2983, %v3092, 0.0
  %v3821 = vsel %vm2984, %v3094, 0.0
  %v3822 = vsel %vm2985, %v3096, 0.0
  %v3823 = vsel %vm2986, %v3098, 0.0
  %v3824 = vsel %vm2987, %v3764, 0.0
  %v3825 = vsel %vm2980, %v3103, 0.0
  %v3826 = vsel %vm2981, %v3105, 0.0
  %v3827 = vsel %vm2982, %v3107, 0.0
  %v3828 = vsel %vm2983, %v3109, 0.0
  %v3829 = vsel %vm2984, %v3111, 0.0
  %v3830 = vsel %vm2985, %v3113, 0.0
  %v3831 = vsel %vm2986, %v3115, 0.0
  %v3832 = vsel %vm2987, %v3766, 0.0
  %v3833 = vsel %vm2980, %v3120, 0.0
  %v3834 = vsel %vm2981, %v3122, 0.0
  %v3835 = vsel %vm2982, %v3124, 0.0
  %v3836 = vsel %vm2983, %v3126, 0.0
  %v3837 = vsel %vm2984, %v3128, 0.0
  %v3838 = vsel %vm2985, %v3130, 0.0
  %v3839 = vsel %vm2986, %v3132, 0.0
  %v3840 = vsel %vm2987, %v3768, 0.0
  %v3841 = vlaneseq
  %v3842 = vshrl.u32 %v3841, 7
  %v3843 = vsub.s32 5, %v3842
  %v3844 = vrot.slane %v2224, %v3843
  %v3845 = vmul.f32 %v3777, %v3844
  %v3846 = vmul.f32 %v3778, %v3844
  %v3847 = vmul.f32 %v3779, %v3844
  %v3848 = vmul.f32 %v3780, %v3844
  %v3849 = vmul.f32 %v3781, %v3844
  %v3850 = vmul.f32 %v3782, %v3844
  %v3851 = vmul.f32 %v3783, %v3844
  %v3852 = vmul.f32 %v3784, %v3844
  %v3853 = vmul.f32 %v3785, %v3844
  %v3854 = vmul.f32 %v3786, %v3844
  %v3855 = vmul.f32 %v3787, %v3844
  %v3856 = vmul.f32 %v3788, %v3844
  %v3857 = vmul.f32 %v3789, %v3844
  %v3858 = vmul.f32 %v3790, %v3844
  %v3859 = vmul.f32 %v3791, %v3844
  %v3860 = vmul.f32 %v3792, %v3844
  %v3861 = vmul.f32 %v3793, %v3844
  %v3862 = vmul.f32 %v3794, %v3844
  %v3863 = vmul.f32 %v3795, %v3844
  %v3864 = vmul.f32 %v3796, %v3844
  %v3865 = vmul.f32 %v3797, %v3844
  %v3866 = vmul.f32 %v3798, %v3844
  %v3867 = vmul.f32 %v3799, %v3844
  %v3868 = vmul.f32 %v3800, %v3844
  %v3869 = vmul.f32 %v3801, %v3844
  %v3870 = vmul.f32 %v3802, %v3844
  %v3871 = vmul.f32 %v3803, %v3844
  %v3872 = vmul.f32 %v3804, %v3844
  %v3873 = vmul.f32 %v3805, %v3844
  %v3874 = vmul.f32 %v3806, %v3844
  %v3875 = vmul.f32 %v3807, %v3844
  %v3876 = vmul.f32 %v3808, %v3844
  %v3877 = vmul.f32 %v3809, %v3844
  %v3878 = vmul.f32 %v3810, %v3844
  %v3879 = vmul.f32 %v3811, %v3844
  %v3880 = vmul.f32 %v3812, %v3844
  %v3881 = vmul.f32 %v3813, %v3844
  %v3882 = vmul.f32 %v3814, %v3844
  %v3883 = vmul.f32 %v3815, %v3844
  %v3884 = vmul.f32 %v3816, %v3844
  %v3885 = vmul.f32 %v3817, %v3844
  %v3886 = vmul.f32 %v3818, %v3844
  %v3887 = vmul.f32 %v3819, %v3844
  %v3888 = vmul.f32 %v3820, %v3844
  %v3889 = vmul.f32 %v3821, %v3844
  %v3890 = vmul.f32 %v3822, %v3844
  %v3891 = vmul.f32 %v3823, %v3844
  %v3892 = vmul.f32 %v3824, %v3844
  %v3893 = vmul.f32 %v3825, %v3844
  %v3894 = vmul.f32 %v3826, %v3844
  %v3895 = vmul.f32 %v3827, %v3844
  %v3896 = vmul.f32 %v3828, %v3844
  %v3897 = vmul.f32 %v3829, %v3844
  %v3898 = vmul.f32 %v3830, %v3844
  %v3899 = vmul.f32 %v3831, %v3844
  %v3900 = vmul.f32 %v3832, %v3844
  %v3901 = vmul.f32 %v3833, %v3844
  %v3902 = vmul.f32 %v3834, %v3844
  %v3903 = vmul.f32 %v3835, %v3844
  %v3904 = vmul.f32 %v3836, %v3844
  %v3905 = vmul.f32 %v3837, %v3844
  %v3906 = vmul.f32 %v3838, %v3844
  %v3907 = vmul.f32 %v3839, %v3844
  %v3908 = vmul.f32 %v3840, %v3844
  %v3909 = vadd.f32 %v3681, %v3845
  %v3910 = vadd.f32 %v3682, %v3846
  %v3911 = vadd.f32 %v3683, %v3847
  %v3912 = vadd.f32 %v3684, %v3848
  %v3913 = vadd.f32 %v3685, %v3849
  %v3914 = vadd.f32 %v3686, %v3850
  %v3915 = vadd.f32 %v3687, %v3851
  %v3916 = vadd.f32 %v3688, %v3852
  %v3917 = vadd.f32 %v3689, %v3853
  %v3918 = vadd.f32 %v3690, %v3854
  %v3919 = vadd.f32 %v3691, %v3855
  %v3920 = vadd.f32 %v3692, %v3856
  %v3921 = vadd.f32 %v3693, %v3857
  %v3922 = vadd.f32 %v3694, %v3858
  %v3923 = vadd.f32 %v3695, %v3859
  %v3924 = vadd.f32 %v3696, %v3860
  %v3925 = vadd.f32 %v3697, %v3861
  %v3926 = vadd.f32 %v3698, %v3862
  %v3927 = vadd.f32 %v3699, %v3863
  %v3928 = vadd.f32 %v3700, %v3864
  %v3929 = vadd.f32 %v3701, %v3865
  %v3930 = vadd.f32 %v3702, %v3866
  %v3931 = vadd.f32 %v3703, %v3867
  %v3932 = vadd.f32 %v3704, %v3868
  %v3933 = vadd.f32 %v3705, %v3869
  %v3934 = vadd.f32 %v3706, %v3870
  %v3935 = vadd.f32 %v3707, %v3871
  %v3936 = vadd.f32 %v3708, %v3872
  %v3937 = vadd.f32 %v3709, %v3873
  %v3938 = vadd.f32 %v3710, %v3874
  %v3939 = vadd.f32 %v3711, %v3875
  %v3940 = vadd.f32 %v3712, %v3876
  %v3941 = vadd.f32 %v3713, %v3877
  %v3942 = vadd.f32 %v3714, %v3878
  %v3943 = vadd.f32 %v3715, %v3879
  %v3944 = vadd.f32 %v3716, %v3880
  %v3945 = vadd.f32 %v3717, %v3881
  %v3946 = vadd.f32 %v3718, %v3882
  %v3947 = vadd.f32 %v3719, %v3883
  %v3948 = vadd.f32 %v3720, %v3884
  %v3949 = vadd.f32 %v3721, %v3885
  %v3950 = vadd.f32 %v3722, %v3886
  %v3951 = vadd.f32 %v3723, %v3887
  %v3952 = vadd.f32 %v3724, %v3888
  %v3953 = vadd.f32 %v3725, %v3889
  %v3954 = vadd.f32 %v3726, %v3890
  %v3955 = vadd.f32 %v3727, %v3891
  %v3956 = vadd.f32 %v3728, %v3892
  %v3957 = vadd.f32 %v3729, %v3893
  %v3958 = vadd.f32 %v3730, %v3894
  %v3959 = vadd.f32 %v3731, %v3895
  %v3960 = vadd.f32 %v3732, %v3896
  %v3961 = vadd.f32 %v3733, %v3897
  %v3962 = vadd.f32 %v3734, %v3898
  %v3963 = vadd.f32 %v3735, %v3899
  %v3964 = vadd.f32 %v3736, %v3900
  %v3965 = vadd.f32 %v3737, %v3901
  %v3966 = vadd.f32 %v3738, %v3902
  %v3967 = vadd.f32 %v3739, %v3903
  %v3968 = vadd.f32 %v3740, %v3904
  %v3969 = vadd.f32 %v3741, %v3905
  %v3970 = vadd.f32 %v3742, %v3906
  %v3971 = vadd.f32 %v3743, %v3907
  %v3972 = vadd.f32 %v3744, %v3908
  %v3973 = vrot.slane %v2138, 7
  %v3974 = vsel %vm2443, %v3393, %v3973
  %v3975 = vrot.slane %v2150, 7
  %v3976 = vsel %vm2443, %v3395, %v3975
  %v3977 = vrot.slane %v2162, 7
  %v3978 = vsel %vm2443, %v3397, %v3977
  %v3979 = vrot.slane %v2174, 7
  %v3980 = vsel %vm2443, %v3399, %v3979
  %v3981 = vrot.slane %v2186, 7
  %v3982 = vsel %vm2443, %v3401, %v3981
  %v3983 = vrot.slane %v2198, 7
  %v3984 = vsel %vm2443, %v3403, %v3983
  %v3985 = vrot.slane %v2210, 7
  %v3986 = vsel %vm2443, %v3405, %v3985
  %v3987 = vrot.slane %v2222, 7
  %v3988 = vsel %vm2443, %v3407, %v3987
  %v3997 = vsel %vm2363, %v2450, 0.0
  %v3998 = vsel %vm2364, %v2452, 0.0
  %v3999 = vsel %vm2365, %v2454, 0.0
  %v4000 = vsel %vm2366, %v2456, 0.0
  %v4001 = vsel %vm2367, %v2458, 0.0
  %v4002 = vsel %vm2368, %v2460, 0.0
  %v4003 = vsel %vm2369, %v3394, 0.0
  %v4004 = vsel %vm2370, %v3974, 0.0
  %v4005 = vsel %vm2363, %v2467, 0.0
  %v4006 = vsel %vm2364, %v2469, 0.0
  %v4007 = vsel %vm2365, %v2471, 0.0
  %v4008 = vsel %vm2366, %v2473, 0.0
  %v4009 = vsel %vm2367, %v2475, 0.0
  %v4010 = vsel %vm2368, %v2477, 0.0
  %v4011 = vsel %vm2369, %v3396, 0.0
  %v4012 = vsel %vm2370, %v3976, 0.0
  %v4013 = vsel %vm2363, %v2484, 0.0
  %v4014 = vsel %vm2364, %v2486, 0.0
  %v4015 = vsel %vm2365, %v2488, 0.0
  %v4016 = vsel %vm2366, %v2490, 0.0
  %v4017 = vsel %vm2367, %v2492, 0.0
  %v4018 = vsel %vm2368, %v2494, 0.0
  %v4019 = vsel %vm2369, %v3398, 0.0
  %v4020 = vsel %vm2370, %v3978, 0.0
  %v4021 = vsel %vm2363, %v2501, 0.0
  %v4022 = vsel %vm2364, %v2503, 0.0
  %v4023 = vsel %vm2365, %v2505, 0.0
  %v4024 = vsel %vm2366, %v2507, 0.0
  %v4025 = vsel %vm2367, %v2509, 0.0
  %v4026 = vsel %vm2368, %v2511, 0.0
  %v4027 = vsel %vm2369, %v3400, 0.0
  %v4028 = vsel %vm2370, %v3980, 0.0
  %v4029 = vsel %vm2363, %v2518, 0.0
  %v4030 = vsel %vm2364, %v2520, 0.0
  %v4031 = vsel %vm2365, %v2522, 0.0
  %v4032 = vsel %vm2366, %v2524, 0.0
  %v4033 = vsel %vm2367, %v2526, 0.0
  %v4034 = vsel %vm2368, %v2528, 0.0
  %v4035 = vsel %vm2369, %v3402, 0.0
  %v4036 = vsel %vm2370, %v3982, 0.0
  %v4037 = vsel %vm2363, %v2535, 0.0
  %v4038 = vsel %vm2364, %v2537, 0.0
  %v4039 = vsel %vm2365, %v2539, 0.0
  %v4040 = vsel %vm2366, %v2541, 0.0
  %v4041 = vsel %vm2367, %v2543, 0.0
  %v4042 = vsel %vm2368, %v2545, 0.0
  %v4043 = vsel %vm2369, %v3404, 0.0
  %v4044 = vsel %vm2370, %v3984, 0.0
  %v4045 = vsel %vm2363, %v2552, 0.0
  %v4046 = vsel %vm2364, %v2554, 0.0
  %v4047 = vsel %vm2365, %v2556, 0.0
  %v4048 = vsel %vm2366, %v2558, 0.0
  %v4049 = vsel %vm2367, %v2560, 0.0
  %v4050 = vsel %vm2368, %v2562, 0.0
  %v4051 = vsel %vm2369, %v3406, 0.0
  %v4052 = vsel %vm2370, %v3986, 0.0
  %v4053 = vsel %vm2363, %v2569, 0.0
  %v4054 = vsel %vm2364, %v2571, 0.0
  %v4055 = vsel %vm2365, %v2573, 0.0
  %v4056 = vsel %vm2366, %v2575, 0.0
  %v4057 = vsel %vm2367, %v2577, 0.0
  %v4058 = vsel %vm2368, %v2579, 0.0
  %v4059 = vsel %vm2369, %v3408, 0.0
  %v4060 = vsel %vm2370, %v3988, 0.0
  %v4061 = vlaneseq
  %v4062 = vshrl.u32 %v4061, 7
  %v4063 = vsub.s32 6, %v4062
  %v4064 = vrot.slane %v2224, %v4063
  %v4065 = vmul.f32 %v3997, %v4064
  %v4066 = vmul.f32 %v3998, %v4064
  %v4067 = vmul.f32 %v3999, %v4064
  %v4068 = vmul.f32 %v4000, %v4064
  %v4069 = vmul.f32 %v4001, %v4064
  %v4070 = vmul.f32 %v4002, %v4064
  %v4071 = vmul.f32 %v4003, %v4064
  %v4072 = vmul.f32 %v4004, %v4064
  %v4073 = vmul.f32 %v4005, %v4064
  %v4074 = vmul.f32 %v4006, %v4064
  %v4075 = vmul.f32 %v4007, %v4064
  %v4076 = vmul.f32 %v4008, %v4064
  %v4077 = vmul.f32 %v4009, %v4064
  %v4078 = vmul.f32 %v4010, %v4064
  %v4079 = vmul.f32 %v4011, %v4064
  %v4080 = vmul.f32 %v4012, %v4064
  %v4081 = vmul.f32 %v4013, %v4064
  %v4082 = vmul.f32 %v4014, %v4064
  %v4083 = vmul.f32 %v4015, %v4064
  %v4084 = vmul.f32 %v4016, %v4064
  %v4085 = vmul.f32 %v4017, %v4064
  %v4086 = vmul.f32 %v4018, %v4064
  %v4087 = vmul.f32 %v4019, %v4064
  %v4088 = vmul.f32 %v4020, %v4064
  %v4089 = vmul.f32 %v4021, %v4064
  %v4090 = vmul.f32 %v4022, %v4064
  %v4091 = vmul.f32 %v4023, %v4064
  %v4092 = vmul.f32 %v4024, %v4064
  %v4093 = vmul.f32 %v4025, %v4064
  %v4094 = vmul.f32 %v4026, %v4064
  %v4095 = vmul.f32 %v4027, %v4064
  %v4096 = vmul.f32 %v4028, %v4064
  %v4097 = vmul.f32 %v4029, %v4064
  %v4098 = vmul.f32 %v4030, %v4064
  %v4099 = vmul.f32 %v4031, %v4064
  %v4100 = vmul.f32 %v4032, %v4064
  %v4101 = vmul.f32 %v4033, %v4064
  %v4102 = vmul.f32 %v4034, %v4064
  %v4103 = vmul.f32 %v4035, %v4064
  %v4104 = vmul.f32 %v4036, %v4064
  %v4105 = vmul.f32 %v4037, %v4064
  %v4106 = vmul.f32 %v4038, %v4064
  %v4107 = vmul.f32 %v4039, %v4064
  %v4108 = vmul.f32 %v4040, %v4064
  %v4109 = vmul.f32 %v4041, %v4064
  %v4110 = vmul.f32 %v4042, %v4064
  %v4111 = vmul.f32 %v4043, %v4064
  %v4112 = vmul.f32 %v4044, %v4064
  %v4113 = vmul.f32 %v4045, %v4064
  %v4114 = vmul.f32 %v4046, %v4064
  %v4115 = vmul.f32 %v4047, %v4064
  %v4116 = vmul.f32 %v4048, %v4064
  %v4117 = vmul.f32 %v4049, %v4064
  %v4118 = vmul.f32 %v4050, %v4064
  %v4119 = vmul.f32 %v4051, %v4064
  %v4120 = vmul.f32 %v4052, %v4064
  %v4121 = vmul.f32 %v4053, %v4064
  %v4122 = vmul.f32 %v4054, %v4064
  %v4123 = vmul.f32 %v4055, %v4064
  %v4124 = vmul.f32 %v4056, %v4064
  %v4125 = vmul.f32 %v4057, %v4064
  %v4126 = vmul.f32 %v4058, %v4064
  %v4127 = vmul.f32 %v4059, %v4064
  %v4128 = vmul.f32 %v4060, %v4064
  %v4129 = vadd.f32 %v3909, %v4065
  %v4130 = vadd.f32 %v3910, %v4066
  %v4131 = vadd.f32 %v3911, %v4067
  %v4132 = vadd.f32 %v3912, %v4068
  %v4133 = vadd.f32 %v3913, %v4069
  %v4134 = vadd.f32 %v3914, %v4070
  %v4135 = vadd.f32 %v3915, %v4071
  %v4136 = vadd.f32 %v3916, %v4072
  %v4137 = vadd.f32 %v3917, %v4073
  %v4138 = vadd.f32 %v3918, %v4074
  %v4139 = vadd.f32 %v3919, %v4075
  %v4140 = vadd.f32 %v3920, %v4076
  %v4141 = vadd.f32 %v3921, %v4077
  %v4142 = vadd.f32 %v3922, %v4078
  %v4143 = vadd.f32 %v3923, %v4079
  %v4144 = vadd.f32 %v3924, %v4080
  %v4145 = vadd.f32 %v3925, %v4081
  %v4146 = vadd.f32 %v3926, %v4082
  %v4147 = vadd.f32 %v3927, %v4083
  %v4148 = vadd.f32 %v3928, %v4084
  %v4149 = vadd.f32 %v3929, %v4085
  %v4150 = vadd.f32 %v3930, %v4086
  %v4151 = vadd.f32 %v3931, %v4087
  %v4152 = vadd.f32 %v3932, %v4088
  %v4153 = vadd.f32 %v3933, %v4089
  %v4154 = vadd.f32 %v3934, %v4090
  %v4155 = vadd.f32 %v3935, %v4091
  %v4156 = vadd.f32 %v3936, %v4092
  %v4157 = vadd.f32 %v3937, %v4093
  %v4158 = vadd.f32 %v3938, %v4094
  %v4159 = vadd.f32 %v3939, %v4095
  %v4160 = vadd.f32 %v3940, %v4096
  %v4161 = vadd.f32 %v3941, %v4097
  %v4162 = vadd.f32 %v3942, %v4098
  %v4163 = vadd.f32 %v3943, %v4099
  %v4164 = vadd.f32 %v3944, %v4100
  %v4165 = vadd.f32 %v3945, %v4101
  %v4166 = vadd.f32 %v3946, %v4102
  %v4167 = vadd.f32 %v3947, %v4103
  %v4168 = vadd.f32 %v3948, %v4104
  %v4169 = vadd.f32 %v3949, %v4105
  %v4170 = vadd.f32 %v3950, %v4106
  %v4171 = vadd.f32 %v3951, %v4107
  %v4172 = vadd.f32 %v3952, %v4108
  %v4173 = vadd.f32 %v3953, %v4109
  %v4174 = vadd.f32 %v3954, %v4110
  %v4175 = vadd.f32 %v3955, %v4111
  %v4176 = vadd.f32 %v3956, %v4112
  %v4177 = vadd.f32 %v3957, %v4113
  %v4178 = vadd.f32 %v3958, %v4114
  %v4179 = vadd.f32 %v3959, %v4115
  %v4180 = vadd.f32 %v3960, %v4116
  %v4181 = vadd.f32 %v3961, %v4117
  %v4182 = vadd.f32 %v3962, %v4118
  %v4183 = vadd.f32 %v3963, %v4119
  %v4184 = vadd.f32 %v3964, %v4120
  %v4185 = vadd.f32 %v3965, %v4121
  %v4186 = vadd.f32 %v3966, %v4122
  %v4187 = vadd.f32 %v3967, %v4123
  %v4188 = vadd.f32 %v3968, %v4124
  %v4189 = vadd.f32 %v3969, %v4125
  %v4190 = vadd.f32 %v3970, %v4126
  %v4191 = vadd.f32 %v3971, %v4127
  %v4192 = vadd.f32 %v3972, %v4128
  %v4193 = vlaneseq
  %v4194 = vshrl.u32 %v4193, 7
  %v4195 = vsub.s32 7, %v4194
  %v4196 = vrot.slane %v2224, %v4195
  %v4197 = vmul.f32 %v2131, %v4196
  %v4198 = vmul.f32 %v2132, %v4196
  %v4199 = vmul.f32 %v2133, %v4196
  %v4200 = vmul.f32 %v2134, %v4196
  %v4201 = vmul.f32 %v2135, %v4196
  %v4202 = vmul.f32 %v2136, %v4196
  %v4203 = vmul.f32 %v2137, %v4196
  %v4204 = vmul.f32 %v2138, %v4196
  %v4205 = vmul.f32 %v2143, %v4196
  %v4206 = vmul.f32 %v2144, %v4196
  %v4207 = vmul.f32 %v2145, %v4196
  %v4208 = vmul.f32 %v2146, %v4196
  %v4209 = vmul.f32 %v2147, %v4196
  %v4210 = vmul.f32 %v2148, %v4196
  %v4211 = vmul.f32 %v2149, %v4196
  %v4212 = vmul.f32 %v2150, %v4196
  %v4213 = vmul.f32 %v2155, %v4196
  %v4214 = vmul.f32 %v2156, %v4196
  %v4215 = vmul.f32 %v2157, %v4196
  %v4216 = vmul.f32 %v2158, %v4196
  %v4217 = vmul.f32 %v2159, %v4196
  %v4218 = vmul.f32 %v2160, %v4196
  %v4219 = vmul.f32 %v2161, %v4196
  %v4220 = vmul.f32 %v2162, %v4196
  %v4221 = vmul.f32 %v2167, %v4196
  %v4222 = vmul.f32 %v2168, %v4196
  %v4223 = vmul.f32 %v2169, %v4196
  %v4224 = vmul.f32 %v2170, %v4196
  %v4225 = vmul.f32 %v2171, %v4196
  %v4226 = vmul.f32 %v2172, %v4196
  %v4227 = vmul.f32 %v2173, %v4196
  %v4228 = vmul.f32 %v2174, %v4196
  %v4229 = vmul.f32 %v2179, %v4196
  %v4230 = vmul.f32 %v2180, %v4196
  %v4231 = vmul.f32 %v2181, %v4196
  %v4232 = vmul.f32 %v2182, %v4196
  %v4233 = vmul.f32 %v2183, %v4196
  %v4234 = vmul.f32 %v2184, %v4196
  %v4235 = vmul.f32 %v2185, %v4196
  %v4236 = vmul.f32 %v2186, %v4196
  %v4237 = vmul.f32 %v2191, %v4196
  %v4238 = vmul.f32 %v2192, %v4196
  %v4239 = vmul.f32 %v2193, %v4196
  %v4240 = vmul.f32 %v2194, %v4196
  %v4241 = vmul.f32 %v2195, %v4196
  %v4242 = vmul.f32 %v2196, %v4196
  %v4243 = vmul.f32 %v2197, %v4196
  %v4244 = vmul.f32 %v2198, %v4196
  %v4245 = vmul.f32 %v2203, %v4196
  %v4246 = vmul.f32 %v2204, %v4196
  %v4247 = vmul.f32 %v2205, %v4196
  %v4248 = vmul.f32 %v2206, %v4196
  %v4249 = vmul.f32 %v2207, %v4196
  %v4250 = vmul.f32 %v2208, %v4196
  %v4251 = vmul.f32 %v2209, %v4196
  %v4252 = vmul.f32 %v2210, %v4196
  %v4253 = vmul.f32 %v2215, %v4196
  %v4254 = vmul.f32 %v2216, %v4196
  %v4255 = vmul.f32 %v2217, %v4196
  %v4256 = vmul.f32 %v2218, %v4196
  %v4257 = vmul.f32 %v2219, %v4196
  %v4258 = vmul.f32 %v2220, %v4196
  %v4259 = vmul.f32 %v2221, %v4196
  %v4260 = vmul.f32 %v2222, %v4196
  %v4261 = vadd.f32 %v4129, %v4197
  %v4262 = vadd.f32 %v4130, %v4198
  %v4263 = vadd.f32 %v4131, %v4199
  %v4264 = vadd.f32 %v4132, %v4200
  %v4265 = vadd.f32 %v4133, %v4201
  %v4266 = vadd.f32 %v4134, %v4202
  %v4267 = vadd.f32 %v4135, %v4203
  %v4268 = vadd.f32 %v4136, %v4204
  %v4269 = vadd.f32 %v4137, %v4205
  %v4270 = vadd.f32 %v4138, %v4206
  %v4271 = vadd.f32 %v4139, %v4207
  %v4272 = vadd.f32 %v4140, %v4208
  %v4273 = vadd.f32 %v4141, %v4209
  %v4274 = vadd.f32 %v4142, %v4210
  %v4275 = vadd.f32 %v4143, %v4211
  %v4276 = vadd.f32 %v4144, %v4212
  %v4277 = vadd.f32 %v4145, %v4213
  %v4278 = vadd.f32 %v4146, %v4214
  %v4279 = vadd.f32 %v4147, %v4215
  %v4280 = vadd.f32 %v4148, %v4216
  %v4281 = vadd.f32 %v4149, %v4217
  %v4282 = vadd.f32 %v4150, %v4218
  %v4283 = vadd.f32 %v4151, %v4219
  %v4284 = vadd.f32 %v4152, %v4220
  %v4285 = vadd.f32 %v4153, %v4221
  %v4286 = vadd.f32 %v4154, %v4222
  %v4287 = vadd.f32 %v4155, %v4223
  %v4288 = vadd.f32 %v4156, %v4224
  %v4289 = vadd.f32 %v4157, %v4225
  %v4290 = vadd.f32 %v4158, %v4226
  %v4291 = vadd.f32 %v4159, %v4227
  %v4292 = vadd.f32 %v4160, %v4228
  %v4293 = vadd.f32 %v4161, %v4229
  %v4294 = vadd.f32 %v4162, %v4230
  %v4295 = vadd.f32 %v4163, %v4231
  %v4296 = vadd.f32 %v4164, %v4232
  %v4297 = vadd.f32 %v4165, %v4233
  %v4298 = vadd.f32 %v4166, %v4234
  %v4299 = vadd.f32 %v4167, %v4235
  %v4300 = vadd.f32 %v4168, %v4236
  %v4301 = vadd.f32 %v4169, %v4237
  %v4302 = vadd.f32 %v4170, %v4238
  %v4303 = vadd.f32 %v4171, %v4239
  %v4304 = vadd.f32 %v4172, %v4240
  %v4305 = vadd.f32 %v4173, %v4241
  %v4306 = vadd.f32 %v4174, %v4242
  %v4307 = vadd.f32 %v4175, %v4243
  %v4308 = vadd.f32 %v4176, %v4244
  %v4309 = vadd.f32 %v4177, %v4245
  %v4310 = vadd.f32 %v4178, %v4246
  %v4311 = vadd.f32 %v4179, %v4247
  %v4312 = vadd.f32 %v4180, %v4248
  %v4313 = vadd.f32 %v4181, %v4249
  %v4314 = vadd.f32 %v4182, %v4250
  %v4315 = vadd.f32 %v4183, %v4251
  %v4316 = vadd.f32 %v4184, %v4252
  %v4317 = vadd.f32 %v4185, %v4253
  %v4318 = vadd.f32 %v4186, %v4254
  %v4319 = vadd.f32 %v4187, %v4255
  %v4320 = vadd.f32 %v4188, %v4256
  %v4321 = vadd.f32 %v4189, %v4257
  %v4322 = vadd.f32 %v4190, %v4258
  %v4323 = vadd.f32 %v4191, %v4259
  %v4324 = vadd.f32 %v4192, %v4260
  %v4333 = vrot.slane %v2139, 1
  %v4334 = vsel %vm2996, %v3753, %v4333
  %v4335 = vrot.slane %v2151, 1
  %v4336 = vsel %vm2996, %v3755, %v4335
  %v4337 = vrot.slane %v2163, 1
  %v4338 = vsel %vm2996, %v3757, %v4337
  %v4339 = vrot.slane %v2175, 1
  %v4340 = vsel %vm2996, %v3759, %v4339
  %v4341 = vrot.slane %v2187, 1
  %v4342 = vsel %vm2996, %v3761, %v4341
  %v4343 = vrot.slane %v2199, 1
  %v4344 = vsel %vm2996, %v3763, %v4343
  %v4345 = vrot.slane %v2211, 1
  %v4346 = vsel %vm2996, %v3765, %v4345
  %v4347 = vrot.slane %v2223, 1
  %v4348 = vsel %vm2996, %v3767, %v4347
  %v4357 = vsel %vm2980, %v3003, 0.0
  %v4358 = vsel %vm2981, %v3005, 0.0
  %v4359 = vsel %vm2982, %v3007, 0.0
  %v4360 = vsel %vm2983, %v3009, 0.0
  %v4361 = vsel %vm2984, %v3011, 0.0
  %v4362 = vsel %vm2985, %v3013, 0.0
  %v4363 = vsel %vm2986, %v3754, 0.0
  %v4364 = vsel %vm2987, %v4334, 0.0
  %v4365 = vsel %vm2980, %v3020, 0.0
  %v4366 = vsel %vm2981, %v3022, 0.0
  %v4367 = vsel %vm2982, %v3024, 0.0
  %v4368 = vsel %vm2983, %v3026, 0.0
  %v4369 = vsel %vm2984, %v3028, 0.0
  %v4370 = vsel %vm2985, %v3030, 0.0
  %v4371 = vsel %vm2986, %v3756, 0.0
  %v4372 = vsel %vm2987, %v4336, 0.0
  %v4373 = vsel %vm2980, %v3037, 0.0
  %v4374 = vsel %vm2981, %v3039, 0.0
  %v4375 = vsel %vm2982, %v3041, 0.0
  %v4376 = vsel %vm2983, %v3043, 0.0
  %v4377 = vsel %vm2984, %v3045, 0.0
  %v4378 = vsel %vm2985, %v3047, 0.0
  %v4379 = vsel %vm2986, %v3758, 0.0
  %v4380 = vsel %vm2987, %v4338, 0.0
  %v4381 = vsel %vm2980, %v3054, 0.0
  %v4382 = vsel %vm2981, %v3056, 0.0
  %v4383 = vsel %vm2982, %v3058, 0.0
  %v4384 = vsel %vm2983, %v3060, 0.0
  %v4385 = vsel %vm2984, %v3062, 0.0
  %v4386 = vsel %vm2985, %v3064, 0.0
  %v4387 = vsel %vm2986, %v3760, 0.0
  %v4388 = vsel %vm2987, %v4340, 0.0
  %v4389 = vsel %vm2980, %v3071, 0.0
  %v4390 = vsel %vm2981, %v3073, 0.0
  %v4391 = vsel %vm2982, %v3075, 0.0
  %v4392 = vsel %vm2983, %v3077, 0.0
  %v4393 = vsel %vm2984, %v3079, 0.0
  %v4394 = vsel %vm2985, %v3081, 0.0
  %v4395 = vsel %vm2986, %v3762, 0.0
  %v4396 = vsel %vm2987, %v4342, 0.0
  %v4397 = vsel %vm2980, %v3088, 0.0
  %v4398 = vsel %vm2981, %v3090, 0.0
  %v4399 = vsel %vm2982, %v3092, 0.0
  %v4400 = vsel %vm2983, %v3094, 0.0
  %v4401 = vsel %vm2984, %v3096, 0.0
  %v4402 = vsel %vm2985, %v3098, 0.0
  %v4403 = vsel %vm2986, %v3764, 0.0
  %v4404 = vsel %vm2987, %v4344, 0.0
  %v4405 = vsel %vm2980, %v3105, 0.0
  %v4406 = vsel %vm2981, %v3107, 0.0
  %v4407 = vsel %vm2982, %v3109, 0.0
  %v4408 = vsel %vm2983, %v3111, 0.0
  %v4409 = vsel %vm2984, %v3113, 0.0
  %v4410 = vsel %vm2985, %v3115, 0.0
  %v4411 = vsel %vm2986, %v3766, 0.0
  %v4412 = vsel %vm2987, %v4346, 0.0
  %v4413 = vsel %vm2980, %v3122, 0.0
  %v4414 = vsel %vm2981, %v3124, 0.0
  %v4415 = vsel %vm2982, %v3126, 0.0
  %v4416 = vsel %vm2983, %v3128, 0.0
  %v4417 = vsel %vm2984, %v3130, 0.0
  %v4418 = vsel %vm2985, %v3132, 0.0
  %v4419 = vsel %vm2986, %v3768, 0.0
  %v4420 = vsel %vm2987, %v4348, 0.0
  %v4421 = vlaneseq
  %v4422 = vshrl.u32 %v4421, 7
  %v4423 = vsub.s32 0, %v4422
  %v4424 = vrot.slane %v2225, %v4423
  %v4425 = vmul.f32 %v4357, %v4424
  %v4426 = vmul.f32 %v4358, %v4424
  %v4427 = vmul.f32 %v4359, %v4424
  %v4428 = vmul.f32 %v4360, %v4424
  %v4429 = vmul.f32 %v4361, %v4424
  %v4430 = vmul.f32 %v4362, %v4424
  %v4431 = vmul.f32 %v4363, %v4424
  %v4432 = vmul.f32 %v4364, %v4424
  %v4433 = vmul.f32 %v4365, %v4424
  %v4434 = vmul.f32 %v4366, %v4424
  %v4435 = vmul.f32 %v4367, %v4424
  %v4436 = vmul.f32 %v4368, %v4424
  %v4437 = vmul.f32 %v4369, %v4424
  %v4438 = vmul.f32 %v4370, %v4424
  %v4439 = vmul.f32 %v4371, %v4424
  %v4440 = vmul.f32 %v4372, %v4424
  %v4441 = vmul.f32 %v4373, %v4424
  %v4442 = vmul.f32 %v4374, %v4424
  %v4443 = vmul.f32 %v4375, %v4424
  %v4444 = vmul.f32 %v4376, %v4424
  %v4445 = vmul.f32 %v4377, %v4424
  %v4446 = vmul.f32 %v4378, %v4424
  %v4447 = vmul.f32 %v4379, %v4424
  %v4448 = vmul.f32 %v4380, %v4424
  %v4449 = vmul.f32 %v4381, %v4424
  %v4450 = vmul.f32 %v4382, %v4424
  %v4451 = vmul.f32 %v4383, %v4424
  %v4452 = vmul.f32 %v4384, %v4424
  %v4453 = vmul.f32 %v4385, %v4424
  %v4454 = vmul.f32 %v4386, %v4424
  %v4455 = vmul.f32 %v4387, %v4424
  %v4456 = vmul.f32 %v4388, %v4424
  %v4457 = vmul.f32 %v4389, %v4424
  %v4458 = vmul.f32 %v4390, %v4424
  %v4459 = vmul.f32 %v4391, %v4424
  %v4460 = vmul.f32 %v4392, %v4424
  %v4461 = vmul.f32 %v4393, %v4424
  %v4462 = vmul.f32 %v4394, %v4424
  %v4463 = vmul.f32 %v4395, %v4424
  %v4464 = vmul.f32 %v4396, %v4424
  %v4465 = vmul.f32 %v4397, %v4424
  %v4466 = vmul.f32 %v4398, %v4424
  %v4467 = vmul.f32 %v4399, %v4424
  %v4468 = vmul.f32 %v4400, %v4424
  %v4469 = vmul.f32 %v4401, %v4424
  %v4470 = vmul.f32 %v4402, %v4424
  %v4471 = vmul.f32 %v4403, %v4424
  %v4472 = vmul.f32 %v4404, %v4424
  %v4473 = vmul.f32 %v4405, %v4424
  %v4474 = vmul.f32 %v4406, %v4424
  %v4475 = vmul.f32 %v4407, %v4424
  %v4476 = vmul.f32 %v4408, %v4424
  %v4477 = vmul.f32 %v4409, %v4424
  %v4478 = vmul.f32 %v4410, %v4424
  %v4479 = vmul.f32 %v4411, %v4424
  %v4480 = vmul.f32 %v4412, %v4424
  %v4481 = vmul.f32 %v4413, %v4424
  %v4482 = vmul.f32 %v4414, %v4424
  %v4483 = vmul.f32 %v4415, %v4424
  %v4484 = vmul.f32 %v4416, %v4424
  %v4485 = vmul.f32 %v4417, %v4424
  %v4486 = vmul.f32 %v4418, %v4424
  %v4487 = vmul.f32 %v4419, %v4424
  %v4488 = vmul.f32 %v4420, %v4424
  %v4489 = vadd.f32 %v4261, %v4425
  %v4490 = vadd.f32 %v4262, %v4426
  %v4491 = vadd.f32 %v4263, %v4427
  %v4492 = vadd.f32 %v4264, %v4428
  %v4493 = vadd.f32 %v4265, %v4429
  %v4494 = vadd.f32 %v4266, %v4430
  %v4495 = vadd.f32 %v4267, %v4431
  %v4496 = vadd.f32 %v4268, %v4432
  %v4497 = vadd.f32 %v4269, %v4433
  %v4498 = vadd.f32 %v4270, %v4434
  %v4499 = vadd.f32 %v4271, %v4435
  %v4500 = vadd.f32 %v4272, %v4436
  %v4501 = vadd.f32 %v4273, %v4437
  %v4502 = vadd.f32 %v4274, %v4438
  %v4503 = vadd.f32 %v4275, %v4439
  %v4504 = vadd.f32 %v4276, %v4440
  %v4505 = vadd.f32 %v4277, %v4441
  %v4506 = vadd.f32 %v4278, %v4442
  %v4507 = vadd.f32 %v4279, %v4443
  %v4508 = vadd.f32 %v4280, %v4444
  %v4509 = vadd.f32 %v4281, %v4445
  %v4510 = vadd.f32 %v4282, %v4446
  %v4511 = vadd.f32 %v4283, %v4447
  %v4512 = vadd.f32 %v4284, %v4448
  %v4513 = vadd.f32 %v4285, %v4449
  %v4514 = vadd.f32 %v4286, %v4450
  %v4515 = vadd.f32 %v4287, %v4451
  %v4516 = vadd.f32 %v4288, %v4452
  %v4517 = vadd.f32 %v4289, %v4453
  %v4518 = vadd.f32 %v4290, %v4454
  %v4519 = vadd.f32 %v4291, %v4455
  %v4520 = vadd.f32 %v4292, %v4456
  %v4521 = vadd.f32 %v4293, %v4457
  %v4522 = vadd.f32 %v4294, %v4458
  %v4523 = vadd.f32 %v4295, %v4459
  %v4524 = vadd.f32 %v4296, %v4460
  %v4525 = vadd.f32 %v4297, %v4461
  %v4526 = vadd.f32 %v4298, %v4462
  %v4527 = vadd.f32 %v4299, %v4463
  %v4528 = vadd.f32 %v4300, %v4464
  %v4529 = vadd.f32 %v4301, %v4465
  %v4530 = vadd.f32 %v4302, %v4466
  %v4531 = vadd.f32 %v4303, %v4467
  %v4532 = vadd.f32 %v4304, %v4468
  %v4533 = vadd.f32 %v4305, %v4469
  %v4534 = vadd.f32 %v4306, %v4470
  %v4535 = vadd.f32 %v4307, %v4471
  %v4536 = vadd.f32 %v4308, %v4472
  %v4537 = vadd.f32 %v4309, %v4473
  %v4538 = vadd.f32 %v4310, %v4474
  %v4539 = vadd.f32 %v4311, %v4475
  %v4540 = vadd.f32 %v4312, %v4476
  %v4541 = vadd.f32 %v4313, %v4477
  %v4542 = vadd.f32 %v4314, %v4478
  %v4543 = vadd.f32 %v4315, %v4479
  %v4544 = vadd.f32 %v4316, %v4480
  %v4545 = vadd.f32 %v4317, %v4481
  %v4546 = vadd.f32 %v4318, %v4482
  %v4547 = vadd.f32 %v4319, %v4483
  %v4548 = vadd.f32 %v4320, %v4484
  %v4549 = vadd.f32 %v4321, %v4485
  %v4550 = vadd.f32 %v4322, %v4486
  %v4551 = vadd.f32 %v4323, %v4487
  %v4552 = vadd.f32 %v4324, %v4488
  %v4553 = vxor.u32 %v4489, 2147483648
  %v4554 = vxor.u32 %v4490, 2147483648
  %v4555 = vxor.u32 %v4491, 2147483648
  %v4556 = vxor.u32 %v4492, 2147483648
  %v4557 = vxor.u32 %v4493, 2147483648
  %v4558 = vxor.u32 %v4494, 2147483648
  %v4559 = vxor.u32 %v4495, 2147483648
  %v4560 = vxor.u32 %v4496, 2147483648
  %v4561 = vxor.u32 %v4497, 2147483648
  %v4562 = vxor.u32 %v4498, 2147483648
  %v4563 = vxor.u32 %v4499, 2147483648
  %v4564 = vxor.u32 %v4500, 2147483648
  %v4565 = vxor.u32 %v4501, 2147483648
  %v4566 = vxor.u32 %v4502, 2147483648
  %v4567 = vxor.u32 %v4503, 2147483648
  %v4568 = vxor.u32 %v4504, 2147483648
  %v4569 = vxor.u32 %v4505, 2147483648
  %v4570 = vxor.u32 %v4506, 2147483648
  %v4571 = vxor.u32 %v4507, 2147483648
  %v4572 = vxor.u32 %v4508, 2147483648
  %v4573 = vxor.u32 %v4509, 2147483648
  %v4574 = vxor.u32 %v4510, 2147483648
  %v4575 = vxor.u32 %v4511, 2147483648
  %v4576 = vxor.u32 %v4512, 2147483648
  %v4577 = vxor.u32 %v4513, 2147483648
  %v4578 = vxor.u32 %v4514, 2147483648
  %v4579 = vxor.u32 %v4515, 2147483648
  %v4580 = vxor.u32 %v4516, 2147483648
  %v4581 = vxor.u32 %v4517, 2147483648
  %v4582 = vxor.u32 %v4518, 2147483648
  %v4583 = vxor.u32 %v4519, 2147483648
  %v4584 = vxor.u32 %v4520, 2147483648
  %v4585 = vxor.u32 %v4521, 2147483648
  %v4586 = vxor.u32 %v4522, 2147483648
  %v4587 = vxor.u32 %v4523, 2147483648
  %v4588 = vxor.u32 %v4524, 2147483648
  %v4589 = vxor.u32 %v4525, 2147483648
  %v4590 = vxor.u32 %v4526, 2147483648
  %v4591 = vxor.u32 %v4527, 2147483648
  %v4592 = vxor.u32 %v4528, 2147483648
  %v4593 = vxor.u32 %v4529, 2147483648
  %v4594 = vxor.u32 %v4530, 2147483648
  %v4595 = vxor.u32 %v4531, 2147483648
  %v4596 = vxor.u32 %v4532, 2147483648
  %v4597 = vxor.u32 %v4533, 2147483648
  %v4598 = vxor.u32 %v4534, 2147483648
  %v4599 = vxor.u32 %v4535, 2147483648
  %v4600 = vxor.u32 %v4536, 2147483648
  %v4601 = vxor.u32 %v4537, 2147483648
  %v4602 = vxor.u32 %v4538, 2147483648
  %v4603 = vxor.u32 %v4539, 2147483648
  %v4604 = vxor.u32 %v4540, 2147483648
  %v4605 = vxor.u32 %v4541, 2147483648
  %v4606 = vxor.u32 %v4542, 2147483648
  %v4607 = vxor.u32 %v4543, 2147483648
  %v4608 = vxor.u32 %v4544, 2147483648
  %v4609 = vxor.u32 %v4545, 2147483648
  %v4610 = vxor.u32 %v4546, 2147483648
  %v4611 = vxor.u32 %v4547, 2147483648
  %v4612 = vxor.u32 %v4548, 2147483648
  %v4613 = vxor.u32 %v4549, 2147483648
  %v4614 = vxor.u32 %v4550, 2147483648
  %v4615 = vxor.u32 %v4551, 2147483648
  %v4616 = vxor.u32 %v4552, 2147483648
  %v4617 = vmul.f32 %v4553, 1.442695
  %v4618 = vpow.pop %v4617
  %v4619 = vmul.f32 %v4554, 1.442695
  %v4620 = vpow.pop %v4619
  %v4621 = vmul.f32 %v4555, 1.442695
  %v4622 = vpow.pop %v4621
  %v4623 = vmul.f32 %v4556, 1.442695
  %v4624 = vpow.pop %v4623
  %v4625 = vmul.f32 %v4557, 1.442695
  %v4626 = vpow.pop %v4625
  %v4627 = vmul.f32 %v4558, 1.442695
  %v4628 = vpow.pop %v4627
  %v4629 = vmul.f32 %v4559, 1.442695
  %v4630 = vpow.pop %v4629
  %v4631 = vmul.f32 %v4560, 1.442695
  %v4632 = vpow.pop %v4631
  %v4633 = vmul.f32 %v4561, 1.442695
  %v4634 = vpow.pop %v4633
  %v4635 = vmul.f32 %v4562, 1.442695
  %v4636 = vpow.pop %v4635
  %v4637 = vmul.f32 %v4563, 1.442695
  %v4638 = vpow.pop %v4637
  %v4639 = vmul.f32 %v4564, 1.442695
  %v4640 = vpow.pop %v4639
  %v4641 = vmul.f32 %v4565, 1.442695
  %v4642 = vpow.pop %v4641
  %v4643 = vmul.f32 %v4566, 1.442695
  %v4644 = vpow.pop %v4643
  %v4645 = vmul.f32 %v4567, 1.442695
  %v4646 = vpow.pop %v4645
  %v4647 = vmul.f32 %v4568, 1.442695
  %v4648 = vpow.pop %v4647
  %v4649 = vmul.f32 %v4569, 1.442695
  %v4650 = vpow.pop %v4649
  %v4651 = vmul.f32 %v4570, 1.442695
  %v4652 = vpow.pop %v4651
  %v4653 = vmul.f32 %v4571, 1.442695
  %v4654 = vpow.pop %v4653
  %v4655 = vmul.f32 %v4572, 1.442695
  %v4656 = vpow.pop %v4655
  %v4657 = vmul.f32 %v4573, 1.442695
  %v4658 = vpow.pop %v4657
  %v4659 = vmul.f32 %v4574, 1.442695
  %v4660 = vpow.pop %v4659
  %v4661 = vmul.f32 %v4575, 1.442695
  %v4662 = vpow.pop %v4661
  %v4663 = vmul.f32 %v4576, 1.442695
  %v4664 = vpow.pop %v4663
  %v4665 = vmul.f32 %v4577, 1.442695
  %v4666 = vpow.pop %v4665
  %v4667 = vmul.f32 %v4578, 1.442695
  %v4668 = vpow.pop %v4667
  %v4669 = vmul.f32 %v4579, 1.442695
  %v4670 = vpow.pop %v4669
  %v4671 = vmul.f32 %v4580, 1.442695
  %v4672 = vpow.pop %v4671
  %v4673 = vmul.f32 %v4581, 1.442695
  %v4674 = vpow.pop %v4673
  %v4675 = vmul.f32 %v4582, 1.442695
  %v4676 = vpow.pop %v4675
  %v4677 = vmul.f32 %v4583, 1.442695
  %v4678 = vpow.pop %v4677
  %v4679 = vmul.f32 %v4584, 1.442695
  %v4680 = vpow.pop %v4679
  %v4681 = vmul.f32 %v4585, 1.442695
  %v4682 = vpow.pop %v4681
  %v4683 = vmul.f32 %v4586, 1.442695
  %v4684 = vpow.pop %v4683
  %v4685 = vmul.f32 %v4587, 1.442695
  %v4686 = vpow.pop %v4685
  %v4687 = vmul.f32 %v4588, 1.442695
  %v4688 = vpow.pop %v4687
  %v4689 = vmul.f32 %v4589, 1.442695
  %v4690 = vpow.pop %v4689
  %v4691 = vmul.f32 %v4590, 1.442695
  %v4692 = vpow.pop %v4691
  %v4693 = vmul.f32 %v4591, 1.442695
  %v4694 = vpow.pop %v4693
  %v4695 = vmul.f32 %v4592, 1.442695
  %v4696 = vpow.pop %v4695
  %v4697 = vmul.f32 %v4593, 1.442695
  %v4698 = vpow.pop %v4697
  %v4699 = vmul.f32 %v4594, 1.442695
  %v4700 = vpow.pop %v4699
  %v4701 = vmul.f32 %v4595, 1.442695
  %v4702 = vpow.pop %v4701
  %v4703 = vmul.f32 %v4596, 1.442695
  %v4704 = vpow.pop %v4703
  %v4705 = vmul.f32 %v4597, 1.442695
  %v4706 = vpow.pop %v4705
  %v4707 = vmul.f32 %v4598, 1.442695
  %v4708 = vpow.pop %v4707
  %v4709 = vmul.f32 %v4599, 1.442695
  %v4710 = vpow.pop %v4709
  %v4711 = vmul.f32 %v4600, 1.442695
  %v4712 = vpow.pop %v4711
  %v4713 = vmul.f32 %v4601, 1.442695
  %v4714 = vpow.pop %v4713
  %v4715 = vmul.f32 %v4602, 1.442695
  %v4716 = vpow.pop %v4715
  %v4717 = vmul.f32 %v4603, 1.442695
  %v4718 = vpow.pop %v4717
  %v4719 = vmul.f32 %v4604, 1.442695
  %v4720 = vpow.pop %v4719
  %v4721 = vmul.f32 %v4605, 1.442695
  %v4722 = vpow.pop %v4721
  %v4723 = vmul.f32 %v4606, 1.442695
  %v4724 = vpow.pop %v4723
  %v4725 = vmul.f32 %v4607, 1.442695
  %v4726 = vpow.pop %v4725
  %v4727 = vmul.f32 %v4608, 1.442695
  %v4728 = vpow.pop %v4727
  %v4729 = vmul.f32 %v4609, 1.442695
  %v4730 = vpow.pop %v4729
  %v4731 = vmul.f32 %v4610, 1.442695
  %v4732 = vpow.pop %v4731
  %v4733 = vmul.f32 %v4611, 1.442695
  %v4734 = vpow.pop %v4733
  %v4735 = vmul.f32 %v4612, 1.442695
  %v4736 = vpow.pop %v4735
  %v4737 = vmul.f32 %v4613, 1.442695
  %v4738 = vpow.pop %v4737
  %v4739 = vmul.f32 %v4614, 1.442695
  %v4740 = vpow.pop %v4739
  %v4741 = vmul.f32 %v4615, 1.442695
  %v4742 = vpow.pop %v4741
  %v4743 = vmul.f32 %v4616, 1.442695
  %v4744 = vpow.pop %v4743
  %v4745 = vadd.f32 %v4618, 1.0
  %v4746 = vadd.f32 %v4620, 1.0
  %v4747 = vadd.f32 %v4622, 1.0
  %v4748 = vadd.f32 %v4624, 1.0
  %v4749 = vadd.f32 %v4626, 1.0
  %v4750 = vadd.f32 %v4628, 1.0
  %v4751 = vadd.f32 %v4630, 1.0
  %v4752 = vadd.f32 %v4632, 1.0
  %v4753 = vadd.f32 %v4634, 1.0
  %v4754 = vadd.f32 %v4636, 1.0
  %v4755 = vadd.f32 %v4638, 1.0
  %v4756 = vadd.f32 %v4640, 1.0
  %v4757 = vadd.f32 %v4642, 1.0
  %v4758 = vadd.f32 %v4644, 1.0
  %v4759 = vadd.f32 %v4646, 1.0
  %v4760 = vadd.f32 %v4648, 1.0
  %v4761 = vadd.f32 %v4650, 1.0
  %v4762 = vadd.f32 %v4652, 1.0
  %v4763 = vadd.f32 %v4654, 1.0
  %v4764 = vadd.f32 %v4656, 1.0
  %v4765 = vadd.f32 %v4658, 1.0
  %v4766 = vadd.f32 %v4660, 1.0
  %v4767 = vadd.f32 %v4662, 1.0
  %v4768 = vadd.f32 %v4664, 1.0
  %v4769 = vadd.f32 %v4666, 1.0
  %v4770 = vadd.f32 %v4668, 1.0
  %v4771 = vadd.f32 %v4670, 1.0
  %v4772 = vadd.f32 %v4672, 1.0
  %v4773 = vadd.f32 %v4674, 1.0
  %v4774 = vadd.f32 %v4676, 1.0
  %v4775 = vadd.f32 %v4678, 1.0
  %v4776 = vadd.f32 %v4680, 1.0
  %v4777 = vadd.f32 %v4682, 1.0
  %v4778 = vadd.f32 %v4684, 1.0
  %v4779 = vadd.f32 %v4686, 1.0
  %v4780 = vadd.f32 %v4688, 1.0
  %v4781 = vadd.f32 %v4690, 1.0
  %v4782 = vadd.f32 %v4692, 1.0
  %v4783 = vadd.f32 %v4694, 1.0
  %v4784 = vadd.f32 %v4696, 1.0
  %v4785 = vadd.f32 %v4698, 1.0
  %v4786 = vadd.f32 %v4700, 1.0
  %v4787 = vadd.f32 %v4702, 1.0
  %v4788 = vadd.f32 %v4704, 1.0
  %v4789 = vadd.f32 %v4706, 1.0
  %v4790 = vadd.f32 %v4708, 1.0
  %v4791 = vadd.f32 %v4710, 1.0
  %v4792 = vadd.f32 %v4712, 1.0
  %v4793 = vadd.f32 %v4714, 1.0
  %v4794 = vadd.f32 %v4716, 1.0
  %v4795 = vadd.f32 %v4718, 1.0
  %v4796 = vadd.f32 %v4720, 1.0
  %v4797 = vadd.f32 %v4722, 1.0
  %v4798 = vadd.f32 %v4724, 1.0
  %v4799 = vadd.f32 %v4726, 1.0
  %v4800 = vadd.f32 %v4728, 1.0
  %v4801 = vadd.f32 %v4730, 1.0
  %v4802 = vadd.f32 %v4732, 1.0
  %v4803 = vadd.f32 %v4734, 1.0
  %v4804 = vadd.f32 %v4736, 1.0
  %v4805 = vadd.f32 %v4738, 1.0
  %v4806 = vadd.f32 %v4740, 1.0
  %v4807 = vadd.f32 %v4742, 1.0
  %v4808 = vadd.f32 %v4744, 1.0
  %v4809 = vrcp.pop %v4745
  %v4810 = vmul.f32 1.0, %v4809
  %v4811 = vrcp.pop %v4746
  %v4812 = vmul.f32 1.0, %v4811
  %v4813 = vrcp.pop %v4747
  %v4814 = vmul.f32 1.0, %v4813
  %v4815 = vrcp.pop %v4748
  %v4816 = vmul.f32 1.0, %v4815
  %v4817 = vrcp.pop %v4749
  %v4818 = vmul.f32 1.0, %v4817
  %v4819 = vrcp.pop %v4750
  %v4820 = vmul.f32 1.0, %v4819
  %v4821 = vrcp.pop %v4751
  %v4822 = vmul.f32 1.0, %v4821
  %v4823 = vrcp.pop %v4752
  %v4824 = vmul.f32 1.0, %v4823
  %v4825 = vrcp.pop %v4753
  %v4826 = vmul.f32 1.0, %v4825
  %v4827 = vrcp.pop %v4754
  %v4828 = vmul.f32 1.0, %v4827
  %v4829 = vrcp.pop %v4755
  %v4830 = vmul.f32 1.0, %v4829
  %v4831 = vrcp.pop %v4756
  %v4832 = vmul.f32 1.0, %v4831
  %v4833 = vrcp.pop %v4757
  %v4834 = vmul.f32 1.0, %v4833
  %v4835 = vrcp.pop %v4758
  %v4836 = vmul.f32 1.0, %v4835
  %v4837 = vrcp.pop %v4759
  %v4838 = vmul.f32 1.0, %v4837
  %v4839 = vrcp.pop %v4760
  %v4840 = vmul.f32 1.0, %v4839
  %v4841 = vrcp.pop %v4761
  %v4842 = vmul.f32 1.0, %v4841
  %v4843 = vrcp.pop %v4762
  %v4844 = vmul.f32 1.0, %v4843
  %v4845 = vrcp.pop %v4763
  %v4846 = vmul.f32 1.0, %v4845
  %v4847 = vrcp.pop %v4764
  %v4848 = vmul.f32 1.0, %v4847
  %v4849 = vrcp.pop %v4765
  %v4850 = vmul.f32 1.0, %v4849
  %v4851 = vrcp.pop %v4766
  %v4852 = vmul.f32 1.0, %v4851
  %v4853 = vrcp.pop %v4767
  %v4854 = vmul.f32 1.0, %v4853
  %v4855 = vrcp.pop %v4768
  %v4856 = vmul.f32 1.0, %v4855
  %v4857 = vrcp.pop %v4769
  %v4858 = vmul.f32 1.0, %v4857
  %v4859 = vrcp.pop %v4770
  %v4860 = vmul.f32 1.0, %v4859
  %v4861 = vrcp.pop %v4771
  %v4862 = vmul.f32 1.0, %v4861
  %v4863 = vrcp.pop %v4772
  %v4864 = vmul.f32 1.0, %v4863
  %v4865 = vrcp.pop %v4773
  %v4866 = vmul.f32 1.0, %v4865
  %v4867 = vrcp.pop %v4774
  %v4868 = vmul.f32 1.0, %v4867
  %v4869 = vrcp.pop %v4775
  %v4870 = vmul.f32 1.0, %v4869
  %v4871 = vrcp.pop %v4776
  %v4872 = vmul.f32 1.0, %v4871
  %v4873 = vrcp.pop %v4777
  %v4874 = vmul.f32 1.0, %v4873
  %v4875 = vrcp.pop %v4778
  %v4876 = vmul.f32 1.0, %v4875
  %v4877 = vrcp.pop %v4779
  %v4878 = vmul.f32 1.0, %v4877
  %v4879 = vrcp.pop %v4780
  %v4880 = vmul.f32 1.0, %v4879
  %v4881 = vrcp.pop %v4781
  %v4882 = vmul.f32 1.0, %v4881
  %v4883 = vrcp.pop %v4782
  %v4884 = vmul.f32 1.0, %v4883
  %v4885 = vrcp.pop %v4783
  %v4886 = vmul.f32 1.0, %v4885
  %v4887 = vrcp.pop %v4784
  %v4888 = vmul.f32 1.0, %v4887
  %v4889 = vrcp.pop %v4785
  %v4890 = vmul.f32 1.0, %v4889
  %v4891 = vrcp.pop %v4786
  %v4892 = vmul.f32 1.0, %v4891
  %v4893 = vrcp.pop %v4787
  %v4894 = vmul.f32 1.0, %v4893
  %v4895 = vrcp.pop %v4788
  %v4896 = vmul.f32 1.0, %v4895
  %v4897 = vrcp.pop %v4789
  %v4898 = vmul.f32 1.0, %v4897
  %v4899 = vrcp.pop %v4790
  %v4900 = vmul.f32 1.0, %v4899
  %v4901 = vrcp.pop %v4791
  %v4902 = vmul.f32 1.0, %v4901
  %v4903 = vrcp.pop %v4792
  %v4904 = vmul.f32 1.0, %v4903
  %v4905 = vrcp.pop %v4793
  %v4906 = vmul.f32 1.0, %v4905
  %v4907 = vrcp.pop %v4794
  %v4908 = vmul.f32 1.0, %v4907
  %v4909 = vrcp.pop %v4795
  %v4910 = vmul.f32 1.0, %v4909
  %v4911 = vrcp.pop %v4796
  %v4912 = vmul.f32 1.0, %v4911
  %v4913 = vrcp.pop %v4797
  %v4914 = vmul.f32 1.0, %v4913
  %v4915 = vrcp.pop %v4798
  %v4916 = vmul.f32 1.0, %v4915
  %v4917 = vrcp.pop %v4799
  %v4918 = vmul.f32 1.0, %v4917
  %v4919 = vrcp.pop %v4800
  %v4920 = vmul.f32 1.0, %v4919
  %v4921 = vrcp.pop %v4801
  %v4922 = vmul.f32 1.0, %v4921
  %v4923 = vrcp.pop %v4802
  %v4924 = vmul.f32 1.0, %v4923
  %v4925 = vrcp.pop %v4803
  %v4926 = vmul.f32 1.0, %v4925
  %v4927 = vrcp.pop %v4804
  %v4928 = vmul.f32 1.0, %v4927
  %v4929 = vrcp.pop %v4805
  %v4930 = vmul.f32 1.0, %v4929
  %v4931 = vrcp.pop %v4806
  %v4932 = vmul.f32 1.0, %v4931
  %v4933 = vrcp.pop %v4807
  %v4934 = vmul.f32 1.0, %v4933
  %v4935 = vrcp.pop %v4808
  %v4936 = vmul.f32 1.0, %v4935
  %v4937 = vmul.f32 %v4489, %v4810
  %v4938 = vmul.f32 %v4490, %v4812
  %v4939 = vmul.f32 %v4491, %v4814
  %v4940 = vmul.f32 %v4492, %v4816
  %v4941 = vmul.f32 %v4493, %v4818
  %v4942 = vmul.f32 %v4494, %v4820
  %v4943 = vmul.f32 %v4495, %v4822
  %v4944 = vmul.f32 %v4496, %v4824
  %v4945 = vmul.f32 %v4497, %v4826
  %v4946 = vmul.f32 %v4498, %v4828
  %v4947 = vmul.f32 %v4499, %v4830
  %v4948 = vmul.f32 %v4500, %v4832
  %v4949 = vmul.f32 %v4501, %v4834
  %v4950 = vmul.f32 %v4502, %v4836
  %v4951 = vmul.f32 %v4503, %v4838
  %v4952 = vmul.f32 %v4504, %v4840
  %v4953 = vmul.f32 %v4505, %v4842
  %v4954 = vmul.f32 %v4506, %v4844
  %v4955 = vmul.f32 %v4507, %v4846
  %v4956 = vmul.f32 %v4508, %v4848
  %v4957 = vmul.f32 %v4509, %v4850
  %v4958 = vmul.f32 %v4510, %v4852
  %v4959 = vmul.f32 %v4511, %v4854
  %v4960 = vmul.f32 %v4512, %v4856
  %v4961 = vmul.f32 %v4513, %v4858
  %v4962 = vmul.f32 %v4514, %v4860
  %v4963 = vmul.f32 %v4515, %v4862
  %v4964 = vmul.f32 %v4516, %v4864
  %v4965 = vmul.f32 %v4517, %v4866
  %v4966 = vmul.f32 %v4518, %v4868
  %v4967 = vmul.f32 %v4519, %v4870
  %v4968 = vmul.f32 %v4520, %v4872
  %v4969 = vmul.f32 %v4521, %v4874
  %v4970 = vmul.f32 %v4522, %v4876
  %v4971 = vmul.f32 %v4523, %v4878
  %v4972 = vmul.f32 %v4524, %v4880
  %v4973 = vmul.f32 %v4525, %v4882
  %v4974 = vmul.f32 %v4526, %v4884
  %v4975 = vmul.f32 %v4527, %v4886
  %v4976 = vmul.f32 %v4528, %v4888
  %v4977 = vmul.f32 %v4529, %v4890
  %v4978 = vmul.f32 %v4530, %v4892
  %v4979 = vmul.f32 %v4531, %v4894
  %v4980 = vmul.f32 %v4532, %v4896
  %v4981 = vmul.f32 %v4533, %v4898
  %v4982 = vmul.f32 %v4534, %v4900
  %v4983 = vmul.f32 %v4535, %v4902
  %v4984 = vmul.f32 %v4536, %v4904
  %v4985 = vmul.f32 %v4537, %v4906
  %v4986 = vmul.f32 %v4538, %v4908
  %v4987 = vmul.f32 %v4539, %v4910
  %v4988 = vmul.f32 %v4540, %v4912
  %v4989 = vmul.f32 %v4541, %v4914
  %v4990 = vmul.f32 %v4542, %v4916
  %v4991 = vmul.f32 %v4543, %v4918
  %v4992 = vmul.f32 %v4544, %v4920
  %v4993 = vmul.f32 %v4545, %v4922
  %v4994 = vmul.f32 %v4546, %v4924
  %v4995 = vmul.f32 %v4547, %v4926
  %v4996 = vmul.f32 %v4548, %v4928
  %v4997 = vmul.f32 %v4549, %v4930
  %v4998 = vmul.f32 %v4550, %v4932
  %v4999 = vmul.f32 %v4551, %v4934
  %v5000 = vmul.f32 %v4552, %v4936
  %v5001 = vadd.f32 %v4937, %v4938
  %v5002 = vadd.f32 %v5001, %v4939
  %v5003 = vadd.f32 %v5002, %v4940
  %v5004 = vadd.f32 %v5003, %v4941
  %v5005 = vadd.f32 %v5004, %v4942
  %v5006 = vadd.f32 %v5005, %v4943
  %v5007 = vadd.f32 %v5006, %v4944
  %v5008 = vrot.slane %v5007, 4
  %v5009 = vadd.f32 %v5007, %v5008
  %v5010 = vrot.slane %v5009, 2
  %v5011 = vadd.f32 %v5009, %v5010
  %v5012 = vrot.slane %v5011, 1
  %v5013 = vadd.f32 %v5011, %v5012
  %v5014 = vadd.f32 %v4945, %v4946
  %v5015 = vadd.f32 %v5014, %v4947
  %v5016 = vadd.f32 %v5015, %v4948
  %v5017 = vadd.f32 %v5016, %v4949
  %v5018 = vadd.f32 %v5017, %v4950
  %v5019 = vadd.f32 %v5018, %v4951
  %v5020 = vadd.f32 %v5019, %v4952
  %v5021 = vrot.slane %v5020, 4
  %v5022 = vadd.f32 %v5020, %v5021
  %v5023 = vrot.slane %v5022, 2
  %v5024 = vadd.f32 %v5022, %v5023
  %v5025 = vrot.slane %v5024, 1
  %v5026 = vadd.f32 %v5024, %v5025
  %v5027 = vadd.f32 %v4953, %v4954
  %v5028 = vadd.f32 %v5027, %v4955
  %v5029 = vadd.f32 %v5028, %v4956
  %v5030 = vadd.f32 %v5029, %v4957
  %v5031 = vadd.f32 %v5030, %v4958
  %v5032 = vadd.f32 %v5031, %v4959
  %v5033 = vadd.f32 %v5032, %v4960
  %v5034 = vrot.slane %v5033, 4
  %v5035 = vadd.f32 %v5033, %v5034
  %v5036 = vrot.slane %v5035, 2
  %v5037 = vadd.f32 %v5035, %v5036
  %v5038 = vrot.slane %v5037, 1
  %v5039 = vadd.f32 %v5037, %v5038
  %v5040 = vadd.f32 %v4961, %v4962
  %v5041 = vadd.f32 %v5040, %v4963
  %v5042 = vadd.f32 %v5041, %v4964
  %v5043 = vadd.f32 %v5042, %v4965
  %v5044 = vadd.f32 %v5043, %v4966
  %v5045 = vadd.f32 %v5044, %v4967
  %v5046 = vadd.f32 %v5045, %v4968
  %v5047 = vrot.slane %v5046, 4
  %v5048 = vadd.f32 %v5046, %v5047
  %v5049 = vrot.slane %v5048, 2
  %v5050 = vadd.f32 %v5048, %v5049
  %v5051 = vrot.slane %v5050, 1
  %v5052 = vadd.f32 %v5050, %v5051
  %v5053 = vadd.f32 %v4969, %v4970
  %v5054 = vadd.f32 %v5053, %v4971
  %v5055 = vadd.f32 %v5054, %v4972
  %v5056 = vadd.f32 %v5055, %v4973
  %v5057 = vadd.f32 %v5056, %v4974
  %v5058 = vadd.f32 %v5057, %v4975
  %v5059 = vadd.f32 %v5058, %v4976
  %v5060 = vrot.slane %v5059, 4
  %v5061 = vadd.f32 %v5059, %v5060
  %v5062 = vrot.slane %v5061, 2
  %v5063 = vadd.f32 %v5061, %v5062
  %v5064 = vrot.slane %v5063, 1
  %v5065 = vadd.f32 %v5063, %v5064
  %v5066 = vadd.f32 %v4977, %v4978
  %v5067 = vadd.f32 %v5066, %v4979
  %v5068 = vadd.f32 %v5067, %v4980
  %v5069 = vadd.f32 %v5068, %v4981
  %v5070 = vadd.f32 %v5069, %v4982
  %v5071 = vadd.f32 %v5070, %v4983
  %v5072 = vadd.f32 %v5071, %v4984
  %v5073 = vrot.slane %v5072, 4
  %v5074 = vadd.f32 %v5072, %v5073
  %v5075 = vrot.slane %v5074, 2
  %v5076 = vadd.f32 %v5074, %v5075
  %v5077 = vrot.slane %v5076, 1
  %v5078 = vadd.f32 %v5076, %v5077
  %v5079 = vadd.f32 %v4985, %v4986
  %v5080 = vadd.f32 %v5079, %v4987
  %v5081 = vadd.f32 %v5080, %v4988
  %v5082 = vadd.f32 %v5081, %v4989
  %v5083 = vadd.f32 %v5082, %v4990
  %v5084 = vadd.f32 %v5083, %v4991
  %v5085 = vadd.f32 %v5084, %v4992
  %v5086 = vrot.slane %v5085, 4
  %v5087 = vadd.f32 %v5085, %v5086
  %v5088 = vrot.slane %v5087, 2
  %v5089 = vadd.f32 %v5087, %v5088
  %v5090 = vrot.slane %v5089, 1
  %v5091 = vadd.f32 %v5089, %v5090
  %v5092 = vadd.f32 %v4993, %v4994
  %v5093 = vadd.f32 %v5092, %v4995
  %v5094 = vadd.f32 %v5093, %v4996
  %v5095 = vadd.f32 %v5094, %v4997
  %v5096 = vadd.f32 %v5095, %v4998
  %v5097 = vadd.f32 %v5096, %v4999
  %v5098 = vadd.f32 %v5097, %v5000
  %v5099 = vrot.slane %v5098, 4
  %v5100 = vadd.f32 %v5098, %v5099
  %v5101 = vrot.slane %v5100, 2
  %v5102 = vadd.f32 %v5100, %v5101
  %v5103 = vrot.slane %v5102, 1
  %v5104 = vadd.f32 %v5102, %v5103
  %v5105 = vrcp.pop 64.0
  %v5106 = vmul.f32 %v5013, %v5105
  %v5107 = vmul.f32 %v5026, %v5105
  %v5108 = vmul.f32 %v5039, %v5105
  %v5109 = vmul.f32 %v5052, %v5105
  %v5110 = vmul.f32 %v5065, %v5105
  %v5111 = vmul.f32 %v5078, %v5105
  %v5112 = vmul.f32 %v5091, %v5105
  %v5113 = vmul.f32 %v5104, %v5105
  %v5114 = vpack.c.bf16 %v5106, %v5106
  %v5115 = vpack.c.bf16 %v5107, %v5107
  %v5116 = vpack.c.bf16 %v5108, %v5108
  %v5117 = vpack.c.bf16 %v5109, %v5109
  %v5118 = vpack.c.bf16 %v5110, %v5110
  %v5119 = vpack.c.bf16 %v5111, %v5111
  %v5120 = vpack.c.bf16 %v5112, %v5112
  %v5121 = vpack.c.bf16 %v5113, %v5113
  %v5122 = vld [vmem:[%s7] sm:$0xf]
  %v5123 = vld [vmem:[%s7 + $0x4] sm:$0xf]
  %v5124 = vld [vmem:[%s7 + $0x8] sm:$0xf]
  %v5125 = vld [vmem:[%s7 + $0xc] sm:$0xf]
  %v5126 = vld [vmem:[%s7 + $0x10] sm:$0xf]
  %v5127 = vld [vmem:[%s7 + $0x14] sm:$0xf]
  %v5128 = vld [vmem:[%s7 + $0x18] sm:$0xf]
  %v5129 = vld [vmem:[%s7 + $0x1c] sm:$0xf]
  %v5130 = vld [vmem:[%s7 + $0x20] sm:$0xf]
  %v5131 = vld [vmem:[%s7 + $0x24] sm:$0xf]
  %v5132 = vld [vmem:[%s7 + $0x28] sm:$0xf]
  %v5133 = vld [vmem:[%s7 + $0x2c] sm:$0xf]
  %v5134 = vld [vmem:[%s7 + $0x30] sm:$0xf]
  %v5135 = vld [vmem:[%s7 + $0x34] sm:$0xf]
  %v5136 = vld [vmem:[%s7 + $0x38] sm:$0xf]
  %v5137 = vld [vmem:[%s7 + $0x3c] sm:$0xf]
  %v5138 = vld [vmem:[%s8] sm:$0x1]
  %v5140 = vlaneseq
  %v5141 = vshrl.u32 %v5140, 7
  %v5142 = vsub.s32 0, %v5141
  %v5143 = vrot.slane %v5138, %v5142
  %v5153 = vunpack.c.l.b16 %v5114
  %v5154 = vunpack.c.l.b16 %v5115
  %v5155 = vunpack.c.l.b16 %v5116
  %v5156 = vunpack.c.l.b16 %v5117
  %v5157 = vunpack.c.l.b16 %v5118
  %v5158 = vunpack.c.l.b16 %v5119
  %v5159 = vunpack.c.l.b16 %v5120
  %v5160 = vunpack.c.l.b16 %v5121
  %vm5161 = vcmask 1041409
  %v5162 = vsel %vm5161, %v5154, %v5153
  %vm5163 = vcmask 1042434
  %v5164 = vsel %vm5163, %v5155, %v5162
  %vm5165 = vcmask 1043459
  %v5166 = vsel %vm5165, %v5156, %v5164
  %vm5167 = vcmask 1044484
  %v5168 = vsel %vm5167, %v5157, %v5166
  %vm5169 = vcmask 1045509
  %v5170 = vsel %vm5169, %v5158, %v5168
  %vm5171 = vcmask 1046534
  %v5172 = vsel %vm5171, %v5159, %v5170
  %vm5173 = vcmask 1047559
  %v5174 = vsel %vm5173, %v5160, %v5172
  %v5175 = vpack.c.b16 %v5174, %v5174
  %v5193 = vunpack.c.l.b16 %v5122
  %v5194 = vunpack.c.l.b16 %v5123
  %v5195 = vunpack.c.l.b16 %v5124
  %v5196 = vunpack.c.l.b16 %v5125
  %v5197 = vunpack.c.l.b16 %v5126
  %v5198 = vunpack.c.l.b16 %v5127
  %v5199 = vunpack.c.l.b16 %v5128
  %v5200 = vunpack.c.l.b16 %v5129
  %v5201 = vunpack.c.l.b16 %v5130
  %v5202 = vunpack.c.l.b16 %v5131
  %v5203 = vunpack.c.l.b16 %v5132
  %v5204 = vunpack.c.l.b16 %v5133
  %v5205 = vunpack.c.l.b16 %v5134
  %v5206 = vunpack.c.l.b16 %v5135
  %v5207 = vunpack.c.l.b16 %v5136
  %v5208 = vunpack.c.l.b16 %v5137
  %v5209 = vpack.c.b16 %v5194, %v5193
  %v5210 = vpack.c.b16 %v5196, %v5195
  %v5211 = vpack.c.b16 %v5198, %v5197
  %v5212 = vpack.c.b16 %v5200, %v5199
  %v5213 = vpack.c.b16 %v5202, %v5201
  %v5214 = vpack.c.b16 %v5204, %v5203
  %v5215 = vpack.c.b16 %v5206, %v5205
  %v5216 = vpack.c.b16 %v5208, %v5207
  %5225 = vmatprep.subr.bf16.mxu0 0
  %5226 = vmatpush1.bf16.msra.mxu0 %v5216
  %5227 = vmatprep.subr.bf16.mxu0 0
  %5228 = vmatpush1.bf16.msra.mxu0 %v5215
  %5229 = vmatprep.subr.bf16.mxu0 0
  %5230 = vmatpush1.bf16.msra.mxu0 %v5214
  %5231 = vmatprep.subr.bf16.mxu0 0
  %5232 = vmatpush1.bf16.msra.mxu0 %v5213
  %5233 = vmatprep.subr.bf16.mxu0 0
  %5234 = vmatpush1.bf16.msra.mxu0 %v5212
  %5235 = vmatprep.subr.bf16.mxu0 0
  %5236 = vmatpush1.bf16.msra.mxu0 %v5211
  %5237 = vmatprep.subr.bf16.mxu0 0
  %5238 = vmatpush1.bf16.msra.mxu0 %v5210
  %5239 = vmatprep.subr.bf16.mxu0 0
  %5240 = vmatpush1.bf16.msra.mxu0 %v5209
  %5241 = vmatprep.subr.bf16.mxu0 0
  %5242 = vmatpush2.bf16.msra.mxu0 0
  %5243 = vmatprep.subr.bf16.mxu0 0
  %5244 = vmatpush2.bf16.msra.mxu0 0
  %5245 = vmatprep.subr.bf16.mxu0 0
  %5246 = vmatpush2.bf16.msra.mxu0 0
  %5247 = vmatprep.subr.bf16.mxu0 0
  %5248 = vmatpush2.bf16.msra.mxu0 0
  %5249 = vmatprep.subr.bf16.mxu0 0
  %5250 = vmatpush2.bf16.msra.mxu0 0
  %5251 = vmatprep.subr.bf16.mxu0 0
  %5252 = vmatpush2.bf16.msra.mxu0 0
  %5253 = vmatprep.subr.bf16.mxu0 0
  %5254 = vmatpush2.bf16.msra.mxu0 0
  %5255 = vmatprep.subr.bf16.mxu0 0
  %5256 = vmatpush2.bf16.msra.mxu0 0
  %5257 = vmatprep.mubr.bf16.mxu0 0
  %5258 = vmatmul.mubr.bf16.gmra.mxu0 %v5175
  %v5259 = vpop.f32.mrf.mxu0
  %v5260 = vadd.f32 %v5143, %v5259
  %v5261 = vpop.f32.mrf.mxu0
  %v5262 = vpop.f32.mrf.mxu0
  %v5263 = vpop.f32.mrf.mxu0
  %5264 = vdwg.mxu0
  %v5265 = vxor.u32 %v5260, 2147483648
  %v5266 = vmul.f32 %v5265, 1.442695
  %v5267 = vpow.pop %v5266
  %v5268 = vadd.f32 %v5267, 1.0
  %v5269 = vrcp.pop %v5268
  %v5270 = vmul.f32 1.0, %v5269
  %v5271 = vmul.f32 %v5260, %v5270
  %v5272 = vpack.c.bf16 %v5271, %v5271
  %v5273 = vld [vmem:[%s9] sm:$0xf]
  %v5274 = vld [vmem:[%s10] sm:$0x1]
  %v5276 = vlaneseq
  %v5277 = vshrl.u32 %v5276, 7
  %v5278 = vsub.s32 0, %v5277
  %v5279 = vrot.slane %v5274, %v5278
  %vm5281 = vcmask 64512
  %v5283 = vsel %vm5281, %v5272, 0
  %vm5285 = vcmask 1043456
  %v5287 = vsel %vm5285, %v5273, 0
  %5289 = vmatprep.subr.bf16.mxu0 0
  %5290 = vmatpush1.bf16.msra.mxu0 0
  %5291 = vmatprep.subr.bf16.mxu0 0
  %5292 = vmatpush1.bf16.msra.mxu0 0
  %5293 = vmatprep.subr.bf16.mxu0 0
  %5294 = vmatpush1.bf16.msra.mxu0 0
  %5295 = vmatprep.subr.bf16.mxu0 0
  %5296 = vmatpush1.bf16.msra.mxu0 0
  %5297 = vmatprep.subr.bf16.mxu0 0
  %5298 = vmatpush1.bf16.msra.mxu0 0
  %5299 = vmatprep.subr.bf16.mxu0 0
  %5300 = vmatpush1.bf16.msra.mxu0 0
  %5301 = vmatprep.subr.bf16.mxu0 0
  %5302 = vmatpush1.bf16.msra.mxu0 0
  %5303 = vmatprep.subr.bf16.mxu0 0
  %5304 = vmatpush1.bf16.msra.mxu0 %v5287
  %5305 = vmatprep.subr.bf16.mxu0 0
  %5306 = vmatpush2.bf16.msra.mxu0 0
  %5307 = vmatprep.subr.bf16.mxu0 0
  %5308 = vmatpush2.bf16.msra.mxu0 0
  %5309 = vmatprep.subr.bf16.mxu0 0
  %5310 = vmatpush2.bf16.msra.mxu0 0
  %5311 = vmatprep.subr.bf16.mxu0 0
  %5312 = vmatpush2.bf16.msra.mxu0 0
  %5313 = vmatprep.subr.bf16.mxu0 0
  %5314 = vmatpush2.bf16.msra.mxu0 0
  %5315 = vmatprep.subr.bf16.mxu0 0
  %5316 = vmatpush2.bf16.msra.mxu0 0
  %5317 = vmatprep.subr.bf16.mxu0 0
  %5318 = vmatpush2.bf16.msra.mxu0 0
  %5319 = vmatprep.subr.bf16.mxu0 0
  %5320 = vmatpush2.bf16.msra.mxu0 0
  %5321 = vmatprep.mubr.bf16.mxu0 0
  %5322 = vmatmul.mubr.bf16.gmra.mxu0 %v5283
  %v5323 = vpop.f32.mrf.mxu0
  %v5324 = vadd.f32 %v5279, %v5323
  %v5325 = vpop.f32.mrf.mxu0
  %v5326 = vpop.f32.mrf.mxu0
  %v5327 = vpop.f32.mrf.mxu0
  %5328 = vdwg.mxu0
  %v5329 = vxor.u32 %v5324, 2147483648
  %v5330 = vmul.f32 %v5329, 1.442695
  %v5331 = vpow.pop %v5330
  %v5332 = vadd.f32 %v5331, 1.0
  %v5333 = vrcp.pop %v5332
  %v5334 = vmul.f32 1.0, %v5333
  %v5336 = vcombine.high %v5334, %v5334
  %v5338 = vunpack.c.l.s4 1966171168
  %v5339 = vunpack.c.0.s8 %v5338
  %v5340 = vlaneseq
  %v5341 = vshrl.u32 %v5340, 7
  %v5342 = vsub.s32 %v5339, %v5341
  %v5343 = vrot.slane %v5334, %v5342
  %v5345 = vunpack.c.l.s4 1966171168
  %v5346 = vunpack.c.0.s8 %v5345
  %v5347 = vlaneseq
  %v5348 = vshrl.u32 %v5347, 7
  %v5349 = vsub.s32 %v5346, %v5348
  %v5350 = vrot.slane %v5336, %v5349
  %v5351 = vcombine.high %v5343, %v5343
  %v5352 = vcombine.high %v5350, %v5350
  %v5354 = vunpack.c.l.s4 1966171168
  %v5355 = vunpack.c.0.s8 %v5354
  %v5356 = vlaneseq
  %v5357 = vshrl.u32 %v5356, 7
  %v5358 = vsub.s32 %v5355, %v5357
  %v5359 = vrot.slane %v5343, %v5358
  %v5361 = vunpack.c.l.s4 1966171168
  %v5362 = vunpack.c.0.s8 %v5361
  %v5363 = vlaneseq
  %v5364 = vshrl.u32 %v5363, 7
  %v5365 = vsub.s32 %v5362, %v5364
  %v5366 = vrot.slane %v5350, %v5365
  %v5368 = vunpack.c.l.s4 1966171168
  %v5369 = vunpack.c.0.s8 %v5368
  %v5370 = vlaneseq
  %v5371 = vshrl.u32 %v5370, 7
  %v5372 = vsub.s32 %v5369, %v5371
  %v5373 = vrot.slane %v5351, %v5372
  %v5375 = vunpack.c.l.s4 1966171168
  %v5376 = vunpack.c.0.s8 %v5375
  %v5377 = vlaneseq
  %v5378 = vshrl.u32 %v5377, 7
  %v5379 = vsub.s32 %v5376, %v5378
  %v5380 = vrot.slane %v5352, %v5379
  %v5381 = vcombine.high %v5359, %v5359
  %v5382 = vcombine.high %v5366, %v5366
  %v5383 = vcombine.high %v5373, %v5373
  %v5384 = vcombine.high %v5380, %v5380
  %v5385 = vlaneseq
  %v5386 = vshrl.u32 %v5385, 7
  %v5387 = vsub.s32 0, %v5386
  %v5388 = vrot.slane %v5359, %v5387
  %v5389 = vlaneseq
  %v5390 = vshrl.u32 %v5389, 7
  %v5391 = vsub.s32 0, %v5390
  %v5392 = vrot.slane %v5373, %v5391
  %v5393 = vlaneseq
  %v5394 = vshrl.u32 %v5393, 7
  %v5395 = vsub.s32 0, %v5394
  %v5396 = vrot.slane %v5381, %v5395
  %v5397 = vlaneseq
  %v5398 = vshrl.u32 %v5397, 7
  %v5399 = vsub.s32 0, %v5398
  %v5400 = vrot.slane %v5383, %v5399
  %v5401 = vlaneseq
  %v5402 = vshrl.u32 %v5401, 7
  %v5403 = vsub.s32 0, %v5402
  %v5404 = vrot.slane %v5366, %v5403
  %v5405 = vlaneseq
  %v5406 = vshrl.u32 %v5405, 7
  %v5407 = vsub.s32 0, %v5406
  %v5408 = vrot.slane %v5380, %v5407
  %v5409 = vlaneseq
  %v5410 = vshrl.u32 %v5409, 7
  %v5411 = vsub.s32 0, %v5410
  %v5412 = vrot.slane %v5382, %v5411
  %v5413 = vlaneseq
  %v5414 = vshrl.u32 %v5413, 7
  %v5415 = vsub.s32 0, %v5414
  %v5416 = vrot.slane %v5384, %v5415
  %v5425 = vmul.f32 %v4937, %v5388
  %v5426 = vmul.f32 %v4938, %v5388
  %v5427 = vmul.f32 %v4939, %v5388
  %v5428 = vmul.f32 %v4940, %v5388
  %v5429 = vmul.f32 %v4941, %v5388
  %v5430 = vmul.f32 %v4942, %v5388
  %v5431 = vmul.f32 %v4943, %v5388
  %v5432 = vmul.f32 %v4944, %v5388
  %v5433 = vmul.f32 %v4945, %v5392
  %v5434 = vmul.f32 %v4946, %v5392
  %v5435 = vmul.f32 %v4947, %v5392
  %v5436 = vmul.f32 %v4948, %v5392
  %v5437 = vmul.f32 %v4949, %v5392
  %v5438 = vmul.f32 %v4950, %v5392
  %v5439 = vmul.f32 %v4951, %v5392
  %v5440 = vmul.f32 %v4952, %v5392
  %v5441 = vmul.f32 %v4953, %v5396
  %v5442 = vmul.f32 %v4954, %v5396
  %v5443 = vmul.f32 %v4955, %v5396
  %v5444 = vmul.f32 %v4956, %v5396
  %v5445 = vmul.f32 %v4957, %v5396
  %v5446 = vmul.f32 %v4958, %v5396
  %v5447 = vmul.f32 %v4959, %v5396
  %v5448 = vmul.f32 %v4960, %v5396
  %v5449 = vmul.f32 %v4961, %v5400
  %v5450 = vmul.f32 %v4962, %v5400
  %v5451 = vmul.f32 %v4963, %v5400
  %v5452 = vmul.f32 %v4964, %v5400
  %v5453 = vmul.f32 %v4965, %v5400
  %v5454 = vmul.f32 %v4966, %v5400
  %v5455 = vmul.f32 %v4967, %v5400
  %v5456 = vmul.f32 %v4968, %v5400
  %v5457 = vmul.f32 %v4969, %v5404
  %v5458 = vmul.f32 %v4970, %v5404
  %v5459 = vmul.f32 %v4971, %v5404
  %v5460 = vmul.f32 %v4972, %v5404
  %v5461 = vmul.f32 %v4973, %v5404
  %v5462 = vmul.f32 %v4974, %v5404
  %v5463 = vmul.f32 %v4975, %v5404
  %v5464 = vmul.f32 %v4976, %v5404
  %v5465 = vmul.f32 %v4977, %v5408
  %v5466 = vmul.f32 %v4978, %v5408
  %v5467 = vmul.f32 %v4979, %v5408
  %v5468 = vmul.f32 %v4980, %v5408
  %v5469 = vmul.f32 %v4981, %v5408
  %v5470 = vmul.f32 %v4982, %v5408
  %v5471 = vmul.f32 %v4983, %v5408
  %v5472 = vmul.f32 %v4984, %v5408
  %v5473 = vmul.f32 %v4985, %v5412
  %v5474 = vmul.f32 %v4986, %v5412
  %v5475 = vmul.f32 %v4987, %v5412
  %v5476 = vmul.f32 %v4988, %v5412
  %v5477 = vmul.f32 %v4989, %v5412
  %v5478 = vmul.f32 %v4990, %v5412
  %v5479 = vmul.f32 %v4991, %v5412
  %v5480 = vmul.f32 %v4992, %v5412
  %v5481 = vmul.f32 %v4993, %v5416
  %v5482 = vmul.f32 %v4994, %v5416
  %v5483 = vmul.f32 %v4995, %v5416
  %v5484 = vmul.f32 %v4996, %v5416
  %v5485 = vmul.f32 %v4997, %v5416
  %v5486 = vmul.f32 %v4998, %v5416
  %v5487 = vmul.f32 %v4999, %v5416
  %v5488 = vmul.f32 %v5000, %v5416
  %v5489 = vpack.c.bf16 %v5426, %v5425
  %v5490 = vpack.c.bf16 %v5428, %v5427
  %v5491 = vpack.c.bf16 %v5430, %v5429
  %v5492 = vpack.c.bf16 %v5432, %v5431
  %v5493 = vpack.c.bf16 %v5434, %v5433
  %v5494 = vpack.c.bf16 %v5436, %v5435
  %v5495 = vpack.c.bf16 %v5438, %v5437
  %v5496 = vpack.c.bf16 %v5440, %v5439
  %v5497 = vpack.c.bf16 %v5442, %v5441
  %v5498 = vpack.c.bf16 %v5444, %v5443
  %v5499 = vpack.c.bf16 %v5446, %v5445
  %v5500 = vpack.c.bf16 %v5448, %v5447
  %v5501 = vpack.c.bf16 %v5450, %v5449
  %v5502 = vpack.c.bf16 %v5452, %v5451
  %v5503 = vpack.c.bf16 %v5454, %v5453
  %v5504 = vpack.c.bf16 %v5456, %v5455
  %v5505 = vpack.c.bf16 %v5458, %v5457
  %v5506 = vpack.c.bf16 %v5460, %v5459
  %v5507 = vpack.c.bf16 %v5462, %v5461
  %v5508 = vpack.c.bf16 %v5464, %v5463
  %v5509 = vpack.c.bf16 %v5466, %v5465
  %v5510 = vpack.c.bf16 %v5468, %v5467
  %v5511 = vpack.c.bf16 %v5470, %v5469
  %v5512 = vpack.c.bf16 %v5472, %v5471
  %v5513 = vpack.c.bf16 %v5474, %v5473
  %v5514 = vpack.c.bf16 %v5476, %v5475
  %v5515 = vpack.c.bf16 %v5478, %v5477
  %v5516 = vpack.c.bf16 %v5480, %v5479
  %v5517 = vpack.c.bf16 %v5482, %v5481
  %v5518 = vpack.c.bf16 %v5484, %v5483
  %v5519 = vpack.c.bf16 %v5486, %v5485
  %v5520 = vpack.c.bf16 %v5488, %v5487
  %v5521 = vld [vmem:[%s11] sm:$0xf]
  %v5522 = vld [vmem:[%s11 + $0x4] sm:$0xf]
  %v5523 = vld [vmem:[%s11 + $0x8] sm:$0xf]
  %v5524 = vld [vmem:[%s11 + $0xc] sm:$0xf]
  %v5525 = vld [vmem:[%s11 + $0x10] sm:$0xf]
  %v5526 = vld [vmem:[%s11 + $0x14] sm:$0xf]
  %v5527 = vld [vmem:[%s11 + $0x18] sm:$0xf]
  %v5528 = vld [vmem:[%s11 + $0x1c] sm:$0xf]
  %v5529 = vld [vmem:[%s11 + $0x20] sm:$0xf]
  %v5530 = vld [vmem:[%s11 + $0x24] sm:$0xf]
  %v5531 = vld [vmem:[%s11 + $0x28] sm:$0xf]
  %v5532 = vld [vmem:[%s11 + $0x2c] sm:$0xf]
  %v5533 = vld [vmem:[%s11 + $0x30] sm:$0xf]
  %v5534 = vld [vmem:[%s11 + $0x34] sm:$0xf]
  %v5535 = vld [vmem:[%s11 + $0x38] sm:$0xf]
  %v5536 = vld [vmem:[%s11 + $0x3c] sm:$0xf]
  %v5537 = vld [vmem:[%s12] sm:$0x1]
  %v5539 = vlaneseq
  %v5540 = vshrl.u32 %v5539, 7
  %v5541 = vsub.s32 0, %v5540
  %v5542 = vrot.slane %v5537, %v5541
  %v5560 = vunpack.c.l.b16 %v5521
  %v5561 = vunpack.c.l.b16 %v5522
  %v5562 = vunpack.c.l.b16 %v5523
  %v5563 = vunpack.c.l.b16 %v5524
  %v5564 = vunpack.c.l.b16 %v5525
  %v5565 = vunpack.c.l.b16 %v5526
  %v5566 = vunpack.c.l.b16 %v5527
  %v5567 = vunpack.c.l.b16 %v5528
  %v5568 = vunpack.c.l.b16 %v5529
  %v5569 = vunpack.c.l.b16 %v5530
  %v5570 = vunpack.c.l.b16 %v5531
  %v5571 = vunpack.c.l.b16 %v5532
  %v5572 = vunpack.c.l.b16 %v5533
  %v5573 = vunpack.c.l.b16 %v5534
  %v5574 = vunpack.c.l.b16 %v5535
  %v5575 = vunpack.c.l.b16 %v5536
  %v5576 = vpack.c.b16 %v5561, %v5560
  %v5577 = vpack.c.b16 %v5563, %v5562
  %v5578 = vpack.c.b16 %v5565, %v5564
  %v5579 = vpack.c.b16 %v5567, %v5566
  %v5580 = vpack.c.b16 %v5569, %v5568
  %v5581 = vpack.c.b16 %v5571, %v5570
  %v5582 = vpack.c.b16 %v5573, %v5572
  %v5583 = vpack.c.b16 %v5575, %v5574
  %5592 = vmatprep.subr.bf16.mxu0 0
  %5593 = vmatpush1.bf16.msra.mxu0 %v5583
  %5594 = vmatprep.subr.bf16.mxu0 0
  %5595 = vmatpush1.bf16.msra.mxu0 %v5582
  %5596 = vmatprep.subr.bf16.mxu0 0
  %5597 = vmatpush1.bf16.msra.mxu0 %v5581
  %5598 = vmatprep.subr.bf16.mxu0 0
  %5599 = vmatpush1.bf16.msra.mxu0 %v5580
  %5600 = vmatprep.subr.bf16.mxu0 0
  %5601 = vmatpush1.bf16.msra.mxu0 %v5579
  %5602 = vmatprep.subr.bf16.mxu0 0
  %5603 = vmatpush1.bf16.msra.mxu0 %v5578
  %5604 = vmatprep.subr.bf16.mxu0 0
  %5605 = vmatpush1.bf16.msra.mxu0 %v5577
  %5606 = vmatprep.subr.bf16.mxu0 0
  %5607 = vmatpush1.bf16.msra.mxu0 %v5576
  %5608 = vmatprep.subr.bf16.mxu0 0
  %5609 = vmatpush2.bf16.msra.mxu0 0
  %5610 = vmatprep.subr.bf16.mxu0 0
  %5611 = vmatpush2.bf16.msra.mxu0 0
  %5612 = vmatprep.subr.bf16.mxu0 0
  %5613 = vmatpush2.bf16.msra.mxu0 0
  %5614 = vmatprep.subr.bf16.mxu0 0
  %5615 = vmatpush2.bf16.msra.mxu0 0
  %5616 = vmatprep.subr.bf16.mxu0 0
  %5617 = vmatpush2.bf16.msra.mxu0 0
  %5618 = vmatprep.subr.bf16.mxu0 0
  %5619 = vmatpush2.bf16.msra.mxu0 0
  %5620 = vmatprep.subr.bf16.mxu0 0
  %5621 = vmatpush2.bf16.msra.mxu0 0
  %5622 = vmatprep.subr.bf16.mxu0 0
  %5623 = vmatpush2.bf16.msra.mxu0 0
  %5624 = vmatprep.mubr.bf16.mxu0 0
  %5625 = vmatmul.mubr.bf16.gmra.mxu0 %v5489
  %v5626 = vpop.f32.mrf.mxu0
  %v5627 = vadd.f32 %v5542, %v5626
  %v5628 = vpop.f32.mrf.mxu0
  %v5629 = vpop.f32.mrf.mxu0
  %v5630 = vadd.f32 %v5542, %v5629
  %v5631 = vpop.f32.mrf.mxu0
  %5632 = vmatprep.mubr.bf16.mxu0 0
  %5633 = vmatmul.mubr.bf16.gmra.mxu0 %v5490
  %v5634 = vpop.f32.mrf.mxu0
  %v5635 = vadd.f32 %v5542, %v5634
  %v5636 = vpop.f32.mrf.mxu0
  %v5637 = vpop.f32.mrf.mxu0
  %v5638 = vadd.f32 %v5542, %v5637
  %v5639 = vpop.f32.mrf.mxu0
  %5640 = vmatprep.mubr.bf16.mxu0 0
  %5641 = vmatmul.mubr.bf16.gmra.mxu0 %v5491
  %v5642 = vpop.f32.mrf.mxu0
  %v5643 = vadd.f32 %v5542, %v5642
  %v5644 = vpop.f32.mrf.mxu0
  %v5645 = vpop.f32.mrf.mxu0
  %v5646 = vadd.f32 %v5542, %v5645
  %v5647 = vpop.f32.mrf.mxu0
  %5648 = vmatprep.mubr.bf16.mxu0 0
  %5649 = vmatmul.mubr.bf16.gmra.mxu0 %v5492
  %v5650 = vpop.f32.mrf.mxu0
  %v5651 = vadd.f32 %v5542, %v5650
  %v5652 = vpop.f32.mrf.mxu0
  %v5653 = vpop.f32.mrf.mxu0
  %v5654 = vadd.f32 %v5542, %v5653
  %v5655 = vpop.f32.mrf.mxu0
  %5656 = vmatprep.mubr.bf16.mxu0 0
  %5657 = vmatmul.mubr.bf16.gmra.mxu0 %v5493
  %v5658 = vpop.f32.mrf.mxu0
  %v5659 = vadd.f32 %v5542, %v5658
  %v5660 = vpop.f32.mrf.mxu0
  %v5661 = vpop.f32.mrf.mxu0
  %v5662 = vadd.f32 %v5542, %v5661
  %v5663 = vpop.f32.mrf.mxu0
  %5664 = vmatprep.mubr.bf16.mxu0 0
  %5665 = vmatmul.mubr.bf16.gmra.mxu0 %v5494
  %v5666 = vpop.f32.mrf.mxu0
  %v5667 = vadd.f32 %v5542, %v5666
  %v5668 = vpop.f32.mrf.mxu0
  %v5669 = vpop.f32.mrf.mxu0
  %v5670 = vadd.f32 %v5542, %v5669
  %v5671 = vpop.f32.mrf.mxu0
  %5672 = vmatprep.mubr.bf16.mxu0 0
  %5673 = vmatmul.mubr.bf16.gmra.mxu0 %v5495
  %v5674 = vpop.f32.mrf.mxu0
  %v5675 = vadd.f32 %v5542, %v5674
  %v5676 = vpop.f32.mrf.mxu0
  %v5677 = vpop.f32.mrf.mxu0
  %v5678 = vadd.f32 %v5542, %v5677
  %v5679 = vpop.f32.mrf.mxu0
  %5680 = vmatprep.mubr.bf16.mxu0 0
  %5681 = vmatmul.mubr.bf16.gmra.mxu0 %v5496
  %v5682 = vpop.f32.mrf.mxu0
  %v5683 = vadd.f32 %v5542, %v5682
  %v5684 = vpop.f32.mrf.mxu0
  %v5685 = vpop.f32.mrf.mxu0
  %v5686 = vadd.f32 %v5542, %v5685
  %v5687 = vpop.f32.mrf.mxu0
  %5688 = vmatprep.mubr.bf16.mxu0 0
  %5689 = vmatmul.mubr.bf16.gmra.mxu0 %v5497
  %v5690 = vpop.f32.mrf.mxu0
  %v5691 = vadd.f32 %v5542, %v5690
  %v5692 = vpop.f32.mrf.mxu0
  %v5693 = vpop.f32.mrf.mxu0
  %v5694 = vadd.f32 %v5542, %v5693
  %v5695 = vpop.f32.mrf.mxu0
  %5696 = vmatprep.mubr.bf16.mxu0 0
  %5697 = vmatmul.mubr.bf16.gmra.mxu0 %v5498
  %v5698 = vpop.f32.mrf.mxu0
  %v5699 = vadd.f32 %v5542, %v5698
  %v5700 = vpop.f32.mrf.mxu0
  %v5701 = vpop.f32.mrf.mxu0
  %v5702 = vadd.f32 %v5542, %v5701
  %v5703 = vpop.f32.mrf.mxu0
  %5704 = vmatprep.mubr.bf16.mxu0 0
  %5705 = vmatmul.mubr.bf16.gmra.mxu0 %v5499
  %v5706 = vpop.f32.mrf.mxu0
  %v5707 = vadd.f32 %v5542, %v5706
  %v5708 = vpop.f32.mrf.mxu0
  %v5709 = vpop.f32.mrf.mxu0
  %v5710 = vadd.f32 %v5542, %v5709
  %v5711 = vpop.f32.mrf.mxu0
  %5712 = vmatprep.mubr.bf16.mxu0 0
  %5713 = vmatmul.mubr.bf16.gmra.mxu0 %v5500
  %v5714 = vpop.f32.mrf.mxu0
  %v5715 = vadd.f32 %v5542, %v5714
  %v5716 = vpop.f32.mrf.mxu0
  %v5717 = vpop.f32.mrf.mxu0
  %v5718 = vadd.f32 %v5542, %v5717
  %v5719 = vpop.f32.mrf.mxu0
  %5720 = vmatprep.mubr.bf16.mxu0 0
  %5721 = vmatmul.mubr.bf16.gmra.mxu0 %v5501
  %v5722 = vpop.f32.mrf.mxu0
  %v5723 = vadd.f32 %v5542, %v5722
  %v5724 = vpop.f32.mrf.mxu0
  %v5725 = vpop.f32.mrf.mxu0
  %v5726 = vadd.f32 %v5542, %v5725
  %v5727 = vpop.f32.mrf.mxu0
  %5728 = vmatprep.mubr.bf16.mxu0 0
  %5729 = vmatmul.mubr.bf16.gmra.mxu0 %v5502
  %v5730 = vpop.f32.mrf.mxu0
  %v5731 = vadd.f32 %v5542, %v5730
  %v5732 = vpop.f32.mrf.mxu0
  %v5733 = vpop.f32.mrf.mxu0
  %v5734 = vadd.f32 %v5542, %v5733
  %v5735 = vpop.f32.mrf.mxu0
  %5736 = vmatprep.mubr.bf16.mxu0 0
  %5737 = vmatmul.mubr.bf16.gmra.mxu0 %v5503
  %v5738 = vpop.f32.mrf.mxu0
  %v5739 = vadd.f32 %v5542, %v5738
  %v5740 = vpop.f32.mrf.mxu0
  %v5741 = vpop.f32.mrf.mxu0
  %v5742 = vadd.f32 %v5542, %v5741
  %v5743 = vpop.f32.mrf.mxu0
  %5744 = vmatprep.mubr.bf16.mxu0 0
  %5745 = vmatmul.mubr.bf16.gmra.mxu0 %v5504
  %v5746 = vpop.f32.mrf.mxu0
  %v5747 = vadd.f32 %v5542, %v5746
  %v5748 = vpop.f32.mrf.mxu0
  %v5749 = vpop.f32.mrf.mxu0
  %v5750 = vadd.f32 %v5542, %v5749
  %v5751 = vpop.f32.mrf.mxu0
  %5752 = vmatprep.mubr.bf16.mxu0 0
  %5753 = vmatmul.mubr.bf16.gmra.mxu0 %v5505
  %v5754 = vpop.f32.mrf.mxu0
  %v5755 = vadd.f32 %v5542, %v5754
  %v5756 = vpop.f32.mrf.mxu0
  %v5757 = vpop.f32.mrf.mxu0
  %v5758 = vadd.f32 %v5542, %v5757
  %v5759 = vpop.f32.mrf.mxu0
  %5760 = vmatprep.mubr.bf16.mxu0 0
  %5761 = vmatmul.mubr.bf16.gmra.mxu0 %v5506
  %v5762 = vpop.f32.mrf.mxu0
  %v5763 = vadd.f32 %v5542, %v5762
  %v5764 = vpop.f32.mrf.mxu0
  %v5765 = vpop.f32.mrf.mxu0
  %v5766 = vadd.f32 %v5542, %v5765
  %v5767 = vpop.f32.mrf.mxu0
  %5768 = vmatprep.mubr.bf16.mxu0 0
  %5769 = vmatmul.mubr.bf16.gmra.mxu0 %v5507
  %v5770 = vpop.f32.mrf.mxu0
  %v5771 = vadd.f32 %v5542, %v5770
  %v5772 = vpop.f32.mrf.mxu0
  %v5773 = vpop.f32.mrf.mxu0
  %v5774 = vadd.f32 %v5542, %v5773
  %v5775 = vpop.f32.mrf.mxu0
  %5776 = vmatprep.mubr.bf16.mxu0 0
  %5777 = vmatmul.mubr.bf16.gmra.mxu0 %v5508
  %v5778 = vpop.f32.mrf.mxu0
  %v5779 = vadd.f32 %v5542, %v5778
  %v5780 = vpop.f32.mrf.mxu0
  %v5781 = vpop.f32.mrf.mxu0
  %v5782 = vadd.f32 %v5542, %v5781
  %v5783 = vpop.f32.mrf.mxu0
  %5784 = vmatprep.mubr.bf16.mxu0 0
  %5785 = vmatmul.mubr.bf16.gmra.mxu0 %v5509
  %v5786 = vpop.f32.mrf.mxu0
  %v5787 = vadd.f32 %v5542, %v5786
  %v5788 = vpop.f32.mrf.mxu0
  %v5789 = vpop.f32.mrf.mxu0
  %v5790 = vadd.f32 %v5542, %v5789
  %v5791 = vpop.f32.mrf.mxu0
  %5792 = vmatprep.mubr.bf16.mxu0 0
  %5793 = vmatmul.mubr.bf16.gmra.mxu0 %v5510
  %v5794 = vpop.f32.mrf.mxu0
  %v5795 = vadd.f32 %v5542, %v5794
  %v5796 = vpop.f32.mrf.mxu0
  %v5797 = vpop.f32.mrf.mxu0
  %v5798 = vadd.f32 %v5542, %v5797
  %v5799 = vpop.f32.mrf.mxu0
  %5800 = vmatprep.mubr.bf16.mxu0 0
  %5801 = vmatmul.mubr.bf16.gmra.mxu0 %v5511
  %v5802 = vpop.f32.mrf.mxu0
  %v5803 = vadd.f32 %v5542, %v5802
  %v5804 = vpop.f32.mrf.mxu0
  %v5805 = vpop.f32.mrf.mxu0
  %v5806 = vadd.f32 %v5542, %v5805
  %v5807 = vpop.f32.mrf.mxu0
  %5808 = vmatprep.mubr.bf16.mxu0 0
  %5809 = vmatmul.mubr.bf16.gmra.mxu0 %v5512
  %v5810 = vpop.f32.mrf.mxu0
  %v5811 = vadd.f32 %v5542, %v5810
  %v5812 = vpop.f32.mrf.mxu0
  %v5813 = vpop.f32.mrf.mxu0
  %v5814 = vadd.f32 %v5542, %v5813
  %v5815 = vpop.f32.mrf.mxu0
  %5816 = vmatprep.mubr.bf16.mxu0 0
  %5817 = vmatmul.mubr.bf16.gmra.mxu0 %v5513
  %v5818 = vpop.f32.mrf.mxu0
  %v5819 = vadd.f32 %v5542, %v5818
  %v5820 = vpop.f32.mrf.mxu0
  %v5821 = vpop.f32.mrf.mxu0
  %v5822 = vadd.f32 %v5542, %v5821
  %v5823 = vpop.f32.mrf.mxu0
  %5824 = vmatprep.mubr.bf16.mxu0 0
  %5825 = vmatmul.mubr.bf16.gmra.mxu0 %v5514
  %v5826 = vpop.f32.mrf.mxu0
  %v5827 = vadd.f32 %v5542, %v5826
  %v5828 = vpop.f32.mrf.mxu0
  %v5829 = vpop.f32.mrf.mxu0
  %v5830 = vadd.f32 %v5542, %v5829
  %v5831 = vpop.f32.mrf.mxu0
  %5832 = vmatprep.mubr.bf16.mxu0 0
  %5833 = vmatmul.mubr.bf16.gmra.mxu0 %v5515
  %v5834 = vpop.f32.mrf.mxu0
  %v5835 = vadd.f32 %v5542, %v5834
  %v5836 = vpop.f32.mrf.mxu0
  %v5837 = vpop.f32.mrf.mxu0
  %v5838 = vadd.f32 %v5542, %v5837
  %v5839 = vpop.f32.mrf.mxu0
  %5840 = vmatprep.mubr.bf16.mxu0 0
  %5841 = vmatmul.mubr.bf16.gmra.mxu0 %v5516
  %v5842 = vpop.f32.mrf.mxu0
  %v5843 = vadd.f32 %v5542, %v5842
  %v5844 = vpop.f32.mrf.mxu0
  %v5845 = vpop.f32.mrf.mxu0
  %v5846 = vadd.f32 %v5542, %v5845
  %v5847 = vpop.f32.mrf.mxu0
  %5848 = vmatprep.mubr.bf16.mxu0 0
  %5849 = vmatmul.mubr.bf16.gmra.mxu0 %v5517
  %v5850 = vpop.f32.mrf.mxu0
  %v5851 = vadd.f32 %v5542, %v5850
  %v5852 = vpop.f32.mrf.mxu0
  %v5853 = vpop.f32.mrf.mxu0
  %v5854 = vadd.f32 %v5542, %v5853
  %v5855 = vpop.f32.mrf.mxu0
  %5856 = vmatprep.mubr.bf16.mxu0 0
  %5857 = vmatmul.mubr.bf16.gmra.mxu0 %v5518
  %v5858 = vpop.f32.mrf.mxu0
  %v5859 = vadd.f32 %v5542, %v5858
  %v5860 = vpop.f32.mrf.mxu0
  %v5861 = vpop.f32.mrf.mxu0
  %v5862 = vadd.f32 %v5542, %v5861
  %v5863 = vpop.f32.mrf.mxu0
  %5864 = vmatprep.mubr.bf16.mxu0 0
  %5865 = vmatmul.mubr.bf16.gmra.mxu0 %v5519
  %v5866 = vpop.f32.mrf.mxu0
  %v5867 = vadd.f32 %v5542, %v5866
  %v5868 = vpop.f32.mrf.mxu0
  %v5869 = vpop.f32.mrf.mxu0
  %v5870 = vadd.f32 %v5542, %v5869
  %v5871 = vpop.f32.mrf.mxu0
  %5872 = vmatprep.mubr.bf16.mxu0 0
  %5873 = vmatmul.mubr.bf16.gmra.mxu0 %v5520
  %v5874 = vpop.f32.mrf.mxu0
  %v5875 = vadd.f32 %v5542, %v5874
  %v5876 = vpop.f32.mrf.mxu0
  %v5877 = vpop.f32.mrf.mxu0
  %v5878 = vadd.f32 %v5542, %v5877
  %v5879 = vpop.f32.mrf.mxu0
  %5880 = vdwg.mxu0
  %v5881 = vadd.f32 %v1080, %v5627
  %v5882 = vadd.f32 %v1081, %v5630
  %v5883 = vadd.f32 %v1082, %v5635
  %v5884 = vadd.f32 %v1083, %v5638
  %v5885 = vadd.f32 %v1084, %v5643
  %v5886 = vadd.f32 %v1085, %v5646
  %v5887 = vadd.f32 %v1086, %v5651
  %v5888 = vadd.f32 %v1087, %v5654
  %v5889 = vadd.f32 %v1088, %v5659
  %v5890 = vadd.f32 %v1089, %v5662
  %v5891 = vadd.f32 %v1090, %v5667
  %v5892 = vadd.f32 %v1091, %v5670
  %v5893 = vadd.f32 %v1092, %v5675
  %v5894 = vadd.f32 %v1093, %v5678
  %v5895 = vadd.f32 %v1094, %v5683
  %v5896 = vadd.f32 %v1095, %v5686
  %v5897 = vadd.f32 %v1096, %v5691
  %v5898 = vadd.f32 %v1097, %v5694
  %v5899 = vadd.f32 %v1098, %v5699
  %v5900 = vadd.f32 %v1099, %v5702
  %v5901 = vadd.f32 %v1100, %v5707
  %v5902 = vadd.f32 %v1101, %v5710
  %v5903 = vadd.f32 %v1102, %v5715
  %v5904 = vadd.f32 %v1103, %v5718
  %v5905 = vadd.f32 %v1104, %v5723
  %v5906 = vadd.f32 %v1105, %v5726
  %v5907 = vadd.f32 %v1106, %v5731
  %v5908 = vadd.f32 %v1107, %v5734
  %v5909 = vadd.f32 %v1108, %v5739
  %v5910 = vadd.f32 %v1109, %v5742
  %v5911 = vadd.f32 %v1110, %v5747
  %v5912 = vadd.f32 %v1111, %v5750
  %v5913 = vadd.f32 %v1112, %v5755
  %v5914 = vadd.f32 %v1113, %v5758
  %v5915 = vadd.f32 %v1114, %v5763
  %v5916 = vadd.f32 %v1115, %v5766
  %v5917 = vadd.f32 %v1116, %v5771
  %v5918 = vadd.f32 %v1117, %v5774
  %v5919 = vadd.f32 %v1118, %v5779
  %v5920 = vadd.f32 %v1119, %v5782
  %v5921 = vadd.f32 %v1120, %v5787
  %v5922 = vadd.f32 %v1121, %v5790
  %v5923 = vadd.f32 %v1122, %v5795
  %v5924 = vadd.f32 %v1123, %v5798
  %v5925 = vadd.f32 %v1124, %v5803
  %v5926 = vadd.f32 %v1125, %v5806
  %v5927 = vadd.f32 %v1126, %v5811
  %v5928 = vadd.f32 %v1127, %v5814
  %v5929 = vadd.f32 %v1128, %v5819
  %v5930 = vadd.f32 %v1129, %v5822
  %v5931 = vadd.f32 %v1130, %v5827
  %v5932 = vadd.f32 %v1131, %v5830
  %v5933 = vadd.f32 %v1132, %v5835
  %v5934 = vadd.f32 %v1133, %v5838
  %v5935 = vadd.f32 %v1134, %v5843
  %v5936 = vadd.f32 %v1135, %v5846
  %v5937 = vadd.f32 %v1136, %v5851
  %v5938 = vadd.f32 %v1137, %v5854
  %v5939 = vadd.f32 %v1138, %v5859
  %v5940 = vadd.f32 %v1139, %v5862
  %v5941 = vadd.f32 %v1140, %v5867
  %v5942 = vadd.f32 %v1141, %v5870
  %v5943 = vadd.f32 %v1142, %v5875
  %v5944 = vadd.f32 %v1143, %v5878
  %v5945 = vpack.c.bf16 %v5882, %v5881
  %v5946 = vpack.c.bf16 %v5884, %v5883
  %v5947 = vpack.c.bf16 %v5886, %v5885
  %v5948 = vpack.c.bf16 %v5888, %v5887
  %v5949 = vpack.c.bf16 %v5890, %v5889
  %v5950 = vpack.c.bf16 %v5892, %v5891
  %v5951 = vpack.c.bf16 %v5894, %v5893
  %v5952 = vpack.c.bf16 %v5896, %v5895
  %v5953 = vpack.c.bf16 %v5898, %v5897
  %v5954 = vpack.c.bf16 %v5900, %v5899
  %v5955 = vpack.c.bf16 %v5902, %v5901
  %v5956 = vpack.c.bf16 %v5904, %v5903
  %v5957 = vpack.c.bf16 %v5906, %v5905
  %v5958 = vpack.c.bf16 %v5908, %v5907
  %v5959 = vpack.c.bf16 %v5910, %v5909
  %v5960 = vpack.c.bf16 %v5912, %v5911
  %v5961 = vpack.c.bf16 %v5914, %v5913
  %v5962 = vpack.c.bf16 %v5916, %v5915
  %v5963 = vpack.c.bf16 %v5918, %v5917
  %v5964 = vpack.c.bf16 %v5920, %v5919
  %v5965 = vpack.c.bf16 %v5922, %v5921
  %v5966 = vpack.c.bf16 %v5924, %v5923
  %v5967 = vpack.c.bf16 %v5926, %v5925
  %v5968 = vpack.c.bf16 %v5928, %v5927
  %v5969 = vpack.c.bf16 %v5930, %v5929
  %v5970 = vpack.c.bf16 %v5932, %v5931
  %v5971 = vpack.c.bf16 %v5934, %v5933
  %v5972 = vpack.c.bf16 %v5936, %v5935
  %v5973 = vpack.c.bf16 %v5938, %v5937
  %v5974 = vpack.c.bf16 %v5940, %v5939
  %v5975 = vpack.c.bf16 %v5942, %v5941
  %v5976 = vpack.c.bf16 %v5944, %v5943
  %v5977 = vld [vmem:[%s13] sm:$0xff]
  %v5978 = vld [vmem:[%s13 + $0x8] sm:$0xff]
  %v5979 = vld [vmem:[%s13 + $0x10] sm:$0xff]
  %v5980 = vld [vmem:[%s13 + $0x18] sm:$0xff]
  %v5981 = vld [vmem:[%s14] sm:$0x3]
  %v5983 = vlaneseq
  %v5984 = vshrl.u32 %v5983, 7
  %v5985 = vsub.s32 0, %v5984
  %v5986 = vrot.slane %v5981, %v5985
  %v5987 = vlaneseq
  %v5988 = vshrl.u32 %v5987, 7
  %v5989 = vsub.s32 1, %v5988
  %v5990 = vrot.slane %v5981, %v5989
  %v5997 = vunpack.c.l.b16 %v5977
  %v5998 = vunpack.c.h.b16 %v5977
  %v5999 = vunpack.c.l.b16 %v5978
  %v6000 = vunpack.c.h.b16 %v5978
  %v6001 = vunpack.c.l.b16 %v5979
  %v6002 = vunpack.c.h.b16 %v5979
  %v6003 = vunpack.c.l.b16 %v5980
  %v6004 = vunpack.c.h.b16 %v5980
  %v6005 = vpack.c.b16 %v5999, %v5997
  %v6006 = vpack.c.b16 %v6000, %v5998
  %v6007 = vpack.c.b16 %v6003, %v6001
  %v6008 = vpack.c.b16 %v6004, %v6002
  %v6014 = vsel %vm310, %v5945, 0
  %v6017 = vsel %vm310, %v5946, 0
  %v6020 = vsel %vm310, %v5947, 0
  %v6023 = vsel %vm310, %v5948, 0
  %v6026 = vsel %vm310, %v5949, 0
  %v6029 = vsel %vm310, %v5950, 0
  %v6032 = vsel %vm310, %v5951, 0
  %v6035 = vsel %vm310, %v5952, 0
  %v6038 = vsel %vm310, %v5953, 0
  %v6041 = vsel %vm310, %v5954, 0
  %v6044 = vsel %vm310, %v5955, 0
  %v6047 = vsel %vm310, %v5956, 0
  %v6050 = vsel %vm310, %v5957, 0
  %v6053 = vsel %vm310, %v5958, 0
  %v6056 = vsel %vm310, %v5959, 0
  %v6059 = vsel %vm310, %v5960, 0
  %v6062 = vsel %vm310, %v5961, 0
  %v6065 = vsel %vm310, %v5962, 0
  %v6068 = vsel %vm310, %v5963, 0
  %v6071 = vsel %vm310, %v5964, 0
  %v6074 = vsel %vm310, %v5965, 0
  %v6077 = vsel %vm310, %v5966, 0
  %v6080 = vsel %vm310, %v5967, 0
  %v6083 = vsel %vm310, %v5968, 0
  %v6086 = vsel %vm310, %v5969, 0
  %v6089 = vsel %vm310, %v5970, 0
  %v6092 = vsel %vm310, %v5971, 0
  %v6095 = vsel %vm310, %v5972, 0
  %v6098 = vsel %vm310, %v5973, 0
  %v6101 = vsel %vm310, %v5974, 0
  %v6104 = vsel %vm310, %v5975, 0
  %v6107 = vsel %vm310, %v5976, 0
  %6109 = vmatprep.subr.bf16.mxu0 0
  %6110 = vmatpush1.bf16.msra.mxu0 0
  %6111 = vmatprep.subr.bf16.mxu0 0
  %6112 = vmatpush1.bf16.msra.mxu0 0
  %6113 = vmatprep.subr.bf16.mxu0 0
  %6114 = vmatpush1.bf16.msra.mxu0 0
  %6115 = vmatprep.subr.bf16.mxu0 0
  %6116 = vmatpush1.bf16.msra.mxu0 0
  %6117 = vmatprep.subr.bf16.mxu0 0
  %6118 = vmatpush1.bf16.msra.mxu0 0
  %6119 = vmatprep.subr.bf16.mxu0 0
  %6120 = vmatpush1.bf16.msra.mxu0 0
  %6121 = vmatprep.subr.bf16.mxu0 %v6008
  %6122 = vmatpush1.bf16.msra.mxu0 %v6007
  %6123 = vmatprep.subr.bf16.mxu0 %v6006
  %6124 = vmatpush1.bf16.msra.mxu0 %v6005
  %6125 = vmatprep.subr.bf16.mxu0 0
  %6126 = vmatpush2.bf16.msra.mxu0 0
  %6127 = vmatprep.subr.bf16.mxu0 0
  %6128 = vmatpush2.bf16.msra.mxu0 0
  %6129 = vmatprep.subr.bf16.mxu0 0
  %6130 = vmatpush2.bf16.msra.mxu0 0
  %6131 = vmatprep.subr.bf16.mxu0 0
  %6132 = vmatpush2.bf16.msra.mxu0 0
  %6133 = vmatprep.subr.bf16.mxu0 0
  %6134 = vmatpush2.bf16.msra.mxu0 0
  %6135 = vmatprep.subr.bf16.mxu0 0
  %6136 = vmatpush2.bf16.msra.mxu0 0
  %6137 = vmatprep.subr.bf16.mxu0 0
  %6138 = vmatpush2.bf16.msra.mxu0 0
  %6139 = vmatprep.subr.bf16.mxu0 0
  %6140 = vmatpush2.bf16.msra.mxu0 0
  %6141 = vmatprep.mubr.bf16.mxu0 0
  %6142 = vmatmul.mubr.bf16.gmra.mxu0 %v6014
  %v6143 = vpop.f32.mrf.mxu0
  %v6144 = vadd.f32 %v5986, %v6143
  %v6145 = vpop.f32.mrf.mxu0
  %v6146 = vadd.f32 %v5990, %v6145
  %v6147 = vpop.f32.mrf.mxu0
  %v6148 = vadd.f32 %v5986, %v6147
  %v6149 = vpop.f32.mrf.mxu0
  %v6150 = vadd.f32 %v5990, %v6149
  %6151 = vmatprep.mubr.bf16.mxu0 0
  %6152 = vmatmul.mubr.bf16.gmra.mxu0 %v6017
  %v6153 = vpop.f32.mrf.mxu0
  %v6154 = vadd.f32 %v5986, %v6153
  %v6155 = vpop.f32.mrf.mxu0
  %v6156 = vadd.f32 %v5990, %v6155
  %v6157 = vpop.f32.mrf.mxu0
  %v6158 = vadd.f32 %v5986, %v6157
  %v6159 = vpop.f32.mrf.mxu0
  %v6160 = vadd.f32 %v5990, %v6159
  %6161 = vmatprep.mubr.bf16.mxu0 0
  %6162 = vmatmul.mubr.bf16.gmra.mxu0 %v6020
  %v6163 = vpop.f32.mrf.mxu0
  %v6164 = vadd.f32 %v5986, %v6163
  %v6165 = vpop.f32.mrf.mxu0
  %v6166 = vadd.f32 %v5990, %v6165
  %v6167 = vpop.f32.mrf.mxu0
  %v6168 = vadd.f32 %v5986, %v6167
  %v6169 = vpop.f32.mrf.mxu0
  %v6170 = vadd.f32 %v5990, %v6169
  %6171 = vmatprep.mubr.bf16.mxu0 0
  %6172 = vmatmul.mubr.bf16.gmra.mxu0 %v6023
  %v6173 = vpop.f32.mrf.mxu0
  %v6174 = vadd.f32 %v5986, %v6173
  %v6175 = vpop.f32.mrf.mxu0
  %v6176 = vadd.f32 %v5990, %v6175
  %v6177 = vpop.f32.mrf.mxu0
  %v6178 = vadd.f32 %v5986, %v6177
  %v6179 = vpop.f32.mrf.mxu0
  %v6180 = vadd.f32 %v5990, %v6179
  %6181 = vmatprep.mubr.bf16.mxu0 0
  %6182 = vmatmul.mubr.bf16.gmra.mxu0 %v6026
  %v6183 = vpop.f32.mrf.mxu0
  %v6184 = vadd.f32 %v5986, %v6183
  %v6185 = vpop.f32.mrf.mxu0
  %v6186 = vadd.f32 %v5990, %v6185
  %v6187 = vpop.f32.mrf.mxu0
  %v6188 = vadd.f32 %v5986, %v6187
  %v6189 = vpop.f32.mrf.mxu0
  %v6190 = vadd.f32 %v5990, %v6189
  %6191 = vmatprep.mubr.bf16.mxu0 0
  %6192 = vmatmul.mubr.bf16.gmra.mxu0 %v6029
  %v6193 = vpop.f32.mrf.mxu0
  %v6194 = vadd.f32 %v5986, %v6193
  %v6195 = vpop.f32.mrf.mxu0
  %v6196 = vadd.f32 %v5990, %v6195
  %v6197 = vpop.f32.mrf.mxu0
  %v6198 = vadd.f32 %v5986, %v6197
  %v6199 = vpop.f32.mrf.mxu0
  %v6200 = vadd.f32 %v5990, %v6199
  %6201 = vmatprep.mubr.bf16.mxu0 0
  %6202 = vmatmul.mubr.bf16.gmra.mxu0 %v6032
  %v6203 = vpop.f32.mrf.mxu0
  %v6204 = vadd.f32 %v5986, %v6203
  %v6205 = vpop.f32.mrf.mxu0
  %v6206 = vadd.f32 %v5990, %v6205
  %v6207 = vpop.f32.mrf.mxu0
  %v6208 = vadd.f32 %v5986, %v6207
  %v6209 = vpop.f32.mrf.mxu0
  %v6210 = vadd.f32 %v5990, %v6209
  %6211 = vmatprep.mubr.bf16.mxu0 0
  %6212 = vmatmul.mubr.bf16.gmra.mxu0 %v6035
  %v6213 = vpop.f32.mrf.mxu0
  %v6214 = vadd.f32 %v5986, %v6213
  %v6215 = vpop.f32.mrf.mxu0
  %v6216 = vadd.f32 %v5990, %v6215
  %v6217 = vpop.f32.mrf.mxu0
  %v6218 = vadd.f32 %v5986, %v6217
  %v6219 = vpop.f32.mrf.mxu0
  %v6220 = vadd.f32 %v5990, %v6219
  %6221 = vmatprep.mubr.bf16.mxu0 0
  %6222 = vmatmul.mubr.bf16.gmra.mxu0 %v6038
  %v6223 = vpop.f32.mrf.mxu0
  %v6224 = vadd.f32 %v5986, %v6223
  %v6225 = vpop.f32.mrf.mxu0
  %v6226 = vadd.f32 %v5990, %v6225
  %v6227 = vpop.f32.mrf.mxu0
  %v6228 = vadd.f32 %v5986, %v6227
  %v6229 = vpop.f32.mrf.mxu0
  %v6230 = vadd.f32 %v5990, %v6229
  %6231 = vmatprep.mubr.bf16.mxu0 0
  %6232 = vmatmul.mubr.bf16.gmra.mxu0 %v6041
  %v6233 = vpop.f32.mrf.mxu0
  %v6234 = vadd.f32 %v5986, %v6233
  %v6235 = vpop.f32.mrf.mxu0
  %v6236 = vadd.f32 %v5990, %v6235
  %v6237 = vpop.f32.mrf.mxu0
  %v6238 = vadd.f32 %v5986, %v6237
  %v6239 = vpop.f32.mrf.mxu0
  %v6240 = vadd.f32 %v5990, %v6239
  %6241 = vmatprep.mubr.bf16.mxu0 0
  %6242 = vmatmul.mubr.bf16.gmra.mxu0 %v6044
  %v6243 = vpop.f32.mrf.mxu0
  %v6244 = vadd.f32 %v5986, %v6243
  %v6245 = vpop.f32.mrf.mxu0
  %v6246 = vadd.f32 %v5990, %v6245
  %v6247 = vpop.f32.mrf.mxu0
  %v6248 = vadd.f32 %v5986, %v6247
  %v6249 = vpop.f32.mrf.mxu0
  %v6250 = vadd.f32 %v5990, %v6249
  %6251 = vmatprep.mubr.bf16.mxu0 0
  %6252 = vmatmul.mubr.bf16.gmra.mxu0 %v6047
  %v6253 = vpop.f32.mrf.mxu0
  %v6254 = vadd.f32 %v5986, %v6253
  %v6255 = vpop.f32.mrf.mxu0
  %v6256 = vadd.f32 %v5990, %v6255
  %v6257 = vpop.f32.mrf.mxu0
  %v6258 = vadd.f32 %v5986, %v6257
  %v6259 = vpop.f32.mrf.mxu0
  %v6260 = vadd.f32 %v5990, %v6259
  %6261 = vmatprep.mubr.bf16.mxu0 0
  %6262 = vmatmul.mubr.bf16.gmra.mxu0 %v6050
  %v6263 = vpop.f32.mrf.mxu0
  %v6264 = vadd.f32 %v5986, %v6263
  %v6265 = vpop.f32.mrf.mxu0
  %v6266 = vadd.f32 %v5990, %v6265
  %v6267 = vpop.f32.mrf.mxu0
  %v6268 = vadd.f32 %v5986, %v6267
  %v6269 = vpop.f32.mrf.mxu0
  %v6270 = vadd.f32 %v5990, %v6269
  %6271 = vmatprep.mubr.bf16.mxu0 0
  %6272 = vmatmul.mubr.bf16.gmra.mxu0 %v6053
  %v6273 = vpop.f32.mrf.mxu0
  %v6274 = vadd.f32 %v5986, %v6273
  %v6275 = vpop.f32.mrf.mxu0
  %v6276 = vadd.f32 %v5990, %v6275
  %v6277 = vpop.f32.mrf.mxu0
  %v6278 = vadd.f32 %v5986, %v6277
  %v6279 = vpop.f32.mrf.mxu0
  %v6280 = vadd.f32 %v5990, %v6279
  %6281 = vmatprep.mubr.bf16.mxu0 0
  %6282 = vmatmul.mubr.bf16.gmra.mxu0 %v6056
  %v6283 = vpop.f32.mrf.mxu0
  %v6284 = vadd.f32 %v5986, %v6283
  %v6285 = vpop.f32.mrf.mxu0
  %v6286 = vadd.f32 %v5990, %v6285
  %v6287 = vpop.f32.mrf.mxu0
  %v6288 = vadd.f32 %v5986, %v6287
  %v6289 = vpop.f32.mrf.mxu0
  %v6290 = vadd.f32 %v5990, %v6289
  %6291 = vmatprep.mubr.bf16.mxu0 0
  %6292 = vmatmul.mubr.bf16.gmra.mxu0 %v6059
  %v6293 = vpop.f32.mrf.mxu0
  %v6294 = vadd.f32 %v5986, %v6293
  %v6295 = vpop.f32.mrf.mxu0
  %v6296 = vadd.f32 %v5990, %v6295
  %v6297 = vpop.f32.mrf.mxu0
  %v6298 = vadd.f32 %v5986, %v6297
  %v6299 = vpop.f32.mrf.mxu0
  %v6300 = vadd.f32 %v5990, %v6299
  %6301 = vmatprep.mubr.bf16.mxu0 0
  %6302 = vmatmul.mubr.bf16.gmra.mxu0 %v6062
  %v6303 = vpop.f32.mrf.mxu0
  %v6304 = vadd.f32 %v5986, %v6303
  %v6305 = vpop.f32.mrf.mxu0
  %v6306 = vadd.f32 %v5990, %v6305
  %v6307 = vpop.f32.mrf.mxu0
  %v6308 = vadd.f32 %v5986, %v6307
  %v6309 = vpop.f32.mrf.mxu0
  %v6310 = vadd.f32 %v5990, %v6309
  %6311 = vmatprep.mubr.bf16.mxu0 0
  %6312 = vmatmul.mubr.bf16.gmra.mxu0 %v6065
  %v6313 = vpop.f32.mrf.mxu0
  %v6314 = vadd.f32 %v5986, %v6313
  %v6315 = vpop.f32.mrf.mxu0
  %v6316 = vadd.f32 %v5990, %v6315
  %v6317 = vpop.f32.mrf.mxu0
  %v6318 = vadd.f32 %v5986, %v6317
  %v6319 = vpop.f32.mrf.mxu0
  %v6320 = vadd.f32 %v5990, %v6319
  %6321 = vmatprep.mubr.bf16.mxu0 0
  %6322 = vmatmul.mubr.bf16.gmra.mxu0 %v6068
  %v6323 = vpop.f32.mrf.mxu0
  %v6324 = vadd.f32 %v5986, %v6323
  %v6325 = vpop.f32.mrf.mxu0
  %v6326 = vadd.f32 %v5990, %v6325
  %v6327 = vpop.f32.mrf.mxu0
  %v6328 = vadd.f32 %v5986, %v6327
  %v6329 = vpop.f32.mrf.mxu0
  %v6330 = vadd.f32 %v5990, %v6329
  %6331 = vmatprep.mubr.bf16.mxu0 0
  %6332 = vmatmul.mubr.bf16.gmra.mxu0 %v6071
  %v6333 = vpop.f32.mrf.mxu0
  %v6334 = vadd.f32 %v5986, %v6333
  %v6335 = vpop.f32.mrf.mxu0
  %v6336 = vadd.f32 %v5990, %v6335
  %v6337 = vpop.f32.mrf.mxu0
  %v6338 = vadd.f32 %v5986, %v6337
  %v6339 = vpop.f32.mrf.mxu0
  %v6340 = vadd.f32 %v5990, %v6339
  %6341 = vmatprep.mubr.bf16.mxu0 0
  %6342 = vmatmul.mubr.bf16.gmra.mxu0 %v6074
  %v6343 = vpop.f32.mrf.mxu0
  %v6344 = vadd.f32 %v5986, %v6343
  %v6345 = vpop.f32.mrf.mxu0
  %v6346 = vadd.f32 %v5990, %v6345
  %v6347 = vpop.f32.mrf.mxu0
  %v6348 = vadd.f32 %v5986, %v6347
  %v6349 = vpop.f32.mrf.mxu0
  %v6350 = vadd.f32 %v5990, %v6349
  %6351 = vmatprep.mubr.bf16.mxu0 0
  %6352 = vmatmul.mubr.bf16.gmra.mxu0 %v6077
  %v6353 = vpop.f32.mrf.mxu0
  %v6354 = vadd.f32 %v5986, %v6353
  %v6355 = vpop.f32.mrf.mxu0
  %v6356 = vadd.f32 %v5990, %v6355
  %v6357 = vpop.f32.mrf.mxu0
  %v6358 = vadd.f32 %v5986, %v6357
  %v6359 = vpop.f32.mrf.mxu0
  %v6360 = vadd.f32 %v5990, %v6359
  %6361 = vmatprep.mubr.bf16.mxu0 0
  %6362 = vmatmul.mubr.bf16.gmra.mxu0 %v6080
  %v6363 = vpop.f32.mrf.mxu0
  %v6364 = vadd.f32 %v5986, %v6363
  %v6365 = vpop.f32.mrf.mxu0
  %v6366 = vadd.f32 %v5990, %v6365
  %v6367 = vpop.f32.mrf.mxu0
  %v6368 = vadd.f32 %v5986, %v6367
  %v6369 = vpop.f32.mrf.mxu0
  %v6370 = vadd.f32 %v5990, %v6369
  %6371 = vmatprep.mubr.bf16.mxu0 0
  %6372 = vmatmul.mubr.bf16.gmra.mxu0 %v6083
  %v6373 = vpop.f32.mrf.mxu0
  %v6374 = vadd.f32 %v5986, %v6373
  %v6375 = vpop.f32.mrf.mxu0
  %v6376 = vadd.f32 %v5990, %v6375
  %v6377 = vpop.f32.mrf.mxu0
  %v6378 = vadd.f32 %v5986, %v6377
  %v6379 = vpop.f32.mrf.mxu0
  %v6380 = vadd.f32 %v5990, %v6379
  %6381 = vmatprep.mubr.bf16.mxu0 0
  %6382 = vmatmul.mubr.bf16.gmra.mxu0 %v6086
  %v6383 = vpop.f32.mrf.mxu0
  %v6384 = vadd.f32 %v5986, %v6383
  %v6385 = vpop.f32.mrf.mxu0
  %v6386 = vadd.f32 %v5990, %v6385
  %v6387 = vpop.f32.mrf.mxu0
  %v6388 = vadd.f32 %v5986, %v6387
  %v6389 = vpop.f32.mrf.mxu0
  %v6390 = vadd.f32 %v5990, %v6389
  %6391 = vmatprep.mubr.bf16.mxu0 0
  %6392 = vmatmul.mubr.bf16.gmra.mxu0 %v6089
  %v6393 = vpop.f32.mrf.mxu0
  %v6394 = vadd.f32 %v5986, %v6393
  %v6395 = vpop.f32.mrf.mxu0
  %v6396 = vadd.f32 %v5990, %v6395
  %v6397 = vpop.f32.mrf.mxu0
  %v6398 = vadd.f32 %v5986, %v6397
  %v6399 = vpop.f32.mrf.mxu0
  %v6400 = vadd.f32 %v5990, %v6399
  %6401 = vmatprep.mubr.bf16.mxu0 0
  %6402 = vmatmul.mubr.bf16.gmra.mxu0 %v6092
  %v6403 = vpop.f32.mrf.mxu0
  %v6404 = vadd.f32 %v5986, %v6403
  %v6405 = vpop.f32.mrf.mxu0
  %v6406 = vadd.f32 %v5990, %v6405
  %v6407 = vpop.f32.mrf.mxu0
  %v6408 = vadd.f32 %v5986, %v6407
  %v6409 = vpop.f32.mrf.mxu0
  %v6410 = vadd.f32 %v5990, %v6409
  %6411 = vmatprep.mubr.bf16.mxu0 0
  %6412 = vmatmul.mubr.bf16.gmra.mxu0 %v6095
  %v6413 = vpop.f32.mrf.mxu0
  %v6414 = vadd.f32 %v5986, %v6413
  %v6415 = vpop.f32.mrf.mxu0
  %v6416 = vadd.f32 %v5990, %v6415
  %v6417 = vpop.f32.mrf.mxu0
  %v6418 = vadd.f32 %v5986, %v6417
  %v6419 = vpop.f32.mrf.mxu0
  %v6420 = vadd.f32 %v5990, %v6419
  %6421 = vmatprep.mubr.bf16.mxu0 0
  %6422 = vmatmul.mubr.bf16.gmra.mxu0 %v6098
  %v6423 = vpop.f32.mrf.mxu0
  %v6424 = vadd.f32 %v5986, %v6423
  %v6425 = vpop.f32.mrf.mxu0
  %v6426 = vadd.f32 %v5990, %v6425
  %v6427 = vpop.f32.mrf.mxu0
  %v6428 = vadd.f32 %v5986, %v6427
  %v6429 = vpop.f32.mrf.mxu0
  %v6430 = vadd.f32 %v5990, %v6429
  %6431 = vmatprep.mubr.bf16.mxu0 0
  %6432 = vmatmul.mubr.bf16.gmra.mxu0 %v6101
  %v6433 = vpop.f32.mrf.mxu0
  %v6434 = vadd.f32 %v5986, %v6433
  %v6435 = vpop.f32.mrf.mxu0
  %v6436 = vadd.f32 %v5990, %v6435
  %v6437 = vpop.f32.mrf.mxu0
  %v6438 = vadd.f32 %v5986, %v6437
  %v6439 = vpop.f32.mrf.mxu0
  %v6440 = vadd.f32 %v5990, %v6439
  %6441 = vmatprep.mubr.bf16.mxu0 0
  %6442 = vmatmul.mubr.bf16.gmra.mxu0 %v6104
  %v6443 = vpop.f32.mrf.mxu0
  %v6444 = vadd.f32 %v5986, %v6443
  %v6445 = vpop.f32.mrf.mxu0
  %v6446 = vadd.f32 %v5990, %v6445
  %v6447 = vpop.f32.mrf.mxu0
  %v6448 = vadd.f32 %v5986, %v6447
  %v6449 = vpop.f32.mrf.mxu0
  %v6450 = vadd.f32 %v5990, %v6449
  %6451 = vmatprep.mubr.bf16.mxu0 0
  %6452 = vmatmul.mubr.bf16.gmra.mxu0 %v6107
  %v6453 = vpop.f32.mrf.mxu0
  %v6454 = vadd.f32 %v5986, %v6453
  %v6455 = vpop.f32.mrf.mxu0
  %v6456 = vadd.f32 %v5990, %v6455
  %v6457 = vpop.f32.mrf.mxu0
  %v6458 = vadd.f32 %v5986, %v6457
  %v6459 = vpop.f32.mrf.mxu0
  %v6460 = vadd.f32 %v5990, %v6459
  %6461 = vdwg.mxu0
  %v6462 = vxor.u32 %v6144, 2147483648
  %v6463 = vxor.u32 %v6146, 2147483648
  %v6464 = vxor.u32 %v6148, 2147483648
  %v6465 = vxor.u32 %v6150, 2147483648
  %v6466 = vxor.u32 %v6154, 2147483648
  %v6467 = vxor.u32 %v6156, 2147483648
  %v6468 = vxor.u32 %v6158, 2147483648
  %v6469 = vxor.u32 %v6160, 2147483648
  %v6470 = vxor.u32 %v6164, 2147483648
  %v6471 = vxor.u32 %v6166, 2147483648
  %v6472 = vxor.u32 %v6168, 2147483648
  %v6473 = vxor.u32 %v6170, 2147483648
  %v6474 = vxor.u32 %v6174, 2147483648
  %v6475 = vxor.u32 %v6176, 2147483648
  %v6476 = vxor.u32 %v6178, 2147483648
  %v6477 = vxor.u32 %v6180, 2147483648
  %v6478 = vxor.u32 %v6184, 2147483648
  %v6479 = vxor.u32 %v6186, 2147483648
  %v6480 = vxor.u32 %v6188, 2147483648
  %v6481 = vxor.u32 %v6190, 2147483648
  %v6482 = vxor.u32 %v6194, 2147483648
  %v6483 = vxor.u32 %v6196, 2147483648
  %v6484 = vxor.u32 %v6198, 2147483648
  %v6485 = vxor.u32 %v6200, 2147483648
  %v6486 = vxor.u32 %v6204, 2147483648
  %v6487 = vxor.u32 %v6206, 2147483648
  %v6488 = vxor.u32 %v6208, 2147483648
  %v6489 = vxor.u32 %v6210, 2147483648
  %v6490 = vxor.u32 %v6214, 2147483648
  %v6491 = vxor.u32 %v6216, 2147483648
  %v6492 = vxor.u32 %v6218, 2147483648
  %v6493 = vxor.u32 %v6220, 2147483648
  %v6494 = vxor.u32 %v6224, 2147483648
  %v6495 = vxor.u32 %v6226, 2147483648
  %v6496 = vxor.u32 %v6228, 2147483648
  %v6497 = vxor.u32 %v6230, 2147483648
  %v6498 = vxor.u32 %v6234, 2147483648
  %v6499 = vxor.u32 %v6236, 2147483648
  %v6500 = vxor.u32 %v6238, 2147483648
  %v6501 = vxor.u32 %v6240, 2147483648
  %v6502 = vxor.u32 %v6244, 2147483648
  %v6503 = vxor.u32 %v6246, 2147483648
  %v6504 = vxor.u32 %v6248, 2147483648
  %v6505 = vxor.u32 %v6250, 2147483648
  %v6506 = vxor.u32 %v6254, 2147483648
  %v6507 = vxor.u32 %v6256, 2147483648
  %v6508 = vxor.u32 %v6258, 2147483648
  %v6509 = vxor.u32 %v6260, 2147483648
  %v6510 = vxor.u32 %v6264, 2147483648
  %v6511 = vxor.u32 %v6266, 2147483648
  %v6512 = vxor.u32 %v6268, 2147483648
  %v6513 = vxor.u32 %v6270, 2147483648
  %v6514 = vxor.u32 %v6274, 2147483648
  %v6515 = vxor.u32 %v6276, 2147483648
  %v6516 = vxor.u32 %v6278, 2147483648
  %v6517 = vxor.u32 %v6280, 2147483648
  %v6518 = vxor.u32 %v6284, 2147483648
  %v6519 = vxor.u32 %v6286, 2147483648
  %v6520 = vxor.u32 %v6288, 2147483648
  %v6521 = vxor.u32 %v6290, 2147483648
  %v6522 = vxor.u32 %v6294, 2147483648
  %v6523 = vxor.u32 %v6296, 2147483648
  %v6524 = vxor.u32 %v6298, 2147483648
  %v6525 = vxor.u32 %v6300, 2147483648
  %v6526 = vxor.u32 %v6304, 2147483648
  %v6527 = vxor.u32 %v6306, 2147483648
  %v6528 = vxor.u32 %v6308, 2147483648
  %v6529 = vxor.u32 %v6310, 2147483648
  %v6530 = vxor.u32 %v6314, 2147483648
  %v6531 = vxor.u32 %v6316, 2147483648
  %v6532 = vxor.u32 %v6318, 2147483648
  %v6533 = vxor.u32 %v6320, 2147483648
  %v6534 = vxor.u32 %v6324, 2147483648
  %v6535 = vxor.u32 %v6326, 2147483648
  %v6536 = vxor.u32 %v6328, 2147483648
  %v6537 = vxor.u32 %v6330, 2147483648
  %v6538 = vxor.u32 %v6334, 2147483648
  %v6539 = vxor.u32 %v6336, 2147483648
  %v6540 = vxor.u32 %v6338, 2147483648
  %v6541 = vxor.u32 %v6340, 2147483648
  %v6542 = vxor.u32 %v6344, 2147483648
  %v6543 = vxor.u32 %v6346, 2147483648
  %v6544 = vxor.u32 %v6348, 2147483648
  %v6545 = vxor.u32 %v6350, 2147483648
  %v6546 = vxor.u32 %v6354, 2147483648
  %v6547 = vxor.u32 %v6356, 2147483648
  %v6548 = vxor.u32 %v6358, 2147483648
  %v6549 = vxor.u32 %v6360, 2147483648
  %v6550 = vxor.u32 %v6364, 2147483648
  %v6551 = vxor.u32 %v6366, 2147483648
  %v6552 = vxor.u32 %v6368, 2147483648
  %v6553 = vxor.u32 %v6370, 2147483648
  %v6554 = vxor.u32 %v6374, 2147483648
  %v6555 = vxor.u32 %v6376, 2147483648
  %v6556 = vxor.u32 %v6378, 2147483648
  %v6557 = vxor.u32 %v6380, 2147483648
  %v6558 = vxor.u32 %v6384, 2147483648
  %v6559 = vxor.u32 %v6386, 2147483648
  %v6560 = vxor.u32 %v6388, 2147483648
  %v6561 = vxor.u32 %v6390, 2147483648
  %v6562 = vxor.u32 %v6394, 2147483648
  %v6563 = vxor.u32 %v6396, 2147483648
  %v6564 = vxor.u32 %v6398, 2147483648
  %v6565 = vxor.u32 %v6400, 2147483648
  %v6566 = vxor.u32 %v6404, 2147483648
  %v6567 = vxor.u32 %v6406, 2147483648
  %v6568 = vxor.u32 %v6408, 2147483648
  %v6569 = vxor.u32 %v6410, 2147483648
  %v6570 = vxor.u32 %v6414, 2147483648
  %v6571 = vxor.u32 %v6416, 2147483648
  %v6572 = vxor.u32 %v6418, 2147483648
  %v6573 = vxor.u32 %v6420, 2147483648
  %v6574 = vxor.u32 %v6424, 2147483648
  %v6575 = vxor.u32 %v6426, 2147483648
  %v6576 = vxor.u32 %v6428, 2147483648
  %v6577 = vxor.u32 %v6430, 2147483648
  %v6578 = vxor.u32 %v6434, 2147483648
  %v6579 = vxor.u32 %v6436, 2147483648
  %v6580 = vxor.u32 %v6438, 2147483648
  %v6581 = vxor.u32 %v6440, 2147483648
  %v6582 = vxor.u32 %v6444, 2147483648
  %v6583 = vxor.u32 %v6446, 2147483648
  %v6584 = vxor.u32 %v6448, 2147483648
  %v6585 = vxor.u32 %v6450, 2147483648
  %v6586 = vxor.u32 %v6454, 2147483648
  %v6587 = vxor.u32 %v6456, 2147483648
  %v6588 = vxor.u32 %v6458, 2147483648
  %v6589 = vxor.u32 %v6460, 2147483648
  %v6590 = vmul.f32 %v6462, 1.442695
  %v6591 = vpow.pop %v6590
  %v6592 = vmul.f32 %v6463, 1.442695
  %v6593 = vpow.pop %v6592
  %v6594 = vmul.f32 %v6464, 1.442695
  %v6595 = vpow.pop %v6594
  %v6596 = vmul.f32 %v6465, 1.442695
  %v6597 = vpow.pop %v6596
  %v6598 = vmul.f32 %v6466, 1.442695
  %v6599 = vpow.pop %v6598
  %v6600 = vmul.f32 %v6467, 1.442695
  %v6601 = vpow.pop %v6600
  %v6602 = vmul.f32 %v6468, 1.442695
  %v6603 = vpow.pop %v6602
  %v6604 = vmul.f32 %v6469, 1.442695
  %v6605 = vpow.pop %v6604
  %v6606 = vmul.f32 %v6470, 1.442695
  %v6607 = vpow.pop %v6606
  %v6608 = vmul.f32 %v6471, 1.442695
  %v6609 = vpow.pop %v6608
  %v6610 = vmul.f32 %v6472, 1.442695
  %v6611 = vpow.pop %v6610
  %v6612 = vmul.f32 %v6473, 1.442695
  %v6613 = vpow.pop %v6612
  %v6614 = vmul.f32 %v6474, 1.442695
  %v6615 = vpow.pop %v6614
  %v6616 = vmul.f32 %v6475, 1.442695
  %v6617 = vpow.pop %v6616
  %v6618 = vmul.f32 %v6476, 1.442695
  %v6619 = vpow.pop %v6618
  %v6620 = vmul.f32 %v6477, 1.442695
  %v6621 = vpow.pop %v6620
  %v6622 = vmul.f32 %v6478, 1.442695
  %v6623 = vpow.pop %v6622
  %v6624 = vmul.f32 %v6479, 1.442695
  %v6625 = vpow.pop %v6624
  %v6626 = vmul.f32 %v6480, 1.442695
  %v6627 = vpow.pop %v6626
  %v6628 = vmul.f32 %v6481, 1.442695
  %v6629 = vpow.pop %v6628
  %v6630 = vmul.f32 %v6482, 1.442695
  %v6631 = vpow.pop %v6630
  %v6632 = vmul.f32 %v6483, 1.442695
  %v6633 = vpow.pop %v6632
  %v6634 = vmul.f32 %v6484, 1.442695
  %v6635 = vpow.pop %v6634
  %v6636 = vmul.f32 %v6485, 1.442695
  %v6637 = vpow.pop %v6636
  %v6638 = vmul.f32 %v6486, 1.442695
  %v6639 = vpow.pop %v6638
  %v6640 = vmul.f32 %v6487, 1.442695
  %v6641 = vpow.pop %v6640
  %v6642 = vmul.f32 %v6488, 1.442695
  %v6643 = vpow.pop %v6642
  %v6644 = vmul.f32 %v6489, 1.442695
  %v6645 = vpow.pop %v6644
  %v6646 = vmul.f32 %v6490, 1.442695
  %v6647 = vpow.pop %v6646
  %v6648 = vmul.f32 %v6491, 1.442695
  %v6649 = vpow.pop %v6648
  %v6650 = vmul.f32 %v6492, 1.442695
  %v6651 = vpow.pop %v6650
  %v6652 = vmul.f32 %v6493, 1.442695
  %v6653 = vpow.pop %v6652
  %v6654 = vmul.f32 %v6494, 1.442695
  %v6655 = vpow.pop %v6654
  %v6656 = vmul.f32 %v6495, 1.442695
  %v6657 = vpow.pop %v6656
  %v6658 = vmul.f32 %v6496, 1.442695
  %v6659 = vpow.pop %v6658
  %v6660 = vmul.f32 %v6497, 1.442695
  %v6661 = vpow.pop %v6660
  %v6662 = vmul.f32 %v6498, 1.442695
  %v6663 = vpow.pop %v6662
  %v6664 = vmul.f32 %v6499, 1.442695
  %v6665 = vpow.pop %v6664
  %v6666 = vmul.f32 %v6500, 1.442695
  %v6667 = vpow.pop %v6666
  %v6668 = vmul.f32 %v6501, 1.442695
  %v6669 = vpow.pop %v6668
  %v6670 = vmul.f32 %v6502, 1.442695
  %v6671 = vpow.pop %v6670
  %v6672 = vmul.f32 %v6503, 1.442695
  %v6673 = vpow.pop %v6672
  %v6674 = vmul.f32 %v6504, 1.442695
  %v6675 = vpow.pop %v6674
  %v6676 = vmul.f32 %v6505, 1.442695
  %v6677 = vpow.pop %v6676
  %v6678 = vmul.f32 %v6506, 1.442695
  %v6679 = vpow.pop %v6678
  %v6680 = vmul.f32 %v6507, 1.442695
  %v6681 = vpow.pop %v6680
  %v6682 = vmul.f32 %v6508, 1.442695
  %v6683 = vpow.pop %v6682
  %v6684 = vmul.f32 %v6509, 1.442695
  %v6685 = vpow.pop %v6684
  %v6686 = vmul.f32 %v6510, 1.442695
  %v6687 = vpow.pop %v6686
  %v6688 = vmul.f32 %v6511, 1.442695
  %v6689 = vpow.pop %v6688
  %v6690 = vmul.f32 %v6512, 1.442695
  %v6691 = vpow.pop %v6690
  %v6692 = vmul.f32 %v6513, 1.442695
  %v6693 = vpow.pop %v6692
  %v6694 = vmul.f32 %v6514, 1.442695
  %v6695 = vpow.pop %v6694
  %v6696 = vmul.f32 %v6515, 1.442695
  %v6697 = vpow.pop %v6696
  %v6698 = vmul.f32 %v6516, 1.442695
  %v6699 = vpow.pop %v6698
  %v6700 = vmul.f32 %v6517, 1.442695
  %v6701 = vpow.pop %v6700
  %v6702 = vmul.f32 %v6518, 1.442695
  %v6703 = vpow.pop %v6702
  %v6704 = vmul.f32 %v6519, 1.442695
  %v6705 = vpow.pop %v6704
  %v6706 = vmul.f32 %v6520, 1.442695
  %v6707 = vpow.pop %v6706
  %v6708 = vmul.f32 %v6521, 1.442695
  %v6709 = vpow.pop %v6708
  %v6710 = vmul.f32 %v6522, 1.442695
  %v6711 = vpow.pop %v6710
  %v6712 = vmul.f32 %v6523, 1.442695
  %v6713 = vpow.pop %v6712
  %v6714 = vmul.f32 %v6524, 1.442695
  %v6715 = vpow.pop %v6714
  %v6716 = vmul.f32 %v6525, 1.442695
  %v6717 = vpow.pop %v6716
  %v6718 = vmul.f32 %v6526, 1.442695
  %v6719 = vpow.pop %v6718
  %v6720 = vmul.f32 %v6527, 1.442695
  %v6721 = vpow.pop %v6720
  %v6722 = vmul.f32 %v6528, 1.442695
  %v6723 = vpow.pop %v6722
  %v6724 = vmul.f32 %v6529, 1.442695
  %v6725 = vpow.pop %v6724
  %v6726 = vmul.f32 %v6530, 1.442695
  %v6727 = vpow.pop %v6726
  %v6728 = vmul.f32 %v6531, 1.442695
  %v6729 = vpow.pop %v6728
  %v6730 = vmul.f32 %v6532, 1.442695
  %v6731 = vpow.pop %v6730
  %v6732 = vmul.f32 %v6533, 1.442695
  %v6733 = vpow.pop %v6732
  %v6734 = vmul.f32 %v6534, 1.442695
  %v6735 = vpow.pop %v6734
  %v6736 = vmul.f32 %v6535, 1.442695
  %v6737 = vpow.pop %v6736
  %v6738 = vmul.f32 %v6536, 1.442695
  %v6739 = vpow.pop %v6738
  %v6740 = vmul.f32 %v6537, 1.442695
  %v6741 = vpow.pop %v6740
  %v6742 = vmul.f32 %v6538, 1.442695
  %v6743 = vpow.pop %v6742
  %v6744 = vmul.f32 %v6539, 1.442695
  %v6745 = vpow.pop %v6744
  %v6746 = vmul.f32 %v6540, 1.442695
  %v6747 = vpow.pop %v6746
  %v6748 = vmul.f32 %v6541, 1.442695
  %v6749 = vpow.pop %v6748
  %v6750 = vmul.f32 %v6542, 1.442695
  %v6751 = vpow.pop %v6750
  %v6752 = vmul.f32 %v6543, 1.442695
  %v6753 = vpow.pop %v6752
  %v6754 = vmul.f32 %v6544, 1.442695
  %v6755 = vpow.pop %v6754
  %v6756 = vmul.f32 %v6545, 1.442695
  %v6757 = vpow.pop %v6756
  %v6758 = vmul.f32 %v6546, 1.442695
  %v6759 = vpow.pop %v6758
  %v6760 = vmul.f32 %v6547, 1.442695
  %v6761 = vpow.pop %v6760
  %v6762 = vmul.f32 %v6548, 1.442695
  %v6763 = vpow.pop %v6762
  %v6764 = vmul.f32 %v6549, 1.442695
  %v6765 = vpow.pop %v6764
  %v6766 = vmul.f32 %v6550, 1.442695
  %v6767 = vpow.pop %v6766
  %v6768 = vmul.f32 %v6551, 1.442695
  %v6769 = vpow.pop %v6768
  %v6770 = vmul.f32 %v6552, 1.442695
  %v6771 = vpow.pop %v6770
  %v6772 = vmul.f32 %v6553, 1.442695
  %v6773 = vpow.pop %v6772
  %v6774 = vmul.f32 %v6554, 1.442695
  %v6775 = vpow.pop %v6774
  %v6776 = vmul.f32 %v6555, 1.442695
  %v6777 = vpow.pop %v6776
  %v6778 = vmul.f32 %v6556, 1.442695
  %v6779 = vpow.pop %v6778
  %v6780 = vmul.f32 %v6557, 1.442695
  %v6781 = vpow.pop %v6780
  %v6782 = vmul.f32 %v6558, 1.442695
  %v6783 = vpow.pop %v6782
  %v6784 = vmul.f32 %v6559, 1.442695
  %v6785 = vpow.pop %v6784
  %v6786 = vmul.f32 %v6560, 1.442695
  %v6787 = vpow.pop %v6786
  %v6788 = vmul.f32 %v6561, 1.442695
  %v6789 = vpow.pop %v6788
  %v6790 = vmul.f32 %v6562, 1.442695
  %v6791 = vpow.pop %v6790
  %v6792 = vmul.f32 %v6563, 1.442695
  %v6793 = vpow.pop %v6792
  %v6794 = vmul.f32 %v6564, 1.442695
  %v6795 = vpow.pop %v6794
  %v6796 = vmul.f32 %v6565, 1.442695
  %v6797 = vpow.pop %v6796
  %v6798 = vmul.f32 %v6566, 1.442695
  %v6799 = vpow.pop %v6798
  %v6800 = vmul.f32 %v6567, 1.442695
  %v6801 = vpow.pop %v6800
  %v6802 = vmul.f32 %v6568, 1.442695
  %v6803 = vpow.pop %v6802
  %v6804 = vmul.f32 %v6569, 1.442695
  %v6805 = vpow.pop %v6804
  %v6806 = vmul.f32 %v6570, 1.442695
  %v6807 = vpow.pop %v6806
  %v6808 = vmul.f32 %v6571, 1.442695
  %v6809 = vpow.pop %v6808
  %v6810 = vmul.f32 %v6572, 1.442695
  %v6811 = vpow.pop %v6810
  %v6812 = vmul.f32 %v6573, 1.442695
  %v6813 = vpow.pop %v6812
  %v6814 = vmul.f32 %v6574, 1.442695
  %v6815 = vpow.pop %v6814
  %v6816 = vmul.f32 %v6575, 1.442695
  %v6817 = vpow.pop %v6816
  %v6818 = vmul.f32 %v6576, 1.442695
  %v6819 = vpow.pop %v6818
  %v6820 = vmul.f32 %v6577, 1.442695
  %v6821 = vpow.pop %v6820
  %v6822 = vmul.f32 %v6578, 1.442695
  %v6823 = vpow.pop %v6822
  %v6824 = vmul.f32 %v6579, 1.442695
  %v6825 = vpow.pop %v6824
  %v6826 = vmul.f32 %v6580, 1.442695
  %v6827 = vpow.pop %v6826
  %v6828 = vmul.f32 %v6581, 1.442695
  %v6829 = vpow.pop %v6828
  %v6830 = vmul.f32 %v6582, 1.442695
  %v6831 = vpow.pop %v6830
  %v6832 = vmul.f32 %v6583, 1.442695
  %v6833 = vpow.pop %v6832
  %v6834 = vmul.f32 %v6584, 1.442695
  %v6835 = vpow.pop %v6834
  %v6836 = vmul.f32 %v6585, 1.442695
  %v6837 = vpow.pop %v6836
  %v6838 = vmul.f32 %v6586, 1.442695
  %v6839 = vpow.pop %v6838
  %v6840 = vmul.f32 %v6587, 1.442695
  %v6841 = vpow.pop %v6840
  %v6842 = vmul.f32 %v6588, 1.442695
  %v6843 = vpow.pop %v6842
  %v6844 = vmul.f32 %v6589, 1.442695
  %v6845 = vpow.pop %v6844
  %v6846 = vadd.f32 %v6591, 1.0
  %v6847 = vadd.f32 %v6593, 1.0
  %v6848 = vadd.f32 %v6595, 1.0
  %v6849 = vadd.f32 %v6597, 1.0
  %v6850 = vadd.f32 %v6599, 1.0
  %v6851 = vadd.f32 %v6601, 1.0
  %v6852 = vadd.f32 %v6603, 1.0
  %v6853 = vadd.f32 %v6605, 1.0
  %v6854 = vadd.f32 %v6607, 1.0
  %v6855 = vadd.f32 %v6609, 1.0
  %v6856 = vadd.f32 %v6611, 1.0
  %v6857 = vadd.f32 %v6613, 1.0
  %v6858 = vadd.f32 %v6615, 1.0
  %v6859 = vadd.f32 %v6617, 1.0
  %v6860 = vadd.f32 %v6619, 1.0
  %v6861 = vadd.f32 %v6621, 1.0
  %v6862 = vadd.f32 %v6623, 1.0
  %v6863 = vadd.f32 %v6625, 1.0
  %v6864 = vadd.f32 %v6627, 1.0
  %v6865 = vadd.f32 %v6629, 1.0
  %v6866 = vadd.f32 %v6631, 1.0
  %v6867 = vadd.f32 %v6633, 1.0
  %v6868 = vadd.f32 %v6635, 1.0
  %v6869 = vadd.f32 %v6637, 1.0
  %v6870 = vadd.f32 %v6639, 1.0
  %v6871 = vadd.f32 %v6641, 1.0
  %v6872 = vadd.f32 %v6643, 1.0
  %v6873 = vadd.f32 %v6645, 1.0
  %v6874 = vadd.f32 %v6647, 1.0
  %v6875 = vadd.f32 %v6649, 1.0
  %v6876 = vadd.f32 %v6651, 1.0
  %v6877 = vadd.f32 %v6653, 1.0
  %v6878 = vadd.f32 %v6655, 1.0
  %v6879 = vadd.f32 %v6657, 1.0
  %v6880 = vadd.f32 %v6659, 1.0
  %v6881 = vadd.f32 %v6661, 1.0
  %v6882 = vadd.f32 %v6663, 1.0
  %v6883 = vadd.f32 %v6665, 1.0
  %v6884 = vadd.f32 %v6667, 1.0
  %v6885 = vadd.f32 %v6669, 1.0
  %v6886 = vadd.f32 %v6671, 1.0
  %v6887 = vadd.f32 %v6673, 1.0
  %v6888 = vadd.f32 %v6675, 1.0
  %v6889 = vadd.f32 %v6677, 1.0
  %v6890 = vadd.f32 %v6679, 1.0
  %v6891 = vadd.f32 %v6681, 1.0
  %v6892 = vadd.f32 %v6683, 1.0
  %v6893 = vadd.f32 %v6685, 1.0
  %v6894 = vadd.f32 %v6687, 1.0
  %v6895 = vadd.f32 %v6689, 1.0
  %v6896 = vadd.f32 %v6691, 1.0
  %v6897 = vadd.f32 %v6693, 1.0
  %v6898 = vadd.f32 %v6695, 1.0
  %v6899 = vadd.f32 %v6697, 1.0
  %v6900 = vadd.f32 %v6699, 1.0
  %v6901 = vadd.f32 %v6701, 1.0
  %v6902 = vadd.f32 %v6703, 1.0
  %v6903 = vadd.f32 %v6705, 1.0
  %v6904 = vadd.f32 %v6707, 1.0
  %v6905 = vadd.f32 %v6709, 1.0
  %v6906 = vadd.f32 %v6711, 1.0
  %v6907 = vadd.f32 %v6713, 1.0
  %v6908 = vadd.f32 %v6715, 1.0
  %v6909 = vadd.f32 %v6717, 1.0
  %v6910 = vadd.f32 %v6719, 1.0
  %v6911 = vadd.f32 %v6721, 1.0
  %v6912 = vadd.f32 %v6723, 1.0
  %v6913 = vadd.f32 %v6725, 1.0
  %v6914 = vadd.f32 %v6727, 1.0
  %v6915 = vadd.f32 %v6729, 1.0
  %v6916 = vadd.f32 %v6731, 1.0
  %v6917 = vadd.f32 %v6733, 1.0
  %v6918 = vadd.f32 %v6735, 1.0
  %v6919 = vadd.f32 %v6737, 1.0
  %v6920 = vadd.f32 %v6739, 1.0
  %v6921 = vadd.f32 %v6741, 1.0
  %v6922 = vadd.f32 %v6743, 1.0
  %v6923 = vadd.f32 %v6745, 1.0
  %v6924 = vadd.f32 %v6747, 1.0
  %v6925 = vadd.f32 %v6749, 1.0
  %v6926 = vadd.f32 %v6751, 1.0
  %v6927 = vadd.f32 %v6753, 1.0
  %v6928 = vadd.f32 %v6755, 1.0
  %v6929 = vadd.f32 %v6757, 1.0
  %v6930 = vadd.f32 %v6759, 1.0
  %v6931 = vadd.f32 %v6761, 1.0
  %v6932 = vadd.f32 %v6763, 1.0
  %v6933 = vadd.f32 %v6765, 1.0
  %v6934 = vadd.f32 %v6767, 1.0
  %v6935 = vadd.f32 %v6769, 1.0
  %v6936 = vadd.f32 %v6771, 1.0
  %v6937 = vadd.f32 %v6773, 1.0
  %v6938 = vadd.f32 %v6775, 1.0
  %v6939 = vadd.f32 %v6777, 1.0
  %v6940 = vadd.f32 %v6779, 1.0
  %v6941 = vadd.f32 %v6781, 1.0
  %v6942 = vadd.f32 %v6783, 1.0
  %v6943 = vadd.f32 %v6785, 1.0
  %v6944 = vadd.f32 %v6787, 1.0
  %v6945 = vadd.f32 %v6789, 1.0
  %v6946 = vadd.f32 %v6791, 1.0
  %v6947 = vadd.f32 %v6793, 1.0
  %v6948 = vadd.f32 %v6795, 1.0
  %v6949 = vadd.f32 %v6797, 1.0
  %v6950 = vadd.f32 %v6799, 1.0
  %v6951 = vadd.f32 %v6801, 1.0
  %v6952 = vadd.f32 %v6803, 1.0
  %v6953 = vadd.f32 %v6805, 1.0
  %v6954 = vadd.f32 %v6807, 1.0
  %v6955 = vadd.f32 %v6809, 1.0
  %v6956 = vadd.f32 %v6811, 1.0
  %v6957 = vadd.f32 %v6813, 1.0
  %v6958 = vadd.f32 %v6815, 1.0
  %v6959 = vadd.f32 %v6817, 1.0
  %v6960 = vadd.f32 %v6819, 1.0
  %v6961 = vadd.f32 %v6821, 1.0
  %v6962 = vadd.f32 %v6823, 1.0
  %v6963 = vadd.f32 %v6825, 1.0
  %v6964 = vadd.f32 %v6827, 1.0
  %v6965 = vadd.f32 %v6829, 1.0
  %v6966 = vadd.f32 %v6831, 1.0
  %v6967 = vadd.f32 %v6833, 1.0
  %v6968 = vadd.f32 %v6835, 1.0
  %v6969 = vadd.f32 %v6837, 1.0
  %v6970 = vadd.f32 %v6839, 1.0
  %v6971 = vadd.f32 %v6841, 1.0
  %v6972 = vadd.f32 %v6843, 1.0
  %v6973 = vadd.f32 %v6845, 1.0
  %v6974 = vrcp.pop %v6846
  %v6975 = vmul.f32 1.0, %v6974
  %v6976 = vrcp.pop %v6847
  %v6977 = vmul.f32 1.0, %v6976
  %v6978 = vrcp.pop %v6848
  %v6979 = vmul.f32 1.0, %v6978
  %v6980 = vrcp.pop %v6849
  %v6981 = vmul.f32 1.0, %v6980
  %v6982 = vrcp.pop %v6850
  %v6983 = vmul.f32 1.0, %v6982
  %v6984 = vrcp.pop %v6851
  %v6985 = vmul.f32 1.0, %v6984
  %v6986 = vrcp.pop %v6852
  %v6987 = vmul.f32 1.0, %v6986
  %v6988 = vrcp.pop %v6853
  %v6989 = vmul.f32 1.0, %v6988
  %v6990 = vrcp.pop %v6854
  %v6991 = vmul.f32 1.0, %v6990
  %v6992 = vrcp.pop %v6855
  %v6993 = vmul.f32 1.0, %v6992
  %v6994 = vrcp.pop %v6856
  %v6995 = vmul.f32 1.0, %v6994
  %v6996 = vrcp.pop %v6857
  %v6997 = vmul.f32 1.0, %v6996
  %v6998 = vrcp.pop %v6858
  %v6999 = vmul.f32 1.0, %v6998
  %v7000 = vrcp.pop %v6859
  %v7001 = vmul.f32 1.0, %v7000
  %v7002 = vrcp.pop %v6860
  %v7003 = vmul.f32 1.0, %v7002
  %v7004 = vrcp.pop %v6861
  %v7005 = vmul.f32 1.0, %v7004
  %v7006 = vrcp.pop %v6862
  %v7007 = vmul.f32 1.0, %v7006
  %v7008 = vrcp.pop %v6863
  %v7009 = vmul.f32 1.0, %v7008
  %v7010 = vrcp.pop %v6864
  %v7011 = vmul.f32 1.0, %v7010
  %v7012 = vrcp.pop %v6865
  %v7013 = vmul.f32 1.0, %v7012
  %v7014 = vrcp.pop %v6866
  %v7015 = vmul.f32 1.0, %v7014
  %v7016 = vrcp.pop %v6867
  %v7017 = vmul.f32 1.0, %v7016
  %v7018 = vrcp.pop %v6868
  %v7019 = vmul.f32 1.0, %v7018
  %v7020 = vrcp.pop %v6869
  %v7021 = vmul.f32 1.0, %v7020
  %v7022 = vrcp.pop %v6870
  %v7023 = vmul.f32 1.0, %v7022
  %v7024 = vrcp.pop %v6871
  %v7025 = vmul.f32 1.0, %v7024
  %v7026 = vrcp.pop %v6872
  %v7027 = vmul.f32 1.0, %v7026
  %v7028 = vrcp.pop %v6873
  %v7029 = vmul.f32 1.0, %v7028
  %v7030 = vrcp.pop %v6874
  %v7031 = vmul.f32 1.0, %v7030
  %v7032 = vrcp.pop %v6875
  %v7033 = vmul.f32 1.0, %v7032
  %v7034 = vrcp.pop %v6876
  %v7035 = vmul.f32 1.0, %v7034
  %v7036 = vrcp.pop %v6877
  %v7037 = vmul.f32 1.0, %v7036
  %v7038 = vrcp.pop %v6878
  %v7039 = vmul.f32 1.0, %v7038
  %v7040 = vrcp.pop %v6879
  %v7041 = vmul.f32 1.0, %v7040
  %v7042 = vrcp.pop %v6880
  %v7043 = vmul.f32 1.0, %v7042
  %v7044 = vrcp.pop %v6881
  %v7045 = vmul.f32 1.0, %v7044
  %v7046 = vrcp.pop %v6882
  %v7047 = vmul.f32 1.0, %v7046
  %v7048 = vrcp.pop %v6883
  %v7049 = vmul.f32 1.0, %v7048
  %v7050 = vrcp.pop %v6884
  %v7051 = vmul.f32 1.0, %v7050
  %v7052 = vrcp.pop %v6885
  %v7053 = vmul.f32 1.0, %v7052
  %v7054 = vrcp.pop %v6886
  %v7055 = vmul.f32 1.0, %v7054
  %v7056 = vrcp.pop %v6887
  %v7057 = vmul.f32 1.0, %v7056
  %v7058 = vrcp.pop %v6888
  %v7059 = vmul.f32 1.0, %v7058
  %v7060 = vrcp.pop %v6889
  %v7061 = vmul.f32 1.0, %v7060
  %v7062 = vrcp.pop %v6890
  %v7063 = vmul.f32 1.0, %v7062
  %v7064 = vrcp.pop %v6891
  %v7065 = vmul.f32 1.0, %v7064
  %v7066 = vrcp.pop %v6892
  %v7067 = vmul.f32 1.0, %v7066
  %v7068 = vrcp.pop %v6893
  %v7069 = vmul.f32 1.0, %v7068
  %v7070 = vrcp.pop %v6894
  %v7071 = vmul.f32 1.0, %v7070
  %v7072 = vrcp.pop %v6895
  %v7073 = vmul.f32 1.0, %v7072
  %v7074 = vrcp.pop %v6896
  %v7075 = vmul.f32 1.0, %v7074
  %v7076 = vrcp.pop %v6897
  %v7077 = vmul.f32 1.0, %v7076
  %v7078 = vrcp.pop %v6898
  %v7079 = vmul.f32 1.0, %v7078
  %v7080 = vrcp.pop %v6899
  %v7081 = vmul.f32 1.0, %v7080
  %v7082 = vrcp.pop %v6900
  %v7083 = vmul.f32 1.0, %v7082
  %v7084 = vrcp.pop %v6901
  %v7085 = vmul.f32 1.0, %v7084
  %v7086 = vrcp.pop %v6902
  %v7087 = vmul.f32 1.0, %v7086
  %v7088 = vrcp.pop %v6903
  %v7089 = vmul.f32 1.0, %v7088
  %v7090 = vrcp.pop %v6904
  %v7091 = vmul.f32 1.0, %v7090
  %v7092 = vrcp.pop %v6905
  %v7093 = vmul.f32 1.0, %v7092
  %v7094 = vrcp.pop %v6906
  %v7095 = vmul.f32 1.0, %v7094
  %v7096 = vrcp.pop %v6907
  %v7097 = vmul.f32 1.0, %v7096
  %v7098 = vrcp.pop %v6908
  %v7099 = vmul.f32 1.0, %v7098
  %v7100 = vrcp.pop %v6909
  %v7101 = vmul.f32 1.0, %v7100
  %v7102 = vrcp.pop %v6910
  %v7103 = vmul.f32 1.0, %v7102
  %v7104 = vrcp.pop %v6911
  %v7105 = vmul.f32 1.0, %v7104
  %v7106 = vrcp.pop %v6912
  %v7107 = vmul.f32 1.0, %v7106
  %v7108 = vrcp.pop %v6913
  %v7109 = vmul.f32 1.0, %v7108
  %v7110 = vrcp.pop %v6914
  %v7111 = vmul.f32 1.0, %v7110
  %v7112 = vrcp.pop %v6915
  %v7113 = vmul.f32 1.0, %v7112
  %v7114 = vrcp.pop %v6916
  %v7115 = vmul.f32 1.0, %v7114
  %v7116 = vrcp.pop %v6917
  %v7117 = vmul.f32 1.0, %v7116
  %v7118 = vrcp.pop %v6918
  %v7119 = vmul.f32 1.0, %v7118
  %v7120 = vrcp.pop %v6919
  %v7121 = vmul.f32 1.0, %v7120
  %v7122 = vrcp.pop %v6920
  %v7123 = vmul.f32 1.0, %v7122
  %v7124 = vrcp.pop %v6921
  %v7125 = vmul.f32 1.0, %v7124
  %v7126 = vrcp.pop %v6922
  %v7127 = vmul.f32 1.0, %v7126
  %v7128 = vrcp.pop %v6923
  %v7129 = vmul.f32 1.0, %v7128
  %v7130 = vrcp.pop %v6924
  %v7131 = vmul.f32 1.0, %v7130
  %v7132 = vrcp.pop %v6925
  %v7133 = vmul.f32 1.0, %v7132
  %v7134 = vrcp.pop %v6926
  %v7135 = vmul.f32 1.0, %v7134
  %v7136 = vrcp.pop %v6927
  %v7137 = vmul.f32 1.0, %v7136
  %v7138 = vrcp.pop %v6928
  %v7139 = vmul.f32 1.0, %v7138
  %v7140 = vrcp.pop %v6929
  %v7141 = vmul.f32 1.0, %v7140
  %v7142 = vrcp.pop %v6930
  %v7143 = vmul.f32 1.0, %v7142
  %v7144 = vrcp.pop %v6931
  %v7145 = vmul.f32 1.0, %v7144
  %v7146 = vrcp.pop %v6932
  %v7147 = vmul.f32 1.0, %v7146
  %v7148 = vrcp.pop %v6933
  %v7149 = vmul.f32 1.0, %v7148
  %v7150 = vrcp.pop %v6934
  %v7151 = vmul.f32 1.0, %v7150
  %v7152 = vrcp.pop %v6935
  %v7153 = vmul.f32 1.0, %v7152
  %v7154 = vrcp.pop %v6936
  %v7155 = vmul.f32 1.0, %v7154
  %v7156 = vrcp.pop %v6937
  %v7157 = vmul.f32 1.0, %v7156
  %v7158 = vrcp.pop %v6938
  %v7159 = vmul.f32 1.0, %v7158
  %v7160 = vrcp.pop %v6939
  %v7161 = vmul.f32 1.0, %v7160
  %v7162 = vrcp.pop %v6940
  %v7163 = vmul.f32 1.0, %v7162
  %v7164 = vrcp.pop %v6941
  %v7165 = vmul.f32 1.0, %v7164
  %v7166 = vrcp.pop %v6942
  %v7167 = vmul.f32 1.0, %v7166
  %v7168 = vrcp.pop %v6943
  %v7169 = vmul.f32 1.0, %v7168
  %v7170 = vrcp.pop %v6944
  %v7171 = vmul.f32 1.0, %v7170
  %v7172 = vrcp.pop %v6945
  %v7173 = vmul.f32 1.0, %v7172
  %v7174 = vrcp.pop %v6946
  %v7175 = vmul.f32 1.0, %v7174
  %v7176 = vrcp.pop %v6947
  %v7177 = vmul.f32 1.0, %v7176
  %v7178 = vrcp.pop %v6948
  %v7179 = vmul.f32 1.0, %v7178
  %v7180 = vrcp.pop %v6949
  %v7181 = vmul.f32 1.0, %v7180
  %v7182 = vrcp.pop %v6950
  %v7183 = vmul.f32 1.0, %v7182
  %v7184 = vrcp.pop %v6951
  %v7185 = vmul.f32 1.0, %v7184
  %v7186 = vrcp.pop %v6952
  %v7187 = vmul.f32 1.0, %v7186
  %v7188 = vrcp.pop %v6953
  %v7189 = vmul.f32 1.0, %v7188
  %v7190 = vrcp.pop %v6954
  %v7191 = vmul.f32 1.0, %v7190
  %v7192 = vrcp.pop %v6955
  %v7193 = vmul.f32 1.0, %v7192
  %v7194 = vrcp.pop %v6956
  %v7195 = vmul.f32 1.0, %v7194
  %v7196 = vrcp.pop %v6957
  %v7197 = vmul.f32 1.0, %v7196
  %v7198 = vrcp.pop %v6958
  %v7199 = vmul.f32 1.0, %v7198
  %v7200 = vrcp.pop %v6959
  %v7201 = vmul.f32 1.0, %v7200
  %v7202 = vrcp.pop %v6960
  %v7203 = vmul.f32 1.0, %v7202
  %v7204 = vrcp.pop %v6961
  %v7205 = vmul.f32 1.0, %v7204
  %v7206 = vrcp.pop %v6962
  %v7207 = vmul.f32 1.0, %v7206
  %v7208 = vrcp.pop %v6963
  %v7209 = vmul.f32 1.0, %v7208
  %v7210 = vrcp.pop %v6964
  %v7211 = vmul.f32 1.0, %v7210
  %v7212 = vrcp.pop %v6965
  %v7213 = vmul.f32 1.0, %v7212
  %v7214 = vrcp.pop %v6966
  %v7215 = vmul.f32 1.0, %v7214
  %v7216 = vrcp.pop %v6967
  %v7217 = vmul.f32 1.0, %v7216
  %v7218 = vrcp.pop %v6968
  %v7219 = vmul.f32 1.0, %v7218
  %v7220 = vrcp.pop %v6969
  %v7221 = vmul.f32 1.0, %v7220
  %v7222 = vrcp.pop %v6970
  %v7223 = vmul.f32 1.0, %v7222
  %v7224 = vrcp.pop %v6971
  %v7225 = vmul.f32 1.0, %v7224
  %v7226 = vrcp.pop %v6972
  %v7227 = vmul.f32 1.0, %v7226
  %v7228 = vrcp.pop %v6973
  %v7229 = vmul.f32 1.0, %v7228
  %v7230 = vmul.f32 %v6144, %v6975
  %v7231 = vmul.f32 %v6146, %v6977
  %v7232 = vmul.f32 %v6148, %v6979
  %v7233 = vmul.f32 %v6150, %v6981
  %v7234 = vmul.f32 %v6154, %v6983
  %v7235 = vmul.f32 %v6156, %v6985
  %v7236 = vmul.f32 %v6158, %v6987
  %v7237 = vmul.f32 %v6160, %v6989
  %v7238 = vmul.f32 %v6164, %v6991
  %v7239 = vmul.f32 %v6166, %v6993
  %v7240 = vmul.f32 %v6168, %v6995
  %v7241 = vmul.f32 %v6170, %v6997
  %v7242 = vmul.f32 %v6174, %v6999
  %v7243 = vmul.f32 %v6176, %v7001
  %v7244 = vmul.f32 %v6178, %v7003
  %v7245 = vmul.f32 %v6180, %v7005
  %v7246 = vmul.f32 %v6184, %v7007
  %v7247 = vmul.f32 %v6186, %v7009
  %v7248 = vmul.f32 %v6188, %v7011
  %v7249 = vmul.f32 %v6190, %v7013
  %v7250 = vmul.f32 %v6194, %v7015
  %v7251 = vmul.f32 %v6196, %v7017
  %v7252 = vmul.f32 %v6198, %v7019
  %v7253 = vmul.f32 %v6200, %v7021
  %v7254 = vmul.f32 %v6204, %v7023
  %v7255 = vmul.f32 %v6206, %v7025
  %v7256 = vmul.f32 %v6208, %v7027
  %v7257 = vmul.f32 %v6210, %v7029
  %v7258 = vmul.f32 %v6214, %v7031
  %v7259 = vmul.f32 %v6216, %v7033
  %v7260 = vmul.f32 %v6218, %v7035
  %v7261 = vmul.f32 %v6220, %v7037
  %v7262 = vmul.f32 %v6224, %v7039
  %v7263 = vmul.f32 %v6226, %v7041
  %v7264 = vmul.f32 %v6228, %v7043
  %v7265 = vmul.f32 %v6230, %v7045
  %v7266 = vmul.f32 %v6234, %v7047
  %v7267 = vmul.f32 %v6236, %v7049
  %v7268 = vmul.f32 %v6238, %v7051
  %v7269 = vmul.f32 %v6240, %v7053
  %v7270 = vmul.f32 %v6244, %v7055
  %v7271 = vmul.f32 %v6246, %v7057
  %v7272 = vmul.f32 %v6248, %v7059
  %v7273 = vmul.f32 %v6250, %v7061
  %v7274 = vmul.f32 %v6254, %v7063
  %v7275 = vmul.f32 %v6256, %v7065
  %v7276 = vmul.f32 %v6258, %v7067
  %v7277 = vmul.f32 %v6260, %v7069
  %v7278 = vmul.f32 %v6264, %v7071
  %v7279 = vmul.f32 %v6266, %v7073
  %v7280 = vmul.f32 %v6268, %v7075
  %v7281 = vmul.f32 %v6270, %v7077
  %v7282 = vmul.f32 %v6274, %v7079
  %v7283 = vmul.f32 %v6276, %v7081
  %v7284 = vmul.f32 %v6278, %v7083
  %v7285 = vmul.f32 %v6280, %v7085
  %v7286 = vmul.f32 %v6284, %v7087
  %v7287 = vmul.f32 %v6286, %v7089
  %v7288 = vmul.f32 %v6288, %v7091
  %v7289 = vmul.f32 %v6290, %v7093
  %v7290 = vmul.f32 %v6294, %v7095
  %v7291 = vmul.f32 %v6296, %v7097
  %v7292 = vmul.f32 %v6298, %v7099
  %v7293 = vmul.f32 %v6300, %v7101
  %v7294 = vmul.f32 %v6304, %v7103
  %v7295 = vmul.f32 %v6306, %v7105
  %v7296 = vmul.f32 %v6308, %v7107
  %v7297 = vmul.f32 %v6310, %v7109
  %v7298 = vmul.f32 %v6314, %v7111
  %v7299 = vmul.f32 %v6316, %v7113
  %v7300 = vmul.f32 %v6318, %v7115
  %v7301 = vmul.f32 %v6320, %v7117
  %v7302 = vmul.f32 %v6324, %v7119
  %v7303 = vmul.f32 %v6326, %v7121
  %v7304 = vmul.f32 %v6328, %v7123
  %v7305 = vmul.f32 %v6330, %v7125
  %v7306 = vmul.f32 %v6334, %v7127
  %v7307 = vmul.f32 %v6336, %v7129
  %v7308 = vmul.f32 %v6338, %v7131
  %v7309 = vmul.f32 %v6340, %v7133
  %v7310 = vmul.f32 %v6344, %v7135
  %v7311 = vmul.f32 %v6346, %v7137
  %v7312 = vmul.f32 %v6348, %v7139
  %v7313 = vmul.f32 %v6350, %v7141
  %v7314 = vmul.f32 %v6354, %v7143
  %v7315 = vmul.f32 %v6356, %v7145
  %v7316 = vmul.f32 %v6358, %v7147
  %v7317 = vmul.f32 %v6360, %v7149
  %v7318 = vmul.f32 %v6364, %v7151
  %v7319 = vmul.f32 %v6366, %v7153
  %v7320 = vmul.f32 %v6368, %v7155
  %v7321 = vmul.f32 %v6370, %v7157
  %v7322 = vmul.f32 %v6374, %v7159
  %v7323 = vmul.f32 %v6376, %v7161
  %v7324 = vmul.f32 %v6378, %v7163
  %v7325 = vmul.f32 %v6380, %v7165
  %v7326 = vmul.f32 %v6384, %v7167
  %v7327 = vmul.f32 %v6386, %v7169
  %v7328 = vmul.f32 %v6388, %v7171
  %v7329 = vmul.f32 %v6390, %v7173
  %v7330 = vmul.f32 %v6394, %v7175
  %v7331 = vmul.f32 %v6396, %v7177
  %v7332 = vmul.f32 %v6398, %v7179
  %v7333 = vmul.f32 %v6400, %v7181
  %v7334 = vmul.f32 %v6404, %v7183
  %v7335 = vmul.f32 %v6406, %v7185
  %v7336 = vmul.f32 %v6408, %v7187
  %v7337 = vmul.f32 %v6410, %v7189
  %v7338 = vmul.f32 %v6414, %v7191
  %v7339 = vmul.f32 %v6416, %v7193
  %v7340 = vmul.f32 %v6418, %v7195
  %v7341 = vmul.f32 %v6420, %v7197
  %v7342 = vmul.f32 %v6424, %v7199
  %v7343 = vmul.f32 %v6426, %v7201
  %v7344 = vmul.f32 %v6428, %v7203
  %v7345 = vmul.f32 %v6430, %v7205
  %v7346 = vmul.f32 %v6434, %v7207
  %v7347 = vmul.f32 %v6436, %v7209
  %v7348 = vmul.f32 %v6438, %v7211
  %v7349 = vmul.f32 %v6440, %v7213
  %v7350 = vmul.f32 %v6444, %v7215
  %v7351 = vmul.f32 %v6446, %v7217
  %v7352 = vmul.f32 %v6448, %v7219
  %v7353 = vmul.f32 %v6450, %v7221
  %v7354 = vmul.f32 %v6454, %v7223
  %v7355 = vmul.f32 %v6456, %v7225
  %v7356 = vmul.f32 %v6458, %v7227
  %v7357 = vmul.f32 %v6460, %v7229
  %v7358 = vadd.f32 %v7230, %v7232
  %v7359 = vadd.f32 %v7358, %v7234
  %v7360 = vadd.f32 %v7359, %v7236
  %v7361 = vadd.f32 %v7360, %v7238
  %v7362 = vadd.f32 %v7361, %v7240
  %v7363 = vadd.f32 %v7362, %v7242
  %v7364 = vadd.f32 %v7363, %v7244
  %v7365 = vrot.slane %v7364, 4
  %v7366 = vadd.f32 %v7364, %v7365
  %v7367 = vrot.slane %v7366, 2
  %v7368 = vadd.f32 %v7366, %v7367
  %v7369 = vrot.slane %v7368, 1
  %v7370 = vadd.f32 %v7368, %v7369
  %v7371 = vadd.f32 %v7231, %v7233
  %v7372 = vadd.f32 %v7371, %v7235
  %v7373 = vadd.f32 %v7372, %v7237
  %v7374 = vadd.f32 %v7373, %v7239
  %v7375 = vadd.f32 %v7374, %v7241
  %v7376 = vadd.f32 %v7375, %v7243
  %v7377 = vadd.f32 %v7376, %v7245
  %v7378 = vrot.slane %v7377, 4
  %v7379 = vadd.f32 %v7377, %v7378
  %v7380 = vrot.slane %v7379, 2
  %v7381 = vadd.f32 %v7379, %v7380
  %v7382 = vrot.slane %v7381, 1
  %v7383 = vadd.f32 %v7381, %v7382
  %v7384 = vadd.f32 %v7246, %v7248
  %v7385 = vadd.f32 %v7384, %v7250
  %v7386 = vadd.f32 %v7385, %v7252
  %v7387 = vadd.f32 %v7386, %v7254
  %v7388 = vadd.f32 %v7387, %v7256
  %v7389 = vadd.f32 %v7388, %v7258
  %v7390 = vadd.f32 %v7389, %v7260
  %v7391 = vrot.slane %v7390, 4
  %v7392 = vadd.f32 %v7390, %v7391
  %v7393 = vrot.slane %v7392, 2
  %v7394 = vadd.f32 %v7392, %v7393
  %v7395 = vrot.slane %v7394, 1
  %v7396 = vadd.f32 %v7394, %v7395
  %v7397 = vadd.f32 %v7247, %v7249
  %v7398 = vadd.f32 %v7397, %v7251
  %v7399 = vadd.f32 %v7398, %v7253
  %v7400 = vadd.f32 %v7399, %v7255
  %v7401 = vadd.f32 %v7400, %v7257
  %v7402 = vadd.f32 %v7401, %v7259
  %v7403 = vadd.f32 %v7402, %v7261
  %v7404 = vrot.slane %v7403, 4
  %v7405 = vadd.f32 %v7403, %v7404
  %v7406 = vrot.slane %v7405, 2
  %v7407 = vadd.f32 %v7405, %v7406
  %v7408 = vrot.slane %v7407, 1
  %v7409 = vadd.f32 %v7407, %v7408
  %v7410 = vadd.f32 %v7262, %v7264
  %v7411 = vadd.f32 %v7410, %v7266
  %v7412 = vadd.f32 %v7411, %v7268
  %v7413 = vadd.f32 %v7412, %v7270
  %v7414 = vadd.f32 %v7413, %v7272
  %v7415 = vadd.f32 %v7414, %v7274
  %v7416 = vadd.f32 %v7415, %v7276
  %v7417 = vrot.slane %v7416, 4
  %v7418 = vadd.f32 %v7416, %v7417
  %v7419 = vrot.slane %v7418, 2
  %v7420 = vadd.f32 %v7418, %v7419
  %v7421 = vrot.slane %v7420, 1
  %v7422 = vadd.f32 %v7420, %v7421
  %v7423 = vadd.f32 %v7263, %v7265
  %v7424 = vadd.f32 %v7423, %v7267
  %v7425 = vadd.f32 %v7424, %v7269
  %v7426 = vadd.f32 %v7425, %v7271
  %v7427 = vadd.f32 %v7426, %v7273
  %v7428 = vadd.f32 %v7427, %v7275
  %v7429 = vadd.f32 %v7428, %v7277
  %v7430 = vrot.slane %v7429, 4
  %v7431 = vadd.f32 %v7429, %v7430
  %v7432 = vrot.slane %v7431, 2
  %v7433 = vadd.f32 %v7431, %v7432
  %v7434 = vrot.slane %v7433, 1
  %v7435 = vadd.f32 %v7433, %v7434
  %v7436 = vadd.f32 %v7278, %v7280
  %v7437 = vadd.f32 %v7436, %v7282
  %v7438 = vadd.f32 %v7437, %v7284
  %v7439 = vadd.f32 %v7438, %v7286
  %v7440 = vadd.f32 %v7439, %v7288
  %v7441 = vadd.f32 %v7440, %v7290
  %v7442 = vadd.f32 %v7441, %v7292
  %v7443 = vrot.slane %v7442, 4
  %v7444 = vadd.f32 %v7442, %v7443
  %v7445 = vrot.slane %v7444, 2
  %v7446 = vadd.f32 %v7444, %v7445
  %v7447 = vrot.slane %v7446, 1
  %v7448 = vadd.f32 %v7446, %v7447
  %v7449 = vadd.f32 %v7279, %v7281
  %v7450 = vadd.f32 %v7449, %v7283
  %v7451 = vadd.f32 %v7450, %v7285
  %v7452 = vadd.f32 %v7451, %v7287
  %v7453 = vadd.f32 %v7452, %v7289
  %v7454 = vadd.f32 %v7453, %v7291
  %v7455 = vadd.f32 %v7454, %v7293
  %v7456 = vrot.slane %v7455, 4
  %v7457 = vadd.f32 %v7455, %v7456
  %v7458 = vrot.slane %v7457, 2
  %v7459 = vadd.f32 %v7457, %v7458
  %v7460 = vrot.slane %v7459, 1
  %v7461 = vadd.f32 %v7459, %v7460
  %v7462 = vadd.f32 %v7294, %v7296
  %v7463 = vadd.f32 %v7462, %v7298
  %v7464 = vadd.f32 %v7463, %v7300
  %v7465 = vadd.f32 %v7464, %v7302
  %v7466 = vadd.f32 %v7465, %v7304
  %v7467 = vadd.f32 %v7466, %v7306
  %v7468 = vadd.f32 %v7467, %v7308
  %v7469 = vrot.slane %v7468, 4
  %v7470 = vadd.f32 %v7468, %v7469
  %v7471 = vrot.slane %v7470, 2
  %v7472 = vadd.f32 %v7470, %v7471
  %v7473 = vrot.slane %v7472, 1
  %v7474 = vadd.f32 %v7472, %v7473
  %v7475 = vadd.f32 %v7295, %v7297
  %v7476 = vadd.f32 %v7475, %v7299
  %v7477 = vadd.f32 %v7476, %v7301
  %v7478 = vadd.f32 %v7477, %v7303
  %v7479 = vadd.f32 %v7478, %v7305
  %v7480 = vadd.f32 %v7479, %v7307
  %v7481 = vadd.f32 %v7480, %v7309
  %v7482 = vrot.slane %v7481, 4
  %v7483 = vadd.f32 %v7481, %v7482
  %v7484 = vrot.slane %v7483, 2
  %v7485 = vadd.f32 %v7483, %v7484
  %v7486 = vrot.slane %v7485, 1
  %v7487 = vadd.f32 %v7485, %v7486
  %v7488 = vadd.f32 %v7310, %v7312
  %v7489 = vadd.f32 %v7488, %v7314
  %v7490 = vadd.f32 %v7489, %v7316
  %v7491 = vadd.f32 %v7490, %v7318
  %v7492 = vadd.f32 %v7491, %v7320
  %v7493 = vadd.f32 %v7492, %v7322
  %v7494 = vadd.f32 %v7493, %v7324
  %v7495 = vrot.slane %v7494, 4
  %v7496 = vadd.f32 %v7494, %v7495
  %v7497 = vrot.slane %v7496, 2
  %v7498 = vadd.f32 %v7496, %v7497
  %v7499 = vrot.slane %v7498, 1
  %v7500 = vadd.f32 %v7498, %v7499
  %v7501 = vadd.f32 %v7311, %v7313
  %v7502 = vadd.f32 %v7501, %v7315
  %v7503 = vadd.f32 %v7502, %v7317
  %v7504 = vadd.f32 %v7503, %v7319
  %v7505 = vadd.f32 %v7504, %v7321
  %v7506 = vadd.f32 %v7505, %v7323
  %v7507 = vadd.f32 %v7506, %v7325
  %v7508 = vrot.slane %v7507, 4
  %v7509 = vadd.f32 %v7507, %v7508
  %v7510 = vrot.slane %v7509, 2
  %v7511 = vadd.f32 %v7509, %v7510
  %v7512 = vrot.slane %v7511, 1
  %v7513 = vadd.f32 %v7511, %v7512
  %v7514 = vadd.f32 %v7326, %v7328
  %v7515 = vadd.f32 %v7514, %v7330
  %v7516 = vadd.f32 %v7515, %v7332
  %v7517 = vadd.f32 %v7516, %v7334
  %v7518 = vadd.f32 %v7517, %v7336
  %v7519 = vadd.f32 %v7518, %v7338
  %v7520 = vadd.f32 %v7519, %v7340
  %v7521 = vrot.slane %v7520, 4
  %v7522 = vadd.f32 %v7520, %v7521
  %v7523 = vrot.slane %v7522, 2
  %v7524 = vadd.f32 %v7522, %v7523
  %v7525 = vrot.slane %v7524, 1
  %v7526 = vadd.f32 %v7524, %v7525
  %v7527 = vadd.f32 %v7327, %v7329
  %v7528 = vadd.f32 %v7527, %v7331
  %v7529 = vadd.f32 %v7528, %v7333
  %v7530 = vadd.f32 %v7529, %v7335
  %v7531 = vadd.f32 %v7530, %v7337
  %v7532 = vadd.f32 %v7531, %v7339
  %v7533 = vadd.f32 %v7532, %v7341
  %v7534 = vrot.slane %v7533, 4
  %v7535 = vadd.f32 %v7533, %v7534
  %v7536 = vrot.slane %v7535, 2
  %v7537 = vadd.f32 %v7535, %v7536
  %v7538 = vrot.slane %v7537, 1
  %v7539 = vadd.f32 %v7537, %v7538
  %v7540 = vadd.f32 %v7342, %v7344
  %v7541 = vadd.f32 %v7540, %v7346
  %v7542 = vadd.f32 %v7541, %v7348
  %v7543 = vadd.f32 %v7542, %v7350
  %v7544 = vadd.f32 %v7543, %v7352
  %v7545 = vadd.f32 %v7544, %v7354
  %v7546 = vadd.f32 %v7545, %v7356
  %v7547 = vrot.slane %v7546, 4
  %v7548 = vadd.f32 %v7546, %v7547
  %v7549 = vrot.slane %v7548, 2
  %v7550 = vadd.f32 %v7548, %v7549
  %v7551 = vrot.slane %v7550, 1
  %v7552 = vadd.f32 %v7550, %v7551
  %v7553 = vadd.f32 %v7343, %v7345
  %v7554 = vadd.f32 %v7553, %v7347
  %v7555 = vadd.f32 %v7554, %v7349
  %v7556 = vadd.f32 %v7555, %v7351
  %v7557 = vadd.f32 %v7556, %v7353
  %v7558 = vadd.f32 %v7557, %v7355
  %v7559 = vadd.f32 %v7558, %v7357
  %v7560 = vrot.slane %v7559, 4
  %v7561 = vadd.f32 %v7559, %v7560
  %v7562 = vrot.slane %v7561, 2
  %v7563 = vadd.f32 %v7561, %v7562
  %v7564 = vrot.slane %v7563, 1
  %v7565 = vadd.f32 %v7563, %v7564
  %v7566 = vmul.f32 %v7370, %v5105
  %v7567 = vmul.f32 %v7383, %v5105
  %v7568 = vmul.f32 %v7396, %v5105
  %v7569 = vmul.f32 %v7409, %v5105
  %v7570 = vmul.f32 %v7422, %v5105
  %v7571 = vmul.f32 %v7435, %v5105
  %v7572 = vmul.f32 %v7448, %v5105
  %v7573 = vmul.f32 %v7461, %v5105
  %v7574 = vmul.f32 %v7474, %v5105
  %v7575 = vmul.f32 %v7487, %v5105
  %v7576 = vmul.f32 %v7500, %v5105
  %v7577 = vmul.f32 %v7513, %v5105
  %v7578 = vmul.f32 %v7526, %v5105
  %v7579 = vmul.f32 %v7539, %v5105
  %v7580 = vmul.f32 %v7552, %v5105
  %v7581 = vmul.f32 %v7565, %v5105
  %v7582 = vpack.c.bf16 %v7566, %v7566
  %v7583 = vpack.c.bf16 %v7567, %v7567
  %v7584 = vpack.c.bf16 %v7568, %v7568
  %v7585 = vpack.c.bf16 %v7569, %v7569
  %v7586 = vpack.c.bf16 %v7570, %v7570
  %v7587 = vpack.c.bf16 %v7571, %v7571
  %v7588 = vpack.c.bf16 %v7572, %v7572
  %v7589 = vpack.c.bf16 %v7573, %v7573
  %v7590 = vpack.c.bf16 %v7574, %v7574
  %v7591 = vpack.c.bf16 %v7575, %v7575
  %v7592 = vpack.c.bf16 %v7576, %v7576
  %v7593 = vpack.c.bf16 %v7577, %v7577
  %v7594 = vpack.c.bf16 %v7578, %v7578
  %v7595 = vpack.c.bf16 %v7579, %v7579
  %v7596 = vpack.c.bf16 %v7580, %v7580
  %v7597 = vpack.c.bf16 %v7581, %v7581
  %v7598 = vld [vmem:[%s15] sm:$0xff]
  %v7599 = vld [vmem:[%s15 + $0x8] sm:$0xff]
  %v7600 = vld [vmem:[%s15 + $0x10] sm:$0xff]
  %v7601 = vld [vmem:[%s15 + $0x18] sm:$0xff]
  %v7602 = vld [vmem:[%s15 + $0x20] sm:$0xff]
  %v7603 = vld [vmem:[%s15 + $0x28] sm:$0xff]
  %v7604 = vld [vmem:[%s15 + $0x30] sm:$0xff]
  %v7605 = vld [vmem:[%s15 + $0x38] sm:$0xff]
  %v7606 = vld [vmem:[%s15 + $0x40] sm:$0xff]
  %v7607 = vld [vmem:[%s15 + $0x48] sm:$0xff]
  %v7608 = vld [vmem:[%s15 + $0x50] sm:$0xff]
  %v7609 = vld [vmem:[%s15 + $0x58] sm:$0xff]
  %v7610 = vld [vmem:[%s15 + $0x60] sm:$0xff]
  %v7611 = vld [vmem:[%s15 + $0x68] sm:$0xff]
  %v7612 = vld [vmem:[%s15 + $0x70] sm:$0xff]
  %v7613 = vld [vmem:[%s15 + $0x78] sm:$0xff]
  %v7614 = vld [vmem:[%s15 + $0x80] sm:$0xff]
  %v7615 = vld [vmem:[%s15 + $0x88] sm:$0xff]
  %v7616 = vld [vmem:[%s15 + $0x90] sm:$0xff]
  %v7617 = vld [vmem:[%s15 + $0x98] sm:$0xff]
  %v7618 = vld [vmem:[%s15 + $0xa0] sm:$0xff]
  %v7619 = vld [vmem:[%s15 + $0xa8] sm:$0xff]
  %v7620 = vld [vmem:[%s15 + $0xb0] sm:$0xff]
  %v7621 = vld [vmem:[%s15 + $0xb8] sm:$0xff]
  %v7622 = vld [vmem:[%s15 + $0xc0] sm:$0xff]
  %v7623 = vld [vmem:[%s15 + $0xc8] sm:$0xff]
  %v7624 = vld [vmem:[%s15 + $0xd0] sm:$0xff]
  %v7625 = vld [vmem:[%s15 + $0xd8] sm:$0xff]
  %v7626 = vld [vmem:[%s15 + $0xe0] sm:$0xff]
  %v7627 = vld [vmem:[%s15 + $0xe8] sm:$0xff]
  %v7628 = vld [vmem:[%s15 + $0xf0] sm:$0xff]
  %v7629 = vld [vmem:[%s15 + $0xf8] sm:$0xff]
  %v7630 = vld [vmem:[%s15 + $0x100] sm:$0xff]
  %v7631 = vld [vmem:[%s15 + $0x108] sm:$0xff]
  %v7632 = vld [vmem:[%s15 + $0x110] sm:$0xff]
  %v7633 = vld [vmem:[%s15 + $0x118] sm:$0xff]
  %v7634 = vld [vmem:[%s15 + $0x120] sm:$0xff]
  %v7635 = vld [vmem:[%s15 + $0x128] sm:$0xff]
  %v7636 = vld [vmem:[%s15 + $0x130] sm:$0xff]
  %v7637 = vld [vmem:[%s15 + $0x138] sm:$0xff]
  %v7638 = vld [vmem:[%s15 + $0x140] sm:$0xff]
  %v7639 = vld [vmem:[%s15 + $0x148] sm:$0xff]
  %v7640 = vld [vmem:[%s15 + $0x150] sm:$0xff]
  %v7641 = vld [vmem:[%s15 + $0x158] sm:$0xff]
  %v7642 = vld [vmem:[%s15 + $0x160] sm:$0xff]
  %v7643 = vld [vmem:[%s15 + $0x168] sm:$0xff]
  %v7644 = vld [vmem:[%s15 + $0x170] sm:$0xff]
  %v7645 = vld [vmem:[%s15 + $0x178] sm:$0xff]
  %v7646 = vld [vmem:[%s15 + $0x180] sm:$0xff]
  %v7647 = vld [vmem:[%s15 + $0x188] sm:$0xff]
  %v7648 = vld [vmem:[%s15 + $0x190] sm:$0xff]
  %v7649 = vld [vmem:[%s15 + $0x198] sm:$0xff]
  %v7650 = vld [vmem:[%s15 + $0x1a0] sm:$0xff]
  %v7651 = vld [vmem:[%s15 + $0x1a8] sm:$0xff]
  %v7652 = vld [vmem:[%s15 + $0x1b0] sm:$0xff]
  %v7653 = vld [vmem:[%s15 + $0x1b8] sm:$0xff]
  %v7654 = vld [vmem:[%s15 + $0x1c0] sm:$0xff]
  %v7655 = vld [vmem:[%s15 + $0x1c8] sm:$0xff]
  %v7656 = vld [vmem:[%s15 + $0x1d0] sm:$0xff]
  %v7657 = vld [vmem:[%s15 + $0x1d8] sm:$0xff]
  %v7658 = vld [vmem:[%s15 + $0x1e0] sm:$0xff]
  %v7659 = vld [vmem:[%s15 + $0x1e8] sm:$0xff]
  %v7660 = vld [vmem:[%s15 + $0x1f0] sm:$0xff]
  %v7661 = vld [vmem:[%s15 + $0x1f8] sm:$0xff]
  %v7662 = vld [vmem:[%s15 + $0x200] sm:$0xff]
  %v7663 = vld [vmem:[%s15 + $0x208] sm:$0xff]
  %v7664 = vld [vmem:[%s15 + $0x210] sm:$0xff]
  %v7665 = vld [vmem:[%s15 + $0x218] sm:$0xff]
  %v7666 = vld [vmem:[%s15 + $0x220] sm:$0xff]
  %v7667 = vld [vmem:[%s15 + $0x228] sm:$0xff]
  %v7668 = vld [vmem:[%s15 + $0x230] sm:$0xff]
  %v7669 = vld [vmem:[%s15 + $0x238] sm:$0xff]
  %v7670 = vld [vmem:[%s15 + $0x240] sm:$0xff]
  %v7671 = vld [vmem:[%s15 + $0x248] sm:$0xff]
  %v7672 = vld [vmem:[%s15 + $0x250] sm:$0xff]
  %v7673 = vld [vmem:[%s15 + $0x258] sm:$0xff]
  %v7674 = vld [vmem:[%s15 + $0x260] sm:$0xff]
  %v7675 = vld [vmem:[%s15 + $0x268] sm:$0xff]
  %v7676 = vld [vmem:[%s15 + $0x270] sm:$0xff]
  %v7677 = vld [vmem:[%s15 + $0x278] sm:$0xff]
  %v7678 = vld [vmem:[%s15 + $0x280] sm:$0xff]
  %v7679 = vld [vmem:[%s15 + $0x288] sm:$0xff]
  %v7680 = vld [vmem:[%s15 + $0x290] sm:$0xff]
  %v7681 = vld [vmem:[%s15 + $0x298] sm:$0xff]
  %v7682 = vld [vmem:[%s15 + $0x2a0] sm:$0xff]
  %v7683 = vld [vmem:[%s15 + $0x2a8] sm:$0xff]
  %v7684 = vld [vmem:[%s15 + $0x2b0] sm:$0xff]
  %v7685 = vld [vmem:[%s15 + $0x2b8] sm:$0xff]
  %v7686 = vld [vmem:[%s15 + $0x2c0] sm:$0xff]
  %v7687 = vld [vmem:[%s15 + $0x2c8] sm:$0xff]
  %v7688 = vld [vmem:[%s15 + $0x2d0] sm:$0xff]
  %v7689 = vld [vmem:[%s15 + $0x2d8] sm:$0xff]
  %v7690 = vld [vmem:[%s15 + $0x2e0] sm:$0xff]
  %v7691 = vld [vmem:[%s15 + $0x2e8] sm:$0xff]
  %v7692 = vld [vmem:[%s15 + $0x2f0] sm:$0xff]
  %v7693 = vld [vmem:[%s15 + $0x2f8] sm:$0xff]
  %v7694 = vld [vmem:[%s15 + $0x300] sm:$0xff]
  %v7695 = vld [vmem:[%s15 + $0x308] sm:$0xff]
  %v7696 = vld [vmem:[%s15 + $0x310] sm:$0xff]
  %v7697 = vld [vmem:[%s15 + $0x318] sm:$0xff]
  %v7698 = vld [vmem:[%s15 + $0x320] sm:$0xff]
  %v7699 = vld [vmem:[%s15 + $0x328] sm:$0xff]
  %v7700 = vld [vmem:[%s15 + $0x330] sm:$0xff]
  %v7701 = vld [vmem:[%s15 + $0x338] sm:$0xff]
  %v7702 = vld [vmem:[%s15 + $0x340] sm:$0xff]
  %v7703 = vld [vmem:[%s15 + $0x348] sm:$0xff]
  %v7704 = vld [vmem:[%s15 + $0x350] sm:$0xff]
  %v7705 = vld [vmem:[%s15 + $0x358] sm:$0xff]
  %v7706 = vld [vmem:[%s15 + $0x360] sm:$0xff]
  %v7707 = vld [vmem:[%s15 + $0x368] sm:$0xff]
  %v7708 = vld [vmem:[%s15 + $0x370] sm:$0xff]
  %v7709 = vld [vmem:[%s15 + $0x378] sm:$0xff]
  %v7710 = vld [vmem:[%s15 + $0x380] sm:$0xff]
  %v7711 = vld [vmem:[%s15 + $0x388] sm:$0xff]
  %v7712 = vld [vmem:[%s15 + $0x390] sm:$0xff]
  %v7713 = vld [vmem:[%s15 + $0x398] sm:$0xff]
  %v7714 = vld [vmem:[%s15 + $0x3a0] sm:$0xff]
  %v7715 = vld [vmem:[%s15 + $0x3a8] sm:$0xff]
  %v7716 = vld [vmem:[%s15 + $0x3b0] sm:$0xff]
  %v7717 = vld [vmem:[%s15 + $0x3b8] sm:$0xff]
  %v7718 = vld [vmem:[%s15 + $0x3c0] sm:$0xff]
  %v7719 = vld [vmem:[%s15 + $0x3c8] sm:$0xff]
  %v7720 = vld [vmem:[%s15 + $0x3d0] sm:$0xff]
  %v7721 = vld [vmem:[%s15 + $0x3d8] sm:$0xff]
  %v7722 = vld [vmem:[%s15 + $0x3e0] sm:$0xff]
  %v7723 = vld [vmem:[%s15 + $0x3e8] sm:$0xff]
  %v7724 = vld [vmem:[%s15 + $0x3f0] sm:$0xff]
  %v7725 = vld [vmem:[%s15 + $0x3f8] sm:$0xff]
  %v7726 = vld [vmem:[%s16] sm:$0xff]
  %v7728 = vlaneseq
  %v7729 = vshrl.u32 %v7728, 7
  %v7730 = vsub.s32 0, %v7729
  %v7731 = vrot.slane %v7726, %v7730
  %v7732 = vlaneseq
  %v7733 = vshrl.u32 %v7732, 7
  %v7734 = vsub.s32 1, %v7733
  %v7735 = vrot.slane %v7726, %v7734
  %v7736 = vlaneseq
  %v7737 = vshrl.u32 %v7736, 7
  %v7738 = vsub.s32 2, %v7737
  %v7739 = vrot.slane %v7726, %v7738
  %v7740 = vlaneseq
  %v7741 = vshrl.u32 %v7740, 7
  %v7742 = vsub.s32 3, %v7741
  %v7743 = vrot.slane %v7726, %v7742
  %v7744 = vlaneseq
  %v7745 = vshrl.u32 %v7744, 7
  %v7746 = vsub.s32 4, %v7745
  %v7747 = vrot.slane %v7726, %v7746
  %v7748 = vlaneseq
  %v7749 = vshrl.u32 %v7748, 7
  %v7750 = vsub.s32 5, %v7749
  %v7751 = vrot.slane %v7726, %v7750
  %v7752 = vlaneseq
  %v7753 = vshrl.u32 %v7752, 7
  %v7754 = vsub.s32 6, %v7753
  %v7755 = vrot.slane %v7726, %v7754
  %v7756 = vlaneseq
  %v7757 = vshrl.u32 %v7756, 7
  %v7758 = vsub.s32 7, %v7757
  %v7759 = vrot.slane %v7726, %v7758
  %v7784 = vunpack.c.l.b16 %v7582
  %v7785 = vunpack.c.l.b16 %v7583
  %v7786 = vunpack.c.l.b16 %v7584
  %v7787 = vunpack.c.l.b16 %v7585
  %v7788 = vunpack.c.l.b16 %v7586
  %v7789 = vunpack.c.l.b16 %v7587
  %v7790 = vunpack.c.l.b16 %v7588
  %v7791 = vunpack.c.l.b16 %v7589
  %v7792 = vunpack.c.l.b16 %v7590
  %v7793 = vunpack.c.l.b16 %v7591
  %v7794 = vunpack.c.l.b16 %v7592
  %v7795 = vunpack.c.l.b16 %v7593
  %v7796 = vunpack.c.l.b16 %v7594
  %v7797 = vunpack.c.l.b16 %v7595
  %v7798 = vunpack.c.l.b16 %v7596
  %v7799 = vunpack.c.l.b16 %v7597
  %v7800 = vsel %vm5161, %v7786, %v7784
  %v7801 = vsel %vm5163, %v7788, %v7800
  %v7802 = vsel %vm5165, %v7790, %v7801
  %v7803 = vsel %vm5167, %v7792, %v7802
  %v7804 = vsel %vm5169, %v7794, %v7803
  %v7805 = vsel %vm5171, %v7796, %v7804
  %v7806 = vsel %vm5173, %v7798, %v7805
  %v7807 = vsel %vm5161, %v7787, %v7785
  %v7808 = vsel %vm5163, %v7789, %v7807
  %v7809 = vsel %vm5165, %v7791, %v7808
  %v7810 = vsel %vm5167, %v7793, %v7809
  %v7811 = vsel %vm5169, %v7795, %v7810
  %v7812 = vsel %vm5171, %v7797, %v7811
  %v7813 = vsel %vm5173, %v7799, %v7812
  %v7814 = vpack.c.b16 %v7806, %v7806
  %v7815 = vpack.c.b16 %v7813, %v7813
  %v7946 = vunpack.c.l.b16 %v7598
  %v7947 = vunpack.c.h.b16 %v7598
  %v7948 = vunpack.c.l.b16 %v7599
  %v7949 = vunpack.c.h.b16 %v7599
  %v7950 = vunpack.c.l.b16 %v7600
  %v7951 = vunpack.c.h.b16 %v7600
  %v7952 = vunpack.c.l.b16 %v7601
  %v7953 = vunpack.c.h.b16 %v7601
  %v7954 = vunpack.c.l.b16 %v7602
  %v7955 = vunpack.c.h.b16 %v7602
  %v7956 = vunpack.c.l.b16 %v7603
  %v7957 = vunpack.c.h.b16 %v7603
  %v7958 = vunpack.c.l.b16 %v7604
  %v7959 = vunpack.c.h.b16 %v7604
  %v7960 = vunpack.c.l.b16 %v7605
  %v7961 = vunpack.c.h.b16 %v7605
  %v7962 = vunpack.c.l.b16 %v7606
  %v7963 = vunpack.c.h.b16 %v7606
  %v7964 = vunpack.c.l.b16 %v7607
  %v7965 = vunpack.c.h.b16 %v7607
  %v7966 = vunpack.c.l.b16 %v7608
  %v7967 = vunpack.c.h.b16 %v7608
  %v7968 = vunpack.c.l.b16 %v7609
  %v7969 = vunpack.c.h.b16 %v7609
  %v7970 = vunpack.c.l.b16 %v7610
  %v7971 = vunpack.c.h.b16 %v7610
  %v7972 = vunpack.c.l.b16 %v7611
  %v7973 = vunpack.c.h.b16 %v7611
  %v7974 = vunpack.c.l.b16 %v7612
  %v7975 = vunpack.c.h.b16 %v7612
  %v7976 = vunpack.c.l.b16 %v7613
  %v7977 = vunpack.c.h.b16 %v7613
  %v7978 = vunpack.c.l.b16 %v7614
  %v7979 = vunpack.c.h.b16 %v7614
  %v7980 = vunpack.c.l.b16 %v7615
  %v7981 = vunpack.c.h.b16 %v7615
  %v7982 = vunpack.c.l.b16 %v7616
  %v7983 = vunpack.c.h.b16 %v7616
  %v7984 = vunpack.c.l.b16 %v7617
  %v7985 = vunpack.c.h.b16 %v7617
  %v7986 = vunpack.c.l.b16 %v7618
  %v7987 = vunpack.c.h.b16 %v7618
  %v7988 = vunpack.c.l.b16 %v7619
  %v7989 = vunpack.c.h.b16 %v7619
  %v7990 = vunpack.c.l.b16 %v7620
  %v7991 = vunpack.c.h.b16 %v7620
  %v7992 = vunpack.c.l.b16 %v7621
  %v7993 = vunpack.c.h.b16 %v7621
  %v7994 = vunpack.c.l.b16 %v7622
  %v7995 = vunpack.c.h.b16 %v7622
  %v7996 = vunpack.c.l.b16 %v7623
  %v7997 = vunpack.c.h.b16 %v7623
  %v7998 = vunpack.c.l.b16 %v7624
  %v7999 = vunpack.c.h.b16 %v7624
  %v8000 = vunpack.c.l.b16 %v7625
  %v8001 = vunpack.c.h.b16 %v7625
  %v8002 = vunpack.c.l.b16 %v7626
  %v8003 = vunpack.c.h.b16 %v7626
  %v8004 = vunpack.c.l.b16 %v7627
  %v8005 = vunpack.c.h.b16 %v7627
  %v8006 = vunpack.c.l.b16 %v7628
  %v8007 = vunpack.c.h.b16 %v7628
  %v8008 = vunpack.c.l.b16 %v7629
  %v8009 = vunpack.c.h.b16 %v7629
  %v8010 = vunpack.c.l.b16 %v7630
  %v8011 = vunpack.c.h.b16 %v7630
  %v8012 = vunpack.c.l.b16 %v7631
  %v8013 = vunpack.c.h.b16 %v7631
  %v8014 = vunpack.c.l.b16 %v7632
  %v8015 = vunpack.c.h.b16 %v7632
  %v8016 = vunpack.c.l.b16 %v7633
  %v8017 = vunpack.c.h.b16 %v7633
  %v8018 = vunpack.c.l.b16 %v7634
  %v8019 = vunpack.c.h.b16 %v7634
  %v8020 = vunpack.c.l.b16 %v7635
  %v8021 = vunpack.c.h.b16 %v7635
  %v8022 = vunpack.c.l.b16 %v7636
  %v8023 = vunpack.c.h.b16 %v7636
  %v8024 = vunpack.c.l.b16 %v7637
  %v8025 = vunpack.c.h.b16 %v7637
  %v8026 = vunpack.c.l.b16 %v7638
  %v8027 = vunpack.c.h.b16 %v7638
  %v8028 = vunpack.c.l.b16 %v7639
  %v8029 = vunpack.c.h.b16 %v7639
  %v8030 = vunpack.c.l.b16 %v7640
  %v8031 = vunpack.c.h.b16 %v7640
  %v8032 = vunpack.c.l.b16 %v7641
  %v8033 = vunpack.c.h.b16 %v7641
  %v8034 = vunpack.c.l.b16 %v7642
  %v8035 = vunpack.c.h.b16 %v7642
  %v8036 = vunpack.c.l.b16 %v7643
  %v8037 = vunpack.c.h.b16 %v7643
  %v8038 = vunpack.c.l.b16 %v7644
  %v8039 = vunpack.c.h.b16 %v7644
  %v8040 = vunpack.c.l.b16 %v7645
  %v8041 = vunpack.c.h.b16 %v7645
  %v8042 = vunpack.c.l.b16 %v7646
  %v8043 = vunpack.c.h.b16 %v7646
  %v8044 = vunpack.c.l.b16 %v7647
  %v8045 = vunpack.c.h.b16 %v7647
  %v8046 = vunpack.c.l.b16 %v7648
  %v8047 = vunpack.c.h.b16 %v7648
  %v8048 = vunpack.c.l.b16 %v7649
  %v8049 = vunpack.c.h.b16 %v7649
  %v8050 = vunpack.c.l.b16 %v7650
  %v8051 = vunpack.c.h.b16 %v7650
  %v8052 = vunpack.c.l.b16 %v7651
  %v8053 = vunpack.c.h.b16 %v7651
  %v8054 = vunpack.c.l.b16 %v7652
  %v8055 = vunpack.c.h.b16 %v7652
  %v8056 = vunpack.c.l.b16 %v7653
  %v8057 = vunpack.c.h.b16 %v7653
  %v8058 = vunpack.c.l.b16 %v7654
  %v8059 = vunpack.c.h.b16 %v7654
  %v8060 = vunpack.c.l.b16 %v7655
  %v8061 = vunpack.c.h.b16 %v7655
  %v8062 = vunpack.c.l.b16 %v7656
  %v8063 = vunpack.c.h.b16 %v7656
  %v8064 = vunpack.c.l.b16 %v7657
  %v8065 = vunpack.c.h.b16 %v7657
  %v8066 = vunpack.c.l.b16 %v7658
  %v8067 = vunpack.c.h.b16 %v7658
  %v8068 = vunpack.c.l.b16 %v7659
  %v8069 = vunpack.c.h.b16 %v7659
  %v8070 = vunpack.c.l.b16 %v7660
  %v8071 = vunpack.c.h.b16 %v7660
  %v8072 = vunpack.c.l.b16 %v7661
  %v8073 = vunpack.c.h.b16 %v7661
  %v8074 = vunpack.c.l.b16 %v7662
  %v8075 = vunpack.c.h.b16 %v7662
  %v8076 = vunpack.c.l.b16 %v7663
  %v8077 = vunpack.c.h.b16 %v7663
  %v8078 = vunpack.c.l.b16 %v7664
  %v8079 = vunpack.c.h.b16 %v7664
  %v8080 = vunpack.c.l.b16 %v7665
  %v8081 = vunpack.c.h.b16 %v7665
  %v8082 = vunpack.c.l.b16 %v7666
  %v8083 = vunpack.c.h.b16 %v7666
  %v8084 = vunpack.c.l.b16 %v7667
  %v8085 = vunpack.c.h.b16 %v7667
  %v8086 = vunpack.c.l.b16 %v7668
  %v8087 = vunpack.c.h.b16 %v7668
  %v8088 = vunpack.c.l.b16 %v7669
  %v8089 = vunpack.c.h.b16 %v7669
  %v8090 = vunpack.c.l.b16 %v7670
  %v8091 = vunpack.c.h.b16 %v7670
  %v8092 = vunpack.c.l.b16 %v7671
  %v8093 = vunpack.c.h.b16 %v7671
  %v8094 = vunpack.c.l.b16 %v7672
  %v8095 = vunpack.c.h.b16 %v7672
  %v8096 = vunpack.c.l.b16 %v7673
  %v8097 = vunpack.c.h.b16 %v7673
  %v8098 = vunpack.c.l.b16 %v7674
  %v8099 = vunpack.c.h.b16 %v7674
  %v8100 = vunpack.c.l.b16 %v7675
  %v8101 = vunpack.c.h.b16 %v7675
  %v8102 = vunpack.c.l.b16 %v7676
  %v8103 = vunpack.c.h.b16 %v7676
  %v8104 = vunpack.c.l.b16 %v7677
  %v8105 = vunpack.c.h.b16 %v7677
  %v8106 = vunpack.c.l.b16 %v7678
  %v8107 = vunpack.c.h.b16 %v7678
  %v8108 = vunpack.c.l.b16 %v7679
  %v8109 = vunpack.c.h.b16 %v7679
  %v8110 = vunpack.c.l.b16 %v7680
  %v8111 = vunpack.c.h.b16 %v7680
  %v8112 = vunpack.c.l.b16 %v7681
  %v8113 = vunpack.c.h.b16 %v7681
  %v8114 = vunpack.c.l.b16 %v7682
  %v8115 = vunpack.c.h.b16 %v7682
  %v8116 = vunpack.c.l.b16 %v7683
  %v8117 = vunpack.c.h.b16 %v7683
  %v8118 = vunpack.c.l.b16 %v7684
  %v8119 = vunpack.c.h.b16 %v7684
  %v8120 = vunpack.c.l.b16 %v7685
  %v8121 = vunpack.c.h.b16 %v7685
  %v8122 = vunpack.c.l.b16 %v7686
  %v8123 = vunpack.c.h.b16 %v7686
  %v8124 = vunpack.c.l.b16 %v7687
  %v8125 = vunpack.c.h.b16 %v7687
  %v8126 = vunpack.c.l.b16 %v7688
  %v8127 = vunpack.c.h.b16 %v7688
  %v8128 = vunpack.c.l.b16 %v7689
  %v8129 = vunpack.c.h.b16 %v7689
  %v8130 = vunpack.c.l.b16 %v7690
  %v8131 = vunpack.c.h.b16 %v7690
  %v8132 = vunpack.c.l.b16 %v7691
  %v8133 = vunpack.c.h.b16 %v7691
  %v8134 = vunpack.c.l.b16 %v7692
  %v8135 = vunpack.c.h.b16 %v7692
  %v8136 = vunpack.c.l.b16 %v7693
  %v8137 = vunpack.c.h.b16 %v7693
  %v8138 = vunpack.c.l.b16 %v7694
  %v8139 = vunpack.c.h.b16 %v7694
  %v8140 = vunpack.c.l.b16 %v7695
  %v8141 = vunpack.c.h.b16 %v7695
  %v8142 = vunpack.c.l.b16 %v7696
  %v8143 = vunpack.c.h.b16 %v7696
  %v8144 = vunpack.c.l.b16 %v7697
  %v8145 = vunpack.c.h.b16 %v7697
  %v8146 = vunpack.c.l.b16 %v7698
  %v8147 = vunpack.c.h.b16 %v7698
  %v8148 = vunpack.c.l.b16 %v7699
  %v8149 = vunpack.c.h.b16 %v7699
  %v8150 = vunpack.c.l.b16 %v7700
  %v8151 = vunpack.c.h.b16 %v7700
  %v8152 = vunpack.c.l.b16 %v7701
  %v8153 = vunpack.c.h.b16 %v7701
  %v8154 = vunpack.c.l.b16 %v7702
  %v8155 = vunpack.c.h.b16 %v7702
  %v8156 = vunpack.c.l.b16 %v7703
  %v8157 = vunpack.c.h.b16 %v7703
  %v8158 = vunpack.c.l.b16 %v7704
  %v8159 = vunpack.c.h.b16 %v7704
  %v8160 = vunpack.c.l.b16 %v7705
  %v8161 = vunpack.c.h.b16 %v7705
  %v8162 = vunpack.c.l.b16 %v7706
  %v8163 = vunpack.c.h.b16 %v7706
  %v8164 = vunpack.c.l.b16 %v7707
  %v8165 = vunpack.c.h.b16 %v7707
  %v8166 = vunpack.c.l.b16 %v7708
  %v8167 = vunpack.c.h.b16 %v7708
  %v8168 = vunpack.c.l.b16 %v7709
  %v8169 = vunpack.c.h.b16 %v7709
  %v8170 = vunpack.c.l.b16 %v7710
  %v8171 = vunpack.c.h.b16 %v7710
  %v8172 = vunpack.c.l.b16 %v7711
  %v8173 = vunpack.c.h.b16 %v7711
  %v8174 = vunpack.c.l.b16 %v7712
  %v8175 = vunpack.c.h.b16 %v7712
  %v8176 = vunpack.c.l.b16 %v7713
  %v8177 = vunpack.c.h.b16 %v7713
  %v8178 = vunpack.c.l.b16 %v7714
  %v8179 = vunpack.c.h.b16 %v7714
  %v8180 = vunpack.c.l.b16 %v7715
  %v8181 = vunpack.c.h.b16 %v7715
  %v8182 = vunpack.c.l.b16 %v7716
  %v8183 = vunpack.c.h.b16 %v7716
  %v8184 = vunpack.c.l.b16 %v7717
  %v8185 = vunpack.c.h.b16 %v7717
  %v8186 = vunpack.c.l.b16 %v7718
  %v8187 = vunpack.c.h.b16 %v7718
  %v8188 = vunpack.c.l.b16 %v7719
  %v8189 = vunpack.c.h.b16 %v7719
  %v8190 = vunpack.c.l.b16 %v7720
  %v8191 = vunpack.c.h.b16 %v7720
  %v8192 = vunpack.c.l.b16 %v7721
  %v8193 = vunpack.c.h.b16 %v7721
  %v8194 = vunpack.c.l.b16 %v7722
  %v8195 = vunpack.c.h.b16 %v7722
  %v8196 = vunpack.c.l.b16 %v7723
  %v8197 = vunpack.c.h.b16 %v7723
  %v8198 = vunpack.c.l.b16 %v7724
  %v8199 = vunpack.c.h.b16 %v7724
  %v8200 = vunpack.c.l.b16 %v7725
  %v8201 = vunpack.c.h.b16 %v7725
  %v8202 = vpack.c.b16 %v7954, %v7946
  %v8203 = vpack.c.b16 %v7955, %v7947
  %v8204 = vpack.c.b16 %v7956, %v7948
  %v8205 = vpack.c.b16 %v7957, %v7949
  %v8206 = vpack.c.b16 %v7958, %v7950
  %v8207 = vpack.c.b16 %v7959, %v7951
  %v8208 = vpack.c.b16 %v7960, %v7952
  %v8209 = vpack.c.b16 %v7961, %v7953
  %v8210 = vpack.c.b16 %v7970, %v7962
  %v8211 = vpack.c.b16 %v7971, %v7963
  %v8212 = vpack.c.b16 %v7972, %v7964
  %v8213 = vpack.c.b16 %v7973, %v7965
  %v8214 = vpack.c.b16 %v7974, %v7966
  %v8215 = vpack.c.b16 %v7975, %v7967
  %v8216 = vpack.c.b16 %v7976, %v7968
  %v8217 = vpack.c.b16 %v7977, %v7969
  %v8218 = vpack.c.b16 %v7986, %v7978
  %v8219 = vpack.c.b16 %v7987, %v7979
  %v8220 = vpack.c.b16 %v7988, %v7980
  %v8221 = vpack.c.b16 %v7989, %v7981
  %v8222 = vpack.c.b16 %v7990, %v7982
  %v8223 = vpack.c.b16 %v7991, %v7983
  %v8224 = vpack.c.b16 %v7992, %v7984
  %v8225 = vpack.c.b16 %v7993, %v7985
  %v8226 = vpack.c.b16 %v8002, %v7994
  %v8227 = vpack.c.b16 %v8003, %v7995
  %v8228 = vpack.c.b16 %v8004, %v7996
  %v8229 = vpack.c.b16 %v8005, %v7997
  %v8230 = vpack.c.b16 %v8006, %v7998
  %v8231 = vpack.c.b16 %v8007, %v7999
  %v8232 = vpack.c.b16 %v8008, %v8000
  %v8233 = vpack.c.b16 %v8009, %v8001
  %v8234 = vpack.c.b16 %v8018, %v8010
  %v8235 = vpack.c.b16 %v8019, %v8011
  %v8236 = vpack.c.b16 %v8020, %v8012
  %v8237 = vpack.c.b16 %v8021, %v8013
  %v8238 = vpack.c.b16 %v8022, %v8014
  %v8239 = vpack.c.b16 %v8023, %v8015
  %v8240 = vpack.c.b16 %v8024, %v8016
  %v8241 = vpack.c.b16 %v8025, %v8017
  %v8242 = vpack.c.b16 %v8034, %v8026
  %v8243 = vpack.c.b16 %v8035, %v8027
  %v8244 = vpack.c.b16 %v8036, %v8028
  %v8245 = vpack.c.b16 %v8037, %v8029
  %v8246 = vpack.c.b16 %v8038, %v8030
  %v8247 = vpack.c.b16 %v8039, %v8031
  %v8248 = vpack.c.b16 %v8040, %v8032
  %v8249 = vpack.c.b16 %v8041, %v8033
  %v8250 = vpack.c.b16 %v8050, %v8042
  %v8251 = vpack.c.b16 %v8051, %v8043
  %v8252 = vpack.c.b16 %v8052, %v8044
  %v8253 = vpack.c.b16 %v8053, %v8045
  %v8254 = vpack.c.b16 %v8054, %v8046
  %v8255 = vpack.c.b16 %v8055, %v8047
  %v8256 = vpack.c.b16 %v8056, %v8048
  %v8257 = vpack.c.b16 %v8057, %v8049
  %v8258 = vpack.c.b16 %v8066, %v8058
  %v8259 = vpack.c.b16 %v8067, %v8059
  %v8260 = vpack.c.b16 %v8068, %v8060
  %v8261 = vpack.c.b16 %v8069, %v8061
  %v8262 = vpack.c.b16 %v8070, %v8062
  %v8263 = vpack.c.b16 %v8071, %v8063
  %v8264 = vpack.c.b16 %v8072, %v8064
  %v8265 = vpack.c.b16 %v8073, %v8065
  %v8266 = vpack.c.b16 %v8082, %v8074
  %v8267 = vpack.c.b16 %v8083, %v8075
  %v8268 = vpack.c.b16 %v8084, %v8076
  %v8269 = vpack.c.b16 %v8085, %v8077
  %v8270 = vpack.c.b16 %v8086, %v8078
  %v8271 = vpack.c.b16 %v8087, %v8079
  %v8272 = vpack.c.b16 %v8088, %v8080
  %v8273 = vpack.c.b16 %v8089, %v8081
  %v8274 = vpack.c.b16 %v8098, %v8090
  %v8275 = vpack.c.b16 %v8099, %v8091
  %v8276 = vpack.c.b16 %v8100, %v8092
  %v8277 = vpack.c.b16 %v8101, %v8093
  %v8278 = vpack.c.b16 %v8102, %v8094
  %v8279 = vpack.c.b16 %v8103, %v8095
  %v8280 = vpack.c.b16 %v8104, %v8096
  %v8281 = vpack.c.b16 %v8105, %v8097
  %v8282 = vpack.c.b16 %v8114, %v8106
  %v8283 = vpack.c.b16 %v8115, %v8107
  %v8284 = vpack.c.b16 %v8116, %v8108
  %v8285 = vpack.c.b16 %v8117, %v8109
  %v8286 = vpack.c.b16 %v8118, %v8110
  %v8287 = vpack.c.b16 %v8119, %v8111
  %v8288 = vpack.c.b16 %v8120, %v8112
  %v8289 = vpack.c.b16 %v8121, %v8113
  %v8290 = vpack.c.b16 %v8130, %v8122
  %v8291 = vpack.c.b16 %v8131, %v8123
  %v8292 = vpack.c.b16 %v8132, %v8124
  %v8293 = vpack.c.b16 %v8133, %v8125
  %v8294 = vpack.c.b16 %v8134, %v8126
  %v8295 = vpack.c.b16 %v8135, %v8127
  %v8296 = vpack.c.b16 %v8136, %v8128
  %v8297 = vpack.c.b16 %v8137, %v8129
  %v8298 = vpack.c.b16 %v8146, %v8138
  %v8299 = vpack.c.b16 %v8147, %v8139
  %v8300 = vpack.c.b16 %v8148, %v8140
  %v8301 = vpack.c.b16 %v8149, %v8141
  %v8302 = vpack.c.b16 %v8150, %v8142
  %v8303 = vpack.c.b16 %v8151, %v8143
  %v8304 = vpack.c.b16 %v8152, %v8144
  %v8305 = vpack.c.b16 %v8153, %v8145
  %v8306 = vpack.c.b16 %v8162, %v8154
  %v8307 = vpack.c.b16 %v8163, %v8155
  %v8308 = vpack.c.b16 %v8164, %v8156
  %v8309 = vpack.c.b16 %v8165, %v8157
  %v8310 = vpack.c.b16 %v8166, %v8158
  %v8311 = vpack.c.b16 %v8167, %v8159
  %v8312 = vpack.c.b16 %v8168, %v8160
  %v8313 = vpack.c.b16 %v8169, %v8161
  %v8314 = vpack.c.b16 %v8178, %v8170
  %v8315 = vpack.c.b16 %v8179, %v8171
  %v8316 = vpack.c.b16 %v8180, %v8172
  %v8317 = vpack.c.b16 %v8181, %v8173
  %v8318 = vpack.c.b16 %v8182, %v8174
  %v8319 = vpack.c.b16 %v8183, %v8175
  %v8320 = vpack.c.b16 %v8184, %v8176
  %v8321 = vpack.c.b16 %v8185, %v8177
  %v8322 = vpack.c.b16 %v8194, %v8186
  %v8323 = vpack.c.b16 %v8195, %v8187
  %v8324 = vpack.c.b16 %v8196, %v8188
  %v8325 = vpack.c.b16 %v8197, %v8189
  %v8326 = vpack.c.b16 %v8198, %v8190
  %v8327 = vpack.c.b16 %v8199, %v8191
  %v8328 = vpack.c.b16 %v8200, %v8192
  %v8329 = vpack.c.b16 %v8201, %v8193
  %8458 = vmatprep.subr.bf16.mxu0 %v8259
  %8459 = vmatpush1.bf16.msra.mxu0 %v8258
  %8460 = vmatprep.subr.bf16.mxu0 %v8251
  %8461 = vmatpush1.bf16.msra.mxu0 %v8250
  %8462 = vmatprep.subr.bf16.mxu0 %v8243
  %8463 = vmatpush1.bf16.msra.mxu0 %v8242
  %8464 = vmatprep.subr.bf16.mxu0 %v8235
  %8465 = vmatpush1.bf16.msra.mxu0 %v8234
  %8466 = vmatprep.subr.bf16.mxu0 %v8227
  %8467 = vmatpush1.bf16.msra.mxu0 %v8226
  %8468 = vmatprep.subr.bf16.mxu0 %v8219
  %8469 = vmatpush1.bf16.msra.mxu0 %v8218
  %8470 = vmatprep.subr.bf16.mxu0 %v8211
  %8471 = vmatpush1.bf16.msra.mxu0 %v8210
  %8472 = vmatprep.subr.bf16.mxu0 %v8203
  %8473 = vmatpush1.bf16.msra.mxu0 %v8202
  %8474 = vmatprep.subr.bf16.mxu0 %v8323
  %8475 = vmatpush2.bf16.msra.mxu0 %v8322
  %8476 = vmatprep.subr.bf16.mxu0 %v8315
  %8477 = vmatpush2.bf16.msra.mxu0 %v8314
  %8478 = vmatprep.subr.bf16.mxu0 %v8307
  %8479 = vmatpush2.bf16.msra.mxu0 %v8306
  %8480 = vmatprep.subr.bf16.mxu0 %v8299
  %8481 = vmatpush2.bf16.msra.mxu0 %v8298
  %8482 = vmatprep.subr.bf16.mxu0 %v8291
  %8483 = vmatpush2.bf16.msra.mxu0 %v8290
  %8484 = vmatprep.subr.bf16.mxu0 %v8283
  %8485 = vmatpush2.bf16.msra.mxu0 %v8282
  %8486 = vmatprep.subr.bf16.mxu0 %v8275
  %8487 = vmatpush2.bf16.msra.mxu0 %v8274
  %8488 = vmatprep.subr.bf16.mxu0 %v8267
  %8489 = vmatpush2.bf16.msra.mxu0 %v8266
  %8490 = vmatprep.mubr.bf16.mxu0 %v7815
  %8491 = vmatmul.mubr.bf16.gmra.mxu0 %v7814
  %v8492 = vpop.f32.mrf.mxu0
  %v8493 = vadd.f32 %v7731, %v8492
  %v8494 = vpop.f32.mrf.mxu0
  %v8495 = vadd.f32 %v7735, %v8494
  %v8496 = vpop.f32.mrf.mxu0
  %v8497 = vpop.f32.mrf.mxu0
  %8498 = vdwg.mxu0
  %8499 = vmatprep.subr.bf16.mxu0 %v8261
  %8500 = vmatpush1.bf16.msra.mxu0 %v8260
  %8501 = vmatprep.subr.bf16.mxu0 %v8253
  %8502 = vmatpush1.bf16.msra.mxu0 %v8252
  %8503 = vmatprep.subr.bf16.mxu0 %v8245
  %8504 = vmatpush1.bf16.msra.mxu0 %v8244
  %8505 = vmatprep.subr.bf16.mxu0 %v8237
  %8506 = vmatpush1.bf16.msra.mxu0 %v8236
  %8507 = vmatprep.subr.bf16.mxu0 %v8229
  %8508 = vmatpush1.bf16.msra.mxu0 %v8228
  %8509 = vmatprep.subr.bf16.mxu0 %v8221
  %8510 = vmatpush1.bf16.msra.mxu0 %v8220
  %8511 = vmatprep.subr.bf16.mxu0 %v8213
  %8512 = vmatpush1.bf16.msra.mxu0 %v8212
  %8513 = vmatprep.subr.bf16.mxu0 %v8205
  %8514 = vmatpush1.bf16.msra.mxu0 %v8204
  %8515 = vmatprep.subr.bf16.mxu0 %v8325
  %8516 = vmatpush2.bf16.msra.mxu0 %v8324
  %8517 = vmatprep.subr.bf16.mxu0 %v8317
  %8518 = vmatpush2.bf16.msra.mxu0 %v8316
  %8519 = vmatprep.subr.bf16.mxu0 %v8309
  %8520 = vmatpush2.bf16.msra.mxu0 %v8308
  %8521 = vmatprep.subr.bf16.mxu0 %v8301
  %8522 = vmatpush2.bf16.msra.mxu0 %v8300
  %8523 = vmatprep.subr.bf16.mxu0 %v8293
  %8524 = vmatpush2.bf16.msra.mxu0 %v8292
  %8525 = vmatprep.subr.bf16.mxu0 %v8285
  %8526 = vmatpush2.bf16.msra.mxu0 %v8284
  %8527 = vmatprep.subr.bf16.mxu0 %v8277
  %8528 = vmatpush2.bf16.msra.mxu0 %v8276
  %8529 = vmatprep.subr.bf16.mxu0 %v8269
  %8530 = vmatpush2.bf16.msra.mxu0 %v8268
  %8531 = vmatprep.mubr.bf16.mxu0 %v7815
  %8532 = vmatmul.mubr.bf16.gmra.mxu0 %v7814
  %v8533 = vpop.f32.mrf.mxu0
  %v8534 = vadd.f32 %v7739, %v8533
  %v8535 = vpop.f32.mrf.mxu0
  %v8536 = vadd.f32 %v7743, %v8535
  %v8537 = vpop.f32.mrf.mxu0
  %v8538 = vpop.f32.mrf.mxu0
  %8539 = vdwg.mxu0
  %8540 = vmatprep.subr.bf16.mxu0 %v8263
  %8541 = vmatpush1.bf16.msra.mxu0 %v8262
  %8542 = vmatprep.subr.bf16.mxu0 %v8255
  %8543 = vmatpush1.bf16.msra.mxu0 %v8254
  %8544 = vmatprep.subr.bf16.mxu0 %v8247
  %8545 = vmatpush1.bf16.msra.mxu0 %v8246
  %8546 = vmatprep.subr.bf16.mxu0 %v8239
  %8547 = vmatpush1.bf16.msra.mxu0 %v8238
  %8548 = vmatprep.subr.bf16.mxu0 %v8231
  %8549 = vmatpush1.bf16.msra.mxu0 %v8230
  %8550 = vmatprep.subr.bf16.mxu0 %v8223
  %8551 = vmatpush1.bf16.msra.mxu0 %v8222
  %8552 = vmatprep.subr.bf16.mxu0 %v8215
  %8553 = vmatpush1.bf16.msra.mxu0 %v8214
  %8554 = vmatprep.subr.bf16.mxu0 %v8207
  %8555 = vmatpush1.bf16.msra.mxu0 %v8206
  %8556 = vmatprep.subr.bf16.mxu0 %v8327
  %8557 = vmatpush2.bf16.msra.mxu0 %v8326
  %8558 = vmatprep.subr.bf16.mxu0 %v8319
  %8559 = vmatpush2.bf16.msra.mxu0 %v8318
  %8560 = vmatprep.subr.bf16.mxu0 %v8311
  %8561 = vmatpush2.bf16.msra.mxu0 %v8310
  %8562 = vmatprep.subr.bf16.mxu0 %v8303
  %8563 = vmatpush2.bf16.msra.mxu0 %v8302
  %8564 = vmatprep.subr.bf16.mxu0 %v8295
  %8565 = vmatpush2.bf16.msra.mxu0 %v8294
  %8566 = vmatprep.subr.bf16.mxu0 %v8287
  %8567 = vmatpush2.bf16.msra.mxu0 %v8286
  %8568 = vmatprep.subr.bf16.mxu0 %v8279
  %8569 = vmatpush2.bf16.msra.mxu0 %v8278
  %8570 = vmatprep.subr.bf16.mxu0 %v8271
  %8571 = vmatpush2.bf16.msra.mxu0 %v8270
  %8572 = vmatprep.mubr.bf16.mxu0 %v7815
  %8573 = vmatmul.mubr.bf16.gmra.mxu0 %v7814
  %v8574 = vpop.f32.mrf.mxu0
  %v8575 = vadd.f32 %v7747, %v8574
  %v8576 = vpop.f32.mrf.mxu0
  %v8577 = vadd.f32 %v7751, %v8576
  %v8578 = vpop.f32.mrf.mxu0
  %v8579 = vpop.f32.mrf.mxu0
  %8580 = vdwg.mxu0
  %8581 = vmatprep.subr.bf16.mxu0 %v8265
  %8582 = vmatpush1.bf16.msra.mxu0 %v8264
  %8583 = vmatprep.subr.bf16.mxu0 %v8257
  %8584 = vmatpush1.bf16.msra.mxu0 %v8256
  %8585 = vmatprep.subr.bf16.mxu0 %v8249
  %8586 = vmatpush1.bf16.msra.mxu0 %v8248
  %8587 = vmatprep.subr.bf16.mxu0 %v8241
  %8588 = vmatpush1.bf16.msra.mxu0 %v8240
  %8589 = vmatprep.subr.bf16.mxu0 %v8233
  %8590 = vmatpush1.bf16.msra.mxu0 %v8232
  %8591 = vmatprep.subr.bf16.mxu0 %v8225
  %8592 = vmatpush1.bf16.msra.mxu0 %v8224
  %8593 = vmatprep.subr.bf16.mxu0 %v8217
  %8594 = vmatpush1.bf16.msra.mxu0 %v8216
  %8595 = vmatprep.subr.bf16.mxu0 %v8209
  %8596 = vmatpush1.bf16.msra.mxu0 %v8208
  %8597 = vmatprep.subr.bf16.mxu0 %v8329
  %8598 = vmatpush2.bf16.msra.mxu0 %v8328
  %8599 = vmatprep.subr.bf16.mxu0 %v8321
  %8600 = vmatpush2.bf16.msra.mxu0 %v8320
  %8601 = vmatprep.subr.bf16.mxu0 %v8313
  %8602 = vmatpush2.bf16.msra.mxu0 %v8312
  %8603 = vmatprep.subr.bf16.mxu0 %v8305
  %8604 = vmatpush2.bf16.msra.mxu0 %v8304
  %8605 = vmatprep.subr.bf16.mxu0 %v8297
  %8606 = vmatpush2.bf16.msra.mxu0 %v8296
  %8607 = vmatprep.subr.bf16.mxu0 %v8289
  %8608 = vmatpush2.bf16.msra.mxu0 %v8288
  %8609 = vmatprep.subr.bf16.mxu0 %v8281
  %8610 = vmatpush2.bf16.msra.mxu0 %v8280
  %8611 = vmatprep.subr.bf16.mxu0 %v8273
  %8612 = vmatpush2.bf16.msra.mxu0 %v8272
  %8613 = vmatprep.mubr.bf16.mxu0 %v7815
  %8614 = vmatmul.mubr.bf16.gmra.mxu0 %v7814
  %v8615 = vpop.f32.mrf.mxu0
  %v8616 = vadd.f32 %v7755, %v8615
  %v8617 = vpop.f32.mrf.mxu0
  %v8618 = vadd.f32 %v7759, %v8617
  %v8619 = vpop.f32.mrf.mxu0
  %v8620 = vpop.f32.mrf.mxu0
  %8621 = vdwg.mxu0
  %v8622 = vpack.c.bf16 %v8493, %v8493
  %v8623 = vpack.c.bf16 %v8495, %v8495
  %v8624 = vpack.c.bf16 %v8534, %v8534
  %v8625 = vpack.c.bf16 %v8536, %v8536
  %v8626 = vpack.c.bf16 %v8575, %v8575
  %v8627 = vpack.c.bf16 %v8577, %v8577
  %v8628 = vpack.c.bf16 %v8616, %v8616
  %v8629 = vpack.c.bf16 %v8618, %v8618
  %v8630 = vld [vmem:[%s17] sm:$0xf]
  %v8631 = vld [vmem:[%s17 + $0x4] sm:$0xf]
  %v8632 = vld [vmem:[%s17 + $0x8] sm:$0xf]
  %v8633 = vld [vmem:[%s17 + $0xc] sm:$0xf]
  %v8634 = vld [vmem:[%s17 + $0x10] sm:$0xf]
  %v8635 = vld [vmem:[%s17 + $0x14] sm:$0xf]
  %v8636 = vld [vmem:[%s17 + $0x18] sm:$0xf]
  %v8637 = vld [vmem:[%s17 + $0x1c] sm:$0xf]
  %v8638 = vld [vmem:[%s17 + $0x20] sm:$0xf]
  %v8639 = vld [vmem:[%s17 + $0x24] sm:$0xf]
  %v8640 = vld [vmem:[%s17 + $0x28] sm:$0xf]
  %v8641 = vld [vmem:[%s17 + $0x2c] sm:$0xf]
  %v8642 = vld [vmem:[%s17 + $0x30] sm:$0xf]
  %v8643 = vld [vmem:[%s17 + $0x34] sm:$0xf]
  %v8644 = vld [vmem:[%s17 + $0x38] sm:$0xf]
  %v8645 = vld [vmem:[%s17 + $0x3c] sm:$0xf]
  %v8646 = vld [vmem:[%s17 + $0x40] sm:$0xf]
  %v8647 = vld [vmem:[%s17 + $0x44] sm:$0xf]
  %v8648 = vld [vmem:[%s17 + $0x48] sm:$0xf]
  %v8649 = vld [vmem:[%s17 + $0x4c] sm:$0xf]
  %v8650 = vld [vmem:[%s17 + $0x50] sm:$0xf]
  %v8651 = vld [vmem:[%s17 + $0x54] sm:$0xf]
  %v8652 = vld [vmem:[%s17 + $0x58] sm:$0xf]
  %v8653 = vld [vmem:[%s17 + $0x5c] sm:$0xf]
  %v8654 = vld [vmem:[%s17 + $0x60] sm:$0xf]
  %v8655 = vld [vmem:[%s17 + $0x64] sm:$0xf]
  %v8656 = vld [vmem:[%s17 + $0x68] sm:$0xf]
  %v8657 = vld [vmem:[%s17 + $0x6c] sm:$0xf]
  %v8658 = vld [vmem:[%s17 + $0x70] sm:$0xf]
  %v8659 = vld [vmem:[%s17 + $0x74] sm:$0xf]
  %v8660 = vld [vmem:[%s17 + $0x78] sm:$0xf]
  %v8661 = vld [vmem:[%s17 + $0x7c] sm:$0xf]
  %v8662 = vld [vmem:[%s17 + $0x80] sm:$0xf]
  %v8663 = vld [vmem:[%s17 + $0x84] sm:$0xf]
  %v8664 = vld [vmem:[%s17 + $0x88] sm:$0xf]
  %v8665 = vld [vmem:[%s17 + $0x8c] sm:$0xf]
  %v8666 = vld [vmem:[%s17 + $0x90] sm:$0xf]
  %v8667 = vld [vmem:[%s17 + $0x94] sm:$0xf]
  %v8668 = vld [vmem:[%s17 + $0x98] sm:$0xf]
  %v8669 = vld [vmem:[%s17 + $0x9c] sm:$0xf]
  %v8670 = vld [vmem:[%s17 + $0xa0] sm:$0xf]
  %v8671 = vld [vmem:[%s17 + $0xa4] sm:$0xf]
  %v8672 = vld [vmem:[%s17 + $0xa8] sm:$0xf]
  %v8673 = vld [vmem:[%s17 + $0xac] sm:$0xf]
  %v8674 = vld [vmem:[%s17 + $0xb0] sm:$0xf]
  %v8675 = vld [vmem:[%s17 + $0xb4] sm:$0xf]
  %v8676 = vld [vmem:[%s17 + $0xb8] sm:$0xf]
  %v8677 = vld [vmem:[%s17 + $0xbc] sm:$0xf]
  %v8678 = vld [vmem:[%s17 + $0xc0] sm:$0xf]
  %v8679 = vld [vmem:[%s17 + $0xc4] sm:$0xf]
  %v8680 = vld [vmem:[%s17 + $0xc8] sm:$0xf]
  %v8681 = vld [vmem:[%s17 + $0xcc] sm:$0xf]
  %v8682 = vld [vmem:[%s17 + $0xd0] sm:$0xf]
  %v8683 = vld [vmem:[%s17 + $0xd4] sm:$0xf]
  %v8684 = vld [vmem:[%s17 + $0xd8] sm:$0xf]
  %v8685 = vld [vmem:[%s17 + $0xdc] sm:$0xf]
  %v8686 = vld [vmem:[%s17 + $0xe0] sm:$0xf]
  %v8687 = vld [vmem:[%s17 + $0xe4] sm:$0xf]
  %v8688 = vld [vmem:[%s17 + $0xe8] sm:$0xf]
  %v8689 = vld [vmem:[%s17 + $0xec] sm:$0xf]
  %v8690 = vld [vmem:[%s17 + $0xf0] sm:$0xf]
  %v8691 = vld [vmem:[%s17 + $0xf4] sm:$0xf]
  %v8692 = vld [vmem:[%s17 + $0xf8] sm:$0xf]
  %v8693 = vld [vmem:[%s17 + $0xfc] sm:$0xf]
  %v8694 = vld [vmem:[%s17 + $0x100] sm:$0xf]
  %v8695 = vld [vmem:[%s17 + $0x104] sm:$0xf]
  %v8696 = vld [vmem:[%s17 + $0x108] sm:$0xf]
  %v8697 = vld [vmem:[%s17 + $0x10c] sm:$0xf]
  %v8698 = vld [vmem:[%s17 + $0x110] sm:$0xf]
  %v8699 = vld [vmem:[%s17 + $0x114] sm:$0xf]
  %v8700 = vld [vmem:[%s17 + $0x118] sm:$0xf]
  %v8701 = vld [vmem:[%s17 + $0x11c] sm:$0xf]
  %v8702 = vld [vmem:[%s17 + $0x120] sm:$0xf]
  %v8703 = vld [vmem:[%s17 + $0x124] sm:$0xf]
  %v8704 = vld [vmem:[%s17 + $0x128] sm:$0xf]
  %v8705 = vld [vmem:[%s17 + $0x12c] sm:$0xf]
  %v8706 = vld [vmem:[%s17 + $0x130] sm:$0xf]
  %v8707 = vld [vmem:[%s17 + $0x134] sm:$0xf]
  %v8708 = vld [vmem:[%s17 + $0x138] sm:$0xf]
  %v8709 = vld [vmem:[%s17 + $0x13c] sm:$0xf]
  %v8710 = vld [vmem:[%s17 + $0x140] sm:$0xf]
  %v8711 = vld [vmem:[%s17 + $0x144] sm:$0xf]
  %v8712 = vld [vmem:[%s17 + $0x148] sm:$0xf]
  %v8713 = vld [vmem:[%s17 + $0x14c] sm:$0xf]
  %v8714 = vld [vmem:[%s17 + $0x150] sm:$0xf]
  %v8715 = vld [vmem:[%s17 + $0x154] sm:$0xf]
  %v8716 = vld [vmem:[%s17 + $0x158] sm:$0xf]
  %v8717 = vld [vmem:[%s17 + $0x15c] sm:$0xf]
  %v8718 = vld [vmem:[%s17 + $0x160] sm:$0xf]
  %v8719 = vld [vmem:[%s17 + $0x164] sm:$0xf]
  %v8720 = vld [vmem:[%s17 + $0x168] sm:$0xf]
  %v8721 = vld [vmem:[%s17 + $0x16c] sm:$0xf]
  %v8722 = vld [vmem:[%s17 + $0x170] sm:$0xf]
  %v8723 = vld [vmem:[%s17 + $0x174] sm:$0xf]
  %v8724 = vld [vmem:[%s17 + $0x178] sm:$0xf]
  %v8725 = vld [vmem:[%s17 + $0x17c] sm:$0xf]
  %v8726 = vld [vmem:[%s17 + $0x180] sm:$0xf]
  %v8727 = vld [vmem:[%s17 + $0x184] sm:$0xf]
  %v8728 = vld [vmem:[%s17 + $0x188] sm:$0xf]
  %v8729 = vld [vmem:[%s17 + $0x18c] sm:$0xf]
  %v8730 = vld [vmem:[%s17 + $0x190] sm:$0xf]
  %v8731 = vld [vmem:[%s17 + $0x194] sm:$0xf]
  %v8732 = vld [vmem:[%s17 + $0x198] sm:$0xf]
  %v8733 = vld [vmem:[%s17 + $0x19c] sm:$0xf]
  %v8734 = vld [vmem:[%s17 + $0x1a0] sm:$0xf]
  %v8735 = vld [vmem:[%s17 + $0x1a4] sm:$0xf]
  %v8736 = vld [vmem:[%s17 + $0x1a8] sm:$0xf]
  %v8737 = vld [vmem:[%s17 + $0x1ac] sm:$0xf]
  %v8738 = vld [vmem:[%s17 + $0x1b0] sm:$0xf]
  %v8739 = vld [vmem:[%s17 + $0x1b4] sm:$0xf]
  %v8740 = vld [vmem:[%s17 + $0x1b8] sm:$0xf]
  %v8741 = vld [vmem:[%s17 + $0x1bc] sm:$0xf]
  %v8742 = vld [vmem:[%s17 + $0x1c0] sm:$0xf]
  %v8743 = vld [vmem:[%s17 + $0x1c4] sm:$0xf]
  %v8744 = vld [vmem:[%s17 + $0x1c8] sm:$0xf]
  %v8745 = vld [vmem:[%s17 + $0x1cc] sm:$0xf]
  %v8746 = vld [vmem:[%s17 + $0x1d0] sm:$0xf]
  %v8747 = vld [vmem:[%s17 + $0x1d4] sm:$0xf]
  %v8748 = vld [vmem:[%s17 + $0x1d8] sm:$0xf]
  %v8749 = vld [vmem:[%s17 + $0x1dc] sm:$0xf]
  %v8750 = vld [vmem:[%s17 + $0x1e0] sm:$0xf]
  %v8751 = vld [vmem:[%s17 + $0x1e4] sm:$0xf]
  %v8752 = vld [vmem:[%s17 + $0x1e8] sm:$0xf]
  %v8753 = vld [vmem:[%s17 + $0x1ec] sm:$0xf]
  %v8754 = vld [vmem:[%s17 + $0x1f0] sm:$0xf]
  %v8755 = vld [vmem:[%s17 + $0x1f4] sm:$0xf]
  %v8756 = vld [vmem:[%s17 + $0x1f8] sm:$0xf]
  %v8757 = vld [vmem:[%s17 + $0x1fc] sm:$0xf]
  %v8758 = vld [vmem:[%s18] sm:$0x1]
  %v8760 = vlaneseq
  %v8761 = vshrl.u32 %v8760, 7
  %v8762 = vsub.s32 0, %v8761
  %v8763 = vrot.slane %v8758, %v8762
  %v8893 = vunpack.c.l.b16 %v8630
  %v8894 = vunpack.c.l.b16 %v8631
  %v8895 = vunpack.c.l.b16 %v8632
  %v8896 = vunpack.c.l.b16 %v8633
  %v8897 = vunpack.c.l.b16 %v8634
  %v8898 = vunpack.c.l.b16 %v8635
  %v8899 = vunpack.c.l.b16 %v8636
  %v8900 = vunpack.c.l.b16 %v8637
  %v8901 = vunpack.c.l.b16 %v8638
  %v8902 = vunpack.c.l.b16 %v8639
  %v8903 = vunpack.c.l.b16 %v8640
  %v8904 = vunpack.c.l.b16 %v8641
  %v8905 = vunpack.c.l.b16 %v8642
  %v8906 = vunpack.c.l.b16 %v8643
  %v8907 = vunpack.c.l.b16 %v8644
  %v8908 = vunpack.c.l.b16 %v8645
  %v8909 = vunpack.c.l.b16 %v8646
  %v8910 = vunpack.c.l.b16 %v8647
  %v8911 = vunpack.c.l.b16 %v8648
  %v8912 = vunpack.c.l.b16 %v8649
  %v8913 = vunpack.c.l.b16 %v8650
  %v8914 = vunpack.c.l.b16 %v8651
  %v8915 = vunpack.c.l.b16 %v8652
  %v8916 = vunpack.c.l.b16 %v8653
  %v8917 = vunpack.c.l.b16 %v8654
  %v8918 = vunpack.c.l.b16 %v8655
  %v8919 = vunpack.c.l.b16 %v8656
  %v8920 = vunpack.c.l.b16 %v8657
  %v8921 = vunpack.c.l.b16 %v8658
  %v8922 = vunpack.c.l.b16 %v8659
  %v8923 = vunpack.c.l.b16 %v8660
  %v8924 = vunpack.c.l.b16 %v8661
  %v8925 = vunpack.c.l.b16 %v8662
  %v8926 = vunpack.c.l.b16 %v8663
  %v8927 = vunpack.c.l.b16 %v8664
  %v8928 = vunpack.c.l.b16 %v8665
  %v8929 = vunpack.c.l.b16 %v8666
  %v8930 = vunpack.c.l.b16 %v8667
  %v8931 = vunpack.c.l.b16 %v8668
  %v8932 = vunpack.c.l.b16 %v8669
  %v8933 = vunpack.c.l.b16 %v8670
  %v8934 = vunpack.c.l.b16 %v8671
  %v8935 = vunpack.c.l.b16 %v8672
  %v8936 = vunpack.c.l.b16 %v8673
  %v8937 = vunpack.c.l.b16 %v8674
  %v8938 = vunpack.c.l.b16 %v8675
  %v8939 = vunpack.c.l.b16 %v8676
  %v8940 = vunpack.c.l.b16 %v8677
  %v8941 = vunpack.c.l.b16 %v8678
  %v8942 = vunpack.c.l.b16 %v8679
  %v8943 = vunpack.c.l.b16 %v8680
  %v8944 = vunpack.c.l.b16 %v8681
  %v8945 = vunpack.c.l.b16 %v8682
  %v8946 = vunpack.c.l.b16 %v8683
  %v8947 = vunpack.c.l.b16 %v8684
  %v8948 = vunpack.c.l.b16 %v8685
  %v8949 = vunpack.c.l.b16 %v8686
  %v8950 = vunpack.c.l.b16 %v8687
  %v8951 = vunpack.c.l.b16 %v8688
  %v8952 = vunpack.c.l.b16 %v8689
  %v8953 = vunpack.c.l.b16 %v8690
  %v8954 = vunpack.c.l.b16 %v8691
  %v8955 = vunpack.c.l.b16 %v8692
  %v8956 = vunpack.c.l.b16 %v8693
  %v8957 = vunpack.c.l.b16 %v8694
  %v8958 = vunpack.c.l.b16 %v8695
  %v8959 = vunpack.c.l.b16 %v8696
  %v8960 = vunpack.c.l.b16 %v8697
  %v8961 = vunpack.c.l.b16 %v8698
  %v8962 = vunpack.c.l.b16 %v8699
  %v8963 = vunpack.c.l.b16 %v8700
  %v8964 = vunpack.c.l.b16 %v8701
  %v8965 = vunpack.c.l.b16 %v8702
  %v8966 = vunpack.c.l.b16 %v8703
  %v8967 = vunpack.c.l.b16 %v8704
  %v8968 = vunpack.c.l.b16 %v8705
  %v8969 = vunpack.c.l.b16 %v8706
  %v8970 = vunpack.c.l.b16 %v8707
  %v8971 = vunpack.c.l.b16 %v8708
  %v8972 = vunpack.c.l.b16 %v8709
  %v8973 = vunpack.c.l.b16 %v8710
  %v8974 = vunpack.c.l.b16 %v8711
  %v8975 = vunpack.c.l.b16 %v8712
  %v8976 = vunpack.c.l.b16 %v8713
  %v8977 = vunpack.c.l.b16 %v8714
  %v8978 = vunpack.c.l.b16 %v8715
  %v8979 = vunpack.c.l.b16 %v8716
  %v8980 = vunpack.c.l.b16 %v8717
  %v8981 = vunpack.c.l.b16 %v8718
  %v8982 = vunpack.c.l.b16 %v8719
  %v8983 = vunpack.c.l.b16 %v8720
  %v8984 = vunpack.c.l.b16 %v8721
  %v8985 = vunpack.c.l.b16 %v8722
  %v8986 = vunpack.c.l.b16 %v8723
  %v8987 = vunpack.c.l.b16 %v8724
  %v8988 = vunpack.c.l.b16 %v8725
  %v8989 = vunpack.c.l.b16 %v8726
  %v8990 = vunpack.c.l.b16 %v8727
  %v8991 = vunpack.c.l.b16 %v8728
  %v8992 = vunpack.c.l.b16 %v8729
  %v8993 = vunpack.c.l.b16 %v8730
  %v8994 = vunpack.c.l.b16 %v8731
  %v8995 = vunpack.c.l.b16 %v8732
  %v8996 = vunpack.c.l.b16 %v8733
  %v8997 = vunpack.c.l.b16 %v8734
  %v8998 = vunpack.c.l.b16 %v8735
  %v8999 = vunpack.c.l.b16 %v8736
  %v9000 = vunpack.c.l.b16 %v8737
  %v9001 = vunpack.c.l.b16 %v8738
  %v9002 = vunpack.c.l.b16 %v8739
  %v9003 = vunpack.c.l.b16 %v8740
  %v9004 = vunpack.c.l.b16 %v8741
  %v9005 = vunpack.c.l.b16 %v8742
  %v9006 = vunpack.c.l.b16 %v8743
  %v9007 = vunpack.c.l.b16 %v8744
  %v9008 = vunpack.c.l.b16 %v8745
  %v9009 = vunpack.c.l.b16 %v8746
  %v9010 = vunpack.c.l.b16 %v8747
  %v9011 = vunpack.c.l.b16 %v8748
  %v9012 = vunpack.c.l.b16 %v8749
  %v9013 = vunpack.c.l.b16 %v8750
  %v9014 = vunpack.c.l.b16 %v8751
  %v9015 = vunpack.c.l.b16 %v8752
  %v9016 = vunpack.c.l.b16 %v8753
  %v9017 = vunpack.c.l.b16 %v8754
  %v9018 = vunpack.c.l.b16 %v8755
  %v9019 = vunpack.c.l.b16 %v8756
  %v9020 = vunpack.c.l.b16 %v8757
  %v9021 = vpack.c.b16 %v8894, %v8893
  %v9022 = vpack.c.b16 %v8896, %v8895
  %v9023 = vpack.c.b16 %v8898, %v8897
  %v9024 = vpack.c.b16 %v8900, %v8899
  %v9025 = vpack.c.b16 %v8902, %v8901
  %v9026 = vpack.c.b16 %v8904, %v8903
  %v9027 = vpack.c.b16 %v8906, %v8905
  %v9028 = vpack.c.b16 %v8908, %v8907
  %v9029 = vpack.c.b16 %v8910, %v8909
  %v9030 = vpack.c.b16 %v8912, %v8911
  %v9031 = vpack.c.b16 %v8914, %v8913
  %v9032 = vpack.c.b16 %v8916, %v8915
  %v9033 = vpack.c.b16 %v8918, %v8917
  %v9034 = vpack.c.b16 %v8920, %v8919
  %v9035 = vpack.c.b16 %v8922, %v8921
  %v9036 = vpack.c.b16 %v8924, %v8923
  %v9037 = vpack.c.b16 %v8926, %v8925
  %v9038 = vpack.c.b16 %v8928, %v8927
  %v9039 = vpack.c.b16 %v8930, %v8929
  %v9040 = vpack.c.b16 %v8932, %v8931
  %v9041 = vpack.c.b16 %v8934, %v8933
  %v9042 = vpack.c.b16 %v8936, %v8935
  %v9043 = vpack.c.b16 %v8938, %v8937
  %v9044 = vpack.c.b16 %v8940, %v8939
  %v9045 = vpack.c.b16 %v8942, %v8941
  %v9046 = vpack.c.b16 %v8944, %v8943
  %v9047 = vpack.c.b16 %v8946, %v8945
  %v9048 = vpack.c.b16 %v8948, %v8947
  %v9049 = vpack.c.b16 %v8950, %v8949
  %v9050 = vpack.c.b16 %v8952, %v8951
  %v9051 = vpack.c.b16 %v8954, %v8953
  %v9052 = vpack.c.b16 %v8956, %v8955
  %v9053 = vpack.c.b16 %v8958, %v8957
  %v9054 = vpack.c.b16 %v8960, %v8959
  %v9055 = vpack.c.b16 %v8962, %v8961
  %v9056 = vpack.c.b16 %v8964, %v8963
  %v9057 = vpack.c.b16 %v8966, %v8965
  %v9058 = vpack.c.b16 %v8968, %v8967
  %v9059 = vpack.c.b16 %v8970, %v8969
  %v9060 = vpack.c.b16 %v8972, %v8971
  %v9061 = vpack.c.b16 %v8974, %v8973
  %v9062 = vpack.c.b16 %v8976, %v8975
  %v9063 = vpack.c.b16 %v8978, %v8977
  %v9064 = vpack.c.b16 %v8980, %v8979
  %v9065 = vpack.c.b16 %v8982, %v8981
  %v9066 = vpack.c.b16 %v8984, %v8983
  %v9067 = vpack.c.b16 %v8986, %v8985
  %v9068 = vpack.c.b16 %v8988, %v8987
  %v9069 = vpack.c.b16 %v8990, %v8989
  %v9070 = vpack.c.b16 %v8992, %v8991
  %v9071 = vpack.c.b16 %v8994, %v8993
  %v9072 = vpack.c.b16 %v8996, %v8995
  %v9073 = vpack.c.b16 %v8998, %v8997
  %v9074 = vpack.c.b16 %v9000, %v8999
  %v9075 = vpack.c.b16 %v9002, %v9001
  %v9076 = vpack.c.b16 %v9004, %v9003
  %v9077 = vpack.c.b16 %v9006, %v9005
  %v9078 = vpack.c.b16 %v9008, %v9007
  %v9079 = vpack.c.b16 %v9010, %v9009
  %v9080 = vpack.c.b16 %v9012, %v9011
  %v9081 = vpack.c.b16 %v9014, %v9013
  %v9082 = vpack.c.b16 %v9016, %v9015
  %v9083 = vpack.c.b16 %v9018, %v9017
  %v9084 = vpack.c.b16 %v9020, %v9019
  %9149 = vmatprep.subr.bf16.mxu0 0
  %9150 = vmatpush1.bf16.msra.mxu0 %v9028
  %9151 = vmatprep.subr.bf16.mxu0 0
  %9152 = vmatpush1.bf16.msra.mxu0 %v9027
  %9153 = vmatprep.subr.bf16.mxu0 0
  %9154 = vmatpush1.bf16.msra.mxu0 %v9026
  %9155 = vmatprep.subr.bf16.mxu0 0
  %9156 = vmatpush1.bf16.msra.mxu0 %v9025
  %9157 = vmatprep.subr.bf16.mxu0 0
  %9158 = vmatpush1.bf16.msra.mxu0 %v9024
  %9159 = vmatprep.subr.bf16.mxu0 0
  %9160 = vmatpush1.bf16.msra.mxu0 %v9023
  %9161 = vmatprep.subr.bf16.mxu0 0
  %9162 = vmatpush1.bf16.msra.mxu0 %v9022
  %9163 = vmatprep.subr.bf16.mxu0 0
  %9164 = vmatpush1.bf16.msra.mxu0 %v9021
  %9165 = vmatprep.subr.bf16.mxu0 0
  %9166 = vmatpush2.bf16.msra.mxu0 %v9036
  %9167 = vmatprep.subr.bf16.mxu0 0
  %9168 = vmatpush2.bf16.msra.mxu0 %v9035
  %9169 = vmatprep.subr.bf16.mxu0 0
  %9170 = vmatpush2.bf16.msra.mxu0 %v9034
  %9171 = vmatprep.subr.bf16.mxu0 0
  %9172 = vmatpush2.bf16.msra.mxu0 %v9033
  %9173 = vmatprep.subr.bf16.mxu0 0
  %9174 = vmatpush2.bf16.msra.mxu0 %v9032
  %9175 = vmatprep.subr.bf16.mxu0 0
  %9176 = vmatpush2.bf16.msra.mxu0 %v9031
  %9177 = vmatprep.subr.bf16.mxu0 0
  %9178 = vmatpush2.bf16.msra.mxu0 %v9030
  %9179 = vmatprep.subr.bf16.mxu0 0
  %9180 = vmatpush2.bf16.msra.mxu0 %v9029
  %9181 = vmatprep.mubr.bf16.mxu0 %v8623
  %9182 = vmatmul.mubr.bf16.gmra.mxu0 %v8622
  %v9183 = vpop.f32.mrf.mxu0
  %v9184 = vadd.f32 %v8763, %v9183
  %v9185 = vpop.f32.mrf.mxu0
  %v9186 = vpop.f32.mrf.mxu0
  %v9187 = vpop.f32.mrf.mxu0
  %9188 = vdwg.mxu0
  %9189 = vmatprep.subr.bf16.mxu0 0
  %9190 = vmatpush1.bf16.msra.mxu0 %v9044
  %9191 = vmatprep.subr.bf16.mxu0 0
  %9192 = vmatpush1.bf16.msra.mxu0 %v9043
  %9193 = vmatprep.subr.bf16.mxu0 0
  %9194 = vmatpush1.bf16.msra.mxu0 %v9042
  %9195 = vmatprep.subr.bf16.mxu0 0
  %9196 = vmatpush1.bf16.msra.mxu0 %v9041
  %9197 = vmatprep.subr.bf16.mxu0 0
  %9198 = vmatpush1.bf16.msra.mxu0 %v9040
  %9199 = vmatprep.subr.bf16.mxu0 0
  %9200 = vmatpush1.bf16.msra.mxu0 %v9039
  %9201 = vmatprep.subr.bf16.mxu0 0
  %9202 = vmatpush1.bf16.msra.mxu0 %v9038
  %9203 = vmatprep.subr.bf16.mxu0 0
  %9204 = vmatpush1.bf16.msra.mxu0 %v9037
  %9205 = vmatprep.subr.bf16.mxu0 0
  %9206 = vmatpush2.bf16.msra.mxu0 %v9052
  %9207 = vmatprep.subr.bf16.mxu0 0
  %9208 = vmatpush2.bf16.msra.mxu0 %v9051
  %9209 = vmatprep.subr.bf16.mxu0 0
  %9210 = vmatpush2.bf16.msra.mxu0 %v9050
  %9211 = vmatprep.subr.bf16.mxu0 0
  %9212 = vmatpush2.bf16.msra.mxu0 %v9049
  %9213 = vmatprep.subr.bf16.mxu0 0
  %9214 = vmatpush2.bf16.msra.mxu0 %v9048
  %9215 = vmatprep.subr.bf16.mxu0 0
  %9216 = vmatpush2.bf16.msra.mxu0 %v9047
  %9217 = vmatprep.subr.bf16.mxu0 0
  %9218 = vmatpush2.bf16.msra.mxu0 %v9046
  %9219 = vmatprep.subr.bf16.mxu0 0
  %9220 = vmatpush2.bf16.msra.mxu0 %v9045
  %9221 = vmatprep.mubr.bf16.mxu0 %v8625
  %9222 = vmatmul.mubr.bf16.gmra.mxu0 %v8624
  %v9223 = vpop.f32.mrf.mxu0
  %v9224 = vadd.f32 %v9184, %v9223
  %v9225 = vpop.f32.mrf.mxu0
  %v9226 = vpop.f32.mrf.mxu0
  %v9227 = vpop.f32.mrf.mxu0
  %9228 = vdwg.mxu0
  %9229 = vmatprep.subr.bf16.mxu0 0
  %9230 = vmatpush1.bf16.msra.mxu0 %v9060
  %9231 = vmatprep.subr.bf16.mxu0 0
  %9232 = vmatpush1.bf16.msra.mxu0 %v9059
  %9233 = vmatprep.subr.bf16.mxu0 0
  %9234 = vmatpush1.bf16.msra.mxu0 %v9058
  %9235 = vmatprep.subr.bf16.mxu0 0
  %9236 = vmatpush1.bf16.msra.mxu0 %v9057
  %9237 = vmatprep.subr.bf16.mxu0 0
  %9238 = vmatpush1.bf16.msra.mxu0 %v9056
  %9239 = vmatprep.subr.bf16.mxu0 0
  %9240 = vmatpush1.bf16.msra.mxu0 %v9055
  %9241 = vmatprep.subr.bf16.mxu0 0
  %9242 = vmatpush1.bf16.msra.mxu0 %v9054
  %9243 = vmatprep.subr.bf16.mxu0 0
  %9244 = vmatpush1.bf16.msra.mxu0 %v9053
  %9245 = vmatprep.subr.bf16.mxu0 0
  %9246 = vmatpush2.bf16.msra.mxu0 %v9068
  %9247 = vmatprep.subr.bf16.mxu0 0
  %9248 = vmatpush2.bf16.msra.mxu0 %v9067
  %9249 = vmatprep.subr.bf16.mxu0 0
  %9250 = vmatpush2.bf16.msra.mxu0 %v9066
  %9251 = vmatprep.subr.bf16.mxu0 0
  %9252 = vmatpush2.bf16.msra.mxu0 %v9065
  %9253 = vmatprep.subr.bf16.mxu0 0
  %9254 = vmatpush2.bf16.msra.mxu0 %v9064
  %9255 = vmatprep.subr.bf16.mxu0 0
  %9256 = vmatpush2.bf16.msra.mxu0 %v9063
  %9257 = vmatprep.subr.bf16.mxu0 0
  %9258 = vmatpush2.bf16.msra.mxu0 %v9062
  %9259 = vmatprep.subr.bf16.mxu0 0
  %9260 = vmatpush2.bf16.msra.mxu0 %v9061
  %9261 = vmatprep.mubr.bf16.mxu0 %v8627
  %9262 = vmatmul.mubr.bf16.gmra.mxu0 %v8626
  %v9263 = vpop.f32.mrf.mxu0
  %v9264 = vadd.f32 %v9224, %v9263
  %v9265 = vpop.f32.mrf.mxu0
  %v9266 = vpop.f32.mrf.mxu0
  %v9267 = vpop.f32.mrf.mxu0
  %9268 = vdwg.mxu0
  %9269 = vmatprep.subr.bf16.mxu0 0
  %9270 = vmatpush1.bf16.msra.mxu0 %v9076
  %9271 = vmatprep.subr.bf16.mxu0 0
  %9272 = vmatpush1.bf16.msra.mxu0 %v9075
  %9273 = vmatprep.subr.bf16.mxu0 0
  %9274 = vmatpush1.bf16.msra.mxu0 %v9074
  %9275 = vmatprep.subr.bf16.mxu0 0
  %9276 = vmatpush1.bf16.msra.mxu0 %v9073
  %9277 = vmatprep.subr.bf16.mxu0 0
  %9278 = vmatpush1.bf16.msra.mxu0 %v9072
  %9279 = vmatprep.subr.bf16.mxu0 0
  %9280 = vmatpush1.bf16.msra.mxu0 %v9071
  %9281 = vmatprep.subr.bf16.mxu0 0
  %9282 = vmatpush1.bf16.msra.mxu0 %v9070
  %9283 = vmatprep.subr.bf16.mxu0 0
  %9284 = vmatpush1.bf16.msra.mxu0 %v9069
  %9285 = vmatprep.subr.bf16.mxu0 0
  %9286 = vmatpush2.bf16.msra.mxu0 %v9084
  %9287 = vmatprep.subr.bf16.mxu0 0
  %9288 = vmatpush2.bf16.msra.mxu0 %v9083
  %9289 = vmatprep.subr.bf16.mxu0 0
  %9290 = vmatpush2.bf16.msra.mxu0 %v9082
  %9291 = vmatprep.subr.bf16.mxu0 0
  %9292 = vmatpush2.bf16.msra.mxu0 %v9081
  %9293 = vmatprep.subr.bf16.mxu0 0
  %9294 = vmatpush2.bf16.msra.mxu0 %v9080
  %9295 = vmatprep.subr.bf16.mxu0 0
  %9296 = vmatpush2.bf16.msra.mxu0 %v9079
  %9297 = vmatprep.subr.bf16.mxu0 0
  %9298 = vmatpush2.bf16.msra.mxu0 %v9078
  %9299 = vmatprep.subr.bf16.mxu0 0
  %9300 = vmatpush2.bf16.msra.mxu0 %v9077
  %9301 = vmatprep.mubr.bf16.mxu0 %v8629
  %9302 = vmatmul.mubr.bf16.gmra.mxu0 %v8628
  %v9303 = vpop.f32.mrf.mxu0
  %v9304 = vadd.f32 %v9264, %v9303
  %v9305 = vpop.f32.mrf.mxu0
  %v9306 = vpop.f32.mrf.mxu0
  %v9307 = vpop.f32.mrf.mxu0
  %9308 = vdwg.mxu0
  %9309 = vst [vmem:[%s19] sm:$0xff] %v9304
  // Predicated region
  $region78: #{effnet_model_forward.1} parent=0 // pred_check
    _
  $region79: #{effnet_model_forward.1} parent=0 // pred_check_branch
    %9311 = sbr.rel (0) target = $region81
  $region80: #{effnet_model_forward.1} parent=0 // pred_region
    _
  $region81: #{effnet_model_forward.1} parent=0 // pred_fallthru
    _
  // Predicated region
  $region82: #{effnet_model_forward.1} parent=0 // pred_check
    _
  $region83: #{effnet_model_forward.1} parent=0 // pred_check_branch
    %9313 = sbr.rel (0) target = $region85
  $region84: #{effnet_model_forward.1} parent=0 // pred_region
    _
  $region85: #{effnet_model_forward.1} parent=0 // pred_fallthru
    _

</llo_original>
